<compile_context>
chip_gen: v7x
topology: tpu7x:2x2x1
jax: 0.10.0
libtpu: 0.0.40
codegen_flags: <defaults>
</compile_context>

<pallas_src>
import jax
import jax.numpy as jnp
from jax.experimental import pallas as pl
from jax.experimental.pallas import tpu as pltpu

EPS = 1e-5
NUM_CLASSES = 62
PADDED_CLASSES = 128          # lane-dense classifier output
HALF = 7 * 7 * 64 // 2        # 1568
F32 = jnp.float32
BF16 = jnp.bfloat16


def _vmem():
    return pl.BlockSpec(memory_space=pltpu.MemorySpace.VMEM)


# ---------------------------------------------------------------------------
# Kernel 1: conv1 (as one matmul) + BN1 (batch stats) + ReLU + 2x2 max-pool
#   x_ref : (B*784, 32)  im2col patches (25 taps + 7 zero columns), rows=(b,h,w)
#   w_ref : (32, 32)     conv1 weight, row = kh*5+kw (last 7 rows zero)
#   o_ref : (B*784, 32)  rows [0, N-29) hold the 2x2 max whose top-left corner is
#                        that (b,h,w); only even-(h,w) rows are consumed outside.
# ---------------------------------------------------------------------------
def _conv1_block_kernel(x_ref, w_ref, g_ref, b_ref, o_ref):
    n_rows = x_ref.shape[0]
    y = jnp.dot(x_ref[...], w_ref[...], preferred_element_type=F32)     # (N, 32)

    # BatchNorm (training mode, batch statistics) folded to scale/shift + ReLU.
    inv_n = 1.0 / float(n_rows)
    s = jnp.sum(y, axis=0, keepdims=True)
    q = jnp.sum(y * y, axis=0, keepdims=True)
    mu = s * inv_n
    var = jnp.maximum(q * inv_n - mu * mu, 0.0)
    scale = g_ref[...] * jax.lax.rsqrt(var + EPS)
    shift = b_ref[...] - mu * scale
    y = jnp.maximum(y * scale + shift, 0.0)

    # Stage activation in the output ref, then max-pool via row-shifted windows
    # (rows ordered (b, h, w), W=28, so (h,w)+(0,1)/(1,0)/(1,1) are +1/+28/+29).
    o_ref[...] = y
    r = n_rows - 29
    m = jnp.maximum(
        jnp.maximum(o_ref[0:r, :], o_ref[1:r + 1, :]),
        jnp.maximum(o_ref[28:r + 28, :], o_ref[29:r + 29, :]))
    o_ref[0:r, :] = m


# ---------------------------------------------------------------------------
# Kernel 2: conv2 as ONE dense (B*196, 800) @ (800, 64) bf16 MXU matmul
#           + BN2 (batch stats) + ReLU + 2x2 max-pool (rows ordered (b,h,w), W=14)
# ---------------------------------------------------------------------------
def _conv2_block_kernel(x_ref, w_ref, g_ref, b_ref, o_ref):
    n_rows = x_ref.shape[0]
    y = jnp.dot(x_ref[...], w_ref[...], preferred_element_type=F32)     # (N, 64)

    inv_n = 1.0 / float(n_rows)
    s = jnp.sum(y, axis=0, keepdims=True)
    q = jnp.sum(y * y, axis=0, keepdims=True)
    mu = s * inv_n
    var = jnp.maximum(q * inv_n - mu * mu, 0.0)
    scale = g_ref[...] * jax.lax.rsqrt(var + EPS)
    shift = b_ref[...] - mu * scale
    y = jnp.maximum(y * scale + shift, 0.0)

    o_ref[...] = y
    r = n_rows - 15
    m = jnp.maximum(
        jnp.maximum(o_ref[0:r, :], o_ref[1:r + 1, :]),
        jnp.maximum(o_ref[14:r + 14, :], o_ref[15:r + 15, :]))
    o_ref[0:r, :] = m


# ---------------------------------------------------------------------------
# Kernel 3: fused spinal head.
#   x_ref   : (B, 3136) HWC-flattened features (free XLA reshape outside)
#   wbig_ref: (3136, 256) bf16 — the four K=1568 matmuls stacked; the CHW->HWC
#             permutation and xa/xb half selection are folded into the weight.
#   swb_ref : (150, 50)  stacked 50x50 weights of spinal layers 2..4
#   wc_ref  : (200, 128) stacked classifier weight (padded to 128 lanes)
# ---------------------------------------------------------------------------
def _head_kernel(x_ref, wbig_ref, bbig_ref, swb_ref, wc_ref, bc_ref, o_ref, u_scr):
    x = x_ref[...].astype(BF16)
    u_scr[...] = (jnp.dot(x, wbig_ref[...], preferred_element_type=F32)
                  + bbig_ref[...])                                       # (B, 256)

    # TODO(synk): training-mode dropout (p=0.5) omitted — identity / eval semantics.
    x1 = jnp.maximum(u_scr[:, 0:50], 0.0)
    x2 = jnp.maximum(u_scr[:, 64:114] +
                     jnp.dot(x1, swb_ref[0:50, :], preferred_element_type=F32), 0.0)
    x3 = jnp.maximum(u_scr[:, 128:178] +
                     jnp.dot(x2, swb_ref[50:100, :], preferred_element_type=F32), 0.0)
    x4 = jnp.maximum(u_scr[:, 192:242] +
                     jnp.dot(x3, swb_ref[100:150, :], preferred_element_type=F32), 0.0)

    logits = (jnp.dot(x1, wc_ref[0:50, :], preferred_element_type=F32) +
              jnp.dot(x2, wc_ref[50:100, :], preferred_element_type=F32) +
              jnp.dot(x3, wc_ref[100:150, :], preferred_element_type=F32) +
              jnp.dot(x4, wc_ref[150:200, :], preferred_element_type=F32) +
              bc_ref[...])
    o_ref[...] = logits                                                  # (B, 128)


# ---------------------------------------------------------------------------
# Forward pass (gridless: BN uses whole-batch statistics, see header note).
# XLA glue between calls is only padding / patch extraction / strided downselect
# on tiny tensors; the flatten feeding the head is a free row-major reshape.
# ---------------------------------------------------------------------------
def spinalnet_forward(x_nchw, kp):
    B, Cin, H, W = x_nchw.shape
    assert (Cin, H, W) == (1, 28, 28), "SpinalNet expects 1x28x28 inputs"

    x = x_nchw.reshape(B, 28, 28).astype(F32)
    xp = jnp.pad(x, ((0, 0), (2, 2), (2, 2)))                     # (B, 32, 32)

    # conv1 im2col: 25 taps -> (B*784, 32) (7 zero columns for alignment)
    taps1 = [xp[:, kh:kh + 28, kw:kw + 28] for kh in range(5) for kw in range(5)]
    x1 = jnp.stack(taps1, axis=-1).reshape(B * 784, 25)
    x1 = jnp.pad(x1, ((0, 0), (0, 7)))

    y1 = pl.pallas_call(
        _conv1_block_kernel,
        out_shape=jax.ShapeDtypeStruct((B * 784, 32), F32),
        in_specs=[_vmem()] * 4,
        out_specs=_vmem(),
    )(x1, kp["w1"], kp["g1"], kp["b1"])

    # pool1 downselect (even h,w), pad=2, conv2 im2col -> (B*196, 800) bf16
    p1 = y1.reshape(B, 28, 28, 32)[:, ::2, ::2, :]                 # (B, 14, 14, 32)
    p1p = jnp.pad(p1, ((0, 0), (2, 2), (2, 2), (0, 0)))            # (B, 18, 18, 32)
    taps2 = [p1p[:, kh:kh + 14, kw:kw + 14, :]
             for kh in range(5) for kw in range(5)]
    x2 = jnp.concatenate(taps2, axis=-1).reshape(B * 196, 800).astype(BF16)

    y2 = pl.pallas_call(
        _conv2_block_kernel,
        out_shape=jax.ShapeDtypeStruct((B * 196, 64), F32),
        in_specs=[_vmem()] * 4,
        out_specs=_vmem(),
    )(x2, kp["w2"], kp["g2"], kp["b2"])

    # pool2 downselect + free HWC flatten (permutation is folded into wbig).
    feats = y2.reshape(B, 14, 14, 64)[:, ::2, ::2, :].reshape(B, 7 * 7 * 64)

    logits = pl.pallas_call(
        _head_kernel,
        out_shape=jax.ShapeDtypeStruct((B, PADDED_CLASSES), F32),
        in_specs=[_vmem()] * 6,
        out_specs=_vmem(),
        scratch_shapes=[pltpu.VMEM((B, 256), F32)],
    )(feats, kp["wbig"], kp["bbig"], kp["swb"], kp["wc"], kp["bc"])

    return logits[:, :NUM_CLASSES]


# ---------------------------------------------------------------------------
# Parameters in PyTorch layout (matches _initialize_weights: conv kaiming_normal
# fan_out, BN gamma=1/beta=0, linear N(0,0.01) bias=0; conv biases are zero and
# therefore omitted from the kernels).
# ---------------------------------------------------------------------------
def init_params(key):
    ks = jax.random.split(key, 8)

    def kaiming(k, shape, fan_out):
        return ((2.0 / fan_out) ** 0.5) * jax.random.normal(k, shape, F32)

    def lin(k, fout, fin):
        return 0.01 * jax.random.normal(k, (fout, fin), F32)

    return {
        "conv1_w": kaiming(ks[0], (32, 1, 5, 5), fan_out=32 * 25),
        "bn1_g": jnp.ones((32,), F32), "bn1_b": jnp.zeros((32,), F32),
        "conv2_w": kaiming(ks[1], (64, 32, 5, 5), fan_out=64 * 25),
        "bn2_g": jnp.ones((64,), F32), "bn2_b": jnp.zeros((64,), F32),
        "sp1_w": lin(ks[2], 50, HALF), "sp1_b": jnp.zeros((50,), F32),
        "sp2_w": lin(ks[3], 50, HALF + 50), "sp2_b": jnp.zeros((50,), F32),
        "sp3_w": lin(ks[4], 50, HALF + 50), "sp3_b": jnp.zeros((50,), F32),
        "sp4_w": lin(ks[5], 50, HALF + 50), "sp4_b": jnp.zeros((50,), F32),
        "cls_w": lin(ks[6], NUM_CLASSES, 200), "cls_b": jnp.zeros((NUM_CLASSES,), F32),
    }


def prepare_params(p):
    """One-time relayout of PyTorch-layout weights into kernel-friendly layouts."""
    kp = {}
    # conv1: (32,1,5,5) -> (32, 32): row = kh*5+kw (rows 25..31 zero), col = cout
    w1 = p["conv1_w"].reshape(32, 25).T
    kp["w1"] = jnp.pad(w1, ((0, 7), (0, 0)))
    kp["g1"] = p["bn1_g"].reshape(1, 32)
    kp["b1"] = p["bn1_b"].reshape(1, 32)
    # conv2: (64,32,5,5) -> (800, 64): row = (kh*5+kw)*32 + cin; bf16 for the MXU
    kp["w2"] = jnp.transpose(p["conv2_w"], (2, 3, 1, 0)).reshape(800, 64).astype(BF16)
    kp["g2"] = p["bn2_g"].reshape(1, 64)
    kp["b2"] = p["bn2_b"].reshape(1, 64)

    # Head: fold CHW->HWC flatten permutation + half selection into one weight.
    def half_to_hwc(w_half, c0):             # w_half: (50, 1568) torch (out, in_chw)
        w = w_half.T.reshape(32, 49, 50)     # (c_local, p=h*7+w, out)
        w = jnp.transpose(w, (1, 0, 2))      # (p, c_local, out)
        blk = jnp.zeros((49, 64, 50), F32).at[:, c0:c0 + 32, :].set(w)
        return blk.reshape(3136, 50)         # row q = p*64 + c  (HWC flatten index)

    z14 = jnp.zeros((3136, 14), F32)
    kp["wbig"] = jnp.concatenate(
        [half_to_hwc(p["sp1_w"], 0), z14,
         half_to_hwc(p["sp2_w"][:, :HALF], 32), z14,
         half_to_hwc(p["sp3_w"][:, :HALF], 0), z14,
         half_to_hwc(p["sp4_w"][:, :HALF], 32), z14], axis=1).astype(BF16)  # (3136,256)

    bbig = jnp.zeros((1, 256), F32)
    bbig = bbig.at[0, 0:50].set(p["sp1_b"]).at[0, 64:114].set(p["sp2_b"])
    bbig = bbig.at[0, 128:178].set(p["sp3_b"]).at[0, 192:242].set(p["sp4_b"])
    kp["bbig"] = bbig

    kp["swb"] = jnp.concatenate([p["sp2_w"][:, HALF:].T,
                                 p["sp3_w"][:, HALF:].T,
                                 p["sp4_w"][:, HALF:].T], axis=0)          # (150, 50)
    kp["wc"] = jnp.zeros((200, PADDED_CLASSES), F32).at[:, :NUM_CLASSES].set(
        p["cls_w"].T)
    kp["bc"] = jnp.zeros((1, PADDED_CLASSES), F32).at[0, :NUM_CLASSES].set(p["cls_b"])
    return kp


if __name__ == "__main__":
    key = jax.random.PRNGKey(0)
    pkey, xkey = jax.random.split(key)
    params = init_params(pkey)
    kparams = prepare_params(params)          # one-time weight relayout

    # PyTorch-convention NCHW input implied by the module: 1 channel, 28x28.
    x = jax.random.normal(xkey, (2, 1, 28, 28), dtype=F32)

    fwd = jax.jit(spinalnet_forward)
    logits = fwd(x, kparams)
    jax.block_until_ready(logits)

    assert logits.shape == (2, NUM_CLASSES)
    assert bool(jnp.all(jnp.isfinite(logits)))
    print("KERNEL_OK")
</pallas_src>

<mosaic_0001>
module attributes {stable_mosaic.version = 11 : i64} {
  func.func @_conv1_block_kernel(%arg0: memref<1568x32xf32, #tpu.memory_space<vmem>>, %arg1: memref<32x32xf32, #tpu.memory_space<vmem>>, %arg2: memref<1x32xf32, #tpu.memory_space<vmem>>, %arg3: memref<1x32xf32, #tpu.memory_space<vmem>>, %arg4: memref<1568x32xf32, #tpu.memory_space<vmem>>) attributes {dimension_semantics = [], scalar_prefetch = 0 : i64, scratch_operands = 0 : i64, tpu.core_type = #tpu.core_type<tc>} {
    %c0 = arith.constant 0 : index
    %c0_0 = arith.constant 0 : index
    %0 = vector.load %arg0[%c0, %c0_0] : memref<1568x32xf32, #tpu.memory_space<vmem>>, vector<1568x32xf32>
    %c0_1 = arith.constant 0 : index
    %c0_2 = arith.constant 0 : index
    %1 = vector.load %arg1[%c0_1, %c0_2] : memref<32x32xf32, #tpu.memory_space<vmem>>, vector<32x32xf32>
    %cst = arith.constant dense<0.000000e+00> : vector<1568x32xf32>
    %2 = tpu.matmul %0, %1, %cst {dimension_numbers = #tpu.dot_dimension_numbers<[1], [0], [0], [1], [0, 0, 1, 1], [], []>} : vector<1568x32xf32>, vector<32x32xf32>, vector<1568x32xf32> -> vector<1568x32xf32>
    %cst_3 = arith.constant dense<0.000000e+00> : vector<32xf32>
    %3 = vector.multi_reduction <add>, %2, %cst_3 [0] : vector<1568x32xf32> to vector<32xf32>
    %4 = vector.shape_cast %3 : vector<32xf32> to vector<1x32xf32>
    %5 = arith.mulf %2, %2 : vector<1568x32xf32>
    %cst_4 = arith.constant dense<0.000000e+00> : vector<32xf32>
    %6 = vector.multi_reduction <add>, %5, %cst_4 [0] : vector<1568x32xf32> to vector<32xf32>
    %7 = vector.shape_cast %6 : vector<32xf32> to vector<1x32xf32>
    %cst_5 = arith.constant 6.37755089E-4 : f32
    %8 = vector.broadcast %cst_5 : f32 to vector<1x32xf32>
    %9 = arith.mulf %4, %8 : vector<1x32xf32>
    %cst_6 = arith.constant 6.37755089E-4 : f32
    %10 = vector.broadcast %cst_6 : f32 to vector<1x32xf32>
    %11 = arith.mulf %7, %10 : vector<1x32xf32>
    %12 = arith.mulf %9, %9 : vector<1x32xf32>
    %13 = arith.subf %11, %12 : vector<1x32xf32>
    %cst_7 = arith.constant 0.000000e+00 : f32
    %14 = vector.broadcast %cst_7 : f32 to vector<1x32xf32>
    %15 = arith.maximumf %13, %14 : vector<1x32xf32>
    %c0_8 = arith.constant 0 : index
    %c0_9 = arith.constant 0 : index
    %16 = vector.load %arg2[%c0_8, %c0_9] : memref<1x32xf32, #tpu.memory_space<vmem>>, vector<1x32xf32>
    %cst_10 = arith.constant 9.99999974E-6 : f32
    %17 = vector.broadcast %cst_10 : f32 to vector<1x32xf32>
    %18 = arith.addf %15, %17 : vector<1x32xf32>
    %19 = math.rsqrt %18 : vector<1x32xf32>
    %20 = arith.mulf %16, %19 : vector<1x32xf32>
    %c0_11 = arith.constant 0 : index
    %c0_12 = arith.constant 0 : index
    %21 = vector.load %arg3[%c0_11, %c0_12] : memref<1x32xf32, #tpu.memory_space<vmem>>, vector<1x32xf32>
    %22 = arith.mulf %9, %20 : vector<1x32xf32>
    %23 = arith.subf %21, %22 : vector<1x32xf32>
    %24 = vector.broadcast %20 : vector<1x32xf32> to vector<1568x32xf32>
    %25 = arith.mulf %2, %24 : vector<1568x32xf32>
    %26 = vector.broadcast %23 : vector<1x32xf32> to vector<1568x32xf32>
    %27 = arith.addf %25, %26 : vector<1568x32xf32>
    %cst_13 = arith.constant 0.000000e+00 : f32
    %28 = vector.broadcast %cst_13 : f32 to vector<1568x32xf32>
    %29 = arith.maximumf %27, %28 : vector<1568x32xf32>
    %c0_14 = arith.constant 0 : index
    %c0_15 = arith.constant 0 : index
    %30 = vector.load %arg4[%c0_14, %c0_15] : memref<1568x32xf32, #tpu.memory_space<vmem>>, vector<1568x32xf32>
    tpu.vector_store %arg4[%c0_14, %c0_15], %29 {strides = array<i32>} : memref<1568x32xf32, #tpu.memory_space<vmem>>, vector<1568x32xf32>,
    %c0_16 = arith.constant 0 : index
    %c0_17 = arith.constant 0 : index
    %31 = vector.load %arg4[%c0_16, %c0_17] : memref<1568x32xf32, #tpu.memory_space<vmem>>, vector<1539x32xf32>
    %c1 = arith.constant 1 : index
    %c0_18 = arith.constant 0 : index
    %32 = vector.load %arg4[%c1, %c0_18] : memref<1568x32xf32, #tpu.memory_space<vmem>>, vector<1539x32xf32>
    %33 = arith.maximumf %31, %32 : vector<1539x32xf32>
    %c28 = arith.constant 28 : index
    %c0_19 = arith.constant 0 : index
    %34 = vector.load %arg4[%c28, %c0_19] : memref<1568x32xf32, #tpu.memory_space<vmem>>, vector<1539x32xf32>
    %c29 = arith.constant 29 : index
    %c0_20 = arith.constant 0 : index
    %35 = vector.load %arg4[%c29, %c0_20] : memref<1568x32xf32, #tpu.memory_space<vmem>>, vector<1539x32xf32>
    %36 = arith.maximumf %34, %35 : vector<1539x32xf32>
    %37 = arith.maximumf %33, %36 : vector<1539x32xf32>
    %c0_21 = arith.constant 0 : index
    %c0_22 = arith.constant 0 : index
    %38 = vector.load %arg4[%c0_21, %c0_22] : memref<1568x32xf32, #tpu.memory_space<vmem>>, vector<1539x32xf32>
    tpu.vector_store %arg4[%c0_21, %c0_22], %37 {strides = array<i32>} : memref<1568x32xf32, #tpu.memory_space<vmem>>, vector<1539x32xf32>,
    return
  }
}

module attributes {stable_mosaic.version = 11 : i64} {
  func.func @_conv2_block_kernel(%arg0: memref<392x800xbf16, #tpu.memory_space<vmem>>, %arg1: memref<800x64xbf16, #tpu.memory_space<vmem>>, %arg2: memref<1x64xf32, #tpu.memory_space<vmem>>, %arg3: memref<1x64xf32, #tpu.memory_space<vmem>>, %arg4: memref<392x64xf32, #tpu.memory_space<vmem>>) attributes {dimension_semantics = [], scalar_prefetch = 0 : i64, scratch_operands = 0 : i64, tpu.core_type = #tpu.core_type<tc>} {
    %c0 = arith.constant 0 : index
    %c0_0 = arith.constant 0 : index
    %0 = vector.load %arg0[%c0, %c0_0] : memref<392x800xbf16, #tpu.memory_space<vmem>>, vector<392x800xbf16>
    %c0_1 = arith.constant 0 : index
    %c0_2 = arith.constant 0 : index
    %1 = vector.load %arg1[%c0_1, %c0_2] : memref<800x64xbf16, #tpu.memory_space<vmem>>, vector<800x64xbf16>
    %cst = arith.constant dense<0.000000e+00> : vector<392x64xf32>
    %2 = tpu.matmul %0, %1, %cst {dimension_numbers = #tpu.dot_dimension_numbers<[1], [0], [0], [1], [0, 0, 1, 1], [], []>} : vector<392x800xbf16>, vector<800x64xbf16>, vector<392x64xf32> -> vector<392x64xf32>
    %cst_3 = arith.constant dense<0.000000e+00> : vector<64xf32>
    %3 = vector.multi_reduction <add>, %2, %cst_3 [0] : vector<392x64xf32> to vector<64xf32>
    %4 = vector.shape_cast %3 : vector<64xf32> to vector<1x64xf32>
    %5 = arith.mulf %2, %2 : vector<392x64xf32>
    %cst_4 = arith.constant dense<0.000000e+00> : vector<64xf32>
    %6 = vector.multi_reduction <add>, %5, %cst_4 [0] : vector<392x64xf32> to vector<64xf32>
    %7 = vector.shape_cast %6 : vector<64xf32> to vector<1x64xf32>
    %cst_5 = arith.constant 0.00255102036 : f32
    %8 = vector.broadcast %cst_5 : f32 to vector<1x64xf32>
    %9 = arith.mulf %4, %8 : vector<1x64xf32>
    %cst_6 = arith.constant 0.00255102036 : f32
    %10 = vector.broadcast %cst_6 : f32 to vector<1x64xf32>
    %11 = arith.mulf %7, %10 : vector<1x64xf32>
    %12 = arith.mulf %9, %9 : vector<1x64xf32>
    %13 = arith.subf %11, %12 : vector<1x64xf32>
    %cst_7 = arith.constant 0.000000e+00 : f32
    %14 = vector.broadcast %cst_7 : f32 to vector<1x64xf32>
    %15 = arith.maximumf %13, %14 : vector<1x64xf32>
    %c0_8 = arith.constant 0 : index
    %c0_9 = arith.constant 0 : index
    %16 = vector.load %arg2[%c0_8, %c0_9] : memref<1x64xf32, #tpu.memory_space<vmem>>, vector<1x64xf32>
    %cst_10 = arith.constant 9.99999974E-6 : f32
    %17 = vector.broadcast %cst_10 : f32 to vector<1x64xf32>
    %18 = arith.addf %15, %17 : vector<1x64xf32>
    %19 = math.rsqrt %18 : vector<1x64xf32>
    %20 = arith.mulf %16, %19 : vector<1x64xf32>
    %c0_11 = arith.constant 0 : index
    %c0_12 = arith.constant 0 : index
    %21 = vector.load %arg3[%c0_11, %c0_12] : memref<1x64xf32, #tpu.memory_space<vmem>>, vector<1x64xf32>
    %22 = arith.mulf %9, %20 : vector<1x64xf32>
    %23 = arith.subf %21, %22 : vector<1x64xf32>
    %24 = vector.broadcast %20 : vector<1x64xf32> to vector<392x64xf32>
    %25 = arith.mulf %2, %24 : vector<392x64xf32>
    %26 = vector.broadcast %23 : vector<1x64xf32> to vector<392x64xf32>
    %27 = arith.addf %25, %26 : vector<392x64xf32>
    %cst_13 = arith.constant 0.000000e+00 : f32
    %28 = vector.broadcast %cst_13 : f32 to vector<392x64xf32>
    %29 = arith.maximumf %27, %28 : vector<392x64xf32>
    %c0_14 = arith.constant 0 : index
    %c0_15 = arith.constant 0 : index
    %30 = vector.load %arg4[%c0_14, %c0_15] : memref<392x64xf32, #tpu.memory_space<vmem>>, vector<392x64xf32>
    tpu.vector_store %arg4[%c0_14, %c0_15], %29 {strides = array<i32>} : memref<392x64xf32, #tpu.memory_space<vmem>>, vector<392x64xf32>,
    %c0_16 = arith.constant 0 : index
    %c0_17 = arith.constant 0 : index
    %31 = vector.load %arg4[%c0_16, %c0_17] : memref<392x64xf32, #tpu.memory_space<vmem>>, vector<377x64xf32>
    %c1 = arith.constant 1 : index
    %c0_18 = arith.constant 0 : index
    %32 = vector.load %arg4[%c1, %c0_18] : memref<392x64xf32, #tpu.memory_space<vmem>>, vector<377x64xf32>
    %33 = arith.maximumf %31, %32 : vector<377x64xf32>
    %c14 = arith.constant 14 : index
    %c0_19 = arith.constant 0 : index
    %34 = vector.load %arg4[%c14, %c0_19] : memref<392x64xf32, #tpu.memory_space<vmem>>, vector<377x64xf32>
    %c15 = arith.constant 15 : index
    %c0_20 = arith.constant 0 : index
    %35 = vector.load %arg4[%c15, %c0_20] : memref<392x64xf32, #tpu.memory_space<vmem>>, vector<377x64xf32>
    %36 = arith.maximumf %34, %35 : vector<377x64xf32>
    %37 = arith.maximumf %33, %36 : vector<377x64xf32>
    %c0_21 = arith.constant 0 : index
    %c0_22 = arith.constant 0 : index
    %38 = vector.load %arg4[%c0_21, %c0_22] : memref<392x64xf32, #tpu.memory_space<vmem>>, vector<377x64xf32>
    tpu.vector_store %arg4[%c0_21, %c0_22], %37 {strides = array<i32>} : memref<392x64xf32, #tpu.memory_space<vmem>>, vector<377x64xf32>,
    return
  }
}

module attributes {stable_mosaic.version = 11 : i64} {
  func.func @_head_kernel(%arg0: memref<2x3136xf32, #tpu.memory_space<vmem>>, %arg1: memref<3136x256xbf16, #tpu.memory_space<vmem>>, %arg2: memref<1x256xf32, #tpu.memory_space<vmem>>, %arg3: memref<150x50xf32, #tpu.memory_space<vmem>>, %arg4: memref<200x128xf32, #tpu.memory_space<vmem>>, %arg5: memref<1x128xf32, #tpu.memory_space<vmem>>, %arg6: memref<2x128xf32, #tpu.memory_space<vmem>>, %arg7: memref<2x256xf32, #tpu.memory_space<vmem>>) attributes {dimension_semantics = [], scalar_prefetch = 0 : i64, scratch_operands = 1 : i64, tpu.core_type = #tpu.core_type<tc>} {
    %c0 = arith.constant 0 : index
    %c0_0 = arith.constant 0 : index
    %0 = vector.load %arg0[%c0, %c0_0] : memref<2x3136xf32, #tpu.memory_space<vmem>>, vector<2x3136xf32>
    %1 = arith.truncf %0 : vector<2x3136xf32> to vector<2x3136xbf16>
    %c0_1 = arith.constant 0 : index
    %c0_2 = arith.constant 0 : index
    %2 = vector.load %arg1[%c0_1, %c0_2] : memref<3136x256xbf16, #tpu.memory_space<vmem>>, vector<3136x256xbf16>
    %cst = arith.constant dense<0.000000e+00> : vector<2x256xf32>
    %3 = tpu.matmul %1, %2, %cst {dimension_numbers = #tpu.dot_dimension_numbers<[1], [0], [0], [1], [0, 0, 1, 1], [], []>} : vector<2x3136xbf16>, vector<3136x256xbf16>, vector<2x256xf32> -> vector<2x256xf32>
    %c0_3 = arith.constant 0 : index
    %c0_4 = arith.constant 0 : index
    %4 = vector.load %arg2[%c0_3, %c0_4] : memref<1x256xf32, #tpu.memory_space<vmem>>, vector<1x256xf32>
    %5 = vector.broadcast %4 : vector<1x256xf32> to vector<2x256xf32>
    %6 = arith.addf %3, %5 : vector<2x256xf32>
    %c0_5 = arith.constant 0 : index
    %c0_6 = arith.constant 0 : index
    %7 = vector.load %arg7[%c0_5, %c0_6] : memref<2x256xf32, #tpu.memory_space<vmem>>, vector<2x256xf32>
    tpu.vector_store %arg7[%c0_5, %c0_6], %6 {strides = array<i32>} : memref<2x256xf32, #tpu.memory_space<vmem>>, vector<2x256xf32>,
    %c0_7 = arith.constant 0 : index
    %c0_8 = arith.constant 0 : index
    %8 = vector.load %arg7[%c0_7, %c0_8] : memref<2x256xf32, #tpu.memory_space<vmem>>, vector<2x50xf32>
    %cst_9 = arith.constant 0.000000e+00 : f32
    %9 = vector.broadcast %cst_9 : f32 to vector<2x50xf32>
    %10 = arith.maximumf %8, %9 : vector<2x50xf32>
    %c0_10 = arith.constant 0 : index
    %c64 = arith.constant 64 : index
    %11 = vector.load %arg7[%c0_10, %c64] : memref<2x256xf32, #tpu.memory_space<vmem>>, vector<2x50xf32>
    %c0_11 = arith.constant 0 : index
    %c0_12 = arith.constant 0 : index
    %12 = vector.load %arg3[%c0_11, %c0_12] : memref<150x50xf32, #tpu.memory_space<vmem>>, vector<50x50xf32>
    %cst_13 = arith.constant dense<0.000000e+00> : vector<2x50xf32>
    %13 = tpu.matmul %10, %12, %cst_13 {dimension_numbers = #tpu.dot_dimension_numbers<[1], [0], [0], [1], [0, 0, 1, 1], [], []>} : vector<2x50xf32>, vector<50x50xf32>, vector<2x50xf32> -> vector<2x50xf32>
    %14 = arith.addf %11, %13 : vector<2x50xf32>
    %cst_14 = arith.constant 0.000000e+00 : f32
    %15 = vector.broadcast %cst_14 : f32 to vector<2x50xf32>
    %16 = arith.maximumf %14, %15 : vector<2x50xf32>
    %c0_15 = arith.constant 0 : index
    %c128 = arith.constant 128 : index
    %17 = vector.load %arg7[%c0_15, %c128] : memref<2x256xf32, #tpu.memory_space<vmem>>, vector<2x50xf32>
    %c50 = arith.constant 50 : index
    %c0_16 = arith.constant 0 : index
    %18 = vector.load %arg3[%c50, %c0_16] : memref<150x50xf32, #tpu.memory_space<vmem>>, vector<50x50xf32>
    %cst_17 = arith.constant dense<0.000000e+00> : vector<2x50xf32>
    %19 = tpu.matmul %16, %18, %cst_17 {dimension_numbers = #tpu.dot_dimension_numbers<[1], [0], [0], [1], [0, 0, 1, 1], [], []>} : vector<2x50xf32>, vector<50x50xf32>, vector<2x50xf32> -> vector<2x50xf32>
    %20 = arith.addf %17, %19 : vector<2x50xf32>
    %cst_18 = arith.constant 0.000000e+00 : f32
    %21 = vector.broadcast %cst_18 : f32 to vector<2x50xf32>
    %22 = arith.maximumf %20, %21 : vector<2x50xf32>
    %c0_19 = arith.constant 0 : index
    %c192 = arith.constant 192 : index
    %23 = vector.load %arg7[%c0_19, %c192] : memref<2x256xf32, #tpu.memory_space<vmem>>, vector<2x50xf32>
    %c100 = arith.constant 100 : index
    %c0_20 = arith.constant 0 : index
    %24 = vector.load %arg3[%c100, %c0_20] : memref<150x50xf32, #tpu.memory_space<vmem>>, vector<50x50xf32>
    %cst_21 = arith.constant dense<0.000000e+00> : vector<2x50xf32>
    %25 = tpu.matmul %22, %24, %cst_21 {dimension_numbers = #tpu.dot_dimension_numbers<[1], [0], [0], [1], [0, 0, 1, 1], [], []>} : vector<2x50xf32>, vector<50x50xf32>, vector<2x50xf32> -> vector<2x50xf32>
    %26 = arith.addf %23, %25 : vector<2x50xf32>
    %cst_22 = arith.constant 0.000000e+00 : f32
    %27 = vector.broadcast %cst_22 : f32 to vector<2x50xf32>
    %28 = arith.maximumf %26, %27 : vector<2x50xf32>
    %c0_23 = arith.constant 0 : index
    %c0_24 = arith.constant 0 : index
    %29 = vector.load %arg4[%c0_23, %c0_24] : memref<200x128xf32, #tpu.memory_space<vmem>>, vector<50x128xf32>
    %cst_25 = arith.constant dense<0.000000e+00> : vector<2x128xf32>
    %30 = tpu.matmul %10, %29, %cst_25 {dimension_numbers = #tpu.dot_dimension_numbers<[1], [0], [0], [1], [0, 0, 1, 1], [], []>} : vector<2x50xf32>, vector<50x128xf32>, vector<2x128xf32> -> vector<2x128xf32>
    %c50_26 = arith.constant 50 : index
    %c0_27 = arith.constant 0 : index
    %31 = vector.load %arg4[%c50_26, %c0_27] : memref<200x128xf32, #tpu.memory_space<vmem>>, vector<50x128xf32>
    %cst_28 = arith.constant dense<0.000000e+00> : vector<2x128xf32>
    %32 = tpu.matmul %16, %31, %cst_28 {dimension_numbers = #tpu.dot_dimension_numbers<[1], [0], [0], [1], [0, 0, 1, 1], [], []>} : vector<2x50xf32>, vector<50x128xf32>, vector<2x128xf32> -> vector<2x128xf32>
    %33 = arith.addf %30, %32 : vector<2x128xf32>
    %c100_29 = arith.constant 100 : index
    %c0_30 = arith.constant 0 : index
    %34 = vector.load %arg4[%c100_29, %c0_30] : memref<200x128xf32, #tpu.memory_space<vmem>>, vector<50x128xf32>
    %cst_31 = arith.constant dense<0.000000e+00> : vector<2x128xf32>
    %35 = tpu.matmul %22, %34, %cst_31 {dimension_numbers = #tpu.dot_dimension_numbers<[1], [0], [0], [1], [0, 0, 1, 1], [], []>} : vector<2x50xf32>, vector<50x128xf32>, vector<2x128xf32> -> vector<2x128xf32>
    %36 = arith.addf %33, %35 : vector<2x128xf32>
    %c150 = arith.constant 150 : index
    %c0_32 = arith.constant 0 : index
    %37 = vector.load %arg4[%c150, %c0_32] : memref<200x128xf32, #tpu.memory_space<vmem>>, vector<50x128xf32>
    %cst_33 = arith.constant dense<0.000000e+00> : vector<2x128xf32>
    %38 = tpu.matmul %28, %37, %cst_33 {dimension_numbers = #tpu.dot_dimension_numbers<[1], [0], [0], [1], [0, 0, 1, 1], [], []>} : vector<2x50xf32>, vector<50x128xf32>, vector<2x128xf32> -> vector<2x128xf32>
    %39 = arith.addf %36, %38 : vector<2x128xf32>
    %c0_34 = arith.constant 0 : index
    %c0_35 = arith.constant 0 : index
    %40 = vector.load %arg5[%c0_34, %c0_35] : memref<1x128xf32, #tpu.memory_space<vmem>>, vector<1x128xf32>
    %41 = vector.broadcast %40 : vector<1x128xf32> to vector<2x128xf32>
    %42 = arith.addf %39, %41 : vector<2x128xf32>
    %c0_36 = arith.constant 0 : index
    %c0_37 = arith.constant 0 : index
    %43 = vector.load %arg6[%c0_36, %c0_37] : memref<2x128xf32, #tpu.memory_space<vmem>>, vector<2x128xf32>
    tpu.vector_store %arg6[%c0_36, %c0_37], %42 {strides = array<i32>} : memref<2x128xf32, #tpu.memory_space<vmem>>, vector<2x128xf32>,
    return
  }
}

</mosaic_0001>

<llo_original>
// kernel: spinalnet_forward.3
$region0: #{spinalnet_forward.3}
  #allocation0 [shape = 'u32[]', space=smem, size = 0x4, offset = 0x4, fixed_abs, tag = 'smem constant byte address 0x4 - core index']
  #allocation1 [shape = 'u32[144,128]{1,0:T(1,128)}', space=vmem, size = 0x12000, scoped, tag = 'internal scratch']
  %s0 = inlined_call_operand.vmem [shape: f32[1568,32], index: 0, kind: input, shape index: {}]
  %s1 = inlined_call_operand.hbm [shape: f32[32,32], index: 1, kind: input, shape index: {}]
  %s2 = inlined_call_operand.hbm [shape: f32[1,32], index: 2, kind: input, shape index: {}]
  %s3 = inlined_call_operand.hbm [shape: f32[1,32], index: 3, kind: input, shape index: {}]
  %s4 = inlined_call_operand.vmem [shape: f32[1568,32], index: 4, kind: output, shape index: {}]
  %s5 = sld [smem:[#allocation0]]
  $region38: #{spinalnet_forward.3} parent=0
    _
  %s7 = ssub.s32 1, %s5
  %s8 = scalar_select 0, %s7, %s5
  $region1: #{spinalnet_forward.3} parent=0
    #allocation2 [shape = 'u8[16384]{0}', space=vmem, size = 0x4000, scoped, tag = 'input window, operand 1, single buffered']
    #allocation3 [shape = 's32[1]{0}', space=sflag, size = 0x4, scoped, tag = 'scoped memory for spinalnet_forward.3']
    #allocation4 [shape = 'u8[512]{0}', space=vmem, size = 0x400, scoped, tag = 'input window, operand 2, single buffered']
    #allocation5 [shape = 's32[1]{0}', space=sflag, size = 0x4, scoped, tag = 'scoped memory for spinalnet_forward.3']
    #allocation6 [shape = 'u8[512]{0}', space=vmem, size = 0x400, scoped, tag = 'input window, operand 3, single buffered']
    %9 = vsyncpa [#allocation3], 0
    %10 = vsyncpa [#allocation5], 0
    // Predicated region
    $region2: #{spinalnet_forward.3} parent=1 // pred_check
      _
    $region3: #{spinalnet_forward.3} parent=1 // pred_check_branch
      %12 = sbr.rel (0) target = $region5
    $region4: #{spinalnet_forward.3} parent=1 // pred_region
      _
    $region5: #{spinalnet_forward.3} parent=1 // pred_fallthru
      _
    // Predicated region
    $region6: #{spinalnet_forward.3} parent=1 // pred_check
      _
    $region7: #{spinalnet_forward.3} parent=1 // pred_check_branch
      %14 = sbr.rel (0) target = $region9
    $region8: #{spinalnet_forward.3} parent=1 // pred_region
      %s16 = ssub.s32 512, 512
      %17 = vsyncadd [#allocation3], %s16
      %s18 = sshll.u32 [#allocation2], 4
      %s19 = int_to_ptr.vmem [resolvable:$true] %s18
      %24 = dma.hbm_to_vmem [thread:$0]  %s1, 512, %s19, [#allocation3], 128, 128, 8
    $region9: #{spinalnet_forward.3} parent=1 // pred_fallthru
      _
    // Predicated region
    $region10: #{spinalnet_forward.3} parent=1 // pred_check
      _
    $region11: #{spinalnet_forward.3} parent=1 // pred_check_branch
      %26 = sbr.rel (0) target = $region13
    $region12: #{spinalnet_forward.3} parent=1 // pred_region
      %s28 = ssub.s32 16, 16
      %29 = vsyncadd [#allocation5], %s28
      %s31 = sshll.u32 [#allocation4], 4
      %s32 = int_to_ptr.vmem [resolvable:$true] %s31
      %34 = dma.hbm_to_vmem [thread:$0]  %s2, 16, %s32, [#allocation5]
    $region13: #{spinalnet_forward.3} parent=1 // pred_fallthru
      _
    // Predicated region
    $region14: #{spinalnet_forward.3} parent=1 // pred_check
      _
    $region15: #{spinalnet_forward.3} parent=1 // pred_check_branch
      %36 = sbr.rel (0) target = $region17
    $region16: #{spinalnet_forward.3} parent=1 // pred_region
      %s38 = ssub.s32 16, 16
      %39 = vsyncadd [#allocation5], %s38
      %s41 = sshll.u32 [#allocation6], 4
      %s42 = int_to_ptr.vmem [resolvable:$true] %s41
      %44 = dma.hbm_to_vmem [thread:$0]  %s3, 16, %s42, [#allocation5]
    $region17: #{spinalnet_forward.3} parent=1 // pred_fallthru
      _
    // Predicated region
    $region18: #{spinalnet_forward.3} parent=1 // pred_check
      _
    $region19: #{spinalnet_forward.3} parent=1 // pred_check_branch
      %46 = sbr.rel (0) target = $region21
    $region20: #{spinalnet_forward.3} parent=1 // pred_region
      %47 = dma.done [#allocation3], 512
    $region21: #{spinalnet_forward.3} parent=1 // pred_fallthru
      _
    // Predicated region
    $region22: #{spinalnet_forward.3} parent=1 // pred_check
      _
    $region23: #{spinalnet_forward.3} parent=1 // pred_check_branch
      %49 = sbr.rel (0) target = $region25
    $region24: #{spinalnet_forward.3} parent=1 // pred_region
      %50 = dma.done [#allocation5], 16
    $region25: #{spinalnet_forward.3} parent=1 // pred_fallthru
      _
    // Predicated region
    $region26: #{spinalnet_forward.3} parent=1 // pred_check
      _
    $region27: #{spinalnet_forward.3} parent=1 // pred_check_branch
      %52 = sbr.rel (0) target = $region29
    $region28: #{spinalnet_forward.3} parent=1 // pred_region
      %53 = dma.done [#allocation5], 16
    $region29: #{spinalnet_forward.3} parent=1 // pred_fallthru
      _
    %v54 = vld [vmem:[%s0] sm:$0xff]
    %v55 = vld [vmem:[%s0 + $0x8] sm:$0xff]
    %v56 = vld [vmem:[%s0 + $0x10] sm:$0xff]
    %v57 = vld [vmem:[%s0 + $0x18] sm:$0xff]
    %v58 = vld [vmem:[%s0 + $0x20] sm:$0xff]
    %v59 = vld [vmem:[%s0 + $0x28] sm:$0xff]
    %v60 = vld [vmem:[%s0 + $0x30] sm:$0xff]
    %v61 = vld [vmem:[%s0 + $0x38] sm:$0xff]
    %v62 = vld [vmem:[%s0 + $0x40] sm:$0xff]
    %v63 = vld [vmem:[%s0 + $0x48] sm:$0xff]
    %v64 = vld [vmem:[%s0 + $0x50] sm:$0xff]
    %v65 = vld [vmem:[%s0 + $0x58] sm:$0xff]
    %v66 = vld [vmem:[%s0 + $0x60] sm:$0xff]
    %v67 = vld [vmem:[%s0 + $0x68] sm:$0xff]
    %v68 = vld [vmem:[%s0 + $0x70] sm:$0xff]
    %v69 = vld [vmem:[%s0 + $0x78] sm:$0xff]
    %v70 = vld [vmem:[%s0 + $0x80] sm:$0xff]
    %v71 = vld [vmem:[%s0 + $0x88] sm:$0xff]
    %v72 = vld [vmem:[%s0 + $0x90] sm:$0xff]
    %v73 = vld [vmem:[%s0 + $0x98] sm:$0xff]
    %v74 = vld [vmem:[%s0 + $0xa0] sm:$0xff]
    %v75 = vld [vmem:[%s0 + $0xa8] sm:$0xff]
    %v76 = vld [vmem:[%s0 + $0xb0] sm:$0xff]
    %v77 = vld [vmem:[%s0 + $0xb8] sm:$0xff]
    %v78 = vld [vmem:[%s0 + $0xc0] sm:$0xff]
    %v79 = vld [vmem:[%s0 + $0xc8] sm:$0xff]
    %v80 = vld [vmem:[%s0 + $0xd0] sm:$0xff]
    %v81 = vld [vmem:[%s0 + $0xd8] sm:$0xff]
    %v82 = vld [vmem:[%s0 + $0xe0] sm:$0xff]
    %v83 = vld [vmem:[%s0 + $0xe8] sm:$0xff]
    %v84 = vld [vmem:[%s0 + $0xf0] sm:$0xff]
    %v85 = vld [vmem:[%s0 + $0xf8] sm:$0xff]
    %v86 = vld [vmem:[%s0 + $0x100] sm:$0xff]
    %v87 = vld [vmem:[%s0 + $0x108] sm:$0xff]
    %v88 = vld [vmem:[%s0 + $0x110] sm:$0xff]
    %v89 = vld [vmem:[%s0 + $0x118] sm:$0xff]
    %v90 = vld [vmem:[%s0 + $0x120] sm:$0xff]
    %v91 = vld [vmem:[%s0 + $0x128] sm:$0xff]
    %v92 = vld [vmem:[%s0 + $0x130] sm:$0xff]
    %v93 = vld [vmem:[%s0 + $0x138] sm:$0xff]
    %v94 = vld [vmem:[%s0 + $0x140] sm:$0xff]
    %v95 = vld [vmem:[%s0 + $0x148] sm:$0xff]
    %v96 = vld [vmem:[%s0 + $0x150] sm:$0xff]
    %v97 = vld [vmem:[%s0 + $0x158] sm:$0xff]
    %v98 = vld [vmem:[%s0 + $0x160] sm:$0xff]
    %v99 = vld [vmem:[%s0 + $0x168] sm:$0xff]
    %v100 = vld [vmem:[%s0 + $0x170] sm:$0xff]
    %v101 = vld [vmem:[%s0 + $0x178] sm:$0xff]
    %v102 = vld [vmem:[%s0 + $0x180] sm:$0xff]
    %v103 = vld [vmem:[%s0 + $0x188] sm:$0xff]
    %v104 = vld [vmem:[%s0 + $0x190] sm:$0xff]
    %v105 = vld [vmem:[%s0 + $0x198] sm:$0xff]
    %v106 = vld [vmem:[%s0 + $0x1a0] sm:$0xff]
    %v107 = vld [vmem:[%s0 + $0x1a8] sm:$0xff]
    %v108 = vld [vmem:[%s0 + $0x1b0] sm:$0xff]
    %v109 = vld [vmem:[%s0 + $0x1b8] sm:$0xff]
    %v110 = vld [vmem:[%s0 + $0x1c0] sm:$0xff]
    %v111 = vld [vmem:[%s0 + $0x1c8] sm:$0xff]
    %v112 = vld [vmem:[%s0 + $0x1d0] sm:$0xff]
    %v113 = vld [vmem:[%s0 + $0x1d8] sm:$0xff]
    %v114 = vld [vmem:[%s0 + $0x1e0] sm:$0xff]
    %v115 = vld [vmem:[%s0 + $0x1e8] sm:$0xff]
    %v116 = vld [vmem:[%s0 + $0x1f0] sm:$0xff]
    %v117 = vld [vmem:[%s0 + $0x1f8] sm:$0xff]
    %v118 = vld [vmem:[%s0 + $0x200] sm:$0xff]
    %v119 = vld [vmem:[%s0 + $0x208] sm:$0xff]
    %v120 = vld [vmem:[%s0 + $0x210] sm:$0xff]
    %v121 = vld [vmem:[%s0 + $0x218] sm:$0xff]
    %v122 = vld [vmem:[%s0 + $0x220] sm:$0xff]
    %v123 = vld [vmem:[%s0 + $0x228] sm:$0xff]
    %v124 = vld [vmem:[%s0 + $0x230] sm:$0xff]
    %v125 = vld [vmem:[%s0 + $0x238] sm:$0xff]
    %v126 = vld [vmem:[%s0 + $0x240] sm:$0xff]
    %v127 = vld [vmem:[%s0 + $0x248] sm:$0xff]
    %v128 = vld [vmem:[%s0 + $0x250] sm:$0xff]
    %v129 = vld [vmem:[%s0 + $0x258] sm:$0xff]
    %v130 = vld [vmem:[%s0 + $0x260] sm:$0xff]
    %v131 = vld [vmem:[%s0 + $0x268] sm:$0xff]
    %v132 = vld [vmem:[%s0 + $0x270] sm:$0xff]
    %v133 = vld [vmem:[%s0 + $0x278] sm:$0xff]
    %v134 = vld [vmem:[%s0 + $0x280] sm:$0xff]
    %v135 = vld [vmem:[%s0 + $0x288] sm:$0xff]
    %v136 = vld [vmem:[%s0 + $0x290] sm:$0xff]
    %v137 = vld [vmem:[%s0 + $0x298] sm:$0xff]
    %v138 = vld [vmem:[%s0 + $0x2a0] sm:$0xff]
    %v139 = vld [vmem:[%s0 + $0x2a8] sm:$0xff]
    %v140 = vld [vmem:[%s0 + $0x2b0] sm:$0xff]
    %v141 = vld [vmem:[%s0 + $0x2b8] sm:$0xff]
    %v142 = vld [vmem:[%s0 + $0x2c0] sm:$0xff]
    %v143 = vld [vmem:[%s0 + $0x2c8] sm:$0xff]
    %v144 = vld [vmem:[%s0 + $0x2d0] sm:$0xff]
    %v145 = vld [vmem:[%s0 + $0x2d8] sm:$0xff]
    %v146 = vld [vmem:[%s0 + $0x2e0] sm:$0xff]
    %v147 = vld [vmem:[%s0 + $0x2e8] sm:$0xff]
    %v148 = vld [vmem:[%s0 + $0x2f0] sm:$0xff]
    %v149 = vld [vmem:[%s0 + $0x2f8] sm:$0xff]
    %v150 = vld [vmem:[%s0 + $0x300] sm:$0xff]
    %v151 = vld [vmem:[%s0 + $0x308] sm:$0xff]
    %v152 = vld [vmem:[%s0 + $0x310] sm:$0xff]
    %v153 = vld [vmem:[%s0 + $0x318] sm:$0xff]
    %v154 = vld [vmem:[%s0 + $0x320] sm:$0xff]
    %v155 = vld [vmem:[%s0 + $0x328] sm:$0xff]
    %v156 = vld [vmem:[%s0 + $0x330] sm:$0xff]
    %v157 = vld [vmem:[%s0 + $0x338] sm:$0xff]
    %v158 = vld [vmem:[%s0 + $0x340] sm:$0xff]
    %v159 = vld [vmem:[%s0 + $0x348] sm:$0xff]
    %v160 = vld [vmem:[%s0 + $0x350] sm:$0xff]
    %v161 = vld [vmem:[%s0 + $0x358] sm:$0xff]
    %v162 = vld [vmem:[%s0 + $0x360] sm:$0xff]
    %v163 = vld [vmem:[%s0 + $0x368] sm:$0xff]
    %v164 = vld [vmem:[%s0 + $0x370] sm:$0xff]
    %v165 = vld [vmem:[%s0 + $0x378] sm:$0xff]
    %v166 = vld [vmem:[%s0 + $0x380] sm:$0xff]
    %v167 = vld [vmem:[%s0 + $0x388] sm:$0xff]
    %v168 = vld [vmem:[%s0 + $0x390] sm:$0xff]
    %v169 = vld [vmem:[%s0 + $0x398] sm:$0xff]
    %v170 = vld [vmem:[%s0 + $0x3a0] sm:$0xff]
    %v171 = vld [vmem:[%s0 + $0x3a8] sm:$0xff]
    %v172 = vld [vmem:[%s0 + $0x3b0] sm:$0xff]
    %v173 = vld [vmem:[%s0 + $0x3b8] sm:$0xff]
    %v174 = vld [vmem:[%s0 + $0x3c0] sm:$0xff]
    %v175 = vld [vmem:[%s0 + $0x3c8] sm:$0xff]
    %v176 = vld [vmem:[%s0 + $0x3d0] sm:$0xff]
    %v177 = vld [vmem:[%s0 + $0x3d8] sm:$0xff]
    %v178 = vld [vmem:[%s0 + $0x3e0] sm:$0xff]
    %v179 = vld [vmem:[%s0 + $0x3e8] sm:$0xff]
    %v180 = vld [vmem:[%s0 + $0x3f0] sm:$0xff]
    %v181 = vld [vmem:[%s0 + $0x3f8] sm:$0xff]
    %v182 = vld [vmem:[%s0 + $0x400] sm:$0xff]
    %v183 = vld [vmem:[%s0 + $0x408] sm:$0xff]
    %v184 = vld [vmem:[%s0 + $0x410] sm:$0xff]
    %v185 = vld [vmem:[%s0 + $0x418] sm:$0xff]
    %v186 = vld [vmem:[%s0 + $0x420] sm:$0xff]
    %v187 = vld [vmem:[%s0 + $0x428] sm:$0xff]
    %v188 = vld [vmem:[%s0 + $0x430] sm:$0xff]
    %v189 = vld [vmem:[%s0 + $0x438] sm:$0xff]
    %v190 = vld [vmem:[%s0 + $0x440] sm:$0xff]
    %v191 = vld [vmem:[%s0 + $0x448] sm:$0xff]
    %v192 = vld [vmem:[%s0 + $0x450] sm:$0xff]
    %v193 = vld [vmem:[%s0 + $0x458] sm:$0xff]
    %v194 = vld [vmem:[%s0 + $0x460] sm:$0xff]
    %v195 = vld [vmem:[%s0 + $0x468] sm:$0xff]
    %v196 = vld [vmem:[%s0 + $0x470] sm:$0xff]
    %v197 = vld [vmem:[%s0 + $0x478] sm:$0xff]
    %v198 = vld [vmem:[%s0 + $0x480] sm:$0xff]
    %v199 = vld [vmem:[%s0 + $0x488] sm:$0xff]
    %v200 = vld [vmem:[%s0 + $0x490] sm:$0xff]
    %v201 = vld [vmem:[%s0 + $0x498] sm:$0xff]
    %v202 = vld [vmem:[%s0 + $0x4a0] sm:$0xff]
    %v203 = vld [vmem:[%s0 + $0x4a8] sm:$0xff]
    %v204 = vld [vmem:[%s0 + $0x4b0] sm:$0xff]
    %v205 = vld [vmem:[%s0 + $0x4b8] sm:$0xff]
    %v206 = vld [vmem:[%s0 + $0x4c0] sm:$0xff]
    %v207 = vld [vmem:[%s0 + $0x4c8] sm:$0xff]
    %v208 = vld [vmem:[%s0 + $0x4d0] sm:$0xff]
    %v209 = vld [vmem:[%s0 + $0x4d8] sm:$0xff]
    %v210 = vld [vmem:[%s0 + $0x4e0] sm:$0xff]
    %v211 = vld [vmem:[%s0 + $0x4e8] sm:$0xff]
    %v212 = vld [vmem:[%s0 + $0x4f0] sm:$0xff]
    %v213 = vld [vmem:[%s0 + $0x4f8] sm:$0xff]
    %v214 = vld [vmem:[%s0 + $0x500] sm:$0xff]
    %v215 = vld [vmem:[%s0 + $0x508] sm:$0xff]
    %v216 = vld [vmem:[%s0 + $0x510] sm:$0xff]
    %v217 = vld [vmem:[%s0 + $0x518] sm:$0xff]
    %v218 = vld [vmem:[%s0 + $0x520] sm:$0xff]
    %v219 = vld [vmem:[%s0 + $0x528] sm:$0xff]
    %v220 = vld [vmem:[%s0 + $0x530] sm:$0xff]
    %v221 = vld [vmem:[%s0 + $0x538] sm:$0xff]
    %v222 = vld [vmem:[%s0 + $0x540] sm:$0xff]
    %v223 = vld [vmem:[%s0 + $0x548] sm:$0xff]
    %v224 = vld [vmem:[%s0 + $0x550] sm:$0xff]
    %v225 = vld [vmem:[%s0 + $0x558] sm:$0xff]
    %v226 = vld [vmem:[%s0 + $0x560] sm:$0xff]
    %v227 = vld [vmem:[%s0 + $0x568] sm:$0xff]
    %v228 = vld [vmem:[%s0 + $0x570] sm:$0xff]
    %v229 = vld [vmem:[%s0 + $0x578] sm:$0xff]
    %v230 = vld [vmem:[%s0 + $0x580] sm:$0xff]
    %v231 = vld [vmem:[%s0 + $0x588] sm:$0xff]
    %v232 = vld [vmem:[%s0 + $0x590] sm:$0xff]
    %v233 = vld [vmem:[%s0 + $0x598] sm:$0xff]
    %v234 = vld [vmem:[%s0 + $0x5a0] sm:$0xff]
    %v235 = vld [vmem:[%s0 + $0x5a8] sm:$0xff]
    %v236 = vld [vmem:[%s0 + $0x5b0] sm:$0xff]
    %v237 = vld [vmem:[%s0 + $0x5b8] sm:$0xff]
    %v238 = vld [vmem:[%s0 + $0x5c0] sm:$0xff]
    %v239 = vld [vmem:[%s0 + $0x5c8] sm:$0xff]
    %v240 = vld [vmem:[%s0 + $0x5d0] sm:$0xff]
    %v241 = vld [vmem:[%s0 + $0x5d8] sm:$0xff]
    %v242 = vld [vmem:[%s0 + $0x5e0] sm:$0xff]
    %v243 = vld [vmem:[%s0 + $0x5e8] sm:$0xff]
    %v244 = vld [vmem:[%s0 + $0x5f0] sm:$0xff]
    %v245 = vld [vmem:[%s0 + $0x5f8] sm:$0xff]
    %v246 = vld [vmem:[%s0 + $0x600] sm:$0xff]
    %v247 = vld [vmem:[%s0 + $0x608] sm:$0xff]
    %v248 = vld [vmem:[%s0 + $0x610] sm:$0xff]
    %v249 = vld [vmem:[%s0 + $0x618] sm:$0xff]
    %v250 = vld [vmem:[#allocation2] sm:$0xff]
    %v251 = vld [vmem:[#allocation2 + $0x8] sm:$0xff]
    %v252 = vld [vmem:[#allocation2 + $0x10] sm:$0xff]
    %v253 = vld [vmem:[#allocation2 + $0x18] sm:$0xff]
    %vm254 = vcmask 261120
    %v256 = vsel %vm254, %v54, 0
    %v259 = vsel %vm254, %v55, 0
    %v262 = vsel %vm254, %v56, 0
    %v265 = vsel %vm254, %v57, 0
    %v268 = vsel %vm254, %v58, 0
    %v271 = vsel %vm254, %v59, 0
    %v274 = vsel %vm254, %v60, 0
    %v277 = vsel %vm254, %v61, 0
    %v280 = vsel %vm254, %v62, 0
    %v283 = vsel %vm254, %v63, 0
    %v286 = vsel %vm254, %v64, 0
    %v289 = vsel %vm254, %v65, 0
    %v292 = vsel %vm254, %v66, 0
    %v295 = vsel %vm254, %v67, 0
    %v298 = vsel %vm254, %v68, 0
    %v301 = vsel %vm254, %v69, 0
    %v304 = vsel %vm254, %v70, 0
    %v307 = vsel %vm254, %v71, 0
    %v310 = vsel %vm254, %v72, 0
    %v313 = vsel %vm254, %v73, 0
    %v316 = vsel %vm254, %v74, 0
    %v319 = vsel %vm254, %v75, 0
    %v322 = vsel %vm254, %v76, 0
    %v325 = vsel %vm254, %v77, 0
    %v328 = vsel %vm254, %v78, 0
    %v331 = vsel %vm254, %v79, 0
    %v334 = vsel %vm254, %v80, 0
    %v337 = vsel %vm254, %v81, 0
    %v340 = vsel %vm254, %v82, 0
    %v343 = vsel %vm254, %v83, 0
    %v346 = vsel %vm254, %v84, 0
    %v349 = vsel %vm254, %v85, 0
    %v352 = vsel %vm254, %v86, 0
    %v355 = vsel %vm254, %v87, 0
    %v358 = vsel %vm254, %v88, 0
    %v361 = vsel %vm254, %v89, 0
    %v364 = vsel %vm254, %v90, 0
    %v367 = vsel %vm254, %v91, 0
    %v370 = vsel %vm254, %v92, 0
    %v373 = vsel %vm254, %v93, 0
    %v376 = vsel %vm254, %v94, 0
    %v379 = vsel %vm254, %v95, 0
    %v382 = vsel %vm254, %v96, 0
    %v385 = vsel %vm254, %v97, 0
    %v388 = vsel %vm254, %v98, 0
    %v391 = vsel %vm254, %v99, 0
    %v394 = vsel %vm254, %v100, 0
    %v397 = vsel %vm254, %v101, 0
    %v400 = vsel %vm254, %v102, 0
    %v403 = vsel %vm254, %v103, 0
    %v406 = vsel %vm254, %v104, 0
    %v409 = vsel %vm254, %v105, 0
    %v412 = vsel %vm254, %v106, 0
    %v415 = vsel %vm254, %v107, 0
    %v418 = vsel %vm254, %v108, 0
    %v421 = vsel %vm254, %v109, 0
    %v424 = vsel %vm254, %v110, 0
    %v427 = vsel %vm254, %v111, 0
    %v430 = vsel %vm254, %v112, 0
    %v433 = vsel %vm254, %v113, 0
    %v436 = vsel %vm254, %v114, 0
    %v439 = vsel %vm254, %v115, 0
    %v442 = vsel %vm254, %v116, 0
    %v445 = vsel %vm254, %v117, 0
    %v448 = vsel %vm254, %v118, 0
    %v451 = vsel %vm254, %v119, 0
    %v454 = vsel %vm254, %v120, 0
    %v457 = vsel %vm254, %v121, 0
    %v460 = vsel %vm254, %v122, 0
    %v463 = vsel %vm254, %v123, 0
    %v466 = vsel %vm254, %v124, 0
    %v469 = vsel %vm254, %v125, 0
    %v472 = vsel %vm254, %v126, 0
    %v475 = vsel %vm254, %v127, 0
    %v478 = vsel %vm254, %v128, 0
    %v481 = vsel %vm254, %v129, 0
    %v484 = vsel %vm254, %v130, 0
    %v487 = vsel %vm254, %v131, 0
    %v490 = vsel %vm254, %v132, 0
    %v493 = vsel %vm254, %v133, 0
    %v496 = vsel %vm254, %v134, 0
    %v499 = vsel %vm254, %v135, 0
    %v502 = vsel %vm254, %v136, 0
    %v505 = vsel %vm254, %v137, 0
    %v508 = vsel %vm254, %v138, 0
    %v511 = vsel %vm254, %v139, 0
    %v514 = vsel %vm254, %v140, 0
    %v517 = vsel %vm254, %v141, 0
    %v520 = vsel %vm254, %v142, 0
    %v523 = vsel %vm254, %v143, 0
    %v526 = vsel %vm254, %v144, 0
    %v529 = vsel %vm254, %v145, 0
    %v532 = vsel %vm254, %v146, 0
    %v535 = vsel %vm254, %v147, 0
    %v538 = vsel %vm254, %v148, 0
    %v541 = vsel %vm254, %v149, 0
    %v544 = vsel %vm254, %v150, 0
    %v547 = vsel %vm254, %v151, 0
    %v550 = vsel %vm254, %v152, 0
    %v553 = vsel %vm254, %v153, 0
    %v556 = vsel %vm254, %v154, 0
    %v559 = vsel %vm254, %v155, 0
    %v562 = vsel %vm254, %v156, 0
    %v565 = vsel %vm254, %v157, 0
    %v568 = vsel %vm254, %v158, 0
    %v571 = vsel %vm254, %v159, 0
    %v574 = vsel %vm254, %v160, 0
    %v577 = vsel %vm254, %v161, 0
    %v580 = vsel %vm254, %v162, 0
    %v583 = vsel %vm254, %v163, 0
    %v586 = vsel %vm254, %v164, 0
    %v589 = vsel %vm254, %v165, 0
    %v592 = vsel %vm254, %v166, 0
    %v595 = vsel %vm254, %v167, 0
    %v598 = vsel %vm254, %v168, 0
    %v601 = vsel %vm254, %v169, 0
    %v604 = vsel %vm254, %v170, 0
    %v607 = vsel %vm254, %v171, 0
    %v610 = vsel %vm254, %v172, 0
    %v613 = vsel %vm254, %v173, 0
    %v616 = vsel %vm254, %v174, 0
    %v619 = vsel %vm254, %v175, 0
    %v622 = vsel %vm254, %v176, 0
    %v625 = vsel %vm254, %v177, 0
    %v628 = vsel %vm254, %v178, 0
    %v631 = vsel %vm254, %v179, 0
    %v634 = vsel %vm254, %v180, 0
    %v637 = vsel %vm254, %v181, 0
    %v640 = vsel %vm254, %v182, 0
    %v643 = vsel %vm254, %v183, 0
    %v646 = vsel %vm254, %v184, 0
    %v649 = vsel %vm254, %v185, 0
    %v652 = vsel %vm254, %v186, 0
    %v655 = vsel %vm254, %v187, 0
    %v658 = vsel %vm254, %v188, 0
    %v661 = vsel %vm254, %v189, 0
    %v664 = vsel %vm254, %v190, 0
    %v667 = vsel %vm254, %v191, 0
    %v670 = vsel %vm254, %v192, 0
    %v673 = vsel %vm254, %v193, 0
    %v676 = vsel %vm254, %v194, 0
    %v679 = vsel %vm254, %v195, 0
    %v682 = vsel %vm254, %v196, 0
    %v685 = vsel %vm254, %v197, 0
    %v688 = vsel %vm254, %v198, 0
    %v691 = vsel %vm254, %v199, 0
    %v694 = vsel %vm254, %v200, 0
    %v697 = vsel %vm254, %v201, 0
    %v700 = vsel %vm254, %v202, 0
    %v703 = vsel %vm254, %v203, 0
    %v706 = vsel %vm254, %v204, 0
    %v709 = vsel %vm254, %v205, 0
    %v712 = vsel %vm254, %v206, 0
    %v715 = vsel %vm254, %v207, 0
    %v718 = vsel %vm254, %v208, 0
    %v721 = vsel %vm254, %v209, 0
    %v724 = vsel %vm254, %v210, 0
    %v727 = vsel %vm254, %v211, 0
    %v730 = vsel %vm254, %v212, 0
    %v733 = vsel %vm254, %v213, 0
    %v736 = vsel %vm254, %v214, 0
    %v739 = vsel %vm254, %v215, 0
    %v742 = vsel %vm254, %v216, 0
    %v745 = vsel %vm254, %v217, 0
    %v748 = vsel %vm254, %v218, 0
    %v751 = vsel %vm254, %v219, 0
    %v754 = vsel %vm254, %v220, 0
    %v757 = vsel %vm254, %v221, 0
    %v760 = vsel %vm254, %v222, 0
    %v763 = vsel %vm254, %v223, 0
    %v766 = vsel %vm254, %v224, 0
    %v769 = vsel %vm254, %v225, 0
    %v772 = vsel %vm254, %v226, 0
    %v775 = vsel %vm254, %v227, 0
    %v778 = vsel %vm254, %v228, 0
    %v781 = vsel %vm254, %v229, 0
    %v784 = vsel %vm254, %v230, 0
    %v787 = vsel %vm254, %v231, 0
    %v790 = vsel %vm254, %v232, 0
    %v793 = vsel %vm254, %v233, 0
    %v796 = vsel %vm254, %v234, 0
    %v799 = vsel %vm254, %v235, 0
    %v802 = vsel %vm254, %v236, 0
    %v805 = vsel %vm254, %v237, 0
    %v808 = vsel %vm254, %v238, 0
    %v811 = vsel %vm254, %v239, 0
    %v814 = vsel %vm254, %v240, 0
    %v817 = vsel %vm254, %v241, 0
    %v820 = vsel %vm254, %v242, 0
    %v823 = vsel %vm254, %v243, 0
    %v826 = vsel %vm254, %v244, 0
    %v829 = vsel %vm254, %v245, 0
    %v832 = vsel %vm254, %v246, 0
    %v835 = vsel %vm254, %v247, 0
    %v838 = vsel %vm254, %v248, 0
    %v841 = vsel %vm254, %v249, 0
    %843 = vmatprep.subr.mxu0 0.0
    %844 = vmatpush1.msra.mxu0 %v250
    %845 = vmatprep.subr.mxu0 0.0
    %846 = vmatpush1.msra.mxu0 %v251
    %847 = vmatprep.subr.mxu0 0.0
    %848 = vmatpush1.msra.mxu0 %v252
    %849 = vmatprep.subr.mxu0 0.0
    %850 = vmatpush1.msra.mxu0 %v253
    %851 = vmatprep.subr.mxu0 0.0
    %852 = vmatpush1.msra.mxu0 0.0
    %853 = vmatprep.subr.mxu0 0.0
    %854 = vmatpush1.msra.mxu0 0.0
    %855 = vmatprep.subr.mxu0 0.0
    %856 = vmatpush1.msra.mxu0 0.0
    %857 = vmatprep.subr.mxu0 0.0
    %858 = vmatpush1.msra.mxu0 0.0
    %859 = vmatprep.subr.mxu0 0.0
    %860 = vmatpush1.msra.mxu0 0.0
    %861 = vmatprep.subr.mxu0 0.0
    %862 = vmatpush1.msra.mxu0 0.0
    %863 = vmatprep.subr.mxu0 0.0
    %864 = vmatpush1.msra.mxu0 0.0
    %865 = vmatprep.subr.mxu0 0.0
    %866 = vmatpush1.msra.mxu0 0.0
    %867 = vmatprep.subr.mxu0 0.0
    %868 = vmatpush1.msra.mxu0 0.0
    %869 = vmatprep.subr.mxu0 0.0
    %870 = vmatpush1.msra.mxu0 0.0
    %871 = vmatprep.subr.mxu0 0.0
    %872 = vmatpush1.msra.mxu0 0.0
    %873 = vmatprep.subr.mxu0 0.0
    %874 = vmatpush1.msra.mxu0 0.0
    %875 = vmatprep.subr.mxu0 0.0
    %876 = vmatpush1.msra.mxu0 0.0
    %877 = vmatprep.subr.mxu0 0.0
    %878 = vmatpush1.msra.mxu0 0.0
    %879 = vmatprep.subr.mxu0 0.0
    %880 = vmatpush1.msra.mxu0 0.0
    %881 = vmatprep.subr.mxu0 0.0
    %882 = vmatpush1.msra.mxu0 0.0
    %883 = vmatprep.subr.mxu0 0.0
    %884 = vmatpush1.msra.mxu0 0.0
    %885 = vmatprep.subr.mxu0 0.0
    %886 = vmatpush1.msra.mxu0 0.0
    %887 = vmatprep.subr.mxu0 0.0
    %888 = vmatpush1.msra.mxu0 0.0
    %889 = vmatprep.subr.mxu0 0.0
    %890 = vmatpush1.msra.mxu0 0.0
    %891 = vmatprep.subr.mxu0 0.0
    %892 = vmatpush1.msra.mxu0 0.0
    %893 = vmatprep.subr.mxu0 0.0
    %894 = vmatpush1.msra.mxu0 0.0
    %895 = vmatprep.subr.mxu0 0.0
    %896 = vmatpush1.msra.mxu0 0.0
    %897 = vmatprep.subr.mxu0 0.0
    %898 = vmatpush1.msra.mxu0 0.0
    %899 = vmatprep.subr.mxu0 0.0
    %900 = vmatpush1.msra.mxu0 0.0
    %901 = vmatprep.subr.mxu0 0.0
    %902 = vmatpush1.msra.mxu0 0.0
    %903 = vmatprep.subr.mxu0 0.0
    %904 = vmatpush1.msra.mxu0 0.0
    %905 = vmatprep.subr.mxu0 0.0
    %906 = vmatpush1.msra.mxu0 0.0
    %907 = vmatprep.mubr.f32.mxu0 0.0
    %908 = vmatmul.mubr.f32.gmra.mrb[0].mxu0 %v256
    %v909 = vpop.f32.mrb[0].mxu0
    %v910 = vadd.f32 0.0, %v909
    %v911 = vpop.f32.mrb[0].mxu0
    %912 = vmatprep.mubr.f32.mxu0 0.0
    %913 = vmatmul.mubr.f32.gmra.mrb[0].mxu0 %v259
    %v914 = vpop.f32.mrb[0].mxu0
    %v915 = vadd.f32 0.0, %v914
    %v916 = vpop.f32.mrb[0].mxu0
    %917 = vmatprep.mubr.f32.mxu0 0.0
    %918 = vmatmul.mubr.f32.gmra.mrb[0].mxu0 %v262
    %v919 = vpop.f32.mrb[0].mxu0
    %v920 = vadd.f32 0.0, %v919
    %v921 = vpop.f32.mrb[0].mxu0
    %922 = vmatprep.mubr.f32.mxu0 0.0
    %923 = vmatmul.mubr.f32.gmra.mrb[0].mxu0 %v265
    %v924 = vpop.f32.mrb[0].mxu0
    %v925 = vadd.f32 0.0, %v924
    %v926 = vpop.f32.mrb[0].mxu0
    %927 = vmatprep.mubr.f32.mxu0 0.0
    %928 = vmatmul.mubr.f32.gmra.mrb[0].mxu0 %v268
    %v929 = vpop.f32.mrb[0].mxu0
    %v930 = vadd.f32 0.0, %v929
    %v931 = vpop.f32.mrb[0].mxu0
    %932 = vmatprep.mubr.f32.mxu0 0.0
    %933 = vmatmul.mubr.f32.gmra.mrb[0].mxu0 %v271
    %v934 = vpop.f32.mrb[0].mxu0
    %v935 = vadd.f32 0.0, %v934
    %v936 = vpop.f32.mrb[0].mxu0
    %937 = vmatprep.mubr.f32.mxu0 0.0
    %938 = vmatmul.mubr.f32.gmra.mrb[0].mxu0 %v274
    %v939 = vpop.f32.mrb[0].mxu0
    %v940 = vadd.f32 0.0, %v939
    %v941 = vpop.f32.mrb[0].mxu0
    %942 = vmatprep.mubr.f32.mxu0 0.0
    %943 = vmatmul.mubr.f32.gmra.mrb[0].mxu0 %v277
    %v944 = vpop.f32.mrb[0].mxu0
    %v945 = vadd.f32 0.0, %v944
    %v946 = vpop.f32.mrb[0].mxu0
    %947 = vmatprep.mubr.f32.mxu0 0.0
    %948 = vmatmul.mubr.f32.gmra.mrb[0].mxu0 %v280
    %v949 = vpop.f32.mrb[0].mxu0
    %v950 = vadd.f32 0.0, %v949
    %v951 = vpop.f32.mrb[0].mxu0
    %952 = vmatprep.mubr.f32.mxu0 0.0
    %953 = vmatmul.mubr.f32.gmra.mrb[0].mxu0 %v283
    %v954 = vpop.f32.mrb[0].mxu0
    %v955 = vadd.f32 0.0, %v954
    %v956 = vpop.f32.mrb[0].mxu0
    %957 = vmatprep.mubr.f32.mxu0 0.0
    %958 = vmatmul.mubr.f32.gmra.mrb[0].mxu0 %v286
    %v959 = vpop.f32.mrb[0].mxu0
    %v960 = vadd.f32 0.0, %v959
    %v961 = vpop.f32.mrb[0].mxu0
    %962 = vmatprep.mubr.f32.mxu0 0.0
    %963 = vmatmul.mubr.f32.gmra.mrb[0].mxu0 %v289
    %v964 = vpop.f32.mrb[0].mxu0
    %v965 = vadd.f32 0.0, %v964
    %v966 = vpop.f32.mrb[0].mxu0
    %967 = vmatprep.mubr.f32.mxu0 0.0
    %968 = vmatmul.mubr.f32.gmra.mrb[0].mxu0 %v292
    %v969 = vpop.f32.mrb[0].mxu0
    %v970 = vadd.f32 0.0, %v969
    %v971 = vpop.f32.mrb[0].mxu0
    %972 = vmatprep.mubr.f32.mxu0 0.0
    %973 = vmatmul.mubr.f32.gmra.mrb[0].mxu0 %v295
    %v974 = vpop.f32.mrb[0].mxu0
    %v975 = vadd.f32 0.0, %v974
    %v976 = vpop.f32.mrb[0].mxu0
    %977 = vmatprep.mubr.f32.mxu0 0.0
    %978 = vmatmul.mubr.f32.gmra.mrb[0].mxu0 %v298
    %v979 = vpop.f32.mrb[0].mxu0
    %v980 = vadd.f32 0.0, %v979
    %v981 = vpop.f32.mrb[0].mxu0
    %982 = vmatprep.mubr.f32.mxu0 0.0
    %983 = vmatmul.mubr.f32.gmra.mrb[0].mxu0 %v301
    %v984 = vpop.f32.mrb[0].mxu0
    %v985 = vadd.f32 0.0, %v984
    %v986 = vpop.f32.mrb[0].mxu0
    %987 = vmatprep.mubr.f32.mxu0 0.0
    %988 = vmatmul.mubr.f32.gmra.mrb[0].mxu0 %v304
    %v989 = vpop.f32.mrb[0].mxu0
    %v990 = vadd.f32 0.0, %v989
    %v991 = vpop.f32.mrb[0].mxu0
    %992 = vmatprep.mubr.f32.mxu0 0.0
    %993 = vmatmul.mubr.f32.gmra.mrb[0].mxu0 %v307
    %v994 = vpop.f32.mrb[0].mxu0
    %v995 = vadd.f32 0.0, %v994
    %v996 = vpop.f32.mrb[0].mxu0
    %997 = vmatprep.mubr.f32.mxu0 0.0
    %998 = vmatmul.mubr.f32.gmra.mrb[0].mxu0 %v310
    %v999 = vpop.f32.mrb[0].mxu0
    %v1000 = vadd.f32 0.0, %v999
    %v1001 = vpop.f32.mrb[0].mxu0
    %1002 = vmatprep.mubr.f32.mxu0 0.0
    %1003 = vmatmul.mubr.f32.gmra.mrb[0].mxu0 %v313
    %v1004 = vpop.f32.mrb[0].mxu0
    %v1005 = vadd.f32 0.0, %v1004
    %v1006 = vpop.f32.mrb[0].mxu0
    %1007 = vmatprep.mubr.f32.mxu0 0.0
    %1008 = vmatmul.mubr.f32.gmra.mrb[0].mxu0 %v316
    %v1009 = vpop.f32.mrb[0].mxu0
    %v1010 = vadd.f32 0.0, %v1009
    %v1011 = vpop.f32.mrb[0].mxu0
    %1012 = vmatprep.mubr.f32.mxu0 0.0
    %1013 = vmatmul.mubr.f32.gmra.mrb[0].mxu0 %v319
    %v1014 = vpop.f32.mrb[0].mxu0
    %v1015 = vadd.f32 0.0, %v1014
    %v1016 = vpop.f32.mrb[0].mxu0
    %1017 = vmatprep.mubr.f32.mxu0 0.0
    %1018 = vmatmul.mubr.f32.gmra.mrb[0].mxu0 %v322
    %v1019 = vpop.f32.mrb[0].mxu0
    %v1020 = vadd.f32 0.0, %v1019
    %v1021 = vpop.f32.mrb[0].mxu0
    %1022 = vmatprep.mubr.f32.mxu0 0.0
    %1023 = vmatmul.mubr.f32.gmra.mrb[0].mxu0 %v325
    %v1024 = vpop.f32.mrb[0].mxu0
    %v1025 = vadd.f32 0.0, %v1024
    %v1026 = vpop.f32.mrb[0].mxu0
    %1027 = vmatprep.mubr.f32.mxu0 0.0
    %1028 = vmatmul.mubr.f32.gmra.mrb[0].mxu0 %v328
    %v1029 = vpop.f32.mrb[0].mxu0
    %v1030 = vadd.f32 0.0, %v1029
    %v1031 = vpop.f32.mrb[0].mxu0
    %1032 = vmatprep.mubr.f32.mxu0 0.0
    %1033 = vmatmul.mubr.f32.gmra.mrb[0].mxu0 %v331
    %v1034 = vpop.f32.mrb[0].mxu0
    %v1035 = vadd.f32 0.0, %v1034
    %v1036 = vpop.f32.mrb[0].mxu0
    %1037 = vmatprep.mubr.f32.mxu0 0.0
    %1038 = vmatmul.mubr.f32.gmra.mrb[0].mxu0 %v334
    %v1039 = vpop.f32.mrb[0].mxu0
    %v1040 = vadd.f32 0.0, %v1039
    %v1041 = vpop.f32.mrb[0].mxu0
    %1042 = vmatprep.mubr.f32.mxu0 0.0
    %1043 = vmatmul.mubr.f32.gmra.mrb[0].mxu0 %v337
    %v1044 = vpop.f32.mrb[0].mxu0
    %v1045 = vadd.f32 0.0, %v1044
    %v1046 = vpop.f32.mrb[0].mxu0
    %1047 = vmatprep.mubr.f32.mxu0 0.0
    %1048 = vmatmul.mubr.f32.gmra.mrb[0].mxu0 %v340
    %v1049 = vpop.f32.mrb[0].mxu0
    %v1050 = vadd.f32 0.0, %v1049
    %v1051 = vpop.f32.mrb[0].mxu0
    %1052 = vmatprep.mubr.f32.mxu0 0.0
    %1053 = vmatmul.mubr.f32.gmra.mrb[0].mxu0 %v343
    %v1054 = vpop.f32.mrb[0].mxu0
    %v1055 = vadd.f32 0.0, %v1054
    %v1056 = vpop.f32.mrb[0].mxu0
    %1057 = vmatprep.mubr.f32.mxu0 0.0
    %1058 = vmatmul.mubr.f32.gmra.mrb[0].mxu0 %v346
    %v1059 = vpop.f32.mrb[0].mxu0
    %v1060 = vadd.f32 0.0, %v1059
    %v1061 = vpop.f32.mrb[0].mxu0
    %1062 = vmatprep.mubr.f32.mxu0 0.0
    %1063 = vmatmul.mubr.f32.gmra.mrb[0].mxu0 %v349
    %v1064 = vpop.f32.mrb[0].mxu0
    %v1065 = vadd.f32 0.0, %v1064
    %v1066 = vpop.f32.mrb[0].mxu0
    %1067 = vmatprep.mubr.f32.mxu0 0.0
    %1068 = vmatmul.mubr.f32.gmra.mrb[0].mxu0 %v352
    %v1069 = vpop.f32.mrb[0].mxu0
    %v1070 = vadd.f32 0.0, %v1069
    %v1071 = vpop.f32.mrb[0].mxu0
    %1072 = vmatprep.mubr.f32.mxu0 0.0
    %1073 = vmatmul.mubr.f32.gmra.mrb[0].mxu0 %v355
    %v1074 = vpop.f32.mrb[0].mxu0
    %v1075 = vadd.f32 0.0, %v1074
    %v1076 = vpop.f32.mrb[0].mxu0
    %1077 = vmatprep.mubr.f32.mxu0 0.0
    %1078 = vmatmul.mubr.f32.gmra.mrb[0].mxu0 %v358
    %v1079 = vpop.f32.mrb[0].mxu0
    %v1080 = vadd.f32 0.0, %v1079
    %v1081 = vpop.f32.mrb[0].mxu0
    %1082 = vmatprep.mubr.f32.mxu0 0.0
    %1083 = vmatmul.mubr.f32.gmra.mrb[0].mxu0 %v361
    %v1084 = vpop.f32.mrb[0].mxu0
    %v1085 = vadd.f32 0.0, %v1084
    %v1086 = vpop.f32.mrb[0].mxu0
    %1087 = vmatprep.mubr.f32.mxu0 0.0
    %1088 = vmatmul.mubr.f32.gmra.mrb[0].mxu0 %v364
    %v1089 = vpop.f32.mrb[0].mxu0
    %v1090 = vadd.f32 0.0, %v1089
    %v1091 = vpop.f32.mrb[0].mxu0
    %1092 = vmatprep.mubr.f32.mxu0 0.0
    %1093 = vmatmul.mubr.f32.gmra.mrb[0].mxu0 %v367
    %v1094 = vpop.f32.mrb[0].mxu0
    %v1095 = vadd.f32 0.0, %v1094
    %v1096 = vpop.f32.mrb[0].mxu0
    %1097 = vmatprep.mubr.f32.mxu0 0.0
    %1098 = vmatmul.mubr.f32.gmra.mrb[0].mxu0 %v370
    %v1099 = vpop.f32.mrb[0].mxu0
    %v1100 = vadd.f32 0.0, %v1099
    %v1101 = vpop.f32.mrb[0].mxu0
    %1102 = vmatprep.mubr.f32.mxu0 0.0
    %1103 = vmatmul.mubr.f32.gmra.mrb[0].mxu0 %v373
    %v1104 = vpop.f32.mrb[0].mxu0
    %v1105 = vadd.f32 0.0, %v1104
    %v1106 = vpop.f32.mrb[0].mxu0
    %1107 = vmatprep.mubr.f32.mxu0 0.0
    %1108 = vmatmul.mubr.f32.gmra.mrb[0].mxu0 %v376
    %v1109 = vpop.f32.mrb[0].mxu0
    %v1110 = vadd.f32 0.0, %v1109
    %v1111 = vpop.f32.mrb[0].mxu0
    %1112 = vmatprep.mubr.f32.mxu0 0.0
    %1113 = vmatmul.mubr.f32.gmra.mrb[0].mxu0 %v379
    %v1114 = vpop.f32.mrb[0].mxu0
    %v1115 = vadd.f32 0.0, %v1114
    %v1116 = vpop.f32.mrb[0].mxu0
    %1117 = vmatprep.mubr.f32.mxu0 0.0
    %1118 = vmatmul.mubr.f32.gmra.mrb[0].mxu0 %v382
    %v1119 = vpop.f32.mrb[0].mxu0
    %v1120 = vadd.f32 0.0, %v1119
    %v1121 = vpop.f32.mrb[0].mxu0
    %1122 = vmatprep.mubr.f32.mxu0 0.0
    %1123 = vmatmul.mubr.f32.gmra.mrb[0].mxu0 %v385
    %v1124 = vpop.f32.mrb[0].mxu0
    %v1125 = vadd.f32 0.0, %v1124
    %v1126 = vpop.f32.mrb[0].mxu0
    %1127 = vmatprep.mubr.f32.mxu0 0.0
    %1128 = vmatmul.mubr.f32.gmra.mrb[0].mxu0 %v388
    %v1129 = vpop.f32.mrb[0].mxu0
    %v1130 = vadd.f32 0.0, %v1129
    %v1131 = vpop.f32.mrb[0].mxu0
    %1132 = vmatprep.mubr.f32.mxu0 0.0
    %1133 = vmatmul.mubr.f32.gmra.mrb[0].mxu0 %v391
    %v1134 = vpop.f32.mrb[0].mxu0
    %v1135 = vadd.f32 0.0, %v1134
    %v1136 = vpop.f32.mrb[0].mxu0
    %1137 = vmatprep.mubr.f32.mxu0 0.0
    %1138 = vmatmul.mubr.f32.gmra.mrb[0].mxu0 %v394
    %v1139 = vpop.f32.mrb[0].mxu0
    %v1140 = vadd.f32 0.0, %v1139
    %v1141 = vpop.f32.mrb[0].mxu0
    %1142 = vmatprep.mubr.f32.mxu0 0.0
    %1143 = vmatmul.mubr.f32.gmra.mrb[0].mxu0 %v397
    %v1144 = vpop.f32.mrb[0].mxu0
    %v1145 = vadd.f32 0.0, %v1144
    %v1146 = vpop.f32.mrb[0].mxu0
    %1147 = vmatprep.mubr.f32.mxu0 0.0
    %1148 = vmatmul.mubr.f32.gmra.mrb[0].mxu0 %v400
    %v1149 = vpop.f32.mrb[0].mxu0
    %v1150 = vadd.f32 0.0, %v1149
    %v1151 = vpop.f32.mrb[0].mxu0
    %1152 = vmatprep.mubr.f32.mxu0 0.0
    %1153 = vmatmul.mubr.f32.gmra.mrb[0].mxu0 %v403
    %v1154 = vpop.f32.mrb[0].mxu0
    %v1155 = vadd.f32 0.0, %v1154
    %v1156 = vpop.f32.mrb[0].mxu0
    %1157 = vmatprep.mubr.f32.mxu0 0.0
    %1158 = vmatmul.mubr.f32.gmra.mrb[0].mxu0 %v406
    %v1159 = vpop.f32.mrb[0].mxu0
    %v1160 = vadd.f32 0.0, %v1159
    %v1161 = vpop.f32.mrb[0].mxu0
    %1162 = vmatprep.mubr.f32.mxu0 0.0
    %1163 = vmatmul.mubr.f32.gmra.mrb[0].mxu0 %v409
    %v1164 = vpop.f32.mrb[0].mxu0
    %v1165 = vadd.f32 0.0, %v1164
    %v1166 = vpop.f32.mrb[0].mxu0
    %1167 = vmatprep.mubr.f32.mxu0 0.0
    %1168 = vmatmul.mubr.f32.gmra.mrb[0].mxu0 %v412
    %v1169 = vpop.f32.mrb[0].mxu0
    %v1170 = vadd.f32 0.0, %v1169
    %v1171 = vpop.f32.mrb[0].mxu0
    %1172 = vmatprep.mubr.f32.mxu0 0.0
    %1173 = vmatmul.mubr.f32.gmra.mrb[0].mxu0 %v415
    %v1174 = vpop.f32.mrb[0].mxu0
    %v1175 = vadd.f32 0.0, %v1174
    %v1176 = vpop.f32.mrb[0].mxu0
    %1177 = vmatprep.mubr.f32.mxu0 0.0
    %1178 = vmatmul.mubr.f32.gmra.mrb[0].mxu0 %v418
    %v1179 = vpop.f32.mrb[0].mxu0
    %v1180 = vadd.f32 0.0, %v1179
    %v1181 = vpop.f32.mrb[0].mxu0
    %1182 = vmatprep.mubr.f32.mxu0 0.0
    %1183 = vmatmul.mubr.f32.gmra.mrb[0].mxu0 %v421
    %v1184 = vpop.f32.mrb[0].mxu0
    %v1185 = vadd.f32 0.0, %v1184
    %v1186 = vpop.f32.mrb[0].mxu0
    %1187 = vmatprep.mubr.f32.mxu0 0.0
    %1188 = vmatmul.mubr.f32.gmra.mrb[0].mxu0 %v424
    %v1189 = vpop.f32.mrb[0].mxu0
    %v1190 = vadd.f32 0.0, %v1189
    %v1191 = vpop.f32.mrb[0].mxu0
    %1192 = vmatprep.mubr.f32.mxu0 0.0
    %1193 = vmatmul.mubr.f32.gmra.mrb[0].mxu0 %v427
    %v1194 = vpop.f32.mrb[0].mxu0
    %v1195 = vadd.f32 0.0, %v1194
    %v1196 = vpop.f32.mrb[0].mxu0
    %1197 = vmatprep.mubr.f32.mxu0 0.0
    %1198 = vmatmul.mubr.f32.gmra.mrb[0].mxu0 %v430
    %v1199 = vpop.f32.mrb[0].mxu0
    %v1200 = vadd.f32 0.0, %v1199
    %v1201 = vpop.f32.mrb[0].mxu0
    %1202 = vmatprep.mubr.f32.mxu0 0.0
    %1203 = vmatmul.mubr.f32.gmra.mrb[0].mxu0 %v433
    %v1204 = vpop.f32.mrb[0].mxu0
    %v1205 = vadd.f32 0.0, %v1204
    %v1206 = vpop.f32.mrb[0].mxu0
    %1207 = vmatprep.mubr.f32.mxu0 0.0
    %1208 = vmatmul.mubr.f32.gmra.mrb[0].mxu0 %v436
    %v1209 = vpop.f32.mrb[0].mxu0
    %v1210 = vadd.f32 0.0, %v1209
    %v1211 = vpop.f32.mrb[0].mxu0
    %1212 = vmatprep.mubr.f32.mxu0 0.0
    %1213 = vmatmul.mubr.f32.gmra.mrb[0].mxu0 %v439
    %v1214 = vpop.f32.mrb[0].mxu0
    %v1215 = vadd.f32 0.0, %v1214
    %v1216 = vpop.f32.mrb[0].mxu0
    %1217 = vmatprep.mubr.f32.mxu0 0.0
    %1218 = vmatmul.mubr.f32.gmra.mrb[0].mxu0 %v442
    %v1219 = vpop.f32.mrb[0].mxu0
    %v1220 = vadd.f32 0.0, %v1219
    %v1221 = vpop.f32.mrb[0].mxu0
    %1222 = vmatprep.mubr.f32.mxu0 0.0
    %1223 = vmatmul.mubr.f32.gmra.mrb[0].mxu0 %v445
    %v1224 = vpop.f32.mrb[0].mxu0
    %v1225 = vadd.f32 0.0, %v1224
    %v1226 = vpop.f32.mrb[0].mxu0
    %1227 = vmatprep.mubr.f32.mxu0 0.0
    %1228 = vmatmul.mubr.f32.gmra.mrb[0].mxu0 %v448
    %v1229 = vpop.f32.mrb[0].mxu0
    %v1230 = vadd.f32 0.0, %v1229
    %v1231 = vpop.f32.mrb[0].mxu0
    %1232 = vmatprep.mubr.f32.mxu0 0.0
    %1233 = vmatmul.mubr.f32.gmra.mrb[0].mxu0 %v451
    %v1234 = vpop.f32.mrb[0].mxu0
    %v1235 = vadd.f32 0.0, %v1234
    %v1236 = vpop.f32.mrb[0].mxu0
    %1237 = vmatprep.mubr.f32.mxu0 0.0
    %1238 = vmatmul.mubr.f32.gmra.mrb[0].mxu0 %v454
    %v1239 = vpop.f32.mrb[0].mxu0
    %v1240 = vadd.f32 0.0, %v1239
    %v1241 = vpop.f32.mrb[0].mxu0
    %1242 = vmatprep.mubr.f32.mxu0 0.0
    %1243 = vmatmul.mubr.f32.gmra.mrb[0].mxu0 %v457
    %v1244 = vpop.f32.mrb[0].mxu0
    %v1245 = vadd.f32 0.0, %v1244
    %v1246 = vpop.f32.mrb[0].mxu0
    %1247 = vmatprep.mubr.f32.mxu0 0.0
    %1248 = vmatmul.mubr.f32.gmra.mrb[0].mxu0 %v460
    %v1249 = vpop.f32.mrb[0].mxu0
    %v1250 = vadd.f32 0.0, %v1249
    %v1251 = vpop.f32.mrb[0].mxu0
    %1252 = vmatprep.mubr.f32.mxu0 0.0
    %1253 = vmatmul.mubr.f32.gmra.mrb[0].mxu0 %v463
    %v1254 = vpop.f32.mrb[0].mxu0
    %v1255 = vadd.f32 0.0, %v1254
    %v1256 = vpop.f32.mrb[0].mxu0
    %1257 = vmatprep.mubr.f32.mxu0 0.0
    %1258 = vmatmul.mubr.f32.gmra.mrb[0].mxu0 %v466
    %v1259 = vpop.f32.mrb[0].mxu0
    %v1260 = vadd.f32 0.0, %v1259
    %v1261 = vpop.f32.mrb[0].mxu0
    %1262 = vmatprep.mubr.f32.mxu0 0.0
    %1263 = vmatmul.mubr.f32.gmra.mrb[0].mxu0 %v469
    %v1264 = vpop.f32.mrb[0].mxu0
    %v1265 = vadd.f32 0.0, %v1264
    %v1266 = vpop.f32.mrb[0].mxu0
    %1267 = vmatprep.mubr.f32.mxu0 0.0
    %1268 = vmatmul.mubr.f32.gmra.mrb[0].mxu0 %v472
    %v1269 = vpop.f32.mrb[0].mxu0
    %v1270 = vadd.f32 0.0, %v1269
    %v1271 = vpop.f32.mrb[0].mxu0
    %1272 = vmatprep.mubr.f32.mxu0 0.0
    %1273 = vmatmul.mubr.f32.gmra.mrb[0].mxu0 %v475
    %v1274 = vpop.f32.mrb[0].mxu0
    %v1275 = vadd.f32 0.0, %v1274
    %v1276 = vpop.f32.mrb[0].mxu0
    %1277 = vmatprep.mubr.f32.mxu0 0.0
    %1278 = vmatmul.mubr.f32.gmra.mrb[0].mxu0 %v478
    %v1279 = vpop.f32.mrb[0].mxu0
    %v1280 = vadd.f32 0.0, %v1279
    %v1281 = vpop.f32.mrb[0].mxu0
    %1282 = vmatprep.mubr.f32.mxu0 0.0
    %1283 = vmatmul.mubr.f32.gmra.mrb[0].mxu0 %v481
    %v1284 = vpop.f32.mrb[0].mxu0
    %v1285 = vadd.f32 0.0, %v1284
    %v1286 = vpop.f32.mrb[0].mxu0
    %1287 = vmatprep.mubr.f32.mxu0 0.0
    %1288 = vmatmul.mubr.f32.gmra.mrb[0].mxu0 %v484
    %v1289 = vpop.f32.mrb[0].mxu0
    %v1290 = vadd.f32 0.0, %v1289
    %v1291 = vpop.f32.mrb[0].mxu0
    %1292 = vmatprep.mubr.f32.mxu0 0.0
    %1293 = vmatmul.mubr.f32.gmra.mrb[0].mxu0 %v487
    %v1294 = vpop.f32.mrb[0].mxu0
    %v1295 = vadd.f32 0.0, %v1294
    %v1296 = vpop.f32.mrb[0].mxu0
    %1297 = vmatprep.mubr.f32.mxu0 0.0
    %1298 = vmatmul.mubr.f32.gmra.mrb[0].mxu0 %v490
    %v1299 = vpop.f32.mrb[0].mxu0
    %v1300 = vadd.f32 0.0, %v1299
    %v1301 = vpop.f32.mrb[0].mxu0
    %1302 = vmatprep.mubr.f32.mxu0 0.0
    %1303 = vmatmul.mubr.f32.gmra.mrb[0].mxu0 %v493
    %v1304 = vpop.f32.mrb[0].mxu0
    %v1305 = vadd.f32 0.0, %v1304
    %v1306 = vpop.f32.mrb[0].mxu0
    %1307 = vmatprep.mubr.f32.mxu0 0.0
    %1308 = vmatmul.mubr.f32.gmra.mrb[0].mxu0 %v496
    %v1309 = vpop.f32.mrb[0].mxu0
    %v1310 = vadd.f32 0.0, %v1309
    %v1311 = vpop.f32.mrb[0].mxu0
    %1312 = vmatprep.mubr.f32.mxu0 0.0
    %1313 = vmatmul.mubr.f32.gmra.mrb[0].mxu0 %v499
    %v1314 = vpop.f32.mrb[0].mxu0
    %v1315 = vadd.f32 0.0, %v1314
    %v1316 = vpop.f32.mrb[0].mxu0
    %1317 = vmatprep.mubr.f32.mxu0 0.0
    %1318 = vmatmul.mubr.f32.gmra.mrb[0].mxu0 %v502
    %v1319 = vpop.f32.mrb[0].mxu0
    %v1320 = vadd.f32 0.0, %v1319
    %v1321 = vpop.f32.mrb[0].mxu0
    %1322 = vmatprep.mubr.f32.mxu0 0.0
    %1323 = vmatmul.mubr.f32.gmra.mrb[0].mxu0 %v505
    %v1324 = vpop.f32.mrb[0].mxu0
    %v1325 = vadd.f32 0.0, %v1324
    %v1326 = vpop.f32.mrb[0].mxu0
    %1327 = vmatprep.mubr.f32.mxu0 0.0
    %1328 = vmatmul.mubr.f32.gmra.mrb[0].mxu0 %v508
    %v1329 = vpop.f32.mrb[0].mxu0
    %v1330 = vadd.f32 0.0, %v1329
    %v1331 = vpop.f32.mrb[0].mxu0
    %1332 = vmatprep.mubr.f32.mxu0 0.0
    %1333 = vmatmul.mubr.f32.gmra.mrb[0].mxu0 %v511
    %v1334 = vpop.f32.mrb[0].mxu0
    %v1335 = vadd.f32 0.0, %v1334
    %v1336 = vpop.f32.mrb[0].mxu0
    %1337 = vmatprep.mubr.f32.mxu0 0.0
    %1338 = vmatmul.mubr.f32.gmra.mrb[0].mxu0 %v514
    %v1339 = vpop.f32.mrb[0].mxu0
    %v1340 = vadd.f32 0.0, %v1339
    %v1341 = vpop.f32.mrb[0].mxu0
    %1342 = vmatprep.mubr.f32.mxu0 0.0
    %1343 = vmatmul.mubr.f32.gmra.mrb[0].mxu0 %v517
    %v1344 = vpop.f32.mrb[0].mxu0
    %v1345 = vadd.f32 0.0, %v1344
    %v1346 = vpop.f32.mrb[0].mxu0
    %1347 = vmatprep.mubr.f32.mxu0 0.0
    %1348 = vmatmul.mubr.f32.gmra.mrb[0].mxu0 %v520
    %v1349 = vpop.f32.mrb[0].mxu0
    %v1350 = vadd.f32 0.0, %v1349
    %v1351 = vpop.f32.mrb[0].mxu0
    %1352 = vmatprep.mubr.f32.mxu0 0.0
    %1353 = vmatmul.mubr.f32.gmra.mrb[0].mxu0 %v523
    %v1354 = vpop.f32.mrb[0].mxu0
    %v1355 = vadd.f32 0.0, %v1354
    %v1356 = vpop.f32.mrb[0].mxu0
    %1357 = vmatprep.mubr.f32.mxu0 0.0
    %1358 = vmatmul.mubr.f32.gmra.mrb[0].mxu0 %v526
    %v1359 = vpop.f32.mrb[0].mxu0
    %v1360 = vadd.f32 0.0, %v1359
    %v1361 = vpop.f32.mrb[0].mxu0
    %1362 = vmatprep.mubr.f32.mxu0 0.0
    %1363 = vmatmul.mubr.f32.gmra.mrb[0].mxu0 %v529
    %v1364 = vpop.f32.mrb[0].mxu0
    %v1365 = vadd.f32 0.0, %v1364
    %v1366 = vpop.f32.mrb[0].mxu0
    %1367 = vmatprep.mubr.f32.mxu0 0.0
    %1368 = vmatmul.mubr.f32.gmra.mrb[0].mxu0 %v532
    %v1369 = vpop.f32.mrb[0].mxu0
    %v1370 = vadd.f32 0.0, %v1369
    %v1371 = vpop.f32.mrb[0].mxu0
    %1372 = vmatprep.mubr.f32.mxu0 0.0
    %1373 = vmatmul.mubr.f32.gmra.mrb[0].mxu0 %v535
    %v1374 = vpop.f32.mrb[0].mxu0
    %v1375 = vadd.f32 0.0, %v1374
    %v1376 = vpop.f32.mrb[0].mxu0
    %1377 = vmatprep.mubr.f32.mxu0 0.0
    %1378 = vmatmul.mubr.f32.gmra.mrb[0].mxu0 %v538
    %v1379 = vpop.f32.mrb[0].mxu0
    %v1380 = vadd.f32 0.0, %v1379
    %v1381 = vpop.f32.mrb[0].mxu0
    %1382 = vmatprep.mubr.f32.mxu0 0.0
    %1383 = vmatmul.mubr.f32.gmra.mrb[0].mxu0 %v541
    %v1384 = vpop.f32.mrb[0].mxu0
    %v1385 = vadd.f32 0.0, %v1384
    %v1386 = vpop.f32.mrb[0].mxu0
    %1387 = vmatprep.mubr.f32.mxu0 0.0
    %1388 = vmatmul.mubr.f32.gmra.mrb[0].mxu0 %v544
    %v1389 = vpop.f32.mrb[0].mxu0
    %v1390 = vadd.f32 0.0, %v1389
    %v1391 = vpop.f32.mrb[0].mxu0
    %1392 = vmatprep.mubr.f32.mxu0 0.0
    %1393 = vmatmul.mubr.f32.gmra.mrb[0].mxu0 %v547
    %v1394 = vpop.f32.mrb[0].mxu0
    %v1395 = vadd.f32 0.0, %v1394
    %v1396 = vpop.f32.mrb[0].mxu0
    %1397 = vmatprep.mubr.f32.mxu0 0.0
    %1398 = vmatmul.mubr.f32.gmra.mrb[0].mxu0 %v550
    %v1399 = vpop.f32.mrb[0].mxu0
    %v1400 = vadd.f32 0.0, %v1399
    %v1401 = vpop.f32.mrb[0].mxu0
    %1402 = vmatprep.mubr.f32.mxu0 0.0
    %1403 = vmatmul.mubr.f32.gmra.mrb[0].mxu0 %v553
    %v1404 = vpop.f32.mrb[0].mxu0
    %v1405 = vadd.f32 0.0, %v1404
    %v1406 = vpop.f32.mrb[0].mxu0
    %1407 = vmatprep.mubr.f32.mxu0 0.0
    %1408 = vmatmul.mubr.f32.gmra.mrb[0].mxu0 %v556
    %v1409 = vpop.f32.mrb[0].mxu0
    %v1410 = vadd.f32 0.0, %v1409
    %v1411 = vpop.f32.mrb[0].mxu0
    %1412 = vmatprep.mubr.f32.mxu0 0.0
    %1413 = vmatmul.mubr.f32.gmra.mrb[0].mxu0 %v559
    %v1414 = vpop.f32.mrb[0].mxu0
    %v1415 = vadd.f32 0.0, %v1414
    %v1416 = vpop.f32.mrb[0].mxu0
    %1417 = vmatprep.mubr.f32.mxu0 0.0
    %1418 = vmatmul.mubr.f32.gmra.mrb[0].mxu0 %v562
    %v1419 = vpop.f32.mrb[0].mxu0
    %v1420 = vadd.f32 0.0, %v1419
    %v1421 = vpop.f32.mrb[0].mxu0
    %1422 = vmatprep.mubr.f32.mxu0 0.0
    %1423 = vmatmul.mubr.f32.gmra.mrb[0].mxu0 %v565
    %v1424 = vpop.f32.mrb[0].mxu0
    %v1425 = vadd.f32 0.0, %v1424
    %v1426 = vpop.f32.mrb[0].mxu0
    %1427 = vmatprep.mubr.f32.mxu0 0.0
    %1428 = vmatmul.mubr.f32.gmra.mrb[0].mxu0 %v568
    %v1429 = vpop.f32.mrb[0].mxu0
    %v1430 = vadd.f32 0.0, %v1429
    %v1431 = vpop.f32.mrb[0].mxu0
    %1432 = vmatprep.mubr.f32.mxu0 0.0
    %1433 = vmatmul.mubr.f32.gmra.mrb[0].mxu0 %v571
    %v1434 = vpop.f32.mrb[0].mxu0
    %v1435 = vadd.f32 0.0, %v1434
    %v1436 = vpop.f32.mrb[0].mxu0
    %1437 = vmatprep.mubr.f32.mxu0 0.0
    %1438 = vmatmul.mubr.f32.gmra.mrb[0].mxu0 %v574
    %v1439 = vpop.f32.mrb[0].mxu0
    %v1440 = vadd.f32 0.0, %v1439
    %v1441 = vpop.f32.mrb[0].mxu0
    %1442 = vmatprep.mubr.f32.mxu0 0.0
    %1443 = vmatmul.mubr.f32.gmra.mrb[0].mxu0 %v577
    %v1444 = vpop.f32.mrb[0].mxu0
    %v1445 = vadd.f32 0.0, %v1444
    %v1446 = vpop.f32.mrb[0].mxu0
    %1447 = vmatprep.mubr.f32.mxu0 0.0
    %1448 = vmatmul.mubr.f32.gmra.mrb[0].mxu0 %v580
    %v1449 = vpop.f32.mrb[0].mxu0
    %v1450 = vadd.f32 0.0, %v1449
    %v1451 = vpop.f32.mrb[0].mxu0
    %1452 = vmatprep.mubr.f32.mxu0 0.0
    %1453 = vmatmul.mubr.f32.gmra.mrb[0].mxu0 %v583
    %v1454 = vpop.f32.mrb[0].mxu0
    %v1455 = vadd.f32 0.0, %v1454
    %v1456 = vpop.f32.mrb[0].mxu0
    %1457 = vmatprep.mubr.f32.mxu0 0.0
    %1458 = vmatmul.mubr.f32.gmra.mrb[0].mxu0 %v586
    %v1459 = vpop.f32.mrb[0].mxu0
    %v1460 = vadd.f32 0.0, %v1459
    %v1461 = vpop.f32.mrb[0].mxu0
    %1462 = vmatprep.mubr.f32.mxu0 0.0
    %1463 = vmatmul.mubr.f32.gmra.mrb[0].mxu0 %v589
    %v1464 = vpop.f32.mrb[0].mxu0
    %v1465 = vadd.f32 0.0, %v1464
    %v1466 = vpop.f32.mrb[0].mxu0
    %1467 = vmatprep.mubr.f32.mxu0 0.0
    %1468 = vmatmul.mubr.f32.gmra.mrb[0].mxu0 %v592
    %v1469 = vpop.f32.mrb[0].mxu0
    %v1470 = vadd.f32 0.0, %v1469
    %v1471 = vpop.f32.mrb[0].mxu0
    %1472 = vmatprep.mubr.f32.mxu0 0.0
    %1473 = vmatmul.mubr.f32.gmra.mrb[0].mxu0 %v595
    %v1474 = vpop.f32.mrb[0].mxu0
    %v1475 = vadd.f32 0.0, %v1474
    %v1476 = vpop.f32.mrb[0].mxu0
    %1477 = vmatprep.mubr.f32.mxu0 0.0
    %1478 = vmatmul.mubr.f32.gmra.mrb[0].mxu0 %v598
    %v1479 = vpop.f32.mrb[0].mxu0
    %v1480 = vadd.f32 0.0, %v1479
    %v1481 = vpop.f32.mrb[0].mxu0
    %1482 = vmatprep.mubr.f32.mxu0 0.0
    %1483 = vmatmul.mubr.f32.gmra.mrb[0].mxu0 %v601
    %v1484 = vpop.f32.mrb[0].mxu0
    %v1485 = vadd.f32 0.0, %v1484
    %v1486 = vpop.f32.mrb[0].mxu0
    %1487 = vmatprep.mubr.f32.mxu0 0.0
    %1488 = vmatmul.mubr.f32.gmra.mrb[0].mxu0 %v604
    %v1489 = vpop.f32.mrb[0].mxu0
    %v1490 = vadd.f32 0.0, %v1489
    %v1491 = vpop.f32.mrb[0].mxu0
    %1492 = vmatprep.mubr.f32.mxu0 0.0
    %1493 = vmatmul.mubr.f32.gmra.mrb[0].mxu0 %v607
    %v1494 = vpop.f32.mrb[0].mxu0
    %v1495 = vadd.f32 0.0, %v1494
    %v1496 = vpop.f32.mrb[0].mxu0
    %1497 = vmatprep.mubr.f32.mxu0 0.0
    %1498 = vmatmul.mubr.f32.gmra.mrb[0].mxu0 %v610
    %v1499 = vpop.f32.mrb[0].mxu0
    %v1500 = vadd.f32 0.0, %v1499
    %v1501 = vpop.f32.mrb[0].mxu0
    %1502 = vmatprep.mubr.f32.mxu0 0.0
    %1503 = vmatmul.mubr.f32.gmra.mrb[0].mxu0 %v613
    %v1504 = vpop.f32.mrb[0].mxu0
    %v1505 = vadd.f32 0.0, %v1504
    %v1506 = vpop.f32.mrb[0].mxu0
    %1507 = vmatprep.mubr.f32.mxu0 0.0
    %1508 = vmatmul.mubr.f32.gmra.mrb[0].mxu0 %v616
    %v1509 = vpop.f32.mrb[0].mxu0
    %v1510 = vadd.f32 0.0, %v1509
    %v1511 = vpop.f32.mrb[0].mxu0
    %1512 = vmatprep.mubr.f32.mxu0 0.0
    %1513 = vmatmul.mubr.f32.gmra.mrb[0].mxu0 %v619
    %v1514 = vpop.f32.mrb[0].mxu0
    %v1515 = vadd.f32 0.0, %v1514
    %v1516 = vpop.f32.mrb[0].mxu0
    %1517 = vmatprep.mubr.f32.mxu0 0.0
    %1518 = vmatmul.mubr.f32.gmra.mrb[0].mxu0 %v622
    %v1519 = vpop.f32.mrb[0].mxu0
    %v1520 = vadd.f32 0.0, %v1519
    %v1521 = vpop.f32.mrb[0].mxu0
    %1522 = vmatprep.mubr.f32.mxu0 0.0
    %1523 = vmatmul.mubr.f32.gmra.mrb[0].mxu0 %v625
    %v1524 = vpop.f32.mrb[0].mxu0
    %v1525 = vadd.f32 0.0, %v1524
    %v1526 = vpop.f32.mrb[0].mxu0
    %1527 = vmatprep.mubr.f32.mxu0 0.0
    %1528 = vmatmul.mubr.f32.gmra.mrb[0].mxu0 %v628
    %v1529 = vpop.f32.mrb[0].mxu0
    %v1530 = vadd.f32 0.0, %v1529
    %v1531 = vpop.f32.mrb[0].mxu0
    %1532 = vmatprep.mubr.f32.mxu0 0.0
    %1533 = vmatmul.mubr.f32.gmra.mrb[0].mxu0 %v631
    %v1534 = vpop.f32.mrb[0].mxu0
    %v1535 = vadd.f32 0.0, %v1534
    %v1536 = vpop.f32.mrb[0].mxu0
    %1537 = vmatprep.mubr.f32.mxu0 0.0
    %1538 = vmatmul.mubr.f32.gmra.mrb[0].mxu0 %v634
    %v1539 = vpop.f32.mrb[0].mxu0
    %v1540 = vadd.f32 0.0, %v1539
    %v1541 = vpop.f32.mrb[0].mxu0
    %1542 = vmatprep.mubr.f32.mxu0 0.0
    %1543 = vmatmul.mubr.f32.gmra.mrb[0].mxu0 %v637
    %v1544 = vpop.f32.mrb[0].mxu0
    %v1545 = vadd.f32 0.0, %v1544
    %v1546 = vpop.f32.mrb[0].mxu0
    %1547 = vmatprep.mubr.f32.mxu0 0.0
    %1548 = vmatmul.mubr.f32.gmra.mrb[0].mxu0 %v640
    %v1549 = vpop.f32.mrb[0].mxu0
    %v1550 = vadd.f32 0.0, %v1549
    %v1551 = vpop.f32.mrb[0].mxu0
    %1552 = vmatprep.mubr.f32.mxu0 0.0
    %1553 = vmatmul.mubr.f32.gmra.mrb[0].mxu0 %v643
    %v1554 = vpop.f32.mrb[0].mxu0
    %v1555 = vadd.f32 0.0, %v1554
    %v1556 = vpop.f32.mrb[0].mxu0
    %1557 = vmatprep.mubr.f32.mxu0 0.0
    %1558 = vmatmul.mubr.f32.gmra.mrb[0].mxu0 %v646
    %v1559 = vpop.f32.mrb[0].mxu0
    %v1560 = vadd.f32 0.0, %v1559
    %v1561 = vpop.f32.mrb[0].mxu0
    %1562 = vmatprep.mubr.f32.mxu0 0.0
    %1563 = vmatmul.mubr.f32.gmra.mrb[0].mxu0 %v649
    %v1564 = vpop.f32.mrb[0].mxu0
    %v1565 = vadd.f32 0.0, %v1564
    %v1566 = vpop.f32.mrb[0].mxu0
    %1567 = vmatprep.mubr.f32.mxu0 0.0
    %1568 = vmatmul.mubr.f32.gmra.mrb[0].mxu0 %v652
    %v1569 = vpop.f32.mrb[0].mxu0
    %v1570 = vadd.f32 0.0, %v1569
    %v1571 = vpop.f32.mrb[0].mxu0
    %1572 = vmatprep.mubr.f32.mxu0 0.0
    %1573 = vmatmul.mubr.f32.gmra.mrb[0].mxu0 %v655
    %v1574 = vpop.f32.mrb[0].mxu0
    %v1575 = vadd.f32 0.0, %v1574
    %v1576 = vpop.f32.mrb[0].mxu0
    %1577 = vmatprep.mubr.f32.mxu0 0.0
    %1578 = vmatmul.mubr.f32.gmra.mrb[0].mxu0 %v658
    %v1579 = vpop.f32.mrb[0].mxu0
    %v1580 = vadd.f32 0.0, %v1579
    %v1581 = vpop.f32.mrb[0].mxu0
    %1582 = vmatprep.mubr.f32.mxu0 0.0
    %1583 = vmatmul.mubr.f32.gmra.mrb[0].mxu0 %v661
    %v1584 = vpop.f32.mrb[0].mxu0
    %v1585 = vadd.f32 0.0, %v1584
    %v1586 = vpop.f32.mrb[0].mxu0
    %1587 = vmatprep.mubr.f32.mxu0 0.0
    %1588 = vmatmul.mubr.f32.gmra.mrb[0].mxu0 %v664
    %v1589 = vpop.f32.mrb[0].mxu0
    %v1590 = vadd.f32 0.0, %v1589
    %v1591 = vpop.f32.mrb[0].mxu0
    %1592 = vmatprep.mubr.f32.mxu0 0.0
    %1593 = vmatmul.mubr.f32.gmra.mrb[0].mxu0 %v667
    %v1594 = vpop.f32.mrb[0].mxu0
    %v1595 = vadd.f32 0.0, %v1594
    %v1596 = vpop.f32.mrb[0].mxu0
    %1597 = vmatprep.mubr.f32.mxu0 0.0
    %1598 = vmatmul.mubr.f32.gmra.mrb[0].mxu0 %v670
    %v1599 = vpop.f32.mrb[0].mxu0
    %v1600 = vadd.f32 0.0, %v1599
    %v1601 = vpop.f32.mrb[0].mxu0
    %1602 = vmatprep.mubr.f32.mxu0 0.0
    %1603 = vmatmul.mubr.f32.gmra.mrb[0].mxu0 %v673
    %v1604 = vpop.f32.mrb[0].mxu0
    %v1605 = vadd.f32 0.0, %v1604
    %v1606 = vpop.f32.mrb[0].mxu0
    %1607 = vmatprep.mubr.f32.mxu0 0.0
    %1608 = vmatmul.mubr.f32.gmra.mrb[0].mxu0 %v676
    %v1609 = vpop.f32.mrb[0].mxu0
    %v1610 = vadd.f32 0.0, %v1609
    %v1611 = vpop.f32.mrb[0].mxu0
    %1612 = vmatprep.mubr.f32.mxu0 0.0
    %1613 = vmatmul.mubr.f32.gmra.mrb[0].mxu0 %v679
    %v1614 = vpop.f32.mrb[0].mxu0
    %v1615 = vadd.f32 0.0, %v1614
    %v1616 = vpop.f32.mrb[0].mxu0
    %1617 = vmatprep.mubr.f32.mxu0 0.0
    %1618 = vmatmul.mubr.f32.gmra.mrb[0].mxu0 %v682
    %v1619 = vpop.f32.mrb[0].mxu0
    %v1620 = vadd.f32 0.0, %v1619
    %v1621 = vpop.f32.mrb[0].mxu0
    %1622 = vmatprep.mubr.f32.mxu0 0.0
    %1623 = vmatmul.mubr.f32.gmra.mrb[0].mxu0 %v685
    %v1624 = vpop.f32.mrb[0].mxu0
    %v1625 = vadd.f32 0.0, %v1624
    %v1626 = vpop.f32.mrb[0].mxu0
    %1627 = vmatprep.mubr.f32.mxu0 0.0
    %1628 = vmatmul.mubr.f32.gmra.mrb[0].mxu0 %v688
    %v1629 = vpop.f32.mrb[0].mxu0
    %v1630 = vadd.f32 0.0, %v1629
    %v1631 = vpop.f32.mrb[0].mxu0
    %1632 = vmatprep.mubr.f32.mxu0 0.0
    %1633 = vmatmul.mubr.f32.gmra.mrb[0].mxu0 %v691
    %v1634 = vpop.f32.mrb[0].mxu0
    %v1635 = vadd.f32 0.0, %v1634
    %v1636 = vpop.f32.mrb[0].mxu0
    %1637 = vmatprep.mubr.f32.mxu0 0.0
    %1638 = vmatmul.mubr.f32.gmra.mrb[0].mxu0 %v694
    %v1639 = vpop.f32.mrb[0].mxu0
    %v1640 = vadd.f32 0.0, %v1639
    %v1641 = vpop.f32.mrb[0].mxu0
    %1642 = vmatprep.mubr.f32.mxu0 0.0
    %1643 = vmatmul.mubr.f32.gmra.mrb[0].mxu0 %v697
    %v1644 = vpop.f32.mrb[0].mxu0
    %v1645 = vadd.f32 0.0, %v1644
    %v1646 = vpop.f32.mrb[0].mxu0
    %1647 = vmatprep.mubr.f32.mxu0 0.0
    %1648 = vmatmul.mubr.f32.gmra.mrb[0].mxu0 %v700
    %v1649 = vpop.f32.mrb[0].mxu0
    %v1650 = vadd.f32 0.0, %v1649
    %v1651 = vpop.f32.mrb[0].mxu0
    %1652 = vmatprep.mubr.f32.mxu0 0.0
    %1653 = vmatmul.mubr.f32.gmra.mrb[0].mxu0 %v703
    %v1654 = vpop.f32.mrb[0].mxu0
    %v1655 = vadd.f32 0.0, %v1654
    %v1656 = vpop.f32.mrb[0].mxu0
    %1657 = vmatprep.mubr.f32.mxu0 0.0
    %1658 = vmatmul.mubr.f32.gmra.mrb[0].mxu0 %v706
    %v1659 = vpop.f32.mrb[0].mxu0
    %v1660 = vadd.f32 0.0, %v1659
    %v1661 = vpop.f32.mrb[0].mxu0
    %1662 = vmatprep.mubr.f32.mxu0 0.0
    %1663 = vmatmul.mubr.f32.gmra.mrb[0].mxu0 %v709
    %v1664 = vpop.f32.mrb[0].mxu0
    %v1665 = vadd.f32 0.0, %v1664
    %v1666 = vpop.f32.mrb[0].mxu0
    %1667 = vmatprep.mubr.f32.mxu0 0.0
    %1668 = vmatmul.mubr.f32.gmra.mrb[0].mxu0 %v712
    %v1669 = vpop.f32.mrb[0].mxu0
    %v1670 = vadd.f32 0.0, %v1669
    %v1671 = vpop.f32.mrb[0].mxu0
    %1672 = vmatprep.mubr.f32.mxu0 0.0
    %1673 = vmatmul.mubr.f32.gmra.mrb[0].mxu0 %v715
    %v1674 = vpop.f32.mrb[0].mxu0
    %v1675 = vadd.f32 0.0, %v1674
    %v1676 = vpop.f32.mrb[0].mxu0
    %1677 = vmatprep.mubr.f32.mxu0 0.0
    %1678 = vmatmul.mubr.f32.gmra.mrb[0].mxu0 %v718
    %v1679 = vpop.f32.mrb[0].mxu0
    %v1680 = vadd.f32 0.0, %v1679
    %v1681 = vpop.f32.mrb[0].mxu0
    %1682 = vmatprep.mubr.f32.mxu0 0.0
    %1683 = vmatmul.mubr.f32.gmra.mrb[0].mxu0 %v721
    %v1684 = vpop.f32.mrb[0].mxu0
    %v1685 = vadd.f32 0.0, %v1684
    %v1686 = vpop.f32.mrb[0].mxu0
    %1687 = vmatprep.mubr.f32.mxu0 0.0
    %1688 = vmatmul.mubr.f32.gmra.mrb[0].mxu0 %v724
    %v1689 = vpop.f32.mrb[0].mxu0
    %v1690 = vadd.f32 0.0, %v1689
    %v1691 = vpop.f32.mrb[0].mxu0
    %1692 = vmatprep.mubr.f32.mxu0 0.0
    %1693 = vmatmul.mubr.f32.gmra.mrb[0].mxu0 %v727
    %v1694 = vpop.f32.mrb[0].mxu0
    %v1695 = vadd.f32 0.0, %v1694
    %v1696 = vpop.f32.mrb[0].mxu0
    %1697 = vmatprep.mubr.f32.mxu0 0.0
    %1698 = vmatmul.mubr.f32.gmra.mrb[0].mxu0 %v730
    %v1699 = vpop.f32.mrb[0].mxu0
    %v1700 = vadd.f32 0.0, %v1699
    %v1701 = vpop.f32.mrb[0].mxu0
    %1702 = vmatprep.mubr.f32.mxu0 0.0
    %1703 = vmatmul.mubr.f32.gmra.mrb[0].mxu0 %v733
    %v1704 = vpop.f32.mrb[0].mxu0
    %v1705 = vadd.f32 0.0, %v1704
    %v1706 = vpop.f32.mrb[0].mxu0
    %1707 = vmatprep.mubr.f32.mxu0 0.0
    %1708 = vmatmul.mubr.f32.gmra.mrb[0].mxu0 %v736
    %v1709 = vpop.f32.mrb[0].mxu0
    %v1710 = vadd.f32 0.0, %v1709
    %v1711 = vpop.f32.mrb[0].mxu0
    %1712 = vmatprep.mubr.f32.mxu0 0.0
    %1713 = vmatmul.mubr.f32.gmra.mrb[0].mxu0 %v739
    %v1714 = vpop.f32.mrb[0].mxu0
    %v1715 = vadd.f32 0.0, %v1714
    %v1716 = vpop.f32.mrb[0].mxu0
    %1717 = vmatprep.mubr.f32.mxu0 0.0
    %1718 = vmatmul.mubr.f32.gmra.mrb[0].mxu0 %v742
    %v1719 = vpop.f32.mrb[0].mxu0
    %v1720 = vadd.f32 0.0, %v1719
    %v1721 = vpop.f32.mrb[0].mxu0
    %1722 = vmatprep.mubr.f32.mxu0 0.0
    %1723 = vmatmul.mubr.f32.gmra.mrb[0].mxu0 %v745
    %v1724 = vpop.f32.mrb[0].mxu0
    %v1725 = vadd.f32 0.0, %v1724
    %v1726 = vpop.f32.mrb[0].mxu0
    %1727 = vmatprep.mubr.f32.mxu0 0.0
    %1728 = vmatmul.mubr.f32.gmra.mrb[0].mxu0 %v748
    %v1729 = vpop.f32.mrb[0].mxu0
    %v1730 = vadd.f32 0.0, %v1729
    %v1731 = vpop.f32.mrb[0].mxu0
    %1732 = vmatprep.mubr.f32.mxu0 0.0
    %1733 = vmatmul.mubr.f32.gmra.mrb[0].mxu0 %v751
    %v1734 = vpop.f32.mrb[0].mxu0
    %v1735 = vadd.f32 0.0, %v1734
    %v1736 = vpop.f32.mrb[0].mxu0
    %1737 = vmatprep.mubr.f32.mxu0 0.0
    %1738 = vmatmul.mubr.f32.gmra.mrb[0].mxu0 %v754
    %v1739 = vpop.f32.mrb[0].mxu0
    %v1740 = vadd.f32 0.0, %v1739
    %v1741 = vpop.f32.mrb[0].mxu0
    %1742 = vmatprep.mubr.f32.mxu0 0.0
    %1743 = vmatmul.mubr.f32.gmra.mrb[0].mxu0 %v757
    %v1744 = vpop.f32.mrb[0].mxu0
    %v1745 = vadd.f32 0.0, %v1744
    %v1746 = vpop.f32.mrb[0].mxu0
    %1747 = vmatprep.mubr.f32.mxu0 0.0
    %1748 = vmatmul.mubr.f32.gmra.mrb[0].mxu0 %v760
    %v1749 = vpop.f32.mrb[0].mxu0
    %v1750 = vadd.f32 0.0, %v1749
    %v1751 = vpop.f32.mrb[0].mxu0
    %1752 = vmatprep.mubr.f32.mxu0 0.0
    %1753 = vmatmul.mubr.f32.gmra.mrb[0].mxu0 %v763
    %v1754 = vpop.f32.mrb[0].mxu0
    %v1755 = vadd.f32 0.0, %v1754
    %v1756 = vpop.f32.mrb[0].mxu0
    %1757 = vmatprep.mubr.f32.mxu0 0.0
    %1758 = vmatmul.mubr.f32.gmra.mrb[0].mxu0 %v766
    %v1759 = vpop.f32.mrb[0].mxu0
    %v1760 = vadd.f32 0.0, %v1759
    %v1761 = vpop.f32.mrb[0].mxu0
    %1762 = vmatprep.mubr.f32.mxu0 0.0
    %1763 = vmatmul.mubr.f32.gmra.mrb[0].mxu0 %v769
    %v1764 = vpop.f32.mrb[0].mxu0
    %v1765 = vadd.f32 0.0, %v1764
    %v1766 = vpop.f32.mrb[0].mxu0
    %1767 = vmatprep.mubr.f32.mxu0 0.0
    %1768 = vmatmul.mubr.f32.gmra.mrb[0].mxu0 %v772
    %v1769 = vpop.f32.mrb[0].mxu0
    %v1770 = vadd.f32 0.0, %v1769
    %v1771 = vpop.f32.mrb[0].mxu0
    %1772 = vmatprep.mubr.f32.mxu0 0.0
    %1773 = vmatmul.mubr.f32.gmra.mrb[0].mxu0 %v775
    %v1774 = vpop.f32.mrb[0].mxu0
    %v1775 = vadd.f32 0.0, %v1774
    %v1776 = vpop.f32.mrb[0].mxu0
    %1777 = vmatprep.mubr.f32.mxu0 0.0
    %1778 = vmatmul.mubr.f32.gmra.mrb[0].mxu0 %v778
    %v1779 = vpop.f32.mrb[0].mxu0
    %v1780 = vadd.f32 0.0, %v1779
    %v1781 = vpop.f32.mrb[0].mxu0
    %1782 = vmatprep.mubr.f32.mxu0 0.0
    %1783 = vmatmul.mubr.f32.gmra.mrb[0].mxu0 %v781
    %v1784 = vpop.f32.mrb[0].mxu0
    %v1785 = vadd.f32 0.0, %v1784
    %v1786 = vpop.f32.mrb[0].mxu0
    %1787 = vmatprep.mubr.f32.mxu0 0.0
    %1788 = vmatmul.mubr.f32.gmra.mrb[0].mxu0 %v784
    %v1789 = vpop.f32.mrb[0].mxu0
    %v1790 = vadd.f32 0.0, %v1789
    %v1791 = vpop.f32.mrb[0].mxu0
    %1792 = vmatprep.mubr.f32.mxu0 0.0
    %1793 = vmatmul.mubr.f32.gmra.mrb[0].mxu0 %v787
    %v1794 = vpop.f32.mrb[0].mxu0
    %v1795 = vadd.f32 0.0, %v1794
    %v1796 = vpop.f32.mrb[0].mxu0
    %1797 = vmatprep.mubr.f32.mxu0 0.0
    %1798 = vmatmul.mubr.f32.gmra.mrb[0].mxu0 %v790
    %v1799 = vpop.f32.mrb[0].mxu0
    %v1800 = vadd.f32 0.0, %v1799
    %v1801 = vpop.f32.mrb[0].mxu0
    %1802 = vmatprep.mubr.f32.mxu0 0.0
    %1803 = vmatmul.mubr.f32.gmra.mrb[0].mxu0 %v793
    %v1804 = vpop.f32.mrb[0].mxu0
    %v1805 = vadd.f32 0.0, %v1804
    %v1806 = vpop.f32.mrb[0].mxu0
    %1807 = vmatprep.mubr.f32.mxu0 0.0
    %1808 = vmatmul.mubr.f32.gmra.mrb[0].mxu0 %v796
    %v1809 = vpop.f32.mrb[0].mxu0
    %v1810 = vadd.f32 0.0, %v1809
    %v1811 = vpop.f32.mrb[0].mxu0
    %1812 = vmatprep.mubr.f32.mxu0 0.0
    %1813 = vmatmul.mubr.f32.gmra.mrb[0].mxu0 %v799
    %v1814 = vpop.f32.mrb[0].mxu0
    %v1815 = vadd.f32 0.0, %v1814
    %v1816 = vpop.f32.mrb[0].mxu0
    %1817 = vmatprep.mubr.f32.mxu0 0.0
    %1818 = vmatmul.mubr.f32.gmra.mrb[0].mxu0 %v802
    %v1819 = vpop.f32.mrb[0].mxu0
    %v1820 = vadd.f32 0.0, %v1819
    %v1821 = vpop.f32.mrb[0].mxu0
    %1822 = vmatprep.mubr.f32.mxu0 0.0
    %1823 = vmatmul.mubr.f32.gmra.mrb[0].mxu0 %v805
    %v1824 = vpop.f32.mrb[0].mxu0
    %v1825 = vadd.f32 0.0, %v1824
    %v1826 = vpop.f32.mrb[0].mxu0
    %1827 = vmatprep.mubr.f32.mxu0 0.0
    %1828 = vmatmul.mubr.f32.gmra.mrb[0].mxu0 %v808
    %v1829 = vpop.f32.mrb[0].mxu0
    %v1830 = vadd.f32 0.0, %v1829
    %v1831 = vpop.f32.mrb[0].mxu0
    %1832 = vmatprep.mubr.f32.mxu0 0.0
    %1833 = vmatmul.mubr.f32.gmra.mrb[0].mxu0 %v811
    %v1834 = vpop.f32.mrb[0].mxu0
    %v1835 = vadd.f32 0.0, %v1834
    %v1836 = vpop.f32.mrb[0].mxu0
    %1837 = vmatprep.mubr.f32.mxu0 0.0
    %1838 = vmatmul.mubr.f32.gmra.mrb[0].mxu0 %v814
    %v1839 = vpop.f32.mrb[0].mxu0
    %v1840 = vadd.f32 0.0, %v1839
    %v1841 = vpop.f32.mrb[0].mxu0
    %1842 = vmatprep.mubr.f32.mxu0 0.0
    %1843 = vmatmul.mubr.f32.gmra.mrb[0].mxu0 %v817
    %v1844 = vpop.f32.mrb[0].mxu0
    %v1845 = vadd.f32 0.0, %v1844
    %v1846 = vpop.f32.mrb[0].mxu0
    %1847 = vmatprep.mubr.f32.mxu0 0.0
    %1848 = vmatmul.mubr.f32.gmra.mrb[0].mxu0 %v820
    %v1849 = vpop.f32.mrb[0].mxu0
    %v1850 = vadd.f32 0.0, %v1849
    %v1851 = vpop.f32.mrb[0].mxu0
    %1852 = vmatprep.mubr.f32.mxu0 0.0
    %1853 = vmatmul.mubr.f32.gmra.mrb[0].mxu0 %v823
    %v1854 = vpop.f32.mrb[0].mxu0
    %v1855 = vadd.f32 0.0, %v1854
    %v1856 = vpop.f32.mrb[0].mxu0
    %1857 = vmatprep.mubr.f32.mxu0 0.0
    %1858 = vmatmul.mubr.f32.gmra.mrb[0].mxu0 %v826
    %v1859 = vpop.f32.mrb[0].mxu0
    %v1860 = vadd.f32 0.0, %v1859
    %v1861 = vpop.f32.mrb[0].mxu0
    %1862 = vmatprep.mubr.f32.mxu0 0.0
    %1863 = vmatmul.mubr.f32.gmra.mrb[0].mxu0 %v829
    %v1864 = vpop.f32.mrb[0].mxu0
    %v1865 = vadd.f32 0.0, %v1864
    %v1866 = vpop.f32.mrb[0].mxu0
    %1867 = vmatprep.mubr.f32.mxu0 0.0
    %1868 = vmatmul.mubr.f32.gmra.mrb[0].mxu0 %v832
    %v1869 = vpop.f32.mrb[0].mxu0
    %v1870 = vadd.f32 0.0, %v1869
    %v1871 = vpop.f32.mrb[0].mxu0
    %1872 = vmatprep.mubr.f32.mxu0 0.0
    %1873 = vmatmul.mubr.f32.gmra.mrb[0].mxu0 %v835
    %v1874 = vpop.f32.mrb[0].mxu0
    %v1875 = vadd.f32 0.0, %v1874
    %v1876 = vpop.f32.mrb[0].mxu0
    %1877 = vmatprep.mubr.f32.mxu0 0.0
    %1878 = vmatmul.mubr.f32.gmra.mrb[0].mxu0 %v838
    %v1879 = vpop.f32.mrb[0].mxu0
    %v1880 = vadd.f32 0.0, %v1879
    %v1881 = vpop.f32.mrb[0].mxu0
    %1882 = vmatprep.mubr.f32.mxu0 0.0
    %1883 = vmatmul.mubr.f32.gmra.mrb[0].mxu0 %v841
    %v1884 = vpop.f32.mrb[0].mxu0
    %v1885 = vadd.f32 0.0, %v1884
    %v1886 = vpop.f32.mrb[0].mxu0
    %1887 = vdwg.mxu0
    %v1888 = vsel %vm254, %v910, 0.0
    %v1889 = vsel %vm254, %v915, 0.0
    %v1890 = vadd.f32 %v1888, %v1889
    %v1891 = vsel %vm254, %v920, 0.0
    %v1892 = vadd.f32 %v1890, %v1891
    %v1893 = vsel %vm254, %v925, 0.0
    %v1894 = vadd.f32 %v1892, %v1893
    %v1895 = vsel %vm254, %v930, 0.0
    %v1896 = vadd.f32 %v1894, %v1895
    %v1897 = vsel %vm254, %v935, 0.0
    %v1898 = vadd.f32 %v1896, %v1897
    %v1899 = vsel %vm254, %v940, 0.0
    %v1900 = vadd.f32 %v1898, %v1899
    %v1901 = vsel %vm254, %v945, 0.0
    %v1902 = vadd.f32 %v1900, %v1901
    %v1903 = vsel %vm254, %v950, 0.0
    %v1904 = vadd.f32 %v1902, %v1903
    %v1905 = vsel %vm254, %v955, 0.0
    %v1906 = vadd.f32 %v1904, %v1905
    %v1907 = vsel %vm254, %v960, 0.0
    %v1908 = vadd.f32 %v1906, %v1907
    %v1909 = vsel %vm254, %v965, 0.0
    %v1910 = vadd.f32 %v1908, %v1909
    %v1911 = vsel %vm254, %v970, 0.0
    %v1912 = vadd.f32 %v1910, %v1911
    %v1913 = vsel %vm254, %v975, 0.0
    %v1914 = vadd.f32 %v1912, %v1913
    %v1915 = vsel %vm254, %v980, 0.0
    %v1916 = vadd.f32 %v1914, %v1915
    %v1917 = vsel %vm254, %v985, 0.0
    %v1918 = vadd.f32 %v1916, %v1917
    %v1919 = vsel %vm254, %v990, 0.0
    %v1920 = vadd.f32 %v1918, %v1919
    %v1921 = vsel %vm254, %v995, 0.0
    %v1922 = vadd.f32 %v1920, %v1921
    %v1923 = vsel %vm254, %v1000, 0.0
    %v1924 = vadd.f32 %v1922, %v1923
    %v1925 = vsel %vm254, %v1005, 0.0
    %v1926 = vadd.f32 %v1924, %v1925
    %v1927 = vsel %vm254, %v1010, 0.0
    %v1928 = vadd.f32 %v1926, %v1927
    %v1929 = vsel %vm254, %v1015, 0.0
    %v1930 = vadd.f32 %v1928, %v1929
    %v1931 = vsel %vm254, %v1020, 0.0
    %v1932 = vadd.f32 %v1930, %v1931
    %v1933 = vsel %vm254, %v1025, 0.0
    %v1934 = vadd.f32 %v1932, %v1933
    %v1935 = vsel %vm254, %v1030, 0.0
    %v1936 = vadd.f32 %v1934, %v1935
    %v1937 = vsel %vm254, %v1035, 0.0
    %v1938 = vadd.f32 %v1936, %v1937
    %v1939 = vsel %vm254, %v1040, 0.0
    %v1940 = vadd.f32 %v1938, %v1939
    %v1941 = vsel %vm254, %v1045, 0.0
    %v1942 = vadd.f32 %v1940, %v1941
    %v1943 = vsel %vm254, %v1050, 0.0
    %v1944 = vadd.f32 %v1942, %v1943
    %v1945 = vsel %vm254, %v1055, 0.0
    %v1946 = vadd.f32 %v1944, %v1945
    %v1947 = vsel %vm254, %v1060, 0.0
    %v1948 = vadd.f32 %v1946, %v1947
    %v1949 = vsel %vm254, %v1065, 0.0
    %v1950 = vadd.f32 %v1948, %v1949
    %v1951 = vsel %vm254, %v1070, 0.0
    %v1952 = vadd.f32 %v1950, %v1951
    %v1953 = vsel %vm254, %v1075, 0.0
    %v1954 = vadd.f32 %v1952, %v1953
    %v1955 = vsel %vm254, %v1080, 0.0
    %v1956 = vadd.f32 %v1954, %v1955
    %v1957 = vsel %vm254, %v1085, 0.0
    %v1958 = vadd.f32 %v1956, %v1957
    %v1959 = vsel %vm254, %v1090, 0.0
    %v1960 = vadd.f32 %v1958, %v1959
    %v1961 = vsel %vm254, %v1095, 0.0
    %v1962 = vadd.f32 %v1960, %v1961
    %v1963 = vsel %vm254, %v1100, 0.0
    %v1964 = vadd.f32 %v1962, %v1963
    %v1965 = vsel %vm254, %v1105, 0.0
    %v1966 = vadd.f32 %v1964, %v1965
    %v1967 = vsel %vm254, %v1110, 0.0
    %v1968 = vadd.f32 %v1966, %v1967
    %v1969 = vsel %vm254, %v1115, 0.0
    %v1970 = vadd.f32 %v1968, %v1969
    %v1971 = vsel %vm254, %v1120, 0.0
    %v1972 = vadd.f32 %v1970, %v1971
    %v1973 = vsel %vm254, %v1125, 0.0
    %v1974 = vadd.f32 %v1972, %v1973
    %v1975 = vsel %vm254, %v1130, 0.0
    %v1976 = vadd.f32 %v1974, %v1975
    %v1977 = vsel %vm254, %v1135, 0.0
    %v1978 = vadd.f32 %v1976, %v1977
    %v1979 = vsel %vm254, %v1140, 0.0
    %v1980 = vadd.f32 %v1978, %v1979
    %v1981 = vsel %vm254, %v1145, 0.0
    %v1982 = vadd.f32 %v1980, %v1981
    %v1983 = vsel %vm254, %v1150, 0.0
    %v1984 = vadd.f32 %v1982, %v1983
    %v1985 = vsel %vm254, %v1155, 0.0
    %v1986 = vadd.f32 %v1984, %v1985
    %v1987 = vsel %vm254, %v1160, 0.0
    %v1988 = vadd.f32 %v1986, %v1987
    %v1989 = vsel %vm254, %v1165, 0.0
    %v1990 = vadd.f32 %v1988, %v1989
    %v1991 = vsel %vm254, %v1170, 0.0
    %v1992 = vadd.f32 %v1990, %v1991
    %v1993 = vsel %vm254, %v1175, 0.0
    %v1994 = vadd.f32 %v1992, %v1993
    %v1995 = vsel %vm254, %v1180, 0.0
    %v1996 = vadd.f32 %v1994, %v1995
    %v1997 = vsel %vm254, %v1185, 0.0
    %v1998 = vadd.f32 %v1996, %v1997
    %v1999 = vsel %vm254, %v1190, 0.0
    %v2000 = vadd.f32 %v1998, %v1999
    %v2001 = vsel %vm254, %v1195, 0.0
    %v2002 = vadd.f32 %v2000, %v2001
    %v2003 = vsel %vm254, %v1200, 0.0
    %v2004 = vadd.f32 %v2002, %v2003
    %v2005 = vsel %vm254, %v1205, 0.0
    %v2006 = vadd.f32 %v2004, %v2005
    %v2007 = vsel %vm254, %v1210, 0.0
    %v2008 = vadd.f32 %v2006, %v2007
    %v2009 = vsel %vm254, %v1215, 0.0
    %v2010 = vadd.f32 %v2008, %v2009
    %v2011 = vsel %vm254, %v1220, 0.0
    %v2012 = vadd.f32 %v2010, %v2011
    %v2013 = vsel %vm254, %v1225, 0.0
    %v2014 = vadd.f32 %v2012, %v2013
    %v2015 = vsel %vm254, %v1230, 0.0
    %v2016 = vadd.f32 %v2014, %v2015
    %v2017 = vsel %vm254, %v1235, 0.0
    %v2018 = vadd.f32 %v2016, %v2017
    %v2019 = vsel %vm254, %v1240, 0.0
    %v2020 = vadd.f32 %v2018, %v2019
    %v2021 = vsel %vm254, %v1245, 0.0
    %v2022 = vadd.f32 %v2020, %v2021
    %v2023 = vsel %vm254, %v1250, 0.0
    %v2024 = vadd.f32 %v2022, %v2023
    %v2025 = vsel %vm254, %v1255, 0.0
    %v2026 = vadd.f32 %v2024, %v2025
    %v2027 = vsel %vm254, %v1260, 0.0
    %v2028 = vadd.f32 %v2026, %v2027
    %v2029 = vsel %vm254, %v1265, 0.0
    %v2030 = vadd.f32 %v2028, %v2029
    %v2031 = vsel %vm254, %v1270, 0.0
    %v2032 = vadd.f32 %v2030, %v2031
    %v2033 = vsel %vm254, %v1275, 0.0
    %v2034 = vadd.f32 %v2032, %v2033
    %v2035 = vsel %vm254, %v1280, 0.0
    %v2036 = vadd.f32 %v2034, %v2035
    %v2037 = vsel %vm254, %v1285, 0.0
    %v2038 = vadd.f32 %v2036, %v2037
    %v2039 = vsel %vm254, %v1290, 0.0
    %v2040 = vadd.f32 %v2038, %v2039
    %v2041 = vsel %vm254, %v1295, 0.0
    %v2042 = vadd.f32 %v2040, %v2041
    %v2043 = vsel %vm254, %v1300, 0.0
    %v2044 = vadd.f32 %v2042, %v2043
    %v2045 = vsel %vm254, %v1305, 0.0
    %v2046 = vadd.f32 %v2044, %v2045
    %v2047 = vsel %vm254, %v1310, 0.0
    %v2048 = vadd.f32 %v2046, %v2047
    %v2049 = vsel %vm254, %v1315, 0.0
    %v2050 = vadd.f32 %v2048, %v2049
    %v2051 = vsel %vm254, %v1320, 0.0
    %v2052 = vadd.f32 %v2050, %v2051
    %v2053 = vsel %vm254, %v1325, 0.0
    %v2054 = vadd.f32 %v2052, %v2053
    %v2055 = vsel %vm254, %v1330, 0.0
    %v2056 = vadd.f32 %v2054, %v2055
    %v2057 = vsel %vm254, %v1335, 0.0
    %v2058 = vadd.f32 %v2056, %v2057
    %v2059 = vsel %vm254, %v1340, 0.0
    %v2060 = vadd.f32 %v2058, %v2059
    %v2061 = vsel %vm254, %v1345, 0.0
    %v2062 = vadd.f32 %v2060, %v2061
    %v2063 = vsel %vm254, %v1350, 0.0
    %v2064 = vadd.f32 %v2062, %v2063
    %v2065 = vsel %vm254, %v1355, 0.0
    %v2066 = vadd.f32 %v2064, %v2065
    %v2067 = vsel %vm254, %v1360, 0.0
    %v2068 = vadd.f32 %v2066, %v2067
    %v2069 = vsel %vm254, %v1365, 0.0
    %v2070 = vadd.f32 %v2068, %v2069
    %v2071 = vsel %vm254, %v1370, 0.0
    %v2072 = vadd.f32 %v2070, %v2071
    %v2073 = vsel %vm254, %v1375, 0.0
    %v2074 = vadd.f32 %v2072, %v2073
    %v2075 = vsel %vm254, %v1380, 0.0
    %v2076 = vadd.f32 %v2074, %v2075
    %v2077 = vsel %vm254, %v1385, 0.0
    %v2078 = vadd.f32 %v2076, %v2077
    %v2079 = vsel %vm254, %v1390, 0.0
    %v2080 = vadd.f32 %v2078, %v2079
    %v2081 = vsel %vm254, %v1395, 0.0
    %v2082 = vadd.f32 %v2080, %v2081
    %v2083 = vsel %vm254, %v1400, 0.0
    %v2084 = vadd.f32 %v2082, %v2083
    %v2085 = vsel %vm254, %v1405, 0.0
    %v2086 = vadd.f32 %v2084, %v2085
    %v2087 = vsel %vm254, %v1410, 0.0
    %v2088 = vadd.f32 %v2086, %v2087
    %v2089 = vsel %vm254, %v1415, 0.0
    %v2090 = vadd.f32 %v2088, %v2089
    %v2091 = vsel %vm254, %v1420, 0.0
    %v2092 = vadd.f32 %v2090, %v2091
    %v2093 = vsel %vm254, %v1425, 0.0
    %v2094 = vadd.f32 %v2092, %v2093
    %v2095 = vsel %vm254, %v1430, 0.0
    %v2096 = vadd.f32 %v2094, %v2095
    %v2097 = vsel %vm254, %v1435, 0.0
    %v2098 = vadd.f32 %v2096, %v2097
    %v2099 = vsel %vm254, %v1440, 0.0
    %v2100 = vadd.f32 %v2098, %v2099
    %v2101 = vsel %vm254, %v1445, 0.0
    %v2102 = vadd.f32 %v2100, %v2101
    %v2103 = vsel %vm254, %v1450, 0.0
    %v2104 = vadd.f32 %v2102, %v2103
    %v2105 = vsel %vm254, %v1455, 0.0
    %v2106 = vadd.f32 %v2104, %v2105
    %v2107 = vsel %vm254, %v1460, 0.0
    %v2108 = vadd.f32 %v2106, %v2107
    %v2109 = vsel %vm254, %v1465, 0.0
    %v2110 = vadd.f32 %v2108, %v2109
    %v2111 = vsel %vm254, %v1470, 0.0
    %v2112 = vadd.f32 %v2110, %v2111
    %v2113 = vsel %vm254, %v1475, 0.0
    %v2114 = vadd.f32 %v2112, %v2113
    %v2115 = vsel %vm254, %v1480, 0.0
    %v2116 = vadd.f32 %v2114, %v2115
    %v2117 = vsel %vm254, %v1485, 0.0
    %v2118 = vadd.f32 %v2116, %v2117
    %v2119 = vsel %vm254, %v1490, 0.0
    %v2120 = vadd.f32 %v2118, %v2119
    %v2121 = vsel %vm254, %v1495, 0.0
    %v2122 = vadd.f32 %v2120, %v2121
    %v2123 = vsel %vm254, %v1500, 0.0
    %v2124 = vadd.f32 %v2122, %v2123
    %v2125 = vsel %vm254, %v1505, 0.0
    %v2126 = vadd.f32 %v2124, %v2125
    %v2127 = vsel %vm254, %v1510, 0.0
    %v2128 = vadd.f32 %v2126, %v2127
    %v2129 = vsel %vm254, %v1515, 0.0
    %v2130 = vadd.f32 %v2128, %v2129
    %v2131 = vsel %vm254, %v1520, 0.0
    %v2132 = vadd.f32 %v2130, %v2131
    %v2133 = vsel %vm254, %v1525, 0.0
    %v2134 = vadd.f32 %v2132, %v2133
    %v2135 = vsel %vm254, %v1530, 0.0
    %v2136 = vadd.f32 %v2134, %v2135
    %v2137 = vsel %vm254, %v1535, 0.0
    %v2138 = vadd.f32 %v2136, %v2137
    %v2139 = vsel %vm254, %v1540, 0.0
    %v2140 = vadd.f32 %v2138, %v2139
    %v2141 = vsel %vm254, %v1545, 0.0
    %v2142 = vadd.f32 %v2140, %v2141
    %v2143 = vsel %vm254, %v1550, 0.0
    %v2144 = vadd.f32 %v2142, %v2143
    %v2145 = vsel %vm254, %v1555, 0.0
    %v2146 = vadd.f32 %v2144, %v2145
    %v2147 = vsel %vm254, %v1560, 0.0
    %v2148 = vadd.f32 %v2146, %v2147
    %v2149 = vsel %vm254, %v1565, 0.0
    %v2150 = vadd.f32 %v2148, %v2149
    %v2151 = vsel %vm254, %v1570, 0.0
    %v2152 = vadd.f32 %v2150, %v2151
    %v2153 = vsel %vm254, %v1575, 0.0
    %v2154 = vadd.f32 %v2152, %v2153
    %v2155 = vsel %vm254, %v1580, 0.0
    %v2156 = vadd.f32 %v2154, %v2155
    %v2157 = vsel %vm254, %v1585, 0.0
    %v2158 = vadd.f32 %v2156, %v2157
    %v2159 = vsel %vm254, %v1590, 0.0
    %v2160 = vadd.f32 %v2158, %v2159
    %v2161 = vsel %vm254, %v1595, 0.0
    %v2162 = vadd.f32 %v2160, %v2161
    %v2163 = vsel %vm254, %v1600, 0.0
    %v2164 = vadd.f32 %v2162, %v2163
    %v2165 = vsel %vm254, %v1605, 0.0
    %v2166 = vadd.f32 %v2164, %v2165
    %v2167 = vsel %vm254, %v1610, 0.0
    %v2168 = vadd.f32 %v2166, %v2167
    %v2169 = vsel %vm254, %v1615, 0.0
    %v2170 = vadd.f32 %v2168, %v2169
    %v2171 = vsel %vm254, %v1620, 0.0
    %v2172 = vadd.f32 %v2170, %v2171
    %v2173 = vsel %vm254, %v1625, 0.0
    %v2174 = vadd.f32 %v2172, %v2173
    %v2175 = vsel %vm254, %v1630, 0.0
    %v2176 = vadd.f32 %v2174, %v2175
    %v2177 = vsel %vm254, %v1635, 0.0
    %v2178 = vadd.f32 %v2176, %v2177
    %v2179 = vsel %vm254, %v1640, 0.0
    %v2180 = vadd.f32 %v2178, %v2179
    %v2181 = vsel %vm254, %v1645, 0.0
    %v2182 = vadd.f32 %v2180, %v2181
    %v2183 = vsel %vm254, %v1650, 0.0
    %v2184 = vadd.f32 %v2182, %v2183
    %v2185 = vsel %vm254, %v1655, 0.0
    %v2186 = vadd.f32 %v2184, %v2185
    %v2187 = vsel %vm254, %v1660, 0.0
    %v2188 = vadd.f32 %v2186, %v2187
    %v2189 = vsel %vm254, %v1665, 0.0
    %v2190 = vadd.f32 %v2188, %v2189
    %v2191 = vsel %vm254, %v1670, 0.0
    %v2192 = vadd.f32 %v2190, %v2191
    %v2193 = vsel %vm254, %v1675, 0.0
    %v2194 = vadd.f32 %v2192, %v2193
    %v2195 = vsel %vm254, %v1680, 0.0
    %v2196 = vadd.f32 %v2194, %v2195
    %v2197 = vsel %vm254, %v1685, 0.0
    %v2198 = vadd.f32 %v2196, %v2197
    %v2199 = vsel %vm254, %v1690, 0.0
    %v2200 = vadd.f32 %v2198, %v2199
    %v2201 = vsel %vm254, %v1695, 0.0
    %v2202 = vadd.f32 %v2200, %v2201
    %v2203 = vsel %vm254, %v1700, 0.0
    %v2204 = vadd.f32 %v2202, %v2203
    %v2205 = vsel %vm254, %v1705, 0.0
    %v2206 = vadd.f32 %v2204, %v2205
    %v2207 = vsel %vm254, %v1710, 0.0
    %v2208 = vadd.f32 %v2206, %v2207
    %v2209 = vsel %vm254, %v1715, 0.0
    %v2210 = vadd.f32 %v2208, %v2209
    %v2211 = vsel %vm254, %v1720, 0.0
    %v2212 = vadd.f32 %v2210, %v2211
    %v2213 = vsel %vm254, %v1725, 0.0
    %v2214 = vadd.f32 %v2212, %v2213
    %v2215 = vsel %vm254, %v1730, 0.0
    %v2216 = vadd.f32 %v2214, %v2215
    %v2217 = vsel %vm254, %v1735, 0.0
    %v2218 = vadd.f32 %v2216, %v2217
    %v2219 = vsel %vm254, %v1740, 0.0
    %v2220 = vadd.f32 %v2218, %v2219
    %v2221 = vsel %vm254, %v1745, 0.0
    %v2222 = vadd.f32 %v2220, %v2221
    %v2223 = vsel %vm254, %v1750, 0.0
    %v2224 = vadd.f32 %v2222, %v2223
    %v2225 = vsel %vm254, %v1755, 0.0
    %v2226 = vadd.f32 %v2224, %v2225
    %v2227 = vsel %vm254, %v1760, 0.0
    %v2228 = vadd.f32 %v2226, %v2227
    %v2229 = vsel %vm254, %v1765, 0.0
    %v2230 = vadd.f32 %v2228, %v2229
    %v2231 = vsel %vm254, %v1770, 0.0
    %v2232 = vadd.f32 %v2230, %v2231
    %v2233 = vsel %vm254, %v1775, 0.0
    %v2234 = vadd.f32 %v2232, %v2233
    %v2235 = vsel %vm254, %v1780, 0.0
    %v2236 = vadd.f32 %v2234, %v2235
    %v2237 = vsel %vm254, %v1785, 0.0
    %v2238 = vadd.f32 %v2236, %v2237
    %v2239 = vsel %vm254, %v1790, 0.0
    %v2240 = vadd.f32 %v2238, %v2239
    %v2241 = vsel %vm254, %v1795, 0.0
    %v2242 = vadd.f32 %v2240, %v2241
    %v2243 = vsel %vm254, %v1800, 0.0
    %v2244 = vadd.f32 %v2242, %v2243
    %v2245 = vsel %vm254, %v1805, 0.0
    %v2246 = vadd.f32 %v2244, %v2245
    %v2247 = vsel %vm254, %v1810, 0.0
    %v2248 = vadd.f32 %v2246, %v2247
    %v2249 = vsel %vm254, %v1815, 0.0
    %v2250 = vadd.f32 %v2248, %v2249
    %v2251 = vsel %vm254, %v1820, 0.0
    %v2252 = vadd.f32 %v2250, %v2251
    %v2253 = vsel %vm254, %v1825, 0.0
    %v2254 = vadd.f32 %v2252, %v2253
    %v2255 = vsel %vm254, %v1830, 0.0
    %v2256 = vadd.f32 %v2254, %v2255
    %v2257 = vsel %vm254, %v1835, 0.0
    %v2258 = vadd.f32 %v2256, %v2257
    %v2259 = vsel %vm254, %v1840, 0.0
    %v2260 = vadd.f32 %v2258, %v2259
    %v2261 = vsel %vm254, %v1845, 0.0
    %v2262 = vadd.f32 %v2260, %v2261
    %v2263 = vsel %vm254, %v1850, 0.0
    %v2264 = vadd.f32 %v2262, %v2263
    %v2265 = vsel %vm254, %v1855, 0.0
    %v2266 = vadd.f32 %v2264, %v2265
    %v2267 = vsel %vm254, %v1860, 0.0
    %v2268 = vadd.f32 %v2266, %v2267
    %v2269 = vsel %vm254, %v1865, 0.0
    %v2270 = vadd.f32 %v2268, %v2269
    %v2271 = vsel %vm254, %v1870, 0.0
    %v2272 = vadd.f32 %v2270, %v2271
    %v2273 = vsel %vm254, %v1875, 0.0
    %v2274 = vadd.f32 %v2272, %v2273
    %v2275 = vsel %vm254, %v1880, 0.0
    %v2276 = vadd.f32 %v2274, %v2275
    %v2277 = vsel %vm254, %v1885, 0.0
    %v2278 = vadd.f32 %v2276, %v2277
    %v2279 = vrot.slane %v2278, 4
    %v2280 = vadd.f32 %v2278, %v2279
    %v2281 = vrot.slane %v2280, 2
    %v2282 = vadd.f32 %v2280, %v2281
    %v2283 = vrot.slane %v2282, 1
    %v2284 = vadd.f32 %v2282, %v2283
    %v2285 = vmul.f32 %v910, %v910
    %v2286 = vmul.f32 %v915, %v915
    %v2287 = vmul.f32 %v920, %v920
    %v2288 = vmul.f32 %v925, %v925
    %v2289 = vmul.f32 %v930, %v930
    %v2290 = vmul.f32 %v935, %v935
    %v2291 = vmul.f32 %v940, %v940
    %v2292 = vmul.f32 %v945, %v945
    %v2293 = vmul.f32 %v950, %v950
    %v2294 = vmul.f32 %v955, %v955
    %v2295 = vmul.f32 %v960, %v960
    %v2296 = vmul.f32 %v965, %v965
    %v2297 = vmul.f32 %v970, %v970
    %v2298 = vmul.f32 %v975, %v975
    %v2299 = vmul.f32 %v980, %v980
    %v2300 = vmul.f32 %v985, %v985
    %v2301 = vmul.f32 %v990, %v990
    %v2302 = vmul.f32 %v995, %v995
    %v2303 = vmul.f32 %v1000, %v1000
    %v2304 = vmul.f32 %v1005, %v1005
    %v2305 = vmul.f32 %v1010, %v1010
    %v2306 = vmul.f32 %v1015, %v1015
    %v2307 = vmul.f32 %v1020, %v1020
    %v2308 = vmul.f32 %v1025, %v1025
    %v2309 = vmul.f32 %v1030, %v1030
    %v2310 = vmul.f32 %v1035, %v1035
    %v2311 = vmul.f32 %v1040, %v1040
    %v2312 = vmul.f32 %v1045, %v1045
    %v2313 = vmul.f32 %v1050, %v1050
    %v2314 = vmul.f32 %v1055, %v1055
    %v2315 = vmul.f32 %v1060, %v1060
    %v2316 = vmul.f32 %v1065, %v1065
    %v2317 = vmul.f32 %v1070, %v1070
    %v2318 = vmul.f32 %v1075, %v1075
    %v2319 = vmul.f32 %v1080, %v1080
    %v2320 = vmul.f32 %v1085, %v1085
    %v2321 = vmul.f32 %v1090, %v1090
    %v2322 = vmul.f32 %v1095, %v1095
    %v2323 = vmul.f32 %v1100, %v1100
    %v2324 = vmul.f32 %v1105, %v1105
    %v2325 = vmul.f32 %v1110, %v1110
    %v2326 = vmul.f32 %v1115, %v1115
    %v2327 = vmul.f32 %v1120, %v1120
    %v2328 = vmul.f32 %v1125, %v1125
    %v2329 = vmul.f32 %v1130, %v1130
    %v2330 = vmul.f32 %v1135, %v1135
    %v2331 = vmul.f32 %v1140, %v1140
    %v2332 = vmul.f32 %v1145, %v1145
    %v2333 = vmul.f32 %v1150, %v1150
    %v2334 = vmul.f32 %v1155, %v1155
    %v2335 = vmul.f32 %v1160, %v1160
    %v2336 = vmul.f32 %v1165, %v1165
    %v2337 = vmul.f32 %v1170, %v1170
    %v2338 = vmul.f32 %v1175, %v1175
    %v2339 = vmul.f32 %v1180, %v1180
    %v2340 = vmul.f32 %v1185, %v1185
    %v2341 = vmul.f32 %v1190, %v1190
    %v2342 = vmul.f32 %v1195, %v1195
    %v2343 = vmul.f32 %v1200, %v1200
    %v2344 = vmul.f32 %v1205, %v1205
    %v2345 = vmul.f32 %v1210, %v1210
    %v2346 = vmul.f32 %v1215, %v1215
    %v2347 = vmul.f32 %v1220, %v1220
    %v2348 = vmul.f32 %v1225, %v1225
    %v2349 = vmul.f32 %v1230, %v1230
    %v2350 = vmul.f32 %v1235, %v1235
    %v2351 = vmul.f32 %v1240, %v1240
    %v2352 = vmul.f32 %v1245, %v1245
    %v2353 = vmul.f32 %v1250, %v1250
    %v2354 = vmul.f32 %v1255, %v1255
    %v2355 = vmul.f32 %v1260, %v1260
    %v2356 = vmul.f32 %v1265, %v1265
    %v2357 = vmul.f32 %v1270, %v1270
    %v2358 = vmul.f32 %v1275, %v1275
    %v2359 = vmul.f32 %v1280, %v1280
    %v2360 = vmul.f32 %v1285, %v1285
    %v2361 = vmul.f32 %v1290, %v1290
    %v2362 = vmul.f32 %v1295, %v1295
    %v2363 = vmul.f32 %v1300, %v1300
    %v2364 = vmul.f32 %v1305, %v1305
    %v2365 = vmul.f32 %v1310, %v1310
    %v2366 = vmul.f32 %v1315, %v1315
    %v2367 = vmul.f32 %v1320, %v1320
    %v2368 = vmul.f32 %v1325, %v1325
    %v2369 = vmul.f32 %v1330, %v1330
    %v2370 = vmul.f32 %v1335, %v1335
    %v2371 = vmul.f32 %v1340, %v1340
    %v2372 = vmul.f32 %v1345, %v1345
    %v2373 = vmul.f32 %v1350, %v1350
    %v2374 = vmul.f32 %v1355, %v1355
    %v2375 = vmul.f32 %v1360, %v1360
    %v2376 = vmul.f32 %v1365, %v1365
    %v2377 = vmul.f32 %v1370, %v1370
    %v2378 = vmul.f32 %v1375, %v1375
    %v2379 = vmul.f32 %v1380, %v1380
    %v2380 = vmul.f32 %v1385, %v1385
    %v2381 = vmul.f32 %v1390, %v1390
    %v2382 = vmul.f32 %v1395, %v1395
    %v2383 = vmul.f32 %v1400, %v1400
    %v2384 = vmul.f32 %v1405, %v1405
    %v2385 = vmul.f32 %v1410, %v1410
    %v2386 = vmul.f32 %v1415, %v1415
    %v2387 = vmul.f32 %v1420, %v1420
    %v2388 = vmul.f32 %v1425, %v1425
    %v2389 = vmul.f32 %v1430, %v1430
    %v2390 = vmul.f32 %v1435, %v1435
    %v2391 = vmul.f32 %v1440, %v1440
    %v2392 = vmul.f32 %v1445, %v1445
    %v2393 = vmul.f32 %v1450, %v1450
    %v2394 = vmul.f32 %v1455, %v1455
    %v2395 = vmul.f32 %v1460, %v1460
    %v2396 = vmul.f32 %v1465, %v1465
    %v2397 = vmul.f32 %v1470, %v1470
    %v2398 = vmul.f32 %v1475, %v1475
    %v2399 = vmul.f32 %v1480, %v1480
    %v2400 = vmul.f32 %v1485, %v1485
    %v2401 = vmul.f32 %v1490, %v1490
    %v2402 = vmul.f32 %v1495, %v1495
    %v2403 = vmul.f32 %v1500, %v1500
    %v2404 = vmul.f32 %v1505, %v1505
    %v2405 = vmul.f32 %v1510, %v1510
    %v2406 = vmul.f32 %v1515, %v1515
    %v2407 = vmul.f32 %v1520, %v1520
    %v2408 = vmul.f32 %v1525, %v1525
    %v2409 = vmul.f32 %v1530, %v1530
    %v2410 = vmul.f32 %v1535, %v1535
    %v2411 = vmul.f32 %v1540, %v1540
    %v2412 = vmul.f32 %v1545, %v1545
    %v2413 = vmul.f32 %v1550, %v1550
    %v2414 = vmul.f32 %v1555, %v1555
    %v2415 = vmul.f32 %v1560, %v1560
    %v2416 = vmul.f32 %v1565, %v1565
    %v2417 = vmul.f32 %v1570, %v1570
    %v2418 = vmul.f32 %v1575, %v1575
    %v2419 = vmul.f32 %v1580, %v1580
    %v2420 = vmul.f32 %v1585, %v1585
    %v2421 = vmul.f32 %v1590, %v1590
    %v2422 = vmul.f32 %v1595, %v1595
    %v2423 = vmul.f32 %v1600, %v1600
    %v2424 = vmul.f32 %v1605, %v1605
    %v2425 = vmul.f32 %v1610, %v1610
    %v2426 = vmul.f32 %v1615, %v1615
    %v2427 = vmul.f32 %v1620, %v1620
    %v2428 = vmul.f32 %v1625, %v1625
    %v2429 = vmul.f32 %v1630, %v1630
    %v2430 = vmul.f32 %v1635, %v1635
    %v2431 = vmul.f32 %v1640, %v1640
    %v2432 = vmul.f32 %v1645, %v1645
    %v2433 = vmul.f32 %v1650, %v1650
    %v2434 = vmul.f32 %v1655, %v1655
    %v2435 = vmul.f32 %v1660, %v1660
    %v2436 = vmul.f32 %v1665, %v1665
    %v2437 = vmul.f32 %v1670, %v1670
    %v2438 = vmul.f32 %v1675, %v1675
    %v2439 = vmul.f32 %v1680, %v1680
    %v2440 = vmul.f32 %v1685, %v1685
    %v2441 = vmul.f32 %v1690, %v1690
    %v2442 = vmul.f32 %v1695, %v1695
    %v2443 = vmul.f32 %v1700, %v1700
    %v2444 = vmul.f32 %v1705, %v1705
    %v2445 = vmul.f32 %v1710, %v1710
    %v2446 = vmul.f32 %v1715, %v1715
    %v2447 = vmul.f32 %v1720, %v1720
    %v2448 = vmul.f32 %v1725, %v1725
    %v2449 = vmul.f32 %v1730, %v1730
    %v2450 = vmul.f32 %v1735, %v1735
    %v2451 = vmul.f32 %v1740, %v1740
    %v2452 = vmul.f32 %v1745, %v1745
    %v2453 = vmul.f32 %v1750, %v1750
    %v2454 = vmul.f32 %v1755, %v1755
    %v2455 = vmul.f32 %v1760, %v1760
    %v2456 = vmul.f32 %v1765, %v1765
    %v2457 = vmul.f32 %v1770, %v1770
    %v2458 = vmul.f32 %v1775, %v1775
    %v2459 = vmul.f32 %v1780, %v1780
    %v2460 = vmul.f32 %v1785, %v1785
    %v2461 = vmul.f32 %v1790, %v1790
    %v2462 = vmul.f32 %v1795, %v1795
    %v2463 = vmul.f32 %v1800, %v1800
    %v2464 = vmul.f32 %v1805, %v1805
    %v2465 = vmul.f32 %v1810, %v1810
    %v2466 = vmul.f32 %v1815, %v1815
    %v2467 = vmul.f32 %v1820, %v1820
    %v2468 = vmul.f32 %v1825, %v1825
    %v2469 = vmul.f32 %v1830, %v1830
    %v2470 = vmul.f32 %v1835, %v1835
    %v2471 = vmul.f32 %v1840, %v1840
    %v2472 = vmul.f32 %v1845, %v1845
    %v2473 = vmul.f32 %v1850, %v1850
    %v2474 = vmul.f32 %v1855, %v1855
    %v2475 = vmul.f32 %v1860, %v1860
    %v2476 = vmul.f32 %v1865, %v1865
    %v2477 = vmul.f32 %v1870, %v1870
    %v2478 = vmul.f32 %v1875, %v1875
    %v2479 = vmul.f32 %v1880, %v1880
    %v2480 = vmul.f32 %v1885, %v1885
    %v2481 = vsel %vm254, %v2285, 0.0
    %v2482 = vsel %vm254, %v2286, 0.0
    %v2483 = vadd.f32 %v2481, %v2482
    %v2484 = vsel %vm254, %v2287, 0.0
    %v2485 = vadd.f32 %v2483, %v2484
    %v2486 = vsel %vm254, %v2288, 0.0
    %v2487 = vadd.f32 %v2485, %v2486
    %v2488 = vsel %vm254, %v2289, 0.0
    %v2489 = vadd.f32 %v2487, %v2488
    %v2490 = vsel %vm254, %v2290, 0.0
    %v2491 = vadd.f32 %v2489, %v2490
    %v2492 = vsel %vm254, %v2291, 0.0
    %v2493 = vadd.f32 %v2491, %v2492
    %v2494 = vsel %vm254, %v2292, 0.0
    %v2495 = vadd.f32 %v2493, %v2494
    %v2496 = vsel %vm254, %v2293, 0.0
    %v2497 = vadd.f32 %v2495, %v2496
    %v2498 = vsel %vm254, %v2294, 0.0
    %v2499 = vadd.f32 %v2497, %v2498
    %v2500 = vsel %vm254, %v2295, 0.0
    %v2501 = vadd.f32 %v2499, %v2500
    %v2502 = vsel %vm254, %v2296, 0.0
    %v2503 = vadd.f32 %v2501, %v2502
    %v2504 = vsel %vm254, %v2297, 0.0
    %v2505 = vadd.f32 %v2503, %v2504
    %v2506 = vsel %vm254, %v2298, 0.0
    %v2507 = vadd.f32 %v2505, %v2506
    %v2508 = vsel %vm254, %v2299, 0.0
    %v2509 = vadd.f32 %v2507, %v2508
    %v2510 = vsel %vm254, %v2300, 0.0
    %v2511 = vadd.f32 %v2509, %v2510
    %v2512 = vsel %vm254, %v2301, 0.0
    %v2513 = vadd.f32 %v2511, %v2512
    %v2514 = vsel %vm254, %v2302, 0.0
    %v2515 = vadd.f32 %v2513, %v2514
    %v2516 = vsel %vm254, %v2303, 0.0
    %v2517 = vadd.f32 %v2515, %v2516
    %v2518 = vsel %vm254, %v2304, 0.0
    %v2519 = vadd.f32 %v2517, %v2518
    %v2520 = vsel %vm254, %v2305, 0.0
    %v2521 = vadd.f32 %v2519, %v2520
    %v2522 = vsel %vm254, %v2306, 0.0
    %v2523 = vadd.f32 %v2521, %v2522
    %v2524 = vsel %vm254, %v2307, 0.0
    %v2525 = vadd.f32 %v2523, %v2524
    %v2526 = vsel %vm254, %v2308, 0.0
    %v2527 = vadd.f32 %v2525, %v2526
    %v2528 = vsel %vm254, %v2309, 0.0
    %v2529 = vadd.f32 %v2527, %v2528
    %v2530 = vsel %vm254, %v2310, 0.0
    %v2531 = vadd.f32 %v2529, %v2530
    %v2532 = vsel %vm254, %v2311, 0.0
    %v2533 = vadd.f32 %v2531, %v2532
    %v2534 = vsel %vm254, %v2312, 0.0
    %v2535 = vadd.f32 %v2533, %v2534
    %v2536 = vsel %vm254, %v2313, 0.0
    %v2537 = vadd.f32 %v2535, %v2536
    %v2538 = vsel %vm254, %v2314, 0.0
    %v2539 = vadd.f32 %v2537, %v2538
    %v2540 = vsel %vm254, %v2315, 0.0
    %v2541 = vadd.f32 %v2539, %v2540
    %v2542 = vsel %vm254, %v2316, 0.0
    %v2543 = vadd.f32 %v2541, %v2542
    %v2544 = vsel %vm254, %v2317, 0.0
    %v2545 = vadd.f32 %v2543, %v2544
    %v2546 = vsel %vm254, %v2318, 0.0
    %v2547 = vadd.f32 %v2545, %v2546
    %v2548 = vsel %vm254, %v2319, 0.0
    %v2549 = vadd.f32 %v2547, %v2548
    %v2550 = vsel %vm254, %v2320, 0.0
    %v2551 = vadd.f32 %v2549, %v2550
    %v2552 = vsel %vm254, %v2321, 0.0
    %v2553 = vadd.f32 %v2551, %v2552
    %v2554 = vsel %vm254, %v2322, 0.0
    %v2555 = vadd.f32 %v2553, %v2554
    %v2556 = vsel %vm254, %v2323, 0.0
    %v2557 = vadd.f32 %v2555, %v2556
    %v2558 = vsel %vm254, %v2324, 0.0
    %v2559 = vadd.f32 %v2557, %v2558
    %v2560 = vsel %vm254, %v2325, 0.0
    %v2561 = vadd.f32 %v2559, %v2560
    %v2562 = vsel %vm254, %v2326, 0.0
    %v2563 = vadd.f32 %v2561, %v2562
    %v2564 = vsel %vm254, %v2327, 0.0
    %v2565 = vadd.f32 %v2563, %v2564
    %v2566 = vsel %vm254, %v2328, 0.0
    %v2567 = vadd.f32 %v2565, %v2566
    %v2568 = vsel %vm254, %v2329, 0.0
    %v2569 = vadd.f32 %v2567, %v2568
    %v2570 = vsel %vm254, %v2330, 0.0
    %v2571 = vadd.f32 %v2569, %v2570
    %v2572 = vsel %vm254, %v2331, 0.0
    %v2573 = vadd.f32 %v2571, %v2572
    %v2574 = vsel %vm254, %v2332, 0.0
    %v2575 = vadd.f32 %v2573, %v2574
    %v2576 = vsel %vm254, %v2333, 0.0
    %v2577 = vadd.f32 %v2575, %v2576
    %v2578 = vsel %vm254, %v2334, 0.0
    %v2579 = vadd.f32 %v2577, %v2578
    %v2580 = vsel %vm254, %v2335, 0.0
    %v2581 = vadd.f32 %v2579, %v2580
    %v2582 = vsel %vm254, %v2336, 0.0
    %v2583 = vadd.f32 %v2581, %v2582
    %v2584 = vsel %vm254, %v2337, 0.0
    %v2585 = vadd.f32 %v2583, %v2584
    %v2586 = vsel %vm254, %v2338, 0.0
    %v2587 = vadd.f32 %v2585, %v2586
    %v2588 = vsel %vm254, %v2339, 0.0
    %v2589 = vadd.f32 %v2587, %v2588
    %v2590 = vsel %vm254, %v2340, 0.0
    %v2591 = vadd.f32 %v2589, %v2590
    %v2592 = vsel %vm254, %v2341, 0.0
    %v2593 = vadd.f32 %v2591, %v2592
    %v2594 = vsel %vm254, %v2342, 0.0
    %v2595 = vadd.f32 %v2593, %v2594
    %v2596 = vsel %vm254, %v2343, 0.0
    %v2597 = vadd.f32 %v2595, %v2596
    %v2598 = vsel %vm254, %v2344, 0.0
    %v2599 = vadd.f32 %v2597, %v2598
    %v2600 = vsel %vm254, %v2345, 0.0
    %v2601 = vadd.f32 %v2599, %v2600
    %v2602 = vsel %vm254, %v2346, 0.0
    %v2603 = vadd.f32 %v2601, %v2602
    %v2604 = vsel %vm254, %v2347, 0.0
    %v2605 = vadd.f32 %v2603, %v2604
    %v2606 = vsel %vm254, %v2348, 0.0
    %v2607 = vadd.f32 %v2605, %v2606
    %v2608 = vsel %vm254, %v2349, 0.0
    %v2609 = vadd.f32 %v2607, %v2608
    %v2610 = vsel %vm254, %v2350, 0.0
    %v2611 = vadd.f32 %v2609, %v2610
    %v2612 = vsel %vm254, %v2351, 0.0
    %v2613 = vadd.f32 %v2611, %v2612
    %v2614 = vsel %vm254, %v2352, 0.0
    %v2615 = vadd.f32 %v2613, %v2614
    %v2616 = vsel %vm254, %v2353, 0.0
    %v2617 = vadd.f32 %v2615, %v2616
    %v2618 = vsel %vm254, %v2354, 0.0
    %v2619 = vadd.f32 %v2617, %v2618
    %v2620 = vsel %vm254, %v2355, 0.0
    %v2621 = vadd.f32 %v2619, %v2620
    %v2622 = vsel %vm254, %v2356, 0.0
    %v2623 = vadd.f32 %v2621, %v2622
    %v2624 = vsel %vm254, %v2357, 0.0
    %v2625 = vadd.f32 %v2623, %v2624
    %v2626 = vsel %vm254, %v2358, 0.0
    %v2627 = vadd.f32 %v2625, %v2626
    %v2628 = vsel %vm254, %v2359, 0.0
    %v2629 = vadd.f32 %v2627, %v2628
    %v2630 = vsel %vm254, %v2360, 0.0
    %v2631 = vadd.f32 %v2629, %v2630
    %v2632 = vsel %vm254, %v2361, 0.0
    %v2633 = vadd.f32 %v2631, %v2632
    %v2634 = vsel %vm254, %v2362, 0.0
    %v2635 = vadd.f32 %v2633, %v2634
    %v2636 = vsel %vm254, %v2363, 0.0
    %v2637 = vadd.f32 %v2635, %v2636
    %v2638 = vsel %vm254, %v2364, 0.0
    %v2639 = vadd.f32 %v2637, %v2638
    %v2640 = vsel %vm254, %v2365, 0.0
    %v2641 = vadd.f32 %v2639, %v2640
    %v2642 = vsel %vm254, %v2366, 0.0
    %v2643 = vadd.f32 %v2641, %v2642
    %v2644 = vsel %vm254, %v2367, 0.0
    %v2645 = vadd.f32 %v2643, %v2644
    %v2646 = vsel %vm254, %v2368, 0.0
    %v2647 = vadd.f32 %v2645, %v2646
    %v2648 = vsel %vm254, %v2369, 0.0
    %v2649 = vadd.f32 %v2647, %v2648
    %v2650 = vsel %vm254, %v2370, 0.0
    %v2651 = vadd.f32 %v2649, %v2650
    %v2652 = vsel %vm254, %v2371, 0.0
    %v2653 = vadd.f32 %v2651, %v2652
    %v2654 = vsel %vm254, %v2372, 0.0
    %v2655 = vadd.f32 %v2653, %v2654
    %v2656 = vsel %vm254, %v2373, 0.0
    %v2657 = vadd.f32 %v2655, %v2656
    %v2658 = vsel %vm254, %v2374, 0.0
    %v2659 = vadd.f32 %v2657, %v2658
    %v2660 = vsel %vm254, %v2375, 0.0
    %v2661 = vadd.f32 %v2659, %v2660
    %v2662 = vsel %vm254, %v2376, 0.0
    %v2663 = vadd.f32 %v2661, %v2662
    %v2664 = vsel %vm254, %v2377, 0.0
    %v2665 = vadd.f32 %v2663, %v2664
    %v2666 = vsel %vm254, %v2378, 0.0
    %v2667 = vadd.f32 %v2665, %v2666
    %v2668 = vsel %vm254, %v2379, 0.0
    %v2669 = vadd.f32 %v2667, %v2668
    %v2670 = vsel %vm254, %v2380, 0.0
    %v2671 = vadd.f32 %v2669, %v2670
    %v2672 = vsel %vm254, %v2381, 0.0
    %v2673 = vadd.f32 %v2671, %v2672
    %v2674 = vsel %vm254, %v2382, 0.0
    %v2675 = vadd.f32 %v2673, %v2674
    %v2676 = vsel %vm254, %v2383, 0.0
    %v2677 = vadd.f32 %v2675, %v2676
    %v2678 = vsel %vm254, %v2384, 0.0
    %v2679 = vadd.f32 %v2677, %v2678
    %v2680 = vsel %vm254, %v2385, 0.0
    %v2681 = vadd.f32 %v2679, %v2680
    %v2682 = vsel %vm254, %v2386, 0.0
    %v2683 = vadd.f32 %v2681, %v2682
    %v2684 = vsel %vm254, %v2387, 0.0
    %v2685 = vadd.f32 %v2683, %v2684
    %v2686 = vsel %vm254, %v2388, 0.0
    %v2687 = vadd.f32 %v2685, %v2686
    %v2688 = vsel %vm254, %v2389, 0.0
    %v2689 = vadd.f32 %v2687, %v2688
    %v2690 = vsel %vm254, %v2390, 0.0
    %v2691 = vadd.f32 %v2689, %v2690
    %v2692 = vsel %vm254, %v2391, 0.0
    %v2693 = vadd.f32 %v2691, %v2692
    %v2694 = vsel %vm254, %v2392, 0.0
    %v2695 = vadd.f32 %v2693, %v2694
    %v2696 = vsel %vm254, %v2393, 0.0
    %v2697 = vadd.f32 %v2695, %v2696
    %v2698 = vsel %vm254, %v2394, 0.0
    %v2699 = vadd.f32 %v2697, %v2698
    %v2700 = vsel %vm254, %v2395, 0.0
    %v2701 = vadd.f32 %v2699, %v2700
    %v2702 = vsel %vm254, %v2396, 0.0
    %v2703 = vadd.f32 %v2701, %v2702
    %v2704 = vsel %vm254, %v2397, 0.0
    %v2705 = vadd.f32 %v2703, %v2704
    %v2706 = vsel %vm254, %v2398, 0.0
    %v2707 = vadd.f32 %v2705, %v2706
    %v2708 = vsel %vm254, %v2399, 0.0
    %v2709 = vadd.f32 %v2707, %v2708
    %v2710 = vsel %vm254, %v2400, 0.0
    %v2711 = vadd.f32 %v2709, %v2710
    %v2712 = vsel %vm254, %v2401, 0.0
    %v2713 = vadd.f32 %v2711, %v2712
    %v2714 = vsel %vm254, %v2402, 0.0
    %v2715 = vadd.f32 %v2713, %v2714
    %v2716 = vsel %vm254, %v2403, 0.0
    %v2717 = vadd.f32 %v2715, %v2716
    %v2718 = vsel %vm254, %v2404, 0.0
    %v2719 = vadd.f32 %v2717, %v2718
    %v2720 = vsel %vm254, %v2405, 0.0
    %v2721 = vadd.f32 %v2719, %v2720
    %v2722 = vsel %vm254, %v2406, 0.0
    %v2723 = vadd.f32 %v2721, %v2722
    %v2724 = vsel %vm254, %v2407, 0.0
    %v2725 = vadd.f32 %v2723, %v2724
    %v2726 = vsel %vm254, %v2408, 0.0
    %v2727 = vadd.f32 %v2725, %v2726
    %v2728 = vsel %vm254, %v2409, 0.0
    %v2729 = vadd.f32 %v2727, %v2728
    %v2730 = vsel %vm254, %v2410, 0.0
    %v2731 = vadd.f32 %v2729, %v2730
    %v2732 = vsel %vm254, %v2411, 0.0
    %v2733 = vadd.f32 %v2731, %v2732
    %v2734 = vsel %vm254, %v2412, 0.0
    %v2735 = vadd.f32 %v2733, %v2734
    %v2736 = vsel %vm254, %v2413, 0.0
    %v2737 = vadd.f32 %v2735, %v2736
    %v2738 = vsel %vm254, %v2414, 0.0
    %v2739 = vadd.f32 %v2737, %v2738
    %v2740 = vsel %vm254, %v2415, 0.0
    %v2741 = vadd.f32 %v2739, %v2740
    %v2742 = vsel %vm254, %v2416, 0.0
    %v2743 = vadd.f32 %v2741, %v2742
    %v2744 = vsel %vm254, %v2417, 0.0
    %v2745 = vadd.f32 %v2743, %v2744
    %v2746 = vsel %vm254, %v2418, 0.0
    %v2747 = vadd.f32 %v2745, %v2746
    %v2748 = vsel %vm254, %v2419, 0.0
    %v2749 = vadd.f32 %v2747, %v2748
    %v2750 = vsel %vm254, %v2420, 0.0
    %v2751 = vadd.f32 %v2749, %v2750
    %v2752 = vsel %vm254, %v2421, 0.0
    %v2753 = vadd.f32 %v2751, %v2752
    %v2754 = vsel %vm254, %v2422, 0.0
    %v2755 = vadd.f32 %v2753, %v2754
    %v2756 = vsel %vm254, %v2423, 0.0
    %v2757 = vadd.f32 %v2755, %v2756
    %v2758 = vsel %vm254, %v2424, 0.0
    %v2759 = vadd.f32 %v2757, %v2758
    %v2760 = vsel %vm254, %v2425, 0.0
    %v2761 = vadd.f32 %v2759, %v2760
    %v2762 = vsel %vm254, %v2426, 0.0
    %v2763 = vadd.f32 %v2761, %v2762
    %v2764 = vsel %vm254, %v2427, 0.0
    %v2765 = vadd.f32 %v2763, %v2764
    %v2766 = vsel %vm254, %v2428, 0.0
    %v2767 = vadd.f32 %v2765, %v2766
    %v2768 = vsel %vm254, %v2429, 0.0
    %v2769 = vadd.f32 %v2767, %v2768
    %v2770 = vsel %vm254, %v2430, 0.0
    %v2771 = vadd.f32 %v2769, %v2770
    %v2772 = vsel %vm254, %v2431, 0.0
    %v2773 = vadd.f32 %v2771, %v2772
    %v2774 = vsel %vm254, %v2432, 0.0
    %v2775 = vadd.f32 %v2773, %v2774
    %v2776 = vsel %vm254, %v2433, 0.0
    %v2777 = vadd.f32 %v2775, %v2776
    %v2778 = vsel %vm254, %v2434, 0.0
    %v2779 = vadd.f32 %v2777, %v2778
    %v2780 = vsel %vm254, %v2435, 0.0
    %v2781 = vadd.f32 %v2779, %v2780
    %v2782 = vsel %vm254, %v2436, 0.0
    %v2783 = vadd.f32 %v2781, %v2782
    %v2784 = vsel %vm254, %v2437, 0.0
    %v2785 = vadd.f32 %v2783, %v2784
    %v2786 = vsel %vm254, %v2438, 0.0
    %v2787 = vadd.f32 %v2785, %v2786
    %v2788 = vsel %vm254, %v2439, 0.0
    %v2789 = vadd.f32 %v2787, %v2788
    %v2790 = vsel %vm254, %v2440, 0.0
    %v2791 = vadd.f32 %v2789, %v2790
    %v2792 = vsel %vm254, %v2441, 0.0
    %v2793 = vadd.f32 %v2791, %v2792
    %v2794 = vsel %vm254, %v2442, 0.0
    %v2795 = vadd.f32 %v2793, %v2794
    %v2796 = vsel %vm254, %v2443, 0.0
    %v2797 = vadd.f32 %v2795, %v2796
    %v2798 = vsel %vm254, %v2444, 0.0
    %v2799 = vadd.f32 %v2797, %v2798
    %v2800 = vsel %vm254, %v2445, 0.0
    %v2801 = vadd.f32 %v2799, %v2800
    %v2802 = vsel %vm254, %v2446, 0.0
    %v2803 = vadd.f32 %v2801, %v2802
    %v2804 = vsel %vm254, %v2447, 0.0
    %v2805 = vadd.f32 %v2803, %v2804
    %v2806 = vsel %vm254, %v2448, 0.0
    %v2807 = vadd.f32 %v2805, %v2806
    %v2808 = vsel %vm254, %v2449, 0.0
    %v2809 = vadd.f32 %v2807, %v2808
    %v2810 = vsel %vm254, %v2450, 0.0
    %v2811 = vadd.f32 %v2809, %v2810
    %v2812 = vsel %vm254, %v2451, 0.0
    %v2813 = vadd.f32 %v2811, %v2812
    %v2814 = vsel %vm254, %v2452, 0.0
    %v2815 = vadd.f32 %v2813, %v2814
    %v2816 = vsel %vm254, %v2453, 0.0
    %v2817 = vadd.f32 %v2815, %v2816
    %v2818 = vsel %vm254, %v2454, 0.0
    %v2819 = vadd.f32 %v2817, %v2818
    %v2820 = vsel %vm254, %v2455, 0.0
    %v2821 = vadd.f32 %v2819, %v2820
    %v2822 = vsel %vm254, %v2456, 0.0
    %v2823 = vadd.f32 %v2821, %v2822
    %v2824 = vsel %vm254, %v2457, 0.0
    %v2825 = vadd.f32 %v2823, %v2824
    %v2826 = vsel %vm254, %v2458, 0.0
    %v2827 = vadd.f32 %v2825, %v2826
    %v2828 = vsel %vm254, %v2459, 0.0
    %v2829 = vadd.f32 %v2827, %v2828
    %v2830 = vsel %vm254, %v2460, 0.0
    %v2831 = vadd.f32 %v2829, %v2830
    %v2832 = vsel %vm254, %v2461, 0.0
    %v2833 = vadd.f32 %v2831, %v2832
    %v2834 = vsel %vm254, %v2462, 0.0
    %v2835 = vadd.f32 %v2833, %v2834
    %v2836 = vsel %vm254, %v2463, 0.0
    %v2837 = vadd.f32 %v2835, %v2836
    %v2838 = vsel %vm254, %v2464, 0.0
    %v2839 = vadd.f32 %v2837, %v2838
    %v2840 = vsel %vm254, %v2465, 0.0
    %v2841 = vadd.f32 %v2839, %v2840
    %v2842 = vsel %vm254, %v2466, 0.0
    %v2843 = vadd.f32 %v2841, %v2842
    %v2844 = vsel %vm254, %v2467, 0.0
    %v2845 = vadd.f32 %v2843, %v2844
    %v2846 = vsel %vm254, %v2468, 0.0
    %v2847 = vadd.f32 %v2845, %v2846
    %v2848 = vsel %vm254, %v2469, 0.0
    %v2849 = vadd.f32 %v2847, %v2848
    %v2850 = vsel %vm254, %v2470, 0.0
    %v2851 = vadd.f32 %v2849, %v2850
    %v2852 = vsel %vm254, %v2471, 0.0
    %v2853 = vadd.f32 %v2851, %v2852
    %v2854 = vsel %vm254, %v2472, 0.0
    %v2855 = vadd.f32 %v2853, %v2854
    %v2856 = vsel %vm254, %v2473, 0.0
    %v2857 = vadd.f32 %v2855, %v2856
    %v2858 = vsel %vm254, %v2474, 0.0
    %v2859 = vadd.f32 %v2857, %v2858
    %v2860 = vsel %vm254, %v2475, 0.0
    %v2861 = vadd.f32 %v2859, %v2860
    %v2862 = vsel %vm254, %v2476, 0.0
    %v2863 = vadd.f32 %v2861, %v2862
    %v2864 = vsel %vm254, %v2477, 0.0
    %v2865 = vadd.f32 %v2863, %v2864
    %v2866 = vsel %vm254, %v2478, 0.0
    %v2867 = vadd.f32 %v2865, %v2866
    %v2868 = vsel %vm254, %v2479, 0.0
    %v2869 = vadd.f32 %v2867, %v2868
    %v2870 = vsel %vm254, %v2480, 0.0
    %v2871 = vadd.f32 %v2869, %v2870
    %v2872 = vrot.slane %v2871, 4
    %v2873 = vadd.f32 %v2871, %v2872
    %v2874 = vrot.slane %v2873, 2
    %v2875 = vadd.f32 %v2873, %v2874
    %v2876 = vrot.slane %v2875, 1
    %v2877 = vadd.f32 %v2875, %v2876
    %v2878 = vmul.f32 %v2284, 0.0006377551
    %v2879 = vmul.f32 %v2877, 0.0006377551
    %v2880 = vmul.f32 %v2878, %v2878
    %v2881 = vsub.f32 %v2879, %v2880
    %v2882 = vmax.f32 %v2881, 0.0
    %v2883 = vld [vmem:[#allocation4] sm:$0x1]
    %v2884 = vadd.f32 %v2882, 1e-05
    %v2885 = vrsqrt.pop %v2884
    %v2886 = vmul.f32 %v2883, %v2885
    %v2887 = vld [vmem:[#allocation6] sm:$0x1]
    %v2888 = vmul.f32 %v2878, %v2886
    %v2889 = vsub.f32 %v2887, %v2888
    %v2891 = vlaneseq
    %v2892 = vshrl.u32 %v2891, 7
    %v2893 = vsub.s32 0, %v2892
    %v2894 = vrot.slane %v2886, %v2893
    %v2896 = vmul.f32 %v910, %v2894
    %v2897 = vmul.f32 %v915, %v2894
    %v2898 = vmul.f32 %v920, %v2894
    %v2899 = vmul.f32 %v925, %v2894
    %v2900 = vmul.f32 %v930, %v2894
    %v2901 = vmul.f32 %v935, %v2894
    %v2902 = vmul.f32 %v940, %v2894
    %v2903 = vmul.f32 %v945, %v2894
    %v2904 = vmul.f32 %v950, %v2894
    %v2905 = vmul.f32 %v955, %v2894
    %v2906 = vmul.f32 %v960, %v2894
    %v2907 = vmul.f32 %v965, %v2894
    %v2908 = vmul.f32 %v970, %v2894
    %v2909 = vmul.f32 %v975, %v2894
    %v2910 = vmul.f32 %v980, %v2894
    %v2911 = vmul.f32 %v985, %v2894
    %v2912 = vmul.f32 %v990, %v2894
    %v2913 = vmul.f32 %v995, %v2894
    %v2914 = vmul.f32 %v1000, %v2894
    %v2915 = vmul.f32 %v1005, %v2894
    %v2916 = vmul.f32 %v1010, %v2894
    %v2917 = vmul.f32 %v1015, %v2894
    %v2918 = vmul.f32 %v1020, %v2894
    %v2919 = vmul.f32 %v1025, %v2894
    %v2920 = vmul.f32 %v1030, %v2894
    %v2921 = vmul.f32 %v1035, %v2894
    %v2922 = vmul.f32 %v1040, %v2894
    %v2923 = vmul.f32 %v1045, %v2894
    %v2924 = vmul.f32 %v1050, %v2894
    %v2925 = vmul.f32 %v1055, %v2894
    %v2926 = vmul.f32 %v1060, %v2894
    %v2927 = vmul.f32 %v1065, %v2894
    %v2928 = vmul.f32 %v1070, %v2894
    %v2929 = vmul.f32 %v1075, %v2894
    %v2930 = vmul.f32 %v1080, %v2894
    %v2931 = vmul.f32 %v1085, %v2894
    %v2932 = vmul.f32 %v1090, %v2894
    %v2933 = vmul.f32 %v1095, %v2894
    %v2934 = vmul.f32 %v1100, %v2894
    %v2935 = vmul.f32 %v1105, %v2894
    %v2936 = vmul.f32 %v1110, %v2894
    %v2937 = vmul.f32 %v1115, %v2894
    %v2938 = vmul.f32 %v1120, %v2894
    %v2939 = vmul.f32 %v1125, %v2894
    %v2940 = vmul.f32 %v1130, %v2894
    %v2941 = vmul.f32 %v1135, %v2894
    %v2942 = vmul.f32 %v1140, %v2894
    %v2943 = vmul.f32 %v1145, %v2894
    %v2944 = vmul.f32 %v1150, %v2894
    %v2945 = vmul.f32 %v1155, %v2894
    %v2946 = vmul.f32 %v1160, %v2894
    %v2947 = vmul.f32 %v1165, %v2894
    %v2948 = vmul.f32 %v1170, %v2894
    %v2949 = vmul.f32 %v1175, %v2894
    %v2950 = vmul.f32 %v1180, %v2894
    %v2951 = vmul.f32 %v1185, %v2894
    %v2952 = vmul.f32 %v1190, %v2894
    %v2953 = vmul.f32 %v1195, %v2894
    %v2954 = vmul.f32 %v1200, %v2894
    %v2955 = vmul.f32 %v1205, %v2894
    %v2956 = vmul.f32 %v1210, %v2894
    %v2957 = vmul.f32 %v1215, %v2894
    %v2958 = vmul.f32 %v1220, %v2894
    %v2959 = vmul.f32 %v1225, %v2894
    %v2960 = vmul.f32 %v1230, %v2894
    %v2961 = vmul.f32 %v1235, %v2894
    %v2962 = vmul.f32 %v1240, %v2894
    %v2963 = vmul.f32 %v1245, %v2894
    %v2964 = vmul.f32 %v1250, %v2894
    %v2965 = vmul.f32 %v1255, %v2894
    %v2966 = vmul.f32 %v1260, %v2894
    %v2967 = vmul.f32 %v1265, %v2894
    %v2968 = vmul.f32 %v1270, %v2894
    %v2969 = vmul.f32 %v1275, %v2894
    %v2970 = vmul.f32 %v1280, %v2894
    %v2971 = vmul.f32 %v1285, %v2894
    %v2972 = vmul.f32 %v1290, %v2894
    %v2973 = vmul.f32 %v1295, %v2894
    %v2974 = vmul.f32 %v1300, %v2894
    %v2975 = vmul.f32 %v1305, %v2894
    %v2976 = vmul.f32 %v1310, %v2894
    %v2977 = vmul.f32 %v1315, %v2894
    %v2978 = vmul.f32 %v1320, %v2894
    %v2979 = vmul.f32 %v1325, %v2894
    %v2980 = vmul.f32 %v1330, %v2894
    %v2981 = vmul.f32 %v1335, %v2894
    %v2982 = vmul.f32 %v1340, %v2894
    %v2983 = vmul.f32 %v1345, %v2894
    %v2984 = vmul.f32 %v1350, %v2894
    %v2985 = vmul.f32 %v1355, %v2894
    %v2986 = vmul.f32 %v1360, %v2894
    %v2987 = vmul.f32 %v1365, %v2894
    %v2988 = vmul.f32 %v1370, %v2894
    %v2989 = vmul.f32 %v1375, %v2894
    %v2990 = vmul.f32 %v1380, %v2894
    %v2991 = vmul.f32 %v1385, %v2894
    %v2992 = vmul.f32 %v1390, %v2894
    %v2993 = vmul.f32 %v1395, %v2894
    %v2994 = vmul.f32 %v1400, %v2894
    %v2995 = vmul.f32 %v1405, %v2894
    %v2996 = vmul.f32 %v1410, %v2894
    %v2997 = vmul.f32 %v1415, %v2894
    %v2998 = vmul.f32 %v1420, %v2894
    %v2999 = vmul.f32 %v1425, %v2894
    %v3000 = vmul.f32 %v1430, %v2894
    %v3001 = vmul.f32 %v1435, %v2894
    %v3002 = vmul.f32 %v1440, %v2894
    %v3003 = vmul.f32 %v1445, %v2894
    %v3004 = vmul.f32 %v1450, %v2894
    %v3005 = vmul.f32 %v1455, %v2894
    %v3006 = vmul.f32 %v1460, %v2894
    %v3007 = vmul.f32 %v1465, %v2894
    %v3008 = vmul.f32 %v1470, %v2894
    %v3009 = vmul.f32 %v1475, %v2894
    %v3010 = vmul.f32 %v1480, %v2894
    %v3011 = vmul.f32 %v1485, %v2894
    %v3012 = vmul.f32 %v1490, %v2894
    %v3013 = vmul.f32 %v1495, %v2894
    %v3014 = vmul.f32 %v1500, %v2894
    %v3015 = vmul.f32 %v1505, %v2894
    %v3016 = vmul.f32 %v1510, %v2894
    %v3017 = vmul.f32 %v1515, %v2894
    %v3018 = vmul.f32 %v1520, %v2894
    %v3019 = vmul.f32 %v1525, %v2894
    %v3020 = vmul.f32 %v1530, %v2894
    %v3021 = vmul.f32 %v1535, %v2894
    %v3022 = vmul.f32 %v1540, %v2894
    %v3023 = vmul.f32 %v1545, %v2894
    %v3024 = vmul.f32 %v1550, %v2894
    %v3025 = vmul.f32 %v1555, %v2894
    %v3026 = vmul.f32 %v1560, %v2894
    %v3027 = vmul.f32 %v1565, %v2894
    %v3028 = vmul.f32 %v1570, %v2894
    %v3029 = vmul.f32 %v1575, %v2894
    %v3030 = vmul.f32 %v1580, %v2894
    %v3031 = vmul.f32 %v1585, %v2894
    %v3032 = vmul.f32 %v1590, %v2894
    %v3033 = vmul.f32 %v1595, %v2894
    %v3034 = vmul.f32 %v1600, %v2894
    %v3035 = vmul.f32 %v1605, %v2894
    %v3036 = vmul.f32 %v1610, %v2894
    %v3037 = vmul.f32 %v1615, %v2894
    %v3038 = vmul.f32 %v1620, %v2894
    %v3039 = vmul.f32 %v1625, %v2894
    %v3040 = vmul.f32 %v1630, %v2894
    %v3041 = vmul.f32 %v1635, %v2894
    %v3042 = vmul.f32 %v1640, %v2894
    %v3043 = vmul.f32 %v1645, %v2894
    %v3044 = vmul.f32 %v1650, %v2894
    %v3045 = vmul.f32 %v1655, %v2894
    %v3046 = vmul.f32 %v1660, %v2894
    %v3047 = vmul.f32 %v1665, %v2894
    %v3048 = vmul.f32 %v1670, %v2894
    %v3049 = vmul.f32 %v1675, %v2894
    %v3050 = vmul.f32 %v1680, %v2894
    %v3051 = vmul.f32 %v1685, %v2894
    %v3052 = vmul.f32 %v1690, %v2894
    %v3053 = vmul.f32 %v1695, %v2894
    %v3054 = vmul.f32 %v1700, %v2894
    %v3055 = vmul.f32 %v1705, %v2894
    %v3056 = vmul.f32 %v1710, %v2894
    %v3057 = vmul.f32 %v1715, %v2894
    %v3058 = vmul.f32 %v1720, %v2894
    %v3059 = vmul.f32 %v1725, %v2894
    %v3060 = vmul.f32 %v1730, %v2894
    %v3061 = vmul.f32 %v1735, %v2894
    %v3062 = vmul.f32 %v1740, %v2894
    %v3063 = vmul.f32 %v1745, %v2894
    %v3064 = vmul.f32 %v1750, %v2894
    %v3065 = vmul.f32 %v1755, %v2894
    %v3066 = vmul.f32 %v1760, %v2894
    %v3067 = vmul.f32 %v1765, %v2894
    %v3068 = vmul.f32 %v1770, %v2894
    %v3069 = vmul.f32 %v1775, %v2894
    %v3070 = vmul.f32 %v1780, %v2894
    %v3071 = vmul.f32 %v1785, %v2894
    %v3072 = vmul.f32 %v1790, %v2894
    %v3073 = vmul.f32 %v1795, %v2894
    %v3074 = vmul.f32 %v1800, %v2894
    %v3075 = vmul.f32 %v1805, %v2894
    %v3076 = vmul.f32 %v1810, %v2894
    %v3077 = vmul.f32 %v1815, %v2894
    %v3078 = vmul.f32 %v1820, %v2894
    %v3079 = vmul.f32 %v1825, %v2894
    %v3080 = vmul.f32 %v1830, %v2894
    %v3081 = vmul.f32 %v1835, %v2894
    %v3082 = vmul.f32 %v1840, %v2894
    %v3083 = vmul.f32 %v1845, %v2894
    %v3084 = vmul.f32 %v1850, %v2894
    %v3085 = vmul.f32 %v1855, %v2894
    %v3086 = vmul.f32 %v1860, %v2894
    %v3087 = vmul.f32 %v1865, %v2894
    %v3088 = vmul.f32 %v1870, %v2894
    %v3089 = vmul.f32 %v1875, %v2894
    %v3090 = vmul.f32 %v1880, %v2894
    %v3091 = vmul.f32 %v1885, %v2894
    %v3093 = vlaneseq
    %v3094 = vshrl.u32 %v3093, 7
    %v3095 = vsub.s32 0, %v3094
    %v3096 = vrot.slane %v2889, %v3095
    %v3098 = vadd.f32 %v2896, %v3096
    %v3099 = vadd.f32 %v2897, %v3096
    %v3100 = vadd.f32 %v2898, %v3096
    %v3101 = vadd.f32 %v2899, %v3096
    %v3102 = vadd.f32 %v2900, %v3096
    %v3103 = vadd.f32 %v2901, %v3096
    %v3104 = vadd.f32 %v2902, %v3096
    %v3105 = vadd.f32 %v2903, %v3096
    %v3106 = vadd.f32 %v2904, %v3096
    %v3107 = vadd.f32 %v2905, %v3096
    %v3108 = vadd.f32 %v2906, %v3096
    %v3109 = vadd.f32 %v2907, %v3096
    %v3110 = vadd.f32 %v2908, %v3096
    %v3111 = vadd.f32 %v2909, %v3096
    %v3112 = vadd.f32 %v2910, %v3096
    %v3113 = vadd.f32 %v2911, %v3096
    %v3114 = vadd.f32 %v2912, %v3096
    %v3115 = vadd.f32 %v2913, %v3096
    %v3116 = vadd.f32 %v2914, %v3096
    %v3117 = vadd.f32 %v2915, %v3096
    %v3118 = vadd.f32 %v2916, %v3096
    %v3119 = vadd.f32 %v2917, %v3096
    %v3120 = vadd.f32 %v2918, %v3096
    %v3121 = vadd.f32 %v2919, %v3096
    %v3122 = vadd.f32 %v2920, %v3096
    %v3123 = vadd.f32 %v2921, %v3096
    %v3124 = vadd.f32 %v2922, %v3096
    %v3125 = vadd.f32 %v2923, %v3096
    %v3126 = vadd.f32 %v2924, %v3096
    %v3127 = vadd.f32 %v2925, %v3096
    %v3128 = vadd.f32 %v2926, %v3096
    %v3129 = vadd.f32 %v2927, %v3096
    %v3130 = vadd.f32 %v2928, %v3096
    %v3131 = vadd.f32 %v2929, %v3096
    %v3132 = vadd.f32 %v2930, %v3096
    %v3133 = vadd.f32 %v2931, %v3096
    %v3134 = vadd.f32 %v2932, %v3096
    %v3135 = vadd.f32 %v2933, %v3096
    %v3136 = vadd.f32 %v2934, %v3096
    %v3137 = vadd.f32 %v2935, %v3096
    %v3138 = vadd.f32 %v2936, %v3096
    %v3139 = vadd.f32 %v2937, %v3096
    %v3140 = vadd.f32 %v2938, %v3096
    %v3141 = vadd.f32 %v2939, %v3096
    %v3142 = vadd.f32 %v2940, %v3096
    %v3143 = vadd.f32 %v2941, %v3096
    %v3144 = vadd.f32 %v2942, %v3096
    %v3145 = vadd.f32 %v2943, %v3096
    %v3146 = vadd.f32 %v2944, %v3096
    %v3147 = vadd.f32 %v2945, %v3096
    %v3148 = vadd.f32 %v2946, %v3096
    %v3149 = vadd.f32 %v2947, %v3096
    %v3150 = vadd.f32 %v2948, %v3096
    %v3151 = vadd.f32 %v2949, %v3096
    %v3152 = vadd.f32 %v2950, %v3096
    %v3153 = vadd.f32 %v2951, %v3096
    %v3154 = vadd.f32 %v2952, %v3096
    %v3155 = vadd.f32 %v2953, %v3096
    %v3156 = vadd.f32 %v2954, %v3096
    %v3157 = vadd.f32 %v2955, %v3096
    %v3158 = vadd.f32 %v2956, %v3096
    %v3159 = vadd.f32 %v2957, %v3096
    %v3160 = vadd.f32 %v2958, %v3096
    %v3161 = vadd.f32 %v2959, %v3096
    %v3162 = vadd.f32 %v2960, %v3096
    %v3163 = vadd.f32 %v2961, %v3096
    %v3164 = vadd.f32 %v2962, %v3096
    %v3165 = vadd.f32 %v2963, %v3096
    %v3166 = vadd.f32 %v2964, %v3096
    %v3167 = vadd.f32 %v2965, %v3096
    %v3168 = vadd.f32 %v2966, %v3096
    %v3169 = vadd.f32 %v2967, %v3096
    %v3170 = vadd.f32 %v2968, %v3096
    %v3171 = vadd.f32 %v2969, %v3096
    %v3172 = vadd.f32 %v2970, %v3096
    %v3173 = vadd.f32 %v2971, %v3096
    %v3174 = vadd.f32 %v2972, %v3096
    %v3175 = vadd.f32 %v2973, %v3096
    %v3176 = vadd.f32 %v2974, %v3096
    %v3177 = vadd.f32 %v2975, %v3096
    %v3178 = vadd.f32 %v2976, %v3096
    %v3179 = vadd.f32 %v2977, %v3096
    %v3180 = vadd.f32 %v2978, %v3096
    %v3181 = vadd.f32 %v2979, %v3096
    %v3182 = vadd.f32 %v2980, %v3096
    %v3183 = vadd.f32 %v2981, %v3096
    %v3184 = vadd.f32 %v2982, %v3096
    %v3185 = vadd.f32 %v2983, %v3096
    %v3186 = vadd.f32 %v2984, %v3096
    %v3187 = vadd.f32 %v2985, %v3096
    %v3188 = vadd.f32 %v2986, %v3096
    %v3189 = vadd.f32 %v2987, %v3096
    %v3190 = vadd.f32 %v2988, %v3096
    %v3191 = vadd.f32 %v2989, %v3096
    %v3192 = vadd.f32 %v2990, %v3096
    %v3193 = vadd.f32 %v2991, %v3096
    %v3194 = vadd.f32 %v2992, %v3096
    %v3195 = vadd.f32 %v2993, %v3096
    %v3196 = vadd.f32 %v2994, %v3096
    %v3197 = vadd.f32 %v2995, %v3096
    %v3198 = vadd.f32 %v2996, %v3096
    %v3199 = vadd.f32 %v2997, %v3096
    %v3200 = vadd.f32 %v2998, %v3096
    %v3201 = vadd.f32 %v2999, %v3096
    %v3202 = vadd.f32 %v3000, %v3096
    %v3203 = vadd.f32 %v3001, %v3096
    %v3204 = vadd.f32 %v3002, %v3096
    %v3205 = vadd.f32 %v3003, %v3096
    %v3206 = vadd.f32 %v3004, %v3096
    %v3207 = vadd.f32 %v3005, %v3096
    %v3208 = vadd.f32 %v3006, %v3096
    %v3209 = vadd.f32 %v3007, %v3096
    %v3210 = vadd.f32 %v3008, %v3096
    %v3211 = vadd.f32 %v3009, %v3096
    %v3212 = vadd.f32 %v3010, %v3096
    %v3213 = vadd.f32 %v3011, %v3096
    %v3214 = vadd.f32 %v3012, %v3096
    %v3215 = vadd.f32 %v3013, %v3096
    %v3216 = vadd.f32 %v3014, %v3096
    %v3217 = vadd.f32 %v3015, %v3096
    %v3218 = vadd.f32 %v3016, %v3096
    %v3219 = vadd.f32 %v3017, %v3096
    %v3220 = vadd.f32 %v3018, %v3096
    %v3221 = vadd.f32 %v3019, %v3096
    %v3222 = vadd.f32 %v3020, %v3096
    %v3223 = vadd.f32 %v3021, %v3096
    %v3224 = vadd.f32 %v3022, %v3096
    %v3225 = vadd.f32 %v3023, %v3096
    %v3226 = vadd.f32 %v3024, %v3096
    %v3227 = vadd.f32 %v3025, %v3096
    %v3228 = vadd.f32 %v3026, %v3096
    %v3229 = vadd.f32 %v3027, %v3096
    %v3230 = vadd.f32 %v3028, %v3096
    %v3231 = vadd.f32 %v3029, %v3096
    %v3232 = vadd.f32 %v3030, %v3096
    %v3233 = vadd.f32 %v3031, %v3096
    %v3234 = vadd.f32 %v3032, %v3096
    %v3235 = vadd.f32 %v3033, %v3096
    %v3236 = vadd.f32 %v3034, %v3096
    %v3237 = vadd.f32 %v3035, %v3096
    %v3238 = vadd.f32 %v3036, %v3096
    %v3239 = vadd.f32 %v3037, %v3096
    %v3240 = vadd.f32 %v3038, %v3096
    %v3241 = vadd.f32 %v3039, %v3096
    %v3242 = vadd.f32 %v3040, %v3096
    %v3243 = vadd.f32 %v3041, %v3096
    %v3244 = vadd.f32 %v3042, %v3096
    %v3245 = vadd.f32 %v3043, %v3096
    %v3246 = vadd.f32 %v3044, %v3096
    %v3247 = vadd.f32 %v3045, %v3096
    %v3248 = vadd.f32 %v3046, %v3096
    %v3249 = vadd.f32 %v3047, %v3096
    %v3250 = vadd.f32 %v3048, %v3096
    %v3251 = vadd.f32 %v3049, %v3096
    %v3252 = vadd.f32 %v3050, %v3096
    %v3253 = vadd.f32 %v3051, %v3096
    %v3254 = vadd.f32 %v3052, %v3096
    %v3255 = vadd.f32 %v3053, %v3096
    %v3256 = vadd.f32 %v3054, %v3096
    %v3257 = vadd.f32 %v3055, %v3096
    %v3258 = vadd.f32 %v3056, %v3096
    %v3259 = vadd.f32 %v3057, %v3096
    %v3260 = vadd.f32 %v3058, %v3096
    %v3261 = vadd.f32 %v3059, %v3096
    %v3262 = vadd.f32 %v3060, %v3096
    %v3263 = vadd.f32 %v3061, %v3096
    %v3264 = vadd.f32 %v3062, %v3096
    %v3265 = vadd.f32 %v3063, %v3096
    %v3266 = vadd.f32 %v3064, %v3096
    %v3267 = vadd.f32 %v3065, %v3096
    %v3268 = vadd.f32 %v3066, %v3096
    %v3269 = vadd.f32 %v3067, %v3096
    %v3270 = vadd.f32 %v3068, %v3096
    %v3271 = vadd.f32 %v3069, %v3096
    %v3272 = vadd.f32 %v3070, %v3096
    %v3273 = vadd.f32 %v3071, %v3096
    %v3274 = vadd.f32 %v3072, %v3096
    %v3275 = vadd.f32 %v3073, %v3096
    %v3276 = vadd.f32 %v3074, %v3096
    %v3277 = vadd.f32 %v3075, %v3096
    %v3278 = vadd.f32 %v3076, %v3096
    %v3279 = vadd.f32 %v3077, %v3096
    %v3280 = vadd.f32 %v3078, %v3096
    %v3281 = vadd.f32 %v3079, %v3096
    %v3282 = vadd.f32 %v3080, %v3096
    %v3283 = vadd.f32 %v3081, %v3096
    %v3284 = vadd.f32 %v3082, %v3096
    %v3285 = vadd.f32 %v3083, %v3096
    %v3286 = vadd.f32 %v3084, %v3096
    %v3287 = vadd.f32 %v3085, %v3096
    %v3288 = vadd.f32 %v3086, %v3096
    %v3289 = vadd.f32 %v3087, %v3096
    %v3290 = vadd.f32 %v3088, %v3096
    %v3291 = vadd.f32 %v3089, %v3096
    %v3292 = vadd.f32 %v3090, %v3096
    %v3293 = vadd.f32 %v3091, %v3096
    %v3294 = vmax.f32 %v3098, 0.0
    %v3295 = vmax.f32 %v3099, 0.0
    %v3296 = vmax.f32 %v3100, 0.0
    %v3297 = vmax.f32 %v3101, 0.0
    %v3298 = vmax.f32 %v3102, 0.0
    %v3299 = vmax.f32 %v3103, 0.0
    %v3300 = vmax.f32 %v3104, 0.0
    %v3301 = vmax.f32 %v3105, 0.0
    %v3302 = vmax.f32 %v3106, 0.0
    %v3303 = vmax.f32 %v3107, 0.0
    %v3304 = vmax.f32 %v3108, 0.0
    %v3305 = vmax.f32 %v3109, 0.0
    %v3306 = vmax.f32 %v3110, 0.0
    %v3307 = vmax.f32 %v3111, 0.0
    %v3308 = vmax.f32 %v3112, 0.0
    %v3309 = vmax.f32 %v3113, 0.0
    %v3310 = vmax.f32 %v3114, 0.0
    %v3311 = vmax.f32 %v3115, 0.0
    %v3312 = vmax.f32 %v3116, 0.0
    %v3313 = vmax.f32 %v3117, 0.0
    %v3314 = vmax.f32 %v3118, 0.0
    %v3315 = vmax.f32 %v3119, 0.0
    %v3316 = vmax.f32 %v3120, 0.0
    %v3317 = vmax.f32 %v3121, 0.0
    %v3318 = vmax.f32 %v3122, 0.0
    %v3319 = vmax.f32 %v3123, 0.0
    %v3320 = vmax.f32 %v3124, 0.0
    %v3321 = vmax.f32 %v3125, 0.0
    %v3322 = vmax.f32 %v3126, 0.0
    %v3323 = vmax.f32 %v3127, 0.0
    %v3324 = vmax.f32 %v3128, 0.0
    %v3325 = vmax.f32 %v3129, 0.0
    %v3326 = vmax.f32 %v3130, 0.0
    %v3327 = vmax.f32 %v3131, 0.0
    %v3328 = vmax.f32 %v3132, 0.0
    %v3329 = vmax.f32 %v3133, 0.0
    %v3330 = vmax.f32 %v3134, 0.0
    %v3331 = vmax.f32 %v3135, 0.0
    %v3332 = vmax.f32 %v3136, 0.0
    %v3333 = vmax.f32 %v3137, 0.0
    %v3334 = vmax.f32 %v3138, 0.0
    %v3335 = vmax.f32 %v3139, 0.0
    %v3336 = vmax.f32 %v3140, 0.0
    %v3337 = vmax.f32 %v3141, 0.0
    %v3338 = vmax.f32 %v3142, 0.0
    %v3339 = vmax.f32 %v3143, 0.0
    %v3340 = vmax.f32 %v3144, 0.0
    %v3341 = vmax.f32 %v3145, 0.0
    %v3342 = vmax.f32 %v3146, 0.0
    %v3343 = vmax.f32 %v3147, 0.0
    %v3344 = vmax.f32 %v3148, 0.0
    %v3345 = vmax.f32 %v3149, 0.0
    %v3346 = vmax.f32 %v3150, 0.0
    %v3347 = vmax.f32 %v3151, 0.0
    %v3348 = vmax.f32 %v3152, 0.0
    %v3349 = vmax.f32 %v3153, 0.0
    %v3350 = vmax.f32 %v3154, 0.0
    %v3351 = vmax.f32 %v3155, 0.0
    %v3352 = vmax.f32 %v3156, 0.0
    %v3353 = vmax.f32 %v3157, 0.0
    %v3354 = vmax.f32 %v3158, 0.0
    %v3355 = vmax.f32 %v3159, 0.0
    %v3356 = vmax.f32 %v3160, 0.0
    %v3357 = vmax.f32 %v3161, 0.0
    %v3358 = vmax.f32 %v3162, 0.0
    %v3359 = vmax.f32 %v3163, 0.0
    %v3360 = vmax.f32 %v3164, 0.0
    %v3361 = vmax.f32 %v3165, 0.0
    %v3362 = vmax.f32 %v3166, 0.0
    %v3363 = vmax.f32 %v3167, 0.0
    %v3364 = vmax.f32 %v3168, 0.0
    %v3365 = vmax.f32 %v3169, 0.0
    %v3366 = vmax.f32 %v3170, 0.0
    %v3367 = vmax.f32 %v3171, 0.0
    %v3368 = vmax.f32 %v3172, 0.0
    %v3369 = vmax.f32 %v3173, 0.0
    %v3370 = vmax.f32 %v3174, 0.0
    %v3371 = vmax.f32 %v3175, 0.0
    %v3372 = vmax.f32 %v3176, 0.0
    %v3373 = vmax.f32 %v3177, 0.0
    %v3374 = vmax.f32 %v3178, 0.0
    %v3375 = vmax.f32 %v3179, 0.0
    %v3376 = vmax.f32 %v3180, 0.0
    %v3377 = vmax.f32 %v3181, 0.0
    %v3378 = vmax.f32 %v3182, 0.0
    %v3379 = vmax.f32 %v3183, 0.0
    %v3380 = vmax.f32 %v3184, 0.0
    %v3381 = vmax.f32 %v3185, 0.0
    %v3382 = vmax.f32 %v3186, 0.0
    %v3383 = vmax.f32 %v3187, 0.0
    %v3384 = vmax.f32 %v3188, 0.0
    %v3385 = vmax.f32 %v3189, 0.0
    %v3386 = vmax.f32 %v3190, 0.0
    %v3387 = vmax.f32 %v3191, 0.0
    %v3388 = vmax.f32 %v3192, 0.0
    %v3389 = vmax.f32 %v3193, 0.0
    %v3390 = vmax.f32 %v3194, 0.0
    %v3391 = vmax.f32 %v3195, 0.0
    %v3392 = vmax.f32 %v3196, 0.0
    %v3393 = vmax.f32 %v3197, 0.0
    %v3394 = vmax.f32 %v3198, 0.0
    %v3395 = vmax.f32 %v3199, 0.0
    %v3396 = vmax.f32 %v3200, 0.0
    %v3397 = vmax.f32 %v3201, 0.0
    %v3398 = vmax.f32 %v3202, 0.0
    %v3399 = vmax.f32 %v3203, 0.0
    %v3400 = vmax.f32 %v3204, 0.0
    %v3401 = vmax.f32 %v3205, 0.0
    %v3402 = vmax.f32 %v3206, 0.0
    %v3403 = vmax.f32 %v3207, 0.0
    %v3404 = vmax.f32 %v3208, 0.0
    %v3405 = vmax.f32 %v3209, 0.0
    %v3406 = vmax.f32 %v3210, 0.0
    %v3407 = vmax.f32 %v3211, 0.0
    %v3408 = vmax.f32 %v3212, 0.0
    %v3409 = vmax.f32 %v3213, 0.0
    %v3410 = vmax.f32 %v3214, 0.0
    %v3411 = vmax.f32 %v3215, 0.0
    %v3412 = vmax.f32 %v3216, 0.0
    %v3413 = vmax.f32 %v3217, 0.0
    %v3414 = vmax.f32 %v3218, 0.0
    %v3415 = vmax.f32 %v3219, 0.0
    %v3416 = vmax.f32 %v3220, 0.0
    %v3417 = vmax.f32 %v3221, 0.0
    %v3418 = vmax.f32 %v3222, 0.0
    %v3419 = vmax.f32 %v3223, 0.0
    %v3420 = vmax.f32 %v3224, 0.0
    %v3421 = vmax.f32 %v3225, 0.0
    %v3422 = vmax.f32 %v3226, 0.0
    %v3423 = vmax.f32 %v3227, 0.0
    %v3424 = vmax.f32 %v3228, 0.0
    %v3425 = vmax.f32 %v3229, 0.0
    %v3426 = vmax.f32 %v3230, 0.0
    %v3427 = vmax.f32 %v3231, 0.0
    %v3428 = vmax.f32 %v3232, 0.0
    %v3429 = vmax.f32 %v3233, 0.0
    %v3430 = vmax.f32 %v3234, 0.0
    %v3431 = vmax.f32 %v3235, 0.0
    %v3432 = vmax.f32 %v3236, 0.0
    %v3433 = vmax.f32 %v3237, 0.0
    %v3434 = vmax.f32 %v3238, 0.0
    %v3435 = vmax.f32 %v3239, 0.0
    %v3436 = vmax.f32 %v3240, 0.0
    %v3437 = vmax.f32 %v3241, 0.0
    %v3438 = vmax.f32 %v3242, 0.0
    %v3439 = vmax.f32 %v3243, 0.0
    %v3440 = vmax.f32 %v3244, 0.0
    %v3441 = vmax.f32 %v3245, 0.0
    %v3442 = vmax.f32 %v3246, 0.0
    %v3443 = vmax.f32 %v3247, 0.0
    %v3444 = vmax.f32 %v3248, 0.0
    %v3445 = vmax.f32 %v3249, 0.0
    %v3446 = vmax.f32 %v3250, 0.0
    %v3447 = vmax.f32 %v3251, 0.0
    %v3448 = vmax.f32 %v3252, 0.0
    %v3449 = vmax.f32 %v3253, 0.0
    %v3450 = vmax.f32 %v3254, 0.0
    %v3451 = vmax.f32 %v3255, 0.0
    %v3452 = vmax.f32 %v3256, 0.0
    %v3453 = vmax.f32 %v3257, 0.0
    %v3454 = vmax.f32 %v3258, 0.0
    %v3455 = vmax.f32 %v3259, 0.0
    %v3456 = vmax.f32 %v3260, 0.0
    %v3457 = vmax.f32 %v3261, 0.0
    %v3458 = vmax.f32 %v3262, 0.0
    %v3459 = vmax.f32 %v3263, 0.0
    %v3460 = vmax.f32 %v3264, 0.0
    %v3461 = vmax.f32 %v3265, 0.0
    %v3462 = vmax.f32 %v3266, 0.0
    %v3463 = vmax.f32 %v3267, 0.0
    %v3464 = vmax.f32 %v3268, 0.0
    %v3465 = vmax.f32 %v3269, 0.0
    %v3466 = vmax.f32 %v3270, 0.0
    %v3467 = vmax.f32 %v3271, 0.0
    %v3468 = vmax.f32 %v3272, 0.0
    %v3469 = vmax.f32 %v3273, 0.0
    %v3470 = vmax.f32 %v3274, 0.0
    %v3471 = vmax.f32 %v3275, 0.0
    %v3472 = vmax.f32 %v3276, 0.0
    %v3473 = vmax.f32 %v3277, 0.0
    %v3474 = vmax.f32 %v3278, 0.0
    %v3475 = vmax.f32 %v3279, 0.0
    %v3476 = vmax.f32 %v3280, 0.0
    %v3477 = vmax.f32 %v3281, 0.0
    %v3478 = vmax.f32 %v3282, 0.0
    %v3479 = vmax.f32 %v3283, 0.0
    %v3480 = vmax.f32 %v3284, 0.0
    %v3481 = vmax.f32 %v3285, 0.0
    %v3482 = vmax.f32 %v3286, 0.0
    %v3483 = vmax.f32 %v3287, 0.0
    %v3484 = vmax.f32 %v3288, 0.0
    %v3485 = vmax.f32 %v3289, 0.0
    %v3486 = vmax.f32 %v3290, 0.0
    %v3487 = vmax.f32 %v3291, 0.0
    %v3488 = vmax.f32 %v3292, 0.0
    %v3489 = vmax.f32 %v3293, 0.0
    %3490 = vst.msk [vmem:[%s4] sm:$0xff] %vm254, %v3294
    %3491 = vst.msk [vmem:[%s4 + $0x8] sm:$0xff] %vm254, %v3295
    %3492 = vst.msk [vmem:[%s4 + $0x10] sm:$0xff] %vm254, %v3296
    %3493 = vst.msk [vmem:[%s4 + $0x18] sm:$0xff] %vm254, %v3297
    %3494 = vst.msk [vmem:[%s4 + $0x20] sm:$0xff] %vm254, %v3298
    %3495 = vst.msk [vmem:[%s4 + $0x28] sm:$0xff] %vm254, %v3299
    %3496 = vst.msk [vmem:[%s4 + $0x30] sm:$0xff] %vm254, %v3300
    %3497 = vst.msk [vmem:[%s4 + $0x38] sm:$0xff] %vm254, %v3301
    %3498 = vst.msk [vmem:[%s4 + $0x40] sm:$0xff] %vm254, %v3302
    %3499 = vst.msk [vmem:[%s4 + $0x48] sm:$0xff] %vm254, %v3303
    %3500 = vst.msk [vmem:[%s4 + $0x50] sm:$0xff] %vm254, %v3304
    %3501 = vst.msk [vmem:[%s4 + $0x58] sm:$0xff] %vm254, %v3305
    %3502 = vst.msk [vmem:[%s4 + $0x60] sm:$0xff] %vm254, %v3306
    %3503 = vst.msk [vmem:[%s4 + $0x68] sm:$0xff] %vm254, %v3307
    %3504 = vst.msk [vmem:[%s4 + $0x70] sm:$0xff] %vm254, %v3308
    %3505 = vst.msk [vmem:[%s4 + $0x78] sm:$0xff] %vm254, %v3309
    %3506 = vst.msk [vmem:[%s4 + $0x80] sm:$0xff] %vm254, %v3310
    %3507 = vst.msk [vmem:[%s4 + $0x88] sm:$0xff] %vm254, %v3311
    %3508 = vst.msk [vmem:[%s4 + $0x90] sm:$0xff] %vm254, %v3312
    %3509 = vst.msk [vmem:[%s4 + $0x98] sm:$0xff] %vm254, %v3313
    %3510 = vst.msk [vmem:[%s4 + $0xa0] sm:$0xff] %vm254, %v3314
    %3511 = vst.msk [vmem:[%s4 + $0xa8] sm:$0xff] %vm254, %v3315
    %3512 = vst.msk [vmem:[%s4 + $0xb0] sm:$0xff] %vm254, %v3316
    %3513 = vst.msk [vmem:[%s4 + $0xb8] sm:$0xff] %vm254, %v3317
    %3514 = vst.msk [vmem:[%s4 + $0xc0] sm:$0xff] %vm254, %v3318
    %3515 = vst.msk [vmem:[%s4 + $0xc8] sm:$0xff] %vm254, %v3319
    %3516 = vst.msk [vmem:[%s4 + $0xd0] sm:$0xff] %vm254, %v3320
    %3517 = vst.msk [vmem:[%s4 + $0xd8] sm:$0xff] %vm254, %v3321
    %3518 = vst.msk [vmem:[%s4 + $0xe0] sm:$0xff] %vm254, %v3322
    %3519 = vst.msk [vmem:[%s4 + $0xe8] sm:$0xff] %vm254, %v3323
    %3520 = vst.msk [vmem:[%s4 + $0xf0] sm:$0xff] %vm254, %v3324
    %3521 = vst.msk [vmem:[%s4 + $0xf8] sm:$0xff] %vm254, %v3325
    %3522 = vst.msk [vmem:[%s4 + $0x100] sm:$0xff] %vm254, %v3326
    %3523 = vst.msk [vmem:[%s4 + $0x108] sm:$0xff] %vm254, %v3327
    %3524 = vst.msk [vmem:[%s4 + $0x110] sm:$0xff] %vm254, %v3328
    %3525 = vst.msk [vmem:[%s4 + $0x118] sm:$0xff] %vm254, %v3329
    %3526 = vst.msk [vmem:[%s4 + $0x120] sm:$0xff] %vm254, %v3330
    %3527 = vst.msk [vmem:[%s4 + $0x128] sm:$0xff] %vm254, %v3331
    %3528 = vst.msk [vmem:[%s4 + $0x130] sm:$0xff] %vm254, %v3332
    %3529 = vst.msk [vmem:[%s4 + $0x138] sm:$0xff] %vm254, %v3333
    %3530 = vst.msk [vmem:[%s4 + $0x140] sm:$0xff] %vm254, %v3334
    %3531 = vst.msk [vmem:[%s4 + $0x148] sm:$0xff] %vm254, %v3335
    %3532 = vst.msk [vmem:[%s4 + $0x150] sm:$0xff] %vm254, %v3336
    %3533 = vst.msk [vmem:[%s4 + $0x158] sm:$0xff] %vm254, %v3337
    %3534 = vst.msk [vmem:[%s4 + $0x160] sm:$0xff] %vm254, %v3338
    %3535 = vst.msk [vmem:[%s4 + $0x168] sm:$0xff] %vm254, %v3339
    %3536 = vst.msk [vmem:[%s4 + $0x170] sm:$0xff] %vm254, %v3340
    %3537 = vst.msk [vmem:[%s4 + $0x178] sm:$0xff] %vm254, %v3341
    %3538 = vst.msk [vmem:[%s4 + $0x180] sm:$0xff] %vm254, %v3342
    %3539 = vst.msk [vmem:[%s4 + $0x188] sm:$0xff] %vm254, %v3343
    %3540 = vst.msk [vmem:[%s4 + $0x190] sm:$0xff] %vm254, %v3344
    %3541 = vst.msk [vmem:[%s4 + $0x198] sm:$0xff] %vm254, %v3345
    %3542 = vst.msk [vmem:[%s4 + $0x1a0] sm:$0xff] %vm254, %v3346
    %3543 = vst.msk [vmem:[%s4 + $0x1a8] sm:$0xff] %vm254, %v3347
    %3544 = vst.msk [vmem:[%s4 + $0x1b0] sm:$0xff] %vm254, %v3348
    %3545 = vst.msk [vmem:[%s4 + $0x1b8] sm:$0xff] %vm254, %v3349
    %3546 = vst.msk [vmem:[%s4 + $0x1c0] sm:$0xff] %vm254, %v3350
    %3547 = vst.msk [vmem:[%s4 + $0x1c8] sm:$0xff] %vm254, %v3351
    %3548 = vst.msk [vmem:[%s4 + $0x1d0] sm:$0xff] %vm254, %v3352
    %3549 = vst.msk [vmem:[%s4 + $0x1d8] sm:$0xff] %vm254, %v3353
    %3550 = vst.msk [vmem:[%s4 + $0x1e0] sm:$0xff] %vm254, %v3354
    %3551 = vst.msk [vmem:[%s4 + $0x1e8] sm:$0xff] %vm254, %v3355
    %3552 = vst.msk [vmem:[%s4 + $0x1f0] sm:$0xff] %vm254, %v3356
    %3553 = vst.msk [vmem:[%s4 + $0x1f8] sm:$0xff] %vm254, %v3357
    %3554 = vst.msk [vmem:[%s4 + $0x200] sm:$0xff] %vm254, %v3358
    %3555 = vst.msk [vmem:[%s4 + $0x208] sm:$0xff] %vm254, %v3359
    %3556 = vst.msk [vmem:[%s4 + $0x210] sm:$0xff] %vm254, %v3360
    %3557 = vst.msk [vmem:[%s4 + $0x218] sm:$0xff] %vm254, %v3361
    %3558 = vst.msk [vmem:[%s4 + $0x220] sm:$0xff] %vm254, %v3362
    %3559 = vst.msk [vmem:[%s4 + $0x228] sm:$0xff] %vm254, %v3363
    %3560 = vst.msk [vmem:[%s4 + $0x230] sm:$0xff] %vm254, %v3364
    %3561 = vst.msk [vmem:[%s4 + $0x238] sm:$0xff] %vm254, %v3365
    %3562 = vst.msk [vmem:[%s4 + $0x240] sm:$0xff] %vm254, %v3366
    %3563 = vst.msk [vmem:[%s4 + $0x248] sm:$0xff] %vm254, %v3367
    %3564 = vst.msk [vmem:[%s4 + $0x250] sm:$0xff] %vm254, %v3368
    %3565 = vst.msk [vmem:[%s4 + $0x258] sm:$0xff] %vm254, %v3369
    %3566 = vst.msk [vmem:[%s4 + $0x260] sm:$0xff] %vm254, %v3370
    %3567 = vst.msk [vmem:[%s4 + $0x268] sm:$0xff] %vm254, %v3371
    %3568 = vst.msk [vmem:[%s4 + $0x270] sm:$0xff] %vm254, %v3372
    %3569 = vst.msk [vmem:[%s4 + $0x278] sm:$0xff] %vm254, %v3373
    %3570 = vst.msk [vmem:[%s4 + $0x280] sm:$0xff] %vm254, %v3374
    %3571 = vst.msk [vmem:[%s4 + $0x288] sm:$0xff] %vm254, %v3375
    %3572 = vst.msk [vmem:[%s4 + $0x290] sm:$0xff] %vm254, %v3376
    %3573 = vst.msk [vmem:[%s4 + $0x298] sm:$0xff] %vm254, %v3377
    %3574 = vst.msk [vmem:[%s4 + $0x2a0] sm:$0xff] %vm254, %v3378
    %3575 = vst.msk [vmem:[%s4 + $0x2a8] sm:$0xff] %vm254, %v3379
    %3576 = vst.msk [vmem:[%s4 + $0x2b0] sm:$0xff] %vm254, %v3380
    %3577 = vst.msk [vmem:[%s4 + $0x2b8] sm:$0xff] %vm254, %v3381
    %3578 = vst.msk [vmem:[%s4 + $0x2c0] sm:$0xff] %vm254, %v3382
    %3579 = vst.msk [vmem:[%s4 + $0x2c8] sm:$0xff] %vm254, %v3383
    %3580 = vst.msk [vmem:[%s4 + $0x2d0] sm:$0xff] %vm254, %v3384
    %3581 = vst.msk [vmem:[%s4 + $0x2d8] sm:$0xff] %vm254, %v3385
    %3582 = vst.msk [vmem:[%s4 + $0x2e0] sm:$0xff] %vm254, %v3386
    %3583 = vst.msk [vmem:[%s4 + $0x2e8] sm:$0xff] %vm254, %v3387
    %3584 = vst.msk [vmem:[%s4 + $0x2f0] sm:$0xff] %vm254, %v3388
    %3585 = vst.msk [vmem:[%s4 + $0x2f8] sm:$0xff] %vm254, %v3389
    %3586 = vst.msk [vmem:[%s4 + $0x300] sm:$0xff] %vm254, %v3390
    %3587 = vst.msk [vmem:[%s4 + $0x308] sm:$0xff] %vm254, %v3391
    %3588 = vst.msk [vmem:[%s4 + $0x310] sm:$0xff] %vm254, %v3392
    %3589 = vst.msk [vmem:[%s4 + $0x318] sm:$0xff] %vm254, %v3393
    %3590 = vst.msk [vmem:[%s4 + $0x320] sm:$0xff] %vm254, %v3394
    %3591 = vst.msk [vmem:[%s4 + $0x328] sm:$0xff] %vm254, %v3395
    %3592 = vst.msk [vmem:[%s4 + $0x330] sm:$0xff] %vm254, %v3396
    %3593 = vst.msk [vmem:[%s4 + $0x338] sm:$0xff] %vm254, %v3397
    %3594 = vst.msk [vmem:[%s4 + $0x340] sm:$0xff] %vm254, %v3398
    %3595 = vst.msk [vmem:[%s4 + $0x348] sm:$0xff] %vm254, %v3399
    %3596 = vst.msk [vmem:[%s4 + $0x350] sm:$0xff] %vm254, %v3400
    %3597 = vst.msk [vmem:[%s4 + $0x358] sm:$0xff] %vm254, %v3401
    %3598 = vst.msk [vmem:[%s4 + $0x360] sm:$0xff] %vm254, %v3402
    %3599 = vst.msk [vmem:[%s4 + $0x368] sm:$0xff] %vm254, %v3403
    %3600 = vst.msk [vmem:[%s4 + $0x370] sm:$0xff] %vm254, %v3404
    %3601 = vst.msk [vmem:[%s4 + $0x378] sm:$0xff] %vm254, %v3405
    %3602 = vst.msk [vmem:[%s4 + $0x380] sm:$0xff] %vm254, %v3406
    %3603 = vst.msk [vmem:[%s4 + $0x388] sm:$0xff] %vm254, %v3407
    %3604 = vst.msk [vmem:[%s4 + $0x390] sm:$0xff] %vm254, %v3408
    %3605 = vst.msk [vmem:[%s4 + $0x398] sm:$0xff] %vm254, %v3409
    %3606 = vst.msk [vmem:[%s4 + $0x3a0] sm:$0xff] %vm254, %v3410
    %3607 = vst.msk [vmem:[%s4 + $0x3a8] sm:$0xff] %vm254, %v3411
    %3608 = vst.msk [vmem:[%s4 + $0x3b0] sm:$0xff] %vm254, %v3412
    %3609 = vst.msk [vmem:[%s4 + $0x3b8] sm:$0xff] %vm254, %v3413
    %3610 = vst.msk [vmem:[%s4 + $0x3c0] sm:$0xff] %vm254, %v3414
    %3611 = vst.msk [vmem:[%s4 + $0x3c8] sm:$0xff] %vm254, %v3415
    %3612 = vst.msk [vmem:[%s4 + $0x3d0] sm:$0xff] %vm254, %v3416
    %3613 = vst.msk [vmem:[%s4 + $0x3d8] sm:$0xff] %vm254, %v3417
    %3614 = vst.msk [vmem:[%s4 + $0x3e0] sm:$0xff] %vm254, %v3418
    %3615 = vst.msk [vmem:[%s4 + $0x3e8] sm:$0xff] %vm254, %v3419
    %3616 = vst.msk [vmem:[%s4 + $0x3f0] sm:$0xff] %vm254, %v3420
    %3617 = vst.msk [vmem:[%s4 + $0x3f8] sm:$0xff] %vm254, %v3421
    %3618 = vst.msk [vmem:[%s4 + $0x400] sm:$0xff] %vm254, %v3422
    %3619 = vst.msk [vmem:[%s4 + $0x408] sm:$0xff] %vm254, %v3423
    %3620 = vst.msk [vmem:[%s4 + $0x410] sm:$0xff] %vm254, %v3424
    %3621 = vst.msk [vmem:[%s4 + $0x418] sm:$0xff] %vm254, %v3425
    %3622 = vst.msk [vmem:[%s4 + $0x420] sm:$0xff] %vm254, %v3426
    %3623 = vst.msk [vmem:[%s4 + $0x428] sm:$0xff] %vm254, %v3427
    %3624 = vst.msk [vmem:[%s4 + $0x430] sm:$0xff] %vm254, %v3428
    %3625 = vst.msk [vmem:[%s4 + $0x438] sm:$0xff] %vm254, %v3429
    %3626 = vst.msk [vmem:[%s4 + $0x440] sm:$0xff] %vm254, %v3430
    %3627 = vst.msk [vmem:[%s4 + $0x448] sm:$0xff] %vm254, %v3431
    %3628 = vst.msk [vmem:[%s4 + $0x450] sm:$0xff] %vm254, %v3432
    %3629 = vst.msk [vmem:[%s4 + $0x458] sm:$0xff] %vm254, %v3433
    %3630 = vst.msk [vmem:[%s4 + $0x460] sm:$0xff] %vm254, %v3434
    %3631 = vst.msk [vmem:[%s4 + $0x468] sm:$0xff] %vm254, %v3435
    %3632 = vst.msk [vmem:[%s4 + $0x470] sm:$0xff] %vm254, %v3436
    %3633 = vst.msk [vmem:[%s4 + $0x478] sm:$0xff] %vm254, %v3437
    %3634 = vst.msk [vmem:[%s4 + $0x480] sm:$0xff] %vm254, %v3438
    %3635 = vst.msk [vmem:[%s4 + $0x488] sm:$0xff] %vm254, %v3439
    %3636 = vst.msk [vmem:[%s4 + $0x490] sm:$0xff] %vm254, %v3440
    %3637 = vst.msk [vmem:[%s4 + $0x498] sm:$0xff] %vm254, %v3441
    %3638 = vst.msk [vmem:[%s4 + $0x4a0] sm:$0xff] %vm254, %v3442
    %3639 = vst.msk [vmem:[%s4 + $0x4a8] sm:$0xff] %vm254, %v3443
    %3640 = vst.msk [vmem:[%s4 + $0x4b0] sm:$0xff] %vm254, %v3444
    %3641 = vst.msk [vmem:[%s4 + $0x4b8] sm:$0xff] %vm254, %v3445
    %3642 = vst.msk [vmem:[%s4 + $0x4c0] sm:$0xff] %vm254, %v3446
    %3643 = vst.msk [vmem:[%s4 + $0x4c8] sm:$0xff] %vm254, %v3447
    %3644 = vst.msk [vmem:[%s4 + $0x4d0] sm:$0xff] %vm254, %v3448
    %3645 = vst.msk [vmem:[%s4 + $0x4d8] sm:$0xff] %vm254, %v3449
    %3646 = vst.msk [vmem:[%s4 + $0x4e0] sm:$0xff] %vm254, %v3450
    %3647 = vst.msk [vmem:[%s4 + $0x4e8] sm:$0xff] %vm254, %v3451
    %3648 = vst.msk [vmem:[%s4 + $0x4f0] sm:$0xff] %vm254, %v3452
    %3649 = vst.msk [vmem:[%s4 + $0x4f8] sm:$0xff] %vm254, %v3453
    %3650 = vst.msk [vmem:[%s4 + $0x500] sm:$0xff] %vm254, %v3454
    %3651 = vst.msk [vmem:[%s4 + $0x508] sm:$0xff] %vm254, %v3455
    %3652 = vst.msk [vmem:[%s4 + $0x510] sm:$0xff] %vm254, %v3456
    %3653 = vst.msk [vmem:[%s4 + $0x518] sm:$0xff] %vm254, %v3457
    %3654 = vst.msk [vmem:[%s4 + $0x520] sm:$0xff] %vm254, %v3458
    %3655 = vst.msk [vmem:[%s4 + $0x528] sm:$0xff] %vm254, %v3459
    %3656 = vst.msk [vmem:[%s4 + $0x530] sm:$0xff] %vm254, %v3460
    %3657 = vst.msk [vmem:[%s4 + $0x538] sm:$0xff] %vm254, %v3461
    %3658 = vst.msk [vmem:[%s4 + $0x540] sm:$0xff] %vm254, %v3462
    %3659 = vst.msk [vmem:[%s4 + $0x548] sm:$0xff] %vm254, %v3463
    %3660 = vst.msk [vmem:[%s4 + $0x550] sm:$0xff] %vm254, %v3464
    %3661 = vst.msk [vmem:[%s4 + $0x558] sm:$0xff] %vm254, %v3465
    %3662 = vst.msk [vmem:[%s4 + $0x560] sm:$0xff] %vm254, %v3466
    %3663 = vst.msk [vmem:[%s4 + $0x568] sm:$0xff] %vm254, %v3467
    %3664 = vst.msk [vmem:[%s4 + $0x570] sm:$0xff] %vm254, %v3468
    %3665 = vst.msk [vmem:[%s4 + $0x578] sm:$0xff] %vm254, %v3469
    %3666 = vst.msk [vmem:[%s4 + $0x580] sm:$0xff] %vm254, %v3470
    %3667 = vst.msk [vmem:[%s4 + $0x588] sm:$0xff] %vm254, %v3471
    %3668 = vst.msk [vmem:[%s4 + $0x590] sm:$0xff] %vm254, %v3472
    %3669 = vst.msk [vmem:[%s4 + $0x598] sm:$0xff] %vm254, %v3473
    %3670 = vst.msk [vmem:[%s4 + $0x5a0] sm:$0xff] %vm254, %v3474
    %3671 = vst.msk [vmem:[%s4 + $0x5a8] sm:$0xff] %vm254, %v3475
    %3672 = vst.msk [vmem:[%s4 + $0x5b0] sm:$0xff] %vm254, %v3476
    %3673 = vst.msk [vmem:[%s4 + $0x5b8] sm:$0xff] %vm254, %v3477
    %3674 = vst.msk [vmem:[%s4 + $0x5c0] sm:$0xff] %vm254, %v3478
    %3675 = vst.msk [vmem:[%s4 + $0x5c8] sm:$0xff] %vm254, %v3479
    %3676 = vst.msk [vmem:[%s4 + $0x5d0] sm:$0xff] %vm254, %v3480
    %3677 = vst.msk [vmem:[%s4 + $0x5d8] sm:$0xff] %vm254, %v3481
    %3678 = vst.msk [vmem:[%s4 + $0x5e0] sm:$0xff] %vm254, %v3482
    %3679 = vst.msk [vmem:[%s4 + $0x5e8] sm:$0xff] %vm254, %v3483
    %3680 = vst.msk [vmem:[%s4 + $0x5f0] sm:$0xff] %vm254, %v3484
    %3681 = vst.msk [vmem:[%s4 + $0x5f8] sm:$0xff] %vm254, %v3485
    %3682 = vst.msk [vmem:[%s4 + $0x600] sm:$0xff] %vm254, %v3486
    %3683 = vst.msk [vmem:[%s4 + $0x608] sm:$0xff] %vm254, %v3487
    %3684 = vst.msk [vmem:[%s4 + $0x610] sm:$0xff] %vm254, %v3488
    %3685 = vst.msk [vmem:[%s4 + $0x618] sm:$0xff] %vm254, %v3489
    %v3686 = vld [vmem:[%s4] sm:$0xff]
    %v3687 = vld [vmem:[%s4 + $0x8] sm:$0xff]
    %v3688 = vld [vmem:[%s4 + $0x10] sm:$0xff]
    %v3689 = vld [vmem:[%s4 + $0x18] sm:$0xff]
    %v3690 = vld [vmem:[%s4 + $0x20] sm:$0xff]
    %v3691 = vld [vmem:[%s4 + $0x28] sm:$0xff]
    %v3692 = vld [vmem:[%s4 + $0x30] sm:$0xff]
    %v3693 = vld [vmem:[%s4 + $0x38] sm:$0xff]
    %v3694 = vld [vmem:[%s4 + $0x40] sm:$0xff]
    %v3695 = vld [vmem:[%s4 + $0x48] sm:$0xff]
    %v3696 = vld [vmem:[%s4 + $0x50] sm:$0xff]
    %v3697 = vld [vmem:[%s4 + $0x58] sm:$0xff]
    %v3698 = vld [vmem:[%s4 + $0x60] sm:$0xff]
    %v3699 = vld [vmem:[%s4 + $0x68] sm:$0xff]
    %v3700 = vld [vmem:[%s4 + $0x70] sm:$0xff]
    %v3701 = vld [vmem:[%s4 + $0x78] sm:$0xff]
    %v3702 = vld [vmem:[%s4 + $0x80] sm:$0xff]
    %v3703 = vld [vmem:[%s4 + $0x88] sm:$0xff]
    %v3704 = vld [vmem:[%s4 + $0x90] sm:$0xff]
    %v3705 = vld [vmem:[%s4 + $0x98] sm:$0xff]
    %v3706 = vld [vmem:[%s4 + $0xa0] sm:$0xff]
    %v3707 = vld [vmem:[%s4 + $0xa8] sm:$0xff]
    %v3708 = vld [vmem:[%s4 + $0xb0] sm:$0xff]
    %v3709 = vld [vmem:[%s4 + $0xb8] sm:$0xff]
    %v3710 = vld [vmem:[%s4 + $0xc0] sm:$0xff]
    %v3711 = vld [vmem:[%s4 + $0xc8] sm:$0xff]
    %v3712 = vld [vmem:[%s4 + $0xd0] sm:$0xff]
    %v3713 = vld [vmem:[%s4 + $0xd8] sm:$0xff]
    %v3714 = vld [vmem:[%s4 + $0xe0] sm:$0xff]
    %v3715 = vld [vmem:[%s4 + $0xe8] sm:$0xff]
    %v3716 = vld [vmem:[%s4 + $0xf0] sm:$0xff]
    %v3717 = vld [vmem:[%s4 + $0xf8] sm:$0xff]
    %v3718 = vld [vmem:[%s4 + $0x100] sm:$0xff]
    %v3719 = vld [vmem:[%s4 + $0x108] sm:$0xff]
    %v3720 = vld [vmem:[%s4 + $0x110] sm:$0xff]
    %v3721 = vld [vmem:[%s4 + $0x118] sm:$0xff]
    %v3722 = vld [vmem:[%s4 + $0x120] sm:$0xff]
    %v3723 = vld [vmem:[%s4 + $0x128] sm:$0xff]
    %v3724 = vld [vmem:[%s4 + $0x130] sm:$0xff]
    %v3725 = vld [vmem:[%s4 + $0x138] sm:$0xff]
    %v3726 = vld [vmem:[%s4 + $0x140] sm:$0xff]
    %v3727 = vld [vmem:[%s4 + $0x148] sm:$0xff]
    %v3728 = vld [vmem:[%s4 + $0x150] sm:$0xff]
    %v3729 = vld [vmem:[%s4 + $0x158] sm:$0xff]
    %v3730 = vld [vmem:[%s4 + $0x160] sm:$0xff]
    %v3731 = vld [vmem:[%s4 + $0x168] sm:$0xff]
    %v3732 = vld [vmem:[%s4 + $0x170] sm:$0xff]
    %v3733 = vld [vmem:[%s4 + $0x178] sm:$0xff]
    %v3734 = vld [vmem:[%s4 + $0x180] sm:$0xff]
    %v3735 = vld [vmem:[%s4 + $0x188] sm:$0xff]
    %v3736 = vld [vmem:[%s4 + $0x190] sm:$0xff]
    %v3737 = vld [vmem:[%s4 + $0x198] sm:$0xff]
    %v3738 = vld [vmem:[%s4 + $0x1a0] sm:$0xff]
    %v3739 = vld [vmem:[%s4 + $0x1a8] sm:$0xff]
    %v3740 = vld [vmem:[%s4 + $0x1b0] sm:$0xff]
    %v3741 = vld [vmem:[%s4 + $0x1b8] sm:$0xff]
    %v3742 = vld [vmem:[%s4 + $0x1c0] sm:$0xff]
    %v3743 = vld [vmem:[%s4 + $0x1c8] sm:$0xff]
    %v3744 = vld [vmem:[%s4 + $0x1d0] sm:$0xff]
    %v3745 = vld [vmem:[%s4 + $0x1d8] sm:$0xff]
    %v3746 = vld [vmem:[%s4 + $0x1e0] sm:$0xff]
    %v3747 = vld [vmem:[%s4 + $0x1e8] sm:$0xff]
    %v3748 = vld [vmem:[%s4 + $0x1f0] sm:$0xff]
    %v3749 = vld [vmem:[%s4 + $0x1f8] sm:$0xff]
    %v3750 = vld [vmem:[%s4 + $0x200] sm:$0xff]
    %v3751 = vld [vmem:[%s4 + $0x208] sm:$0xff]
    %v3752 = vld [vmem:[%s4 + $0x210] sm:$0xff]
    %v3753 = vld [vmem:[%s4 + $0x218] sm:$0xff]
    %v3754 = vld [vmem:[%s4 + $0x220] sm:$0xff]
    %v3755 = vld [vmem:[%s4 + $0x228] sm:$0xff]
    %v3756 = vld [vmem:[%s4 + $0x230] sm:$0xff]
    %v3757 = vld [vmem:[%s4 + $0x238] sm:$0xff]
    %v3758 = vld [vmem:[%s4 + $0x240] sm:$0xff]
    %v3759 = vld [vmem:[%s4 + $0x248] sm:$0xff]
    %v3760 = vld [vmem:[%s4 + $0x250] sm:$0xff]
    %v3761 = vld [vmem:[%s4 + $0x258] sm:$0xff]
    %v3762 = vld [vmem:[%s4 + $0x260] sm:$0xff]
    %v3763 = vld [vmem:[%s4 + $0x268] sm:$0xff]
    %v3764 = vld [vmem:[%s4 + $0x270] sm:$0xff]
    %v3765 = vld [vmem:[%s4 + $0x278] sm:$0xff]
    %v3766 = vld [vmem:[%s4 + $0x280] sm:$0xff]
    %v3767 = vld [vmem:[%s4 + $0x288] sm:$0xff]
    %v3768 = vld [vmem:[%s4 + $0x290] sm:$0xff]
    %v3769 = vld [vmem:[%s4 + $0x298] sm:$0xff]
    %v3770 = vld [vmem:[%s4 + $0x2a0] sm:$0xff]
    %v3771 = vld [vmem:[%s4 + $0x2a8] sm:$0xff]
    %v3772 = vld [vmem:[%s4 + $0x2b0] sm:$0xff]
    %v3773 = vld [vmem:[%s4 + $0x2b8] sm:$0xff]
    %v3774 = vld [vmem:[%s4 + $0x2c0] sm:$0xff]
    %v3775 = vld [vmem:[%s4 + $0x2c8] sm:$0xff]
    %v3776 = vld [vmem:[%s4 + $0x2d0] sm:$0xff]
    %v3777 = vld [vmem:[%s4 + $0x2d8] sm:$0xff]
    %v3778 = vld [vmem:[%s4 + $0x2e0] sm:$0xff]
    %v3779 = vld [vmem:[%s4 + $0x2e8] sm:$0xff]
    %v3780 = vld [vmem:[%s4 + $0x2f0] sm:$0xff]
    %v3781 = vld [vmem:[%s4 + $0x2f8] sm:$0xff]
    %v3782 = vld [vmem:[%s4 + $0x300] sm:$0xff]
    %v3783 = vld [vmem:[%s4 + $0x308] sm:$0xff]
    %v3784 = vld [vmem:[%s4 + $0x310] sm:$0xff]
    %v3785 = vld [vmem:[%s4 + $0x318] sm:$0xff]
    %v3786 = vld [vmem:[%s4 + $0x320] sm:$0xff]
    %v3787 = vld [vmem:[%s4 + $0x328] sm:$0xff]
    %v3788 = vld [vmem:[%s4 + $0x330] sm:$0xff]
    %v3789 = vld [vmem:[%s4 + $0x338] sm:$0xff]
    %v3790 = vld [vmem:[%s4 + $0x340] sm:$0xff]
    %v3791 = vld [vmem:[%s4 + $0x348] sm:$0xff]
    %v3792 = vld [vmem:[%s4 + $0x350] sm:$0xff]
    %v3793 = vld [vmem:[%s4 + $0x358] sm:$0xff]
    %v3794 = vld [vmem:[%s4 + $0x360] sm:$0xff]
    %v3795 = vld [vmem:[%s4 + $0x368] sm:$0xff]
    %v3796 = vld [vmem:[%s4 + $0x370] sm:$0xff]
    %v3797 = vld [vmem:[%s4 + $0x378] sm:$0xff]
    %v3798 = vld [vmem:[%s4 + $0x380] sm:$0xff]
    %v3799 = vld [vmem:[%s4 + $0x388] sm:$0xff]
    %v3800 = vld [vmem:[%s4 + $0x390] sm:$0xff]
    %v3801 = vld [vmem:[%s4 + $0x398] sm:$0xff]
    %v3802 = vld [vmem:[%s4 + $0x3a0] sm:$0xff]
    %v3803 = vld [vmem:[%s4 + $0x3a8] sm:$0xff]
    %v3804 = vld [vmem:[%s4 + $0x3b0] sm:$0xff]
    %v3805 = vld [vmem:[%s4 + $0x3b8] sm:$0xff]
    %v3806 = vld [vmem:[%s4 + $0x3c0] sm:$0xff]
    %v3807 = vld [vmem:[%s4 + $0x3c8] sm:$0xff]
    %v3808 = vld [vmem:[%s4 + $0x3d0] sm:$0xff]
    %v3809 = vld [vmem:[%s4 + $0x3d8] sm:$0xff]
    %v3810 = vld [vmem:[%s4 + $0x3e0] sm:$0xff]
    %v3811 = vld [vmem:[%s4 + $0x3e8] sm:$0xff]
    %v3812 = vld [vmem:[%s4 + $0x3f0] sm:$0xff]
    %v3813 = vld [vmem:[%s4 + $0x3f8] sm:$0xff]
    %v3814 = vld [vmem:[%s4 + $0x400] sm:$0xff]
    %v3815 = vld [vmem:[%s4 + $0x408] sm:$0xff]
    %v3816 = vld [vmem:[%s4 + $0x410] sm:$0xff]
    %v3817 = vld [vmem:[%s4 + $0x418] sm:$0xff]
    %v3818 = vld [vmem:[%s4 + $0x420] sm:$0xff]
    %v3819 = vld [vmem:[%s4 + $0x428] sm:$0xff]
    %v3820 = vld [vmem:[%s4 + $0x430] sm:$0xff]
    %v3821 = vld [vmem:[%s4 + $0x438] sm:$0xff]
    %v3822 = vld [vmem:[%s4 + $0x440] sm:$0xff]
    %v3823 = vld [vmem:[%s4 + $0x448] sm:$0xff]
    %v3824 = vld [vmem:[%s4 + $0x450] sm:$0xff]
    %v3825 = vld [vmem:[%s4 + $0x458] sm:$0xff]
    %v3826 = vld [vmem:[%s4 + $0x460] sm:$0xff]
    %v3827 = vld [vmem:[%s4 + $0x468] sm:$0xff]
    %v3828 = vld [vmem:[%s4 + $0x470] sm:$0xff]
    %v3829 = vld [vmem:[%s4 + $0x478] sm:$0xff]
    %v3830 = vld [vmem:[%s4 + $0x480] sm:$0xff]
    %v3831 = vld [vmem:[%s4 + $0x488] sm:$0xff]
    %v3832 = vld [vmem:[%s4 + $0x490] sm:$0xff]
    %v3833 = vld [vmem:[%s4 + $0x498] sm:$0xff]
    %v3834 = vld [vmem:[%s4 + $0x4a0] sm:$0xff]
    %v3835 = vld [vmem:[%s4 + $0x4a8] sm:$0xff]
    %v3836 = vld [vmem:[%s4 + $0x4b0] sm:$0xff]
    %v3837 = vld [vmem:[%s4 + $0x4b8] sm:$0xff]
    %v3838 = vld [vmem:[%s4 + $0x4c0] sm:$0xff]
    %v3839 = vld [vmem:[%s4 + $0x4c8] sm:$0xff]
    %v3840 = vld [vmem:[%s4 + $0x4d0] sm:$0xff]
    %v3841 = vld [vmem:[%s4 + $0x4d8] sm:$0xff]
    %v3842 = vld [vmem:[%s4 + $0x4e0] sm:$0xff]
    %v3843 = vld [vmem:[%s4 + $0x4e8] sm:$0xff]
    %v3844 = vld [vmem:[%s4 + $0x4f0] sm:$0xff]
    %v3845 = vld [vmem:[%s4 + $0x4f8] sm:$0xff]
    %v3846 = vld [vmem:[%s4 + $0x500] sm:$0xff]
    %v3847 = vld [vmem:[%s4 + $0x508] sm:$0xff]
    %v3848 = vld [vmem:[%s4 + $0x510] sm:$0xff]
    %v3849 = vld [vmem:[%s4 + $0x518] sm:$0xff]
    %v3850 = vld [vmem:[%s4 + $0x520] sm:$0xff]
    %v3851 = vld [vmem:[%s4 + $0x528] sm:$0xff]
    %v3852 = vld [vmem:[%s4 + $0x530] sm:$0xff]
    %v3853 = vld [vmem:[%s4 + $0x538] sm:$0xff]
    %v3854 = vld [vmem:[%s4 + $0x540] sm:$0xff]
    %v3855 = vld [vmem:[%s4 + $0x548] sm:$0xff]
    %v3856 = vld [vmem:[%s4 + $0x550] sm:$0xff]
    %v3857 = vld [vmem:[%s4 + $0x558] sm:$0xff]
    %v3858 = vld [vmem:[%s4 + $0x560] sm:$0xff]
    %v3859 = vld [vmem:[%s4 + $0x568] sm:$0xff]
    %v3860 = vld [vmem:[%s4 + $0x570] sm:$0xff]
    %v3861 = vld [vmem:[%s4 + $0x578] sm:$0xff]
    %v3862 = vld [vmem:[%s4 + $0x580] sm:$0xff]
    %v3863 = vld [vmem:[%s4 + $0x588] sm:$0xff]
    %v3864 = vld [vmem:[%s4 + $0x590] sm:$0xff]
    %v3865 = vld [vmem:[%s4 + $0x598] sm:$0xff]
    %v3866 = vld [vmem:[%s4 + $0x5a0] sm:$0xff]
    %v3867 = vld [vmem:[%s4 + $0x5a8] sm:$0xff]
    %v3868 = vld [vmem:[%s4 + $0x5b0] sm:$0xff]
    %v3869 = vld [vmem:[%s4 + $0x5b8] sm:$0xff]
    %v3870 = vld [vmem:[%s4 + $0x5c0] sm:$0xff]
    %v3871 = vld [vmem:[%s4 + $0x5c8] sm:$0xff]
    %v3872 = vld [vmem:[%s4 + $0x5d0] sm:$0xff]
    %v3873 = vld [vmem:[%s4 + $0x5d8] sm:$0xff]
    %v3874 = vld [vmem:[%s4 + $0x5e0] sm:$0xff]
    %v3875 = vld [vmem:[%s4 + $0x5e8] sm:$0xff]
    %v3876 = vld [vmem:[%s4 + $0x5f0] sm:$0xff]
    %v3877 = vld [vmem:[%s4 + $0x5f8] sm:$0xff]
    %v3878 = vld [vmem:[%s4 + $0x600] sm:$0x7]
    %v3879 = vld [vmem:[%s4 + $0x1] sm:$0xff]
    %v3880 = vld [vmem:[%s4 + $0x9] sm:$0xff]
    %v3881 = vld [vmem:[%s4 + $0x11] sm:$0xff]
    %v3882 = vld [vmem:[%s4 + $0x19] sm:$0xff]
    %v3883 = vld [vmem:[%s4 + $0x21] sm:$0xff]
    %v3884 = vld [vmem:[%s4 + $0x29] sm:$0xff]
    %v3885 = vld [vmem:[%s4 + $0x31] sm:$0xff]
    %v3886 = vld [vmem:[%s4 + $0x39] sm:$0xff]
    %v3887 = vld [vmem:[%s4 + $0x41] sm:$0xff]
    %v3888 = vld [vmem:[%s4 + $0x49] sm:$0xff]
    %v3889 = vld [vmem:[%s4 + $0x51] sm:$0xff]
    %v3890 = vld [vmem:[%s4 + $0x59] sm:$0xff]
    %v3891 = vld [vmem:[%s4 + $0x61] sm:$0xff]
    %v3892 = vld [vmem:[%s4 + $0x69] sm:$0xff]
    %v3893 = vld [vmem:[%s4 + $0x71] sm:$0xff]
    %v3894 = vld [vmem:[%s4 + $0x79] sm:$0xff]
    %v3895 = vld [vmem:[%s4 + $0x81] sm:$0xff]
    %v3896 = vld [vmem:[%s4 + $0x89] sm:$0xff]
    %v3897 = vld [vmem:[%s4 + $0x91] sm:$0xff]
    %v3898 = vld [vmem:[%s4 + $0x99] sm:$0xff]
    %v3899 = vld [vmem:[%s4 + $0xa1] sm:$0xff]
    %v3900 = vld [vmem:[%s4 + $0xa9] sm:$0xff]
    %v3901 = vld [vmem:[%s4 + $0xb1] sm:$0xff]
    %v3902 = vld [vmem:[%s4 + $0xb9] sm:$0xff]
    %v3903 = vld [vmem:[%s4 + $0xc1] sm:$0xff]
    %v3904 = vld [vmem:[%s4 + $0xc9] sm:$0xff]
    %v3905 = vld [vmem:[%s4 + $0xd1] sm:$0xff]
    %v3906 = vld [vmem:[%s4 + $0xd9] sm:$0xff]
    %v3907 = vld [vmem:[%s4 + $0xe1] sm:$0xff]
    %v3908 = vld [vmem:[%s4 + $0xe9] sm:$0xff]
    %v3909 = vld [vmem:[%s4 + $0xf1] sm:$0xff]
    %v3910 = vld [vmem:[%s4 + $0xf9] sm:$0xff]
    %v3911 = vld [vmem:[%s4 + $0x101] sm:$0xff]
    %v3912 = vld [vmem:[%s4 + $0x109] sm:$0xff]
    %v3913 = vld [vmem:[%s4 + $0x111] sm:$0xff]
    %v3914 = vld [vmem:[%s4 + $0x119] sm:$0xff]
    %v3915 = vld [vmem:[%s4 + $0x121] sm:$0xff]
    %v3916 = vld [vmem:[%s4 + $0x129] sm:$0xff]
    %v3917 = vld [vmem:[%s4 + $0x131] sm:$0xff]
    %v3918 = vld [vmem:[%s4 + $0x139] sm:$0xff]
    %v3919 = vld [vmem:[%s4 + $0x141] sm:$0xff]
    %v3920 = vld [vmem:[%s4 + $0x149] sm:$0xff]
    %v3921 = vld [vmem:[%s4 + $0x151] sm:$0xff]
    %v3922 = vld [vmem:[%s4 + $0x159] sm:$0xff]
    %v3923 = vld [vmem:[%s4 + $0x161] sm:$0xff]
    %v3924 = vld [vmem:[%s4 + $0x169] sm:$0xff]
    %v3925 = vld [vmem:[%s4 + $0x171] sm:$0xff]
    %v3926 = vld [vmem:[%s4 + $0x179] sm:$0xff]
    %v3927 = vld [vmem:[%s4 + $0x181] sm:$0xff]
    %v3928 = vld [vmem:[%s4 + $0x189] sm:$0xff]
    %v3929 = vld [vmem:[%s4 + $0x191] sm:$0xff]
    %v3930 = vld [vmem:[%s4 + $0x199] sm:$0xff]
    %v3931 = vld [vmem:[%s4 + $0x1a1] sm:$0xff]
    %v3932 = vld [vmem:[%s4 + $0x1a9] sm:$0xff]
    %v3933 = vld [vmem:[%s4 + $0x1b1] sm:$0xff]
    %v3934 = vld [vmem:[%s4 + $0x1b9] sm:$0xff]
    %v3935 = vld [vmem:[%s4 + $0x1c1] sm:$0xff]
    %v3936 = vld [vmem:[%s4 + $0x1c9] sm:$0xff]
    %v3937 = vld [vmem:[%s4 + $0x1d1] sm:$0xff]
    %v3938 = vld [vmem:[%s4 + $0x1d9] sm:$0xff]
    %v3939 = vld [vmem:[%s4 + $0x1e1] sm:$0xff]
    %v3940 = vld [vmem:[%s4 + $0x1e9] sm:$0xff]
    %v3941 = vld [vmem:[%s4 + $0x1f1] sm:$0xff]
    %v3942 = vld [vmem:[%s4 + $0x1f9] sm:$0xff]
    %v3943 = vld [vmem:[%s4 + $0x201] sm:$0xff]
    %v3944 = vld [vmem:[%s4 + $0x209] sm:$0xff]
    %v3945 = vld [vmem:[%s4 + $0x211] sm:$0xff]
    %v3946 = vld [vmem:[%s4 + $0x219] sm:$0xff]
    %v3947 = vld [vmem:[%s4 + $0x221] sm:$0xff]
    %v3948 = vld [vmem:[%s4 + $0x229] sm:$0xff]
    %v3949 = vld [vmem:[%s4 + $0x231] sm:$0xff]
    %v3950 = vld [vmem:[%s4 + $0x239] sm:$0xff]
    %v3951 = vld [vmem:[%s4 + $0x241] sm:$0xff]
    %v3952 = vld [vmem:[%s4 + $0x249] sm:$0xff]
    %v3953 = vld [vmem:[%s4 + $0x251] sm:$0xff]
    %v3954 = vld [vmem:[%s4 + $0x259] sm:$0xff]
    %v3955 = vld [vmem:[%s4 + $0x261] sm:$0xff]
    %v3956 = vld [vmem:[%s4 + $0x269] sm:$0xff]
    %v3957 = vld [vmem:[%s4 + $0x271] sm:$0xff]
    %v3958 = vld [vmem:[%s4 + $0x279] sm:$0xff]
    %v3959 = vld [vmem:[%s4 + $0x281] sm:$0xff]
    %v3960 = vld [vmem:[%s4 + $0x289] sm:$0xff]
    %v3961 = vld [vmem:[%s4 + $0x291] sm:$0xff]
    %v3962 = vld [vmem:[%s4 + $0x299] sm:$0xff]
    %v3963 = vld [vmem:[%s4 + $0x2a1] sm:$0xff]
    %v3964 = vld [vmem:[%s4 + $0x2a9] sm:$0xff]
    %v3965 = vld [vmem:[%s4 + $0x2b1] sm:$0xff]
    %v3966 = vld [vmem:[%s4 + $0x2b9] sm:$0xff]
    %v3967 = vld [vmem:[%s4 + $0x2c1] sm:$0xff]
    %v3968 = vld [vmem:[%s4 + $0x2c9] sm:$0xff]
    %v3969 = vld [vmem:[%s4 + $0x2d1] sm:$0xff]
    %v3970 = vld [vmem:[%s4 + $0x2d9] sm:$0xff]
    %v3971 = vld [vmem:[%s4 + $0x2e1] sm:$0xff]
    %v3972 = vld [vmem:[%s4 + $0x2e9] sm:$0xff]
    %v3973 = vld [vmem:[%s4 + $0x2f1] sm:$0xff]
    %v3974 = vld [vmem:[%s4 + $0x2f9] sm:$0xff]
    %v3975 = vld [vmem:[%s4 + $0x301] sm:$0xff]
    %v3976 = vld [vmem:[%s4 + $0x309] sm:$0xff]
    %v3977 = vld [vmem:[%s4 + $0x311] sm:$0xff]
    %v3978 = vld [vmem:[%s4 + $0x319] sm:$0xff]
    %v3979 = vld [vmem:[%s4 + $0x321] sm:$0xff]
    %v3980 = vld [vmem:[%s4 + $0x329] sm:$0xff]
    %v3981 = vld [vmem:[%s4 + $0x331] sm:$0xff]
    %v3982 = vld [vmem:[%s4 + $0x339] sm:$0xff]
    %v3983 = vld [vmem:[%s4 + $0x341] sm:$0xff]
    %v3984 = vld [vmem:[%s4 + $0x349] sm:$0xff]
    %v3985 = vld [vmem:[%s4 + $0x351] sm:$0xff]
    %v3986 = vld [vmem:[%s4 + $0x359] sm:$0xff]
    %v3987 = vld [vmem:[%s4 + $0x361] sm:$0xff]
    %v3988 = vld [vmem:[%s4 + $0x369] sm:$0xff]
    %v3989 = vld [vmem:[%s4 + $0x371] sm:$0xff]
    %v3990 = vld [vmem:[%s4 + $0x379] sm:$0xff]
    %v3991 = vld [vmem:[%s4 + $0x381] sm:$0xff]
    %v3992 = vld [vmem:[%s4 + $0x389] sm:$0xff]
    %v3993 = vld [vmem:[%s4 + $0x391] sm:$0xff]
    %v3994 = vld [vmem:[%s4 + $0x399] sm:$0xff]
    %v3995 = vld [vmem:[%s4 + $0x3a1] sm:$0xff]
    %v3996 = vld [vmem:[%s4 + $0x3a9] sm:$0xff]
    %v3997 = vld [vmem:[%s4 + $0x3b1] sm:$0xff]
    %v3998 = vld [vmem:[%s4 + $0x3b9] sm:$0xff]
    %v3999 = vld [vmem:[%s4 + $0x3c1] sm:$0xff]
    %v4000 = vld [vmem:[%s4 + $0x3c9] sm:$0xff]
    %v4001 = vld [vmem:[%s4 + $0x3d1] sm:$0xff]
    %v4002 = vld [vmem:[%s4 + $0x3d9] sm:$0xff]
    %v4003 = vld [vmem:[%s4 + $0x3e1] sm:$0xff]
    %v4004 = vld [vmem:[%s4 + $0x3e9] sm:$0xff]
    %v4005 = vld [vmem:[%s4 + $0x3f1] sm:$0xff]
    %v4006 = vld [vmem:[%s4 + $0x3f9] sm:$0xff]
    %v4007 = vld [vmem:[%s4 + $0x401] sm:$0xff]
    %v4008 = vld [vmem:[%s4 + $0x409] sm:$0xff]
    %v4009 = vld [vmem:[%s4 + $0x411] sm:$0xff]
    %v4010 = vld [vmem:[%s4 + $0x419] sm:$0xff]
    %v4011 = vld [vmem:[%s4 + $0x421] sm:$0xff]
    %v4012 = vld [vmem:[%s4 + $0x429] sm:$0xff]
    %v4013 = vld [vmem:[%s4 + $0x431] sm:$0xff]
    %v4014 = vld [vmem:[%s4 + $0x439] sm:$0xff]
    %v4015 = vld [vmem:[%s4 + $0x441] sm:$0xff]
    %v4016 = vld [vmem:[%s4 + $0x449] sm:$0xff]
    %v4017 = vld [vmem:[%s4 + $0x451] sm:$0xff]
    %v4018 = vld [vmem:[%s4 + $0x459] sm:$0xff]
    %v4019 = vld [vmem:[%s4 + $0x461] sm:$0xff]
    %v4020 = vld [vmem:[%s4 + $0x469] sm:$0xff]
    %v4021 = vld [vmem:[%s4 + $0x471] sm:$0xff]
    %v4022 = vld [vmem:[%s4 + $0x479] sm:$0xff]
    %v4023 = vld [vmem:[%s4 + $0x481] sm:$0xff]
    %v4024 = vld [vmem:[%s4 + $0x489] sm:$0xff]
    %v4025 = vld [vmem:[%s4 + $0x491] sm:$0xff]
    %v4026 = vld [vmem:[%s4 + $0x499] sm:$0xff]
    %v4027 = vld [vmem:[%s4 + $0x4a1] sm:$0xff]
    %v4028 = vld [vmem:[%s4 + $0x4a9] sm:$0xff]
    %v4029 = vld [vmem:[%s4 + $0x4b1] sm:$0xff]
    %v4030 = vld [vmem:[%s4 + $0x4b9] sm:$0xff]
    %v4031 = vld [vmem:[%s4 + $0x4c1] sm:$0xff]
    %v4032 = vld [vmem:[%s4 + $0x4c9] sm:$0xff]
    %v4033 = vld [vmem:[%s4 + $0x4d1] sm:$0xff]
    %v4034 = vld [vmem:[%s4 + $0x4d9] sm:$0xff]
    %v4035 = vld [vmem:[%s4 + $0x4e1] sm:$0xff]
    %v4036 = vld [vmem:[%s4 + $0x4e9] sm:$0xff]
    %v4037 = vld [vmem:[%s4 + $0x4f1] sm:$0xff]
    %v4038 = vld [vmem:[%s4 + $0x4f9] sm:$0xff]
    %v4039 = vld [vmem:[%s4 + $0x501] sm:$0xff]
    %v4040 = vld [vmem:[%s4 + $0x509] sm:$0xff]
    %v4041 = vld [vmem:[%s4 + $0x511] sm:$0xff]
    %v4042 = vld [vmem:[%s4 + $0x519] sm:$0xff]
    %v4043 = vld [vmem:[%s4 + $0x521] sm:$0xff]
    %v4044 = vld [vmem:[%s4 + $0x529] sm:$0xff]
    %v4045 = vld [vmem:[%s4 + $0x531] sm:$0xff]
    %v4046 = vld [vmem:[%s4 + $0x539] sm:$0xff]
    %v4047 = vld [vmem:[%s4 + $0x541] sm:$0xff]
    %v4048 = vld [vmem:[%s4 + $0x549] sm:$0xff]
    %v4049 = vld [vmem:[%s4 + $0x551] sm:$0xff]
    %v4050 = vld [vmem:[%s4 + $0x559] sm:$0xff]
    %v4051 = vld [vmem:[%s4 + $0x561] sm:$0xff]
    %v4052 = vld [vmem:[%s4 + $0x569] sm:$0xff]
    %v4053 = vld [vmem:[%s4 + $0x571] sm:$0xff]
    %v4054 = vld [vmem:[%s4 + $0x579] sm:$0xff]
    %v4055 = vld [vmem:[%s4 + $0x581] sm:$0xff]
    %v4056 = vld [vmem:[%s4 + $0x589] sm:$0xff]
    %v4057 = vld [vmem:[%s4 + $0x591] sm:$0xff]
    %v4058 = vld [vmem:[%s4 + $0x599] sm:$0xff]
    %v4059 = vld [vmem:[%s4 + $0x5a1] sm:$0xff]
    %v4060 = vld [vmem:[%s4 + $0x5a9] sm:$0xff]
    %v4061 = vld [vmem:[%s4 + $0x5b1] sm:$0xff]
    %v4062 = vld [vmem:[%s4 + $0x5b9] sm:$0xff]
    %v4063 = vld [vmem:[%s4 + $0x5c1] sm:$0xff]
    %v4064 = vld [vmem:[%s4 + $0x5c9] sm:$0xff]
    %v4065 = vld [vmem:[%s4 + $0x5d1] sm:$0xff]
    %v4066 = vld [vmem:[%s4 + $0x5d9] sm:$0xff]
    %v4067 = vld [vmem:[%s4 + $0x5e1] sm:$0xff]
    %v4068 = vld [vmem:[%s4 + $0x5e9] sm:$0xff]
    %v4069 = vld [vmem:[%s4 + $0x5f1] sm:$0xff]
    %v4070 = vld [vmem:[%s4 + $0x5f9] sm:$0xff]
    %v4071 = vld [vmem:[%s4 + $0x601] sm:$0x7]
    %v4072 = vmax.f32 %v3686, %v3879
    %v4073 = vmax.f32 %v3687, %v3880
    %v4074 = vmax.f32 %v3688, %v3881
    %v4075 = vmax.f32 %v3689, %v3882
    %v4076 = vmax.f32 %v3690, %v3883
    %v4077 = vmax.f32 %v3691, %v3884
    %v4078 = vmax.f32 %v3692, %v3885
    %v4079 = vmax.f32 %v3693, %v3886
    %v4080 = vmax.f32 %v3694, %v3887
    %v4081 = vmax.f32 %v3695, %v3888
    %v4082 = vmax.f32 %v3696, %v3889
    %v4083 = vmax.f32 %v3697, %v3890
    %v4084 = vmax.f32 %v3698, %v3891
    %v4085 = vmax.f32 %v3699, %v3892
    %v4086 = vmax.f32 %v3700, %v3893
    %v4087 = vmax.f32 %v3701, %v3894
    %v4088 = vmax.f32 %v3702, %v3895
    %v4089 = vmax.f32 %v3703, %v3896
    %v4090 = vmax.f32 %v3704, %v3897
    %v4091 = vmax.f32 %v3705, %v3898
    %v4092 = vmax.f32 %v3706, %v3899
    %v4093 = vmax.f32 %v3707, %v3900
    %v4094 = vmax.f32 %v3708, %v3901
    %v4095 = vmax.f32 %v3709, %v3902
    %v4096 = vmax.f32 %v3710, %v3903
    %v4097 = vmax.f32 %v3711, %v3904
    %v4098 = vmax.f32 %v3712, %v3905
    %v4099 = vmax.f32 %v3713, %v3906
    %v4100 = vmax.f32 %v3714, %v3907
    %v4101 = vmax.f32 %v3715, %v3908
    %v4102 = vmax.f32 %v3716, %v3909
    %v4103 = vmax.f32 %v3717, %v3910
    %v4104 = vmax.f32 %v3718, %v3911
    %v4105 = vmax.f32 %v3719, %v3912
    %v4106 = vmax.f32 %v3720, %v3913
    %v4107 = vmax.f32 %v3721, %v3914
    %v4108 = vmax.f32 %v3722, %v3915
    %v4109 = vmax.f32 %v3723, %v3916
    %v4110 = vmax.f32 %v3724, %v3917
    %v4111 = vmax.f32 %v3725, %v3918
    %v4112 = vmax.f32 %v3726, %v3919
    %v4113 = vmax.f32 %v3727, %v3920
    %v4114 = vmax.f32 %v3728, %v3921
    %v4115 = vmax.f32 %v3729, %v3922
    %v4116 = vmax.f32 %v3730, %v3923
    %v4117 = vmax.f32 %v3731, %v3924
    %v4118 = vmax.f32 %v3732, %v3925
    %v4119 = vmax.f32 %v3733, %v3926
    %v4120 = vmax.f32 %v3734, %v3927
    %v4121 = vmax.f32 %v3735, %v3928
    %v4122 = vmax.f32 %v3736, %v3929
    %v4123 = vmax.f32 %v3737, %v3930
    %v4124 = vmax.f32 %v3738, %v3931
    %v4125 = vmax.f32 %v3739, %v3932
    %v4126 = vmax.f32 %v3740, %v3933
    %v4127 = vmax.f32 %v3741, %v3934
    %v4128 = vmax.f32 %v3742, %v3935
    %v4129 = vmax.f32 %v3743, %v3936
    %v4130 = vmax.f32 %v3744, %v3937
    %v4131 = vmax.f32 %v3745, %v3938
    %v4132 = vmax.f32 %v3746, %v3939
    %v4133 = vmax.f32 %v3747, %v3940
    %v4134 = vmax.f32 %v3748, %v3941
    %v4135 = vmax.f32 %v3749, %v3942
    %v4136 = vmax.f32 %v3750, %v3943
    %v4137 = vmax.f32 %v3751, %v3944
    %v4138 = vmax.f32 %v3752, %v3945
    %v4139 = vmax.f32 %v3753, %v3946
    %v4140 = vmax.f32 %v3754, %v3947
    %v4141 = vmax.f32 %v3755, %v3948
    %v4142 = vmax.f32 %v3756, %v3949
    %v4143 = vmax.f32 %v3757, %v3950
    %v4144 = vmax.f32 %v3758, %v3951
    %v4145 = vmax.f32 %v3759, %v3952
    %v4146 = vmax.f32 %v3760, %v3953
    %v4147 = vmax.f32 %v3761, %v3954
    %v4148 = vmax.f32 %v3762, %v3955
    %v4149 = vmax.f32 %v3763, %v3956
    %v4150 = vmax.f32 %v3764, %v3957
    %v4151 = vmax.f32 %v3765, %v3958
    %v4152 = vmax.f32 %v3766, %v3959
    %v4153 = vmax.f32 %v3767, %v3960
    %v4154 = vmax.f32 %v3768, %v3961
    %v4155 = vmax.f32 %v3769, %v3962
    %v4156 = vmax.f32 %v3770, %v3963
    %v4157 = vmax.f32 %v3771, %v3964
    %v4158 = vmax.f32 %v3772, %v3965
    %v4159 = vmax.f32 %v3773, %v3966
    %v4160 = vmax.f32 %v3774, %v3967
    %v4161 = vmax.f32 %v3775, %v3968
    %v4162 = vmax.f32 %v3776, %v3969
    %v4163 = vmax.f32 %v3777, %v3970
    %v4164 = vmax.f32 %v3778, %v3971
    %v4165 = vmax.f32 %v3779, %v3972
    %v4166 = vmax.f32 %v3780, %v3973
    %v4167 = vmax.f32 %v3781, %v3974
    %v4168 = vmax.f32 %v3782, %v3975
    %v4169 = vmax.f32 %v3783, %v3976
    %v4170 = vmax.f32 %v3784, %v3977
    %v4171 = vmax.f32 %v3785, %v3978
    %v4172 = vmax.f32 %v3786, %v3979
    %v4173 = vmax.f32 %v3787, %v3980
    %v4174 = vmax.f32 %v3788, %v3981
    %v4175 = vmax.f32 %v3789, %v3982
    %v4176 = vmax.f32 %v3790, %v3983
    %v4177 = vmax.f32 %v3791, %v3984
    %v4178 = vmax.f32 %v3792, %v3985
    %v4179 = vmax.f32 %v3793, %v3986
    %v4180 = vmax.f32 %v3794, %v3987
    %v4181 = vmax.f32 %v3795, %v3988
    %v4182 = vmax.f32 %v3796, %v3989
    %v4183 = vmax.f32 %v3797, %v3990
    %v4184 = vmax.f32 %v3798, %v3991
    %v4185 = vmax.f32 %v3799, %v3992
    %v4186 = vmax.f32 %v3800, %v3993
    %v4187 = vmax.f32 %v3801, %v3994
    %v4188 = vmax.f32 %v3802, %v3995
    %v4189 = vmax.f32 %v3803, %v3996
    %v4190 = vmax.f32 %v3804, %v3997
    %v4191 = vmax.f32 %v3805, %v3998
    %v4192 = vmax.f32 %v3806, %v3999
    %v4193 = vmax.f32 %v3807, %v4000
    %v4194 = vmax.f32 %v3808, %v4001
    %v4195 = vmax.f32 %v3809, %v4002
    %v4196 = vmax.f32 %v3810, %v4003
    %v4197 = vmax.f32 %v3811, %v4004
    %v4198 = vmax.f32 %v3812, %v4005
    %v4199 = vmax.f32 %v3813, %v4006
    %v4200 = vmax.f32 %v3814, %v4007
    %v4201 = vmax.f32 %v3815, %v4008
    %v4202 = vmax.f32 %v3816, %v4009
    %v4203 = vmax.f32 %v3817, %v4010
    %v4204 = vmax.f32 %v3818, %v4011
    %v4205 = vmax.f32 %v3819, %v4012
    %v4206 = vmax.f32 %v3820, %v4013
    %v4207 = vmax.f32 %v3821, %v4014
    %v4208 = vmax.f32 %v3822, %v4015
    %v4209 = vmax.f32 %v3823, %v4016
    %v4210 = vmax.f32 %v3824, %v4017
    %v4211 = vmax.f32 %v3825, %v4018
    %v4212 = vmax.f32 %v3826, %v4019
    %v4213 = vmax.f32 %v3827, %v4020
    %v4214 = vmax.f32 %v3828, %v4021
    %v4215 = vmax.f32 %v3829, %v4022
    %v4216 = vmax.f32 %v3830, %v4023
    %v4217 = vmax.f32 %v3831, %v4024
    %v4218 = vmax.f32 %v3832, %v4025
    %v4219 = vmax.f32 %v3833, %v4026
    %v4220 = vmax.f32 %v3834, %v4027
    %v4221 = vmax.f32 %v3835, %v4028
    %v4222 = vmax.f32 %v3836, %v4029
    %v4223 = vmax.f32 %v3837, %v4030
    %v4224 = vmax.f32 %v3838, %v4031
    %v4225 = vmax.f32 %v3839, %v4032
    %v4226 = vmax.f32 %v3840, %v4033
    %v4227 = vmax.f32 %v3841, %v4034
    %v4228 = vmax.f32 %v3842, %v4035
    %v4229 = vmax.f32 %v3843, %v4036
    %v4230 = vmax.f32 %v3844, %v4037
    %v4231 = vmax.f32 %v3845, %v4038
    %v4232 = vmax.f32 %v3846, %v4039
    %v4233 = vmax.f32 %v3847, %v4040
    %v4234 = vmax.f32 %v3848, %v4041
    %v4235 = vmax.f32 %v3849, %v4042
    %v4236 = vmax.f32 %v3850, %v4043
    %v4237 = vmax.f32 %v3851, %v4044
    %v4238 = vmax.f32 %v3852, %v4045
    %v4239 = vmax.f32 %v3853, %v4046
    %v4240 = vmax.f32 %v3854, %v4047
    %v4241 = vmax.f32 %v3855, %v4048
    %v4242 = vmax.f32 %v3856, %v4049
    %v4243 = vmax.f32 %v3857, %v4050
    %v4244 = vmax.f32 %v3858, %v4051
    %v4245 = vmax.f32 %v3859, %v4052
    %v4246 = vmax.f32 %v3860, %v4053
    %v4247 = vmax.f32 %v3861, %v4054
    %v4248 = vmax.f32 %v3862, %v4055
    %v4249 = vmax.f32 %v3863, %v4056
    %v4250 = vmax.f32 %v3864, %v4057
    %v4251 = vmax.f32 %v3865, %v4058
    %v4252 = vmax.f32 %v3866, %v4059
    %v4253 = vmax.f32 %v3867, %v4060
    %v4254 = vmax.f32 %v3868, %v4061
    %v4255 = vmax.f32 %v3869, %v4062
    %v4256 = vmax.f32 %v3870, %v4063
    %v4257 = vmax.f32 %v3871, %v4064
    %v4258 = vmax.f32 %v3872, %v4065
    %v4259 = vmax.f32 %v3873, %v4066
    %v4260 = vmax.f32 %v3874, %v4067
    %v4261 = vmax.f32 %v3875, %v4068
    %v4262 = vmax.f32 %v3876, %v4069
    %v4263 = vmax.f32 %v3877, %v4070
    %v4264 = vmax.f32 %v3878, %v4071
    %v4265 = vld [vmem:[%s4 + $0x1c] sm:$0xff]
    %v4266 = vld [vmem:[%s4 + $0x24] sm:$0xff]
    %v4267 = vld [vmem:[%s4 + $0x2c] sm:$0xff]
    %v4268 = vld [vmem:[%s4 + $0x34] sm:$0xff]
    %v4269 = vld [vmem:[%s4 + $0x3c] sm:$0xff]
    %v4270 = vld [vmem:[%s4 + $0x44] sm:$0xff]
    %v4271 = vld [vmem:[%s4 + $0x4c] sm:$0xff]
    %v4272 = vld [vmem:[%s4 + $0x54] sm:$0xff]
    %v4273 = vld [vmem:[%s4 + $0x5c] sm:$0xff]
    %v4274 = vld [vmem:[%s4 + $0x64] sm:$0xff]
    %v4275 = vld [vmem:[%s4 + $0x6c] sm:$0xff]
    %v4276 = vld [vmem:[%s4 + $0x74] sm:$0xff]
    %v4277 = vld [vmem:[%s4 + $0x7c] sm:$0xff]
    %v4278 = vld [vmem:[%s4 + $0x84] sm:$0xff]
    %v4279 = vld [vmem:[%s4 + $0x8c] sm:$0xff]
    %v4280 = vld [vmem:[%s4 + $0x94] sm:$0xff]
    %v4281 = vld [vmem:[%s4 + $0x9c] sm:$0xff]
    %v4282 = vld [vmem:[%s4 + $0xa4] sm:$0xff]
    %v4283 = vld [vmem:[%s4 + $0xac] sm:$0xff]
    %v4284 = vld [vmem:[%s4 + $0xb4] sm:$0xff]
    %v4285 = vld [vmem:[%s4 + $0xbc] sm:$0xff]
    %v4286 = vld [vmem:[%s4 + $0xc4] sm:$0xff]
    %v4287 = vld [vmem:[%s4 + $0xcc] sm:$0xff]
    %v4288 = vld [vmem:[%s4 + $0xd4] sm:$0xff]
    %v4289 = vld [vmem:[%s4 + $0xdc] sm:$0xff]
    %v4290 = vld [vmem:[%s4 + $0xe4] sm:$0xff]
    %v4291 = vld [vmem:[%s4 + $0xec] sm:$0xff]
    %v4292 = vld [vmem:[%s4 + $0xf4] sm:$0xff]
    %v4293 = vld [vmem:[%s4 + $0xfc] sm:$0xff]
    %v4294 = vld [vmem:[%s4 + $0x104] sm:$0xff]
    %v4295 = vld [vmem:[%s4 + $0x10c] sm:$0xff]
    %v4296 = vld [vmem:[%s4 + $0x114] sm:$0xff]
    %v4297 = vld [vmem:[%s4 + $0x11c] sm:$0xff]
    %v4298 = vld [vmem:[%s4 + $0x124] sm:$0xff]
    %v4299 = vld [vmem:[%s4 + $0x12c] sm:$0xff]
    %v4300 = vld [vmem:[%s4 + $0x134] sm:$0xff]
    %v4301 = vld [vmem:[%s4 + $0x13c] sm:$0xff]
    %v4302 = vld [vmem:[%s4 + $0x144] sm:$0xff]
    %v4303 = vld [vmem:[%s4 + $0x14c] sm:$0xff]
    %v4304 = vld [vmem:[%s4 + $0x154] sm:$0xff]
    %v4305 = vld [vmem:[%s4 + $0x15c] sm:$0xff]
    %v4306 = vld [vmem:[%s4 + $0x164] sm:$0xff]
    %v4307 = vld [vmem:[%s4 + $0x16c] sm:$0xff]
    %v4308 = vld [vmem:[%s4 + $0x174] sm:$0xff]
    %v4309 = vld [vmem:[%s4 + $0x17c] sm:$0xff]
    %v4310 = vld [vmem:[%s4 + $0x184] sm:$0xff]
    %v4311 = vld [vmem:[%s4 + $0x18c] sm:$0xff]
    %v4312 = vld [vmem:[%s4 + $0x194] sm:$0xff]
    %v4313 = vld [vmem:[%s4 + $0x19c] sm:$0xff]
    %v4314 = vld [vmem:[%s4 + $0x1a4] sm:$0xff]
    %v4315 = vld [vmem:[%s4 + $0x1ac] sm:$0xff]
    %v4316 = vld [vmem:[%s4 + $0x1b4] sm:$0xff]
    %v4317 = vld [vmem:[%s4 + $0x1bc] sm:$0xff]
    %v4318 = vld [vmem:[%s4 + $0x1c4] sm:$0xff]
    %v4319 = vld [vmem:[%s4 + $0x1cc] sm:$0xff]
    %v4320 = vld [vmem:[%s4 + $0x1d4] sm:$0xff]
    %v4321 = vld [vmem:[%s4 + $0x1dc] sm:$0xff]
    %v4322 = vld [vmem:[%s4 + $0x1e4] sm:$0xff]
    %v4323 = vld [vmem:[%s4 + $0x1ec] sm:$0xff]
    %v4324 = vld [vmem:[%s4 + $0x1f4] sm:$0xff]
    %v4325 = vld [vmem:[%s4 + $0x1fc] sm:$0xff]
    %v4326 = vld [vmem:[%s4 + $0x204] sm:$0xff]
    %v4327 = vld [vmem:[%s4 + $0x20c] sm:$0xff]
    %v4328 = vld [vmem:[%s4 + $0x214] sm:$0xff]
    %v4329 = vld [vmem:[%s4 + $0x21c] sm:$0xff]
    %v4330 = vld [vmem:[%s4 + $0x224] sm:$0xff]
    %v4331 = vld [vmem:[%s4 + $0x22c] sm:$0xff]
    %v4332 = vld [vmem:[%s4 + $0x234] sm:$0xff]
    %v4333 = vld [vmem:[%s4 + $0x23c] sm:$0xff]
    %v4334 = vld [vmem:[%s4 + $0x244] sm:$0xff]
    %v4335 = vld [vmem:[%s4 + $0x24c] sm:$0xff]
    %v4336 = vld [vmem:[%s4 + $0x254] sm:$0xff]
    %v4337 = vld [vmem:[%s4 + $0x25c] sm:$0xff]
    %v4338 = vld [vmem:[%s4 + $0x264] sm:$0xff]
    %v4339 = vld [vmem:[%s4 + $0x26c] sm:$0xff]
    %v4340 = vld [vmem:[%s4 + $0x274] sm:$0xff]
    %v4341 = vld [vmem:[%s4 + $0x27c] sm:$0xff]
    %v4342 = vld [vmem:[%s4 + $0x284] sm:$0xff]
    %v4343 = vld [vmem:[%s4 + $0x28c] sm:$0xff]
    %v4344 = vld [vmem:[%s4 + $0x294] sm:$0xff]
    %v4345 = vld [vmem:[%s4 + $0x29c] sm:$0xff]
    %v4346 = vld [vmem:[%s4 + $0x2a4] sm:$0xff]
    %v4347 = vld [vmem:[%s4 + $0x2ac] sm:$0xff]
    %v4348 = vld [vmem:[%s4 + $0x2b4] sm:$0xff]
    %v4349 = vld [vmem:[%s4 + $0x2bc] sm:$0xff]
    %v4350 = vld [vmem:[%s4 + $0x2c4] sm:$0xff]
    %v4351 = vld [vmem:[%s4 + $0x2cc] sm:$0xff]
    %v4352 = vld [vmem:[%s4 + $0x2d4] sm:$0xff]
    %v4353 = vld [vmem:[%s4 + $0x2dc] sm:$0xff]
    %v4354 = vld [vmem:[%s4 + $0x2e4] sm:$0xff]
    %v4355 = vld [vmem:[%s4 + $0x2ec] sm:$0xff]
    %v4356 = vld [vmem:[%s4 + $0x2f4] sm:$0xff]
    %v4357 = vld [vmem:[%s4 + $0x2fc] sm:$0xff]
    %v4358 = vld [vmem:[%s4 + $0x304] sm:$0xff]
    %v4359 = vld [vmem:[%s4 + $0x30c] sm:$0xff]
    %v4360 = vld [vmem:[%s4 + $0x314] sm:$0xff]
    %v4361 = vld [vmem:[%s4 + $0x31c] sm:$0xff]
    %v4362 = vld [vmem:[%s4 + $0x324] sm:$0xff]
    %v4363 = vld [vmem:[%s4 + $0x32c] sm:$0xff]
    %v4364 = vld [vmem:[%s4 + $0x334] sm:$0xff]
    %v4365 = vld [vmem:[%s4 + $0x33c] sm:$0xff]
    %v4366 = vld [vmem:[%s4 + $0x344] sm:$0xff]
    %v4367 = vld [vmem:[%s4 + $0x34c] sm:$0xff]
    %v4368 = vld [vmem:[%s4 + $0x354] sm:$0xff]
    %v4369 = vld [vmem:[%s4 + $0x35c] sm:$0xff]
    %v4370 = vld [vmem:[%s4 + $0x364] sm:$0xff]
    %v4371 = vld [vmem:[%s4 + $0x36c] sm:$0xff]
    %v4372 = vld [vmem:[%s4 + $0x374] sm:$0xff]
    %v4373 = vld [vmem:[%s4 + $0x37c] sm:$0xff]
    %v4374 = vld [vmem:[%s4 + $0x384] sm:$0xff]
    %v4375 = vld [vmem:[%s4 + $0x38c] sm:$0xff]
    %v4376 = vld [vmem:[%s4 + $0x394] sm:$0xff]
    %v4377 = vld [vmem:[%s4 + $0x39c] sm:$0xff]
    %v4378 = vld [vmem:[%s4 + $0x3a4] sm:$0xff]
    %v4379 = vld [vmem:[%s4 + $0x3ac] sm:$0xff]
    %v4380 = vld [vmem:[%s4 + $0x3b4] sm:$0xff]
    %v4381 = vld [vmem:[%s4 + $0x3bc] sm:$0xff]
    %v4382 = vld [vmem:[%s4 + $0x3c4] sm:$0xff]
    %v4383 = vld [vmem:[%s4 + $0x3cc] sm:$0xff]
    %v4384 = vld [vmem:[%s4 + $0x3d4] sm:$0xff]
    %v4385 = vld [vmem:[%s4 + $0x3dc] sm:$0xff]
    %v4386 = vld [vmem:[%s4 + $0x3e4] sm:$0xff]
    %v4387 = vld [vmem:[%s4 + $0x3ec] sm:$0xff]
    %v4388 = vld [vmem:[%s4 + $0x3f4] sm:$0xff]
    %v4389 = vld [vmem:[%s4 + $0x3fc] sm:$0xff]
    %v4390 = vld [vmem:[%s4 + $0x404] sm:$0xff]
    %v4391 = vld [vmem:[%s4 + $0x40c] sm:$0xff]
    %v4392 = vld [vmem:[%s4 + $0x414] sm:$0xff]
    %v4393 = vld [vmem:[%s4 + $0x41c] sm:$0xff]
    %v4394 = vld [vmem:[%s4 + $0x424] sm:$0xff]
    %v4395 = vld [vmem:[%s4 + $0x42c] sm:$0xff]
    %v4396 = vld [vmem:[%s4 + $0x434] sm:$0xff]
    %v4397 = vld [vmem:[%s4 + $0x43c] sm:$0xff]
    %v4398 = vld [vmem:[%s4 + $0x444] sm:$0xff]
    %v4399 = vld [vmem:[%s4 + $0x44c] sm:$0xff]
    %v4400 = vld [vmem:[%s4 + $0x454] sm:$0xff]
    %v4401 = vld [vmem:[%s4 + $0x45c] sm:$0xff]
    %v4402 = vld [vmem:[%s4 + $0x464] sm:$0xff]
    %v4403 = vld [vmem:[%s4 + $0x46c] sm:$0xff]
    %v4404 = vld [vmem:[%s4 + $0x474] sm:$0xff]
    %v4405 = vld [vmem:[%s4 + $0x47c] sm:$0xff]
    %v4406 = vld [vmem:[%s4 + $0x484] sm:$0xff]
    %v4407 = vld [vmem:[%s4 + $0x48c] sm:$0xff]
    %v4408 = vld [vmem:[%s4 + $0x494] sm:$0xff]
    %v4409 = vld [vmem:[%s4 + $0x49c] sm:$0xff]
    %v4410 = vld [vmem:[%s4 + $0x4a4] sm:$0xff]
    %v4411 = vld [vmem:[%s4 + $0x4ac] sm:$0xff]
    %v4412 = vld [vmem:[%s4 + $0x4b4] sm:$0xff]
    %v4413 = vld [vmem:[%s4 + $0x4bc] sm:$0xff]
    %v4414 = vld [vmem:[%s4 + $0x4c4] sm:$0xff]
    %v4415 = vld [vmem:[%s4 + $0x4cc] sm:$0xff]
    %v4416 = vld [vmem:[%s4 + $0x4d4] sm:$0xff]
    %v4417 = vld [vmem:[%s4 + $0x4dc] sm:$0xff]
    %v4418 = vld [vmem:[%s4 + $0x4e4] sm:$0xff]
    %v4419 = vld [vmem:[%s4 + $0x4ec] sm:$0xff]
    %v4420 = vld [vmem:[%s4 + $0x4f4] sm:$0xff]
    %v4421 = vld [vmem:[%s4 + $0x4fc] sm:$0xff]
    %v4422 = vld [vmem:[%s4 + $0x504] sm:$0xff]
    %v4423 = vld [vmem:[%s4 + $0x50c] sm:$0xff]
    %v4424 = vld [vmem:[%s4 + $0x514] sm:$0xff]
    %v4425 = vld [vmem:[%s4 + $0x51c] sm:$0xff]
    %v4426 = vld [vmem:[%s4 + $0x524] sm:$0xff]
    %v4427 = vld [vmem:[%s4 + $0x52c] sm:$0xff]
    %v4428 = vld [vmem:[%s4 + $0x534] sm:$0xff]
    %v4429 = vld [vmem:[%s4 + $0x53c] sm:$0xff]
    %v4430 = vld [vmem:[%s4 + $0x544] sm:$0xff]
    %v4431 = vld [vmem:[%s4 + $0x54c] sm:$0xff]
    %v4432 = vld [vmem:[%s4 + $0x554] sm:$0xff]
    %v4433 = vld [vmem:[%s4 + $0x55c] sm:$0xff]
    %v4434 = vld [vmem:[%s4 + $0x564] sm:$0xff]
    %v4435 = vld [vmem:[%s4 + $0x56c] sm:$0xff]
    %v4436 = vld [vmem:[%s4 + $0x574] sm:$0xff]
    %v4437 = vld [vmem:[%s4 + $0x57c] sm:$0xff]
    %v4438 = vld [vmem:[%s4 + $0x584] sm:$0xff]
    %v4439 = vld [vmem:[%s4 + $0x58c] sm:$0xff]
    %v4440 = vld [vmem:[%s4 + $0x594] sm:$0xff]
    %v4441 = vld [vmem:[%s4 + $0x59c] sm:$0xff]
    %v4442 = vld [vmem:[%s4 + $0x5a4] sm:$0xff]
    %v4443 = vld [vmem:[%s4 + $0x5ac] sm:$0xff]
    %v4444 = vld [vmem:[%s4 + $0x5b4] sm:$0xff]
    %v4445 = vld [vmem:[%s4 + $0x5bc] sm:$0xff]
    %v4446 = vld [vmem:[%s4 + $0x5c4] sm:$0xff]
    %v4447 = vld [vmem:[%s4 + $0x5cc] sm:$0xff]
    %v4448 = vld [vmem:[%s4 + $0x5d4] sm:$0xff]
    %v4449 = vld [vmem:[%s4 + $0x5dc] sm:$0xff]
    %v4450 = vld [vmem:[%s4 + $0x5e4] sm:$0xff]
    %v4451 = vld [vmem:[%s4 + $0x5ec] sm:$0xff]
    %v4452 = vld [vmem:[%s4 + $0x5f4] sm:$0xff]
    %v4453 = vld [vmem:[%s4 + $0x5fc] sm:$0xff]
    %v4454 = vld [vmem:[%s4 + $0x604] sm:$0xff]
    %v4455 = vld [vmem:[%s4 + $0x60c] sm:$0xff]
    %v4456 = vld [vmem:[%s4 + $0x614] sm:$0xff]
    %v4457 = vld [vmem:[%s4 + $0x61c] sm:$0x7]
    %v4458 = vld [vmem:[%s4 + $0x1d] sm:$0xff]
    %v4459 = vld [vmem:[%s4 + $0x25] sm:$0xff]
    %v4460 = vld [vmem:[%s4 + $0x2d] sm:$0xff]
    %v4461 = vld [vmem:[%s4 + $0x35] sm:$0xff]
    %v4462 = vld [vmem:[%s4 + $0x3d] sm:$0xff]
    %v4463 = vld [vmem:[%s4 + $0x45] sm:$0xff]
    %v4464 = vld [vmem:[%s4 + $0x4d] sm:$0xff]
    %v4465 = vld [vmem:[%s4 + $0x55] sm:$0xff]
    %v4466 = vld [vmem:[%s4 + $0x5d] sm:$0xff]
    %v4467 = vld [vmem:[%s4 + $0x65] sm:$0xff]
    %v4468 = vld [vmem:[%s4 + $0x6d] sm:$0xff]
    %v4469 = vld [vmem:[%s4 + $0x75] sm:$0xff]
    %v4470 = vld [vmem:[%s4 + $0x7d] sm:$0xff]
    %v4471 = vld [vmem:[%s4 + $0x85] sm:$0xff]
    %v4472 = vld [vmem:[%s4 + $0x8d] sm:$0xff]
    %v4473 = vld [vmem:[%s4 + $0x95] sm:$0xff]
    %v4474 = vld [vmem:[%s4 + $0x9d] sm:$0xff]
    %v4475 = vld [vmem:[%s4 + $0xa5] sm:$0xff]
    %v4476 = vld [vmem:[%s4 + $0xad] sm:$0xff]
    %v4477 = vld [vmem:[%s4 + $0xb5] sm:$0xff]
    %v4478 = vld [vmem:[%s4 + $0xbd] sm:$0xff]
    %v4479 = vld [vmem:[%s4 + $0xc5] sm:$0xff]
    %v4480 = vld [vmem:[%s4 + $0xcd] sm:$0xff]
    %v4481 = vld [vmem:[%s4 + $0xd5] sm:$0xff]
    %v4482 = vld [vmem:[%s4 + $0xdd] sm:$0xff]
    %v4483 = vld [vmem:[%s4 + $0xe5] sm:$0xff]
    %v4484 = vld [vmem:[%s4 + $0xed] sm:$0xff]
    %v4485 = vld [vmem:[%s4 + $0xf5] sm:$0xff]
    %v4486 = vld [vmem:[%s4 + $0xfd] sm:$0xff]
    %v4487 = vld [vmem:[%s4 + $0x105] sm:$0xff]
    %v4488 = vld [vmem:[%s4 + $0x10d] sm:$0xff]
    %v4489 = vld [vmem:[%s4 + $0x115] sm:$0xff]
    %v4490 = vld [vmem:[%s4 + $0x11d] sm:$0xff]
    %v4491 = vld [vmem:[%s4 + $0x125] sm:$0xff]
    %v4492 = vld [vmem:[%s4 + $0x12d] sm:$0xff]
    %v4493 = vld [vmem:[%s4 + $0x135] sm:$0xff]
    %v4494 = vld [vmem:[%s4 + $0x13d] sm:$0xff]
    %v4495 = vld [vmem:[%s4 + $0x145] sm:$0xff]
    %v4496 = vld [vmem:[%s4 + $0x14d] sm:$0xff]
    %v4497 = vld [vmem:[%s4 + $0x155] sm:$0xff]
    %v4498 = vld [vmem:[%s4 + $0x15d] sm:$0xff]
    %v4499 = vld [vmem:[%s4 + $0x165] sm:$0xff]
    %v4500 = vld [vmem:[%s4 + $0x16d] sm:$0xff]
    %v4501 = vld [vmem:[%s4 + $0x175] sm:$0xff]
    %v4502 = vld [vmem:[%s4 + $0x17d] sm:$0xff]
    %v4503 = vld [vmem:[%s4 + $0x185] sm:$0xff]
    %v4504 = vld [vmem:[%s4 + $0x18d] sm:$0xff]
    %v4505 = vld [vmem:[%s4 + $0x195] sm:$0xff]
    %v4506 = vld [vmem:[%s4 + $0x19d] sm:$0xff]
    %v4507 = vld [vmem:[%s4 + $0x1a5] sm:$0xff]
    %v4508 = vld [vmem:[%s4 + $0x1ad] sm:$0xff]
    %v4509 = vld [vmem:[%s4 + $0x1b5] sm:$0xff]
    %v4510 = vld [vmem:[%s4 + $0x1bd] sm:$0xff]
    %v4511 = vld [vmem:[%s4 + $0x1c5] sm:$0xff]
    %v4512 = vld [vmem:[%s4 + $0x1cd] sm:$0xff]
    %v4513 = vld [vmem:[%s4 + $0x1d5] sm:$0xff]
    %v4514 = vld [vmem:[%s4 + $0x1dd] sm:$0xff]
    %v4515 = vld [vmem:[%s4 + $0x1e5] sm:$0xff]
    %v4516 = vld [vmem:[%s4 + $0x1ed] sm:$0xff]
    %v4517 = vld [vmem:[%s4 + $0x1f5] sm:$0xff]
    %v4518 = vld [vmem:[%s4 + $0x1fd] sm:$0xff]
    %v4519 = vld [vmem:[%s4 + $0x205] sm:$0xff]
    %v4520 = vld [vmem:[%s4 + $0x20d] sm:$0xff]
    %v4521 = vld [vmem:[%s4 + $0x215] sm:$0xff]
    %v4522 = vld [vmem:[%s4 + $0x21d] sm:$0xff]
    %v4523 = vld [vmem:[%s4 + $0x225] sm:$0xff]
    %v4524 = vld [vmem:[%s4 + $0x22d] sm:$0xff]
    %v4525 = vld [vmem:[%s4 + $0x235] sm:$0xff]
    %v4526 = vld [vmem:[%s4 + $0x23d] sm:$0xff]
    %v4527 = vld [vmem:[%s4 + $0x245] sm:$0xff]
    %v4528 = vld [vmem:[%s4 + $0x24d] sm:$0xff]
    %v4529 = vld [vmem:[%s4 + $0x255] sm:$0xff]
    %v4530 = vld [vmem:[%s4 + $0x25d] sm:$0xff]
    %v4531 = vld [vmem:[%s4 + $0x265] sm:$0xff]
    %v4532 = vld [vmem:[%s4 + $0x26d] sm:$0xff]
    %v4533 = vld [vmem:[%s4 + $0x275] sm:$0xff]
    %v4534 = vld [vmem:[%s4 + $0x27d] sm:$0xff]
    %v4535 = vld [vmem:[%s4 + $0x285] sm:$0xff]
    %v4536 = vld [vmem:[%s4 + $0x28d] sm:$0xff]
    %v4537 = vld [vmem:[%s4 + $0x295] sm:$0xff]
    %v4538 = vld [vmem:[%s4 + $0x29d] sm:$0xff]
    %v4539 = vld [vmem:[%s4 + $0x2a5] sm:$0xff]
    %v4540 = vld [vmem:[%s4 + $0x2ad] sm:$0xff]
    %v4541 = vld [vmem:[%s4 + $0x2b5] sm:$0xff]
    %v4542 = vld [vmem:[%s4 + $0x2bd] sm:$0xff]
    %v4543 = vld [vmem:[%s4 + $0x2c5] sm:$0xff]
    %v4544 = vld [vmem:[%s4 + $0x2cd] sm:$0xff]
    %v4545 = vld [vmem:[%s4 + $0x2d5] sm:$0xff]
    %v4546 = vld [vmem:[%s4 + $0x2dd] sm:$0xff]
    %v4547 = vld [vmem:[%s4 + $0x2e5] sm:$0xff]
    %v4548 = vld [vmem:[%s4 + $0x2ed] sm:$0xff]
    %v4549 = vld [vmem:[%s4 + $0x2f5] sm:$0xff]
    %v4550 = vld [vmem:[%s4 + $0x2fd] sm:$0xff]
    %v4551 = vld [vmem:[%s4 + $0x305] sm:$0xff]
    %v4552 = vld [vmem:[%s4 + $0x30d] sm:$0xff]
    %v4553 = vld [vmem:[%s4 + $0x315] sm:$0xff]
    %v4554 = vld [vmem:[%s4 + $0x31d] sm:$0xff]
    %v4555 = vld [vmem:[%s4 + $0x325] sm:$0xff]
    %v4556 = vld [vmem:[%s4 + $0x32d] sm:$0xff]
    %v4557 = vld [vmem:[%s4 + $0x335] sm:$0xff]
    %v4558 = vld [vmem:[%s4 + $0x33d] sm:$0xff]
    %v4559 = vld [vmem:[%s4 + $0x345] sm:$0xff]
    %v4560 = vld [vmem:[%s4 + $0x34d] sm:$0xff]
    %v4561 = vld [vmem:[%s4 + $0x355] sm:$0xff]
    %v4562 = vld [vmem:[%s4 + $0x35d] sm:$0xff]
    %v4563 = vld [vmem:[%s4 + $0x365] sm:$0xff]
    %v4564 = vld [vmem:[%s4 + $0x36d] sm:$0xff]
    %v4565 = vld [vmem:[%s4 + $0x375] sm:$0xff]
    %v4566 = vld [vmem:[%s4 + $0x37d] sm:$0xff]
    %v4567 = vld [vmem:[%s4 + $0x385] sm:$0xff]
    %v4568 = vld [vmem:[%s4 + $0x38d] sm:$0xff]
    %v4569 = vld [vmem:[%s4 + $0x395] sm:$0xff]
    %v4570 = vld [vmem:[%s4 + $0x39d] sm:$0xff]
    %v4571 = vld [vmem:[%s4 + $0x3a5] sm:$0xff]
    %v4572 = vld [vmem:[%s4 + $0x3ad] sm:$0xff]
    %v4573 = vld [vmem:[%s4 + $0x3b5] sm:$0xff]
    %v4574 = vld [vmem:[%s4 + $0x3bd] sm:$0xff]
    %v4575 = vld [vmem:[%s4 + $0x3c5] sm:$0xff]
    %v4576 = vld [vmem:[%s4 + $0x3cd] sm:$0xff]
    %v4577 = vld [vmem:[%s4 + $0x3d5] sm:$0xff]
    %v4578 = vld [vmem:[%s4 + $0x3dd] sm:$0xff]
    %v4579 = vld [vmem:[%s4 + $0x3e5] sm:$0xff]
    %v4580 = vld [vmem:[%s4 + $0x3ed] sm:$0xff]
    %v4581 = vld [vmem:[%s4 + $0x3f5] sm:$0xff]
    %v4582 = vld [vmem:[%s4 + $0x3fd] sm:$0xff]
    %v4583 = vld [vmem:[%s4 + $0x405] sm:$0xff]
    %v4584 = vld [vmem:[%s4 + $0x40d] sm:$0xff]
    %v4585 = vld [vmem:[%s4 + $0x415] sm:$0xff]
    %v4586 = vld [vmem:[%s4 + $0x41d] sm:$0xff]
    %v4587 = vld [vmem:[%s4 + $0x425] sm:$0xff]
    %v4588 = vld [vmem:[%s4 + $0x42d] sm:$0xff]
    %v4589 = vld [vmem:[%s4 + $0x435] sm:$0xff]
    %v4590 = vld [vmem:[%s4 + $0x43d] sm:$0xff]
    %v4591 = vld [vmem:[%s4 + $0x445] sm:$0xff]
    %v4592 = vld [vmem:[%s4 + $0x44d] sm:$0xff]
    %v4593 = vld [vmem:[%s4 + $0x455] sm:$0xff]
    %v4594 = vld [vmem:[%s4 + $0x45d] sm:$0xff]
    %v4595 = vld [vmem:[%s4 + $0x465] sm:$0xff]
    %v4596 = vld [vmem:[%s4 + $0x46d] sm:$0xff]
    %v4597 = vld [vmem:[%s4 + $0x475] sm:$0xff]
    %v4598 = vld [vmem:[%s4 + $0x47d] sm:$0xff]
    %v4599 = vld [vmem:[%s4 + $0x485] sm:$0xff]
    %v4600 = vld [vmem:[%s4 + $0x48d] sm:$0xff]
    %v4601 = vld [vmem:[%s4 + $0x495] sm:$0xff]
    %v4602 = vld [vmem:[%s4 + $0x49d] sm:$0xff]
    %v4603 = vld [vmem:[%s4 + $0x4a5] sm:$0xff]
    %v4604 = vld [vmem:[%s4 + $0x4ad] sm:$0xff]
    %v4605 = vld [vmem:[%s4 + $0x4b5] sm:$0xff]
    %v4606 = vld [vmem:[%s4 + $0x4bd] sm:$0xff]
    %v4607 = vld [vmem:[%s4 + $0x4c5] sm:$0xff]
    %v4608 = vld [vmem:[%s4 + $0x4cd] sm:$0xff]
    %v4609 = vld [vmem:[%s4 + $0x4d5] sm:$0xff]
    %v4610 = vld [vmem:[%s4 + $0x4dd] sm:$0xff]
    %v4611 = vld [vmem:[%s4 + $0x4e5] sm:$0xff]
    %v4612 = vld [vmem:[%s4 + $0x4ed] sm:$0xff]
    %v4613 = vld [vmem:[%s4 + $0x4f5] sm:$0xff]
    %v4614 = vld [vmem:[%s4 + $0x4fd] sm:$0xff]
    %v4615 = vld [vmem:[%s4 + $0x505] sm:$0xff]
    %v4616 = vld [vmem:[%s4 + $0x50d] sm:$0xff]
    %v4617 = vld [vmem:[%s4 + $0x515] sm:$0xff]
    %v4618 = vld [vmem:[%s4 + $0x51d] sm:$0xff]
    %v4619 = vld [vmem:[%s4 + $0x525] sm:$0xff]
    %v4620 = vld [vmem:[%s4 + $0x52d] sm:$0xff]
    %v4621 = vld [vmem:[%s4 + $0x535] sm:$0xff]
    %v4622 = vld [vmem:[%s4 + $0x53d] sm:$0xff]
    %v4623 = vld [vmem:[%s4 + $0x545] sm:$0xff]
    %v4624 = vld [vmem:[%s4 + $0x54d] sm:$0xff]
    %v4625 = vld [vmem:[%s4 + $0x555] sm:$0xff]
    %v4626 = vld [vmem:[%s4 + $0x55d] sm:$0xff]
    %v4627 = vld [vmem:[%s4 + $0x565] sm:$0xff]
    %v4628 = vld [vmem:[%s4 + $0x56d] sm:$0xff]
    %v4629 = vld [vmem:[%s4 + $0x575] sm:$0xff]
    %v4630 = vld [vmem:[%s4 + $0x57d] sm:$0xff]
    %v4631 = vld [vmem:[%s4 + $0x585] sm:$0xff]
    %v4632 = vld [vmem:[%s4 + $0x58d] sm:$0xff]
    %v4633 = vld [vmem:[%s4 + $0x595] sm:$0xff]
    %v4634 = vld [vmem:[%s4 + $0x59d] sm:$0xff]
    %v4635 = vld [vmem:[%s4 + $0x5a5] sm:$0xff]
    %v4636 = vld [vmem:[%s4 + $0x5ad] sm:$0xff]
    %v4637 = vld [vmem:[%s4 + $0x5b5] sm:$0xff]
    %v4638 = vld [vmem:[%s4 + $0x5bd] sm:$0xff]
    %v4639 = vld [vmem:[%s4 + $0x5c5] sm:$0xff]
    %v4640 = vld [vmem:[%s4 + $0x5cd] sm:$0xff]
    %v4641 = vld [vmem:[%s4 + $0x5d5] sm:$0xff]
    %v4642 = vld [vmem:[%s4 + $0x5dd] sm:$0xff]
    %v4643 = vld [vmem:[%s4 + $0x5e5] sm:$0xff]
    %v4644 = vld [vmem:[%s4 + $0x5ed] sm:$0xff]
    %v4645 = vld [vmem:[%s4 + $0x5f5] sm:$0xff]
    %v4646 = vld [vmem:[%s4 + $0x5fd] sm:$0xff]
    %v4647 = vld [vmem:[%s4 + $0x605] sm:$0xff]
    %v4648 = vld [vmem:[%s4 + $0x60d] sm:$0xff]
    %v4649 = vld [vmem:[%s4 + $0x615] sm:$0xff]
    %v4650 = vld [vmem:[%s4 + $0x61d] sm:$0x7]
    %v4651 = vmax.f32 %v4265, %v4458
    %v4652 = vmax.f32 %v4266, %v4459
    %v4653 = vmax.f32 %v4267, %v4460
    %v4654 = vmax.f32 %v4268, %v4461
    %v4655 = vmax.f32 %v4269, %v4462
    %v4656 = vmax.f32 %v4270, %v4463
    %v4657 = vmax.f32 %v4271, %v4464
    %v4658 = vmax.f32 %v4272, %v4465
    %v4659 = vmax.f32 %v4273, %v4466
    %v4660 = vmax.f32 %v4274, %v4467
    %v4661 = vmax.f32 %v4275, %v4468
    %v4662 = vmax.f32 %v4276, %v4469
    %v4663 = vmax.f32 %v4277, %v4470
    %v4664 = vmax.f32 %v4278, %v4471
    %v4665 = vmax.f32 %v4279, %v4472
    %v4666 = vmax.f32 %v4280, %v4473
    %v4667 = vmax.f32 %v4281, %v4474
    %v4668 = vmax.f32 %v4282, %v4475
    %v4669 = vmax.f32 %v4283, %v4476
    %v4670 = vmax.f32 %v4284, %v4477
    %v4671 = vmax.f32 %v4285, %v4478
    %v4672 = vmax.f32 %v4286, %v4479
    %v4673 = vmax.f32 %v4287, %v4480
    %v4674 = vmax.f32 %v4288, %v4481
    %v4675 = vmax.f32 %v4289, %v4482
    %v4676 = vmax.f32 %v4290, %v4483
    %v4677 = vmax.f32 %v4291, %v4484
    %v4678 = vmax.f32 %v4292, %v4485
    %v4679 = vmax.f32 %v4293, %v4486
    %v4680 = vmax.f32 %v4294, %v4487
    %v4681 = vmax.f32 %v4295, %v4488
    %v4682 = vmax.f32 %v4296, %v4489
    %v4683 = vmax.f32 %v4297, %v4490
    %v4684 = vmax.f32 %v4298, %v4491
    %v4685 = vmax.f32 %v4299, %v4492
    %v4686 = vmax.f32 %v4300, %v4493
    %v4687 = vmax.f32 %v4301, %v4494
    %v4688 = vmax.f32 %v4302, %v4495
    %v4689 = vmax.f32 %v4303, %v4496
    %v4690 = vmax.f32 %v4304, %v4497
    %v4691 = vmax.f32 %v4305, %v4498
    %v4692 = vmax.f32 %v4306, %v4499
    %v4693 = vmax.f32 %v4307, %v4500
    %v4694 = vmax.f32 %v4308, %v4501
    %v4695 = vmax.f32 %v4309, %v4502
    %v4696 = vmax.f32 %v4310, %v4503
    %v4697 = vmax.f32 %v4311, %v4504
    %v4698 = vmax.f32 %v4312, %v4505
    %v4699 = vmax.f32 %v4313, %v4506
    %v4700 = vmax.f32 %v4314, %v4507
    %v4701 = vmax.f32 %v4315, %v4508
    %v4702 = vmax.f32 %v4316, %v4509
    %v4703 = vmax.f32 %v4317, %v4510
    %v4704 = vmax.f32 %v4318, %v4511
    %v4705 = vmax.f32 %v4319, %v4512
    %v4706 = vmax.f32 %v4320, %v4513
    %v4707 = vmax.f32 %v4321, %v4514
    %v4708 = vmax.f32 %v4322, %v4515
    %v4709 = vmax.f32 %v4323, %v4516
    %v4710 = vmax.f32 %v4324, %v4517
    %v4711 = vmax.f32 %v4325, %v4518
    %v4712 = vmax.f32 %v4326, %v4519
    %v4713 = vmax.f32 %v4327, %v4520
    %v4714 = vmax.f32 %v4328, %v4521
    %v4715 = vmax.f32 %v4329, %v4522
    %v4716 = vmax.f32 %v4330, %v4523
    %v4717 = vmax.f32 %v4331, %v4524
    %v4718 = vmax.f32 %v4332, %v4525
    %v4719 = vmax.f32 %v4333, %v4526
    %v4720 = vmax.f32 %v4334, %v4527
    %v4721 = vmax.f32 %v4335, %v4528
    %v4722 = vmax.f32 %v4336, %v4529
    %v4723 = vmax.f32 %v4337, %v4530
    %v4724 = vmax.f32 %v4338, %v4531
    %v4725 = vmax.f32 %v4339, %v4532
    %v4726 = vmax.f32 %v4340, %v4533
    %v4727 = vmax.f32 %v4341, %v4534
    %v4728 = vmax.f32 %v4342, %v4535
    %v4729 = vmax.f32 %v4343, %v4536
    %v4730 = vmax.f32 %v4344, %v4537
    %v4731 = vmax.f32 %v4345, %v4538
    %v4732 = vmax.f32 %v4346, %v4539
    %v4733 = vmax.f32 %v4347, %v4540
    %v4734 = vmax.f32 %v4348, %v4541
    %v4735 = vmax.f32 %v4349, %v4542
    %v4736 = vmax.f32 %v4350, %v4543
    %v4737 = vmax.f32 %v4351, %v4544
    %v4738 = vmax.f32 %v4352, %v4545
    %v4739 = vmax.f32 %v4353, %v4546
    %v4740 = vmax.f32 %v4354, %v4547
    %v4741 = vmax.f32 %v4355, %v4548
    %v4742 = vmax.f32 %v4356, %v4549
    %v4743 = vmax.f32 %v4357, %v4550
    %v4744 = vmax.f32 %v4358, %v4551
    %v4745 = vmax.f32 %v4359, %v4552
    %v4746 = vmax.f32 %v4360, %v4553
    %v4747 = vmax.f32 %v4361, %v4554
    %v4748 = vmax.f32 %v4362, %v4555
    %v4749 = vmax.f32 %v4363, %v4556
    %v4750 = vmax.f32 %v4364, %v4557
    %v4751 = vmax.f32 %v4365, %v4558
    %v4752 = vmax.f32 %v4366, %v4559
    %v4753 = vmax.f32 %v4367, %v4560
    %v4754 = vmax.f32 %v4368, %v4561
    %v4755 = vmax.f32 %v4369, %v4562
    %v4756 = vmax.f32 %v4370, %v4563
    %v4757 = vmax.f32 %v4371, %v4564
    %v4758 = vmax.f32 %v4372, %v4565
    %v4759 = vmax.f32 %v4373, %v4566
    %v4760 = vmax.f32 %v4374, %v4567
    %v4761 = vmax.f32 %v4375, %v4568
    %v4762 = vmax.f32 %v4376, %v4569
    %v4763 = vmax.f32 %v4377, %v4570
    %v4764 = vmax.f32 %v4378, %v4571
    %v4765 = vmax.f32 %v4379, %v4572
    %v4766 = vmax.f32 %v4380, %v4573
    %v4767 = vmax.f32 %v4381, %v4574
    %v4768 = vmax.f32 %v4382, %v4575
    %v4769 = vmax.f32 %v4383, %v4576
    %v4770 = vmax.f32 %v4384, %v4577
    %v4771 = vmax.f32 %v4385, %v4578
    %v4772 = vmax.f32 %v4386, %v4579
    %v4773 = vmax.f32 %v4387, %v4580
    %v4774 = vmax.f32 %v4388, %v4581
    %v4775 = vmax.f32 %v4389, %v4582
    %v4776 = vmax.f32 %v4390, %v4583
    %v4777 = vmax.f32 %v4391, %v4584
    %v4778 = vmax.f32 %v4392, %v4585
    %v4779 = vmax.f32 %v4393, %v4586
    %v4780 = vmax.f32 %v4394, %v4587
    %v4781 = vmax.f32 %v4395, %v4588
    %v4782 = vmax.f32 %v4396, %v4589
    %v4783 = vmax.f32 %v4397, %v4590
    %v4784 = vmax.f32 %v4398, %v4591
    %v4785 = vmax.f32 %v4399, %v4592
    %v4786 = vmax.f32 %v4400, %v4593
    %v4787 = vmax.f32 %v4401, %v4594
    %v4788 = vmax.f32 %v4402, %v4595
    %v4789 = vmax.f32 %v4403, %v4596
    %v4790 = vmax.f32 %v4404, %v4597
    %v4791 = vmax.f32 %v4405, %v4598
    %v4792 = vmax.f32 %v4406, %v4599
    %v4793 = vmax.f32 %v4407, %v4600
    %v4794 = vmax.f32 %v4408, %v4601
    %v4795 = vmax.f32 %v4409, %v4602
    %v4796 = vmax.f32 %v4410, %v4603
    %v4797 = vmax.f32 %v4411, %v4604
    %v4798 = vmax.f32 %v4412, %v4605
    %v4799 = vmax.f32 %v4413, %v4606
    %v4800 = vmax.f32 %v4414, %v4607
    %v4801 = vmax.f32 %v4415, %v4608
    %v4802 = vmax.f32 %v4416, %v4609
    %v4803 = vmax.f32 %v4417, %v4610
    %v4804 = vmax.f32 %v4418, %v4611
    %v4805 = vmax.f32 %v4419, %v4612
    %v4806 = vmax.f32 %v4420, %v4613
    %v4807 = vmax.f32 %v4421, %v4614
    %v4808 = vmax.f32 %v4422, %v4615
    %v4809 = vmax.f32 %v4423, %v4616
    %v4810 = vmax.f32 %v4424, %v4617
    %v4811 = vmax.f32 %v4425, %v4618
    %v4812 = vmax.f32 %v4426, %v4619
    %v4813 = vmax.f32 %v4427, %v4620
    %v4814 = vmax.f32 %v4428, %v4621
    %v4815 = vmax.f32 %v4429, %v4622
    %v4816 = vmax.f32 %v4430, %v4623
    %v4817 = vmax.f32 %v4431, %v4624
    %v4818 = vmax.f32 %v4432, %v4625
    %v4819 = vmax.f32 %v4433, %v4626
    %v4820 = vmax.f32 %v4434, %v4627
    %v4821 = vmax.f32 %v4435, %v4628
    %v4822 = vmax.f32 %v4436, %v4629
    %v4823 = vmax.f32 %v4437, %v4630
    %v4824 = vmax.f32 %v4438, %v4631
    %v4825 = vmax.f32 %v4439, %v4632
    %v4826 = vmax.f32 %v4440, %v4633
    %v4827 = vmax.f32 %v4441, %v4634
    %v4828 = vmax.f32 %v4442, %v4635
    %v4829 = vmax.f32 %v4443, %v4636
    %v4830 = vmax.f32 %v4444, %v4637
    %v4831 = vmax.f32 %v4445, %v4638
    %v4832 = vmax.f32 %v4446, %v4639
    %v4833 = vmax.f32 %v4447, %v4640
    %v4834 = vmax.f32 %v4448, %v4641
    %v4835 = vmax.f32 %v4449, %v4642
    %v4836 = vmax.f32 %v4450, %v4643
    %v4837 = vmax.f32 %v4451, %v4644
    %v4838 = vmax.f32 %v4452, %v4645
    %v4839 = vmax.f32 %v4453, %v4646
    %v4840 = vmax.f32 %v4454, %v4647
    %v4841 = vmax.f32 %v4455, %v4648
    %v4842 = vmax.f32 %v4456, %v4649
    %v4843 = vmax.f32 %v4457, %v4650
    %v4844 = vmax.f32 %v4072, %v4651
    %v4845 = vmax.f32 %v4073, %v4652
    %v4846 = vmax.f32 %v4074, %v4653
    %v4847 = vmax.f32 %v4075, %v4654
    %v4848 = vmax.f32 %v4076, %v4655
    %v4849 = vmax.f32 %v4077, %v4656
    %v4850 = vmax.f32 %v4078, %v4657
    %v4851 = vmax.f32 %v4079, %v4658
    %v4852 = vmax.f32 %v4080, %v4659
    %v4853 = vmax.f32 %v4081, %v4660
    %v4854 = vmax.f32 %v4082, %v4661
    %v4855 = vmax.f32 %v4083, %v4662
    %v4856 = vmax.f32 %v4084, %v4663
    %v4857 = vmax.f32 %v4085, %v4664
    %v4858 = vmax.f32 %v4086, %v4665
    %v4859 = vmax.f32 %v4087, %v4666
    %v4860 = vmax.f32 %v4088, %v4667
    %v4861 = vmax.f32 %v4089, %v4668
    %v4862 = vmax.f32 %v4090, %v4669
    %v4863 = vmax.f32 %v4091, %v4670
    %v4864 = vmax.f32 %v4092, %v4671
    %v4865 = vmax.f32 %v4093, %v4672
    %v4866 = vmax.f32 %v4094, %v4673
    %v4867 = vmax.f32 %v4095, %v4674
    %v4868 = vmax.f32 %v4096, %v4675
    %v4869 = vmax.f32 %v4097, %v4676
    %v4870 = vmax.f32 %v4098, %v4677
    %v4871 = vmax.f32 %v4099, %v4678
    %v4872 = vmax.f32 %v4100, %v4679
    %v4873 = vmax.f32 %v4101, %v4680
    %v4874 = vmax.f32 %v4102, %v4681
    %v4875 = vmax.f32 %v4103, %v4682
    %v4876 = vmax.f32 %v4104, %v4683
    %v4877 = vmax.f32 %v4105, %v4684
    %v4878 = vmax.f32 %v4106, %v4685
    %v4879 = vmax.f32 %v4107, %v4686
    %v4880 = vmax.f32 %v4108, %v4687
    %v4881 = vmax.f32 %v4109, %v4688
    %v4882 = vmax.f32 %v4110, %v4689
    %v4883 = vmax.f32 %v4111, %v4690
    %v4884 = vmax.f32 %v4112, %v4691
    %v4885 = vmax.f32 %v4113, %v4692
    %v4886 = vmax.f32 %v4114, %v4693
    %v4887 = vmax.f32 %v4115, %v4694
    %v4888 = vmax.f32 %v4116, %v4695
    %v4889 = vmax.f32 %v4117, %v4696
    %v4890 = vmax.f32 %v4118, %v4697
    %v4891 = vmax.f32 %v4119, %v4698
    %v4892 = vmax.f32 %v4120, %v4699
    %v4893 = vmax.f32 %v4121, %v4700
    %v4894 = vmax.f32 %v4122, %v4701
    %v4895 = vmax.f32 %v4123, %v4702
    %v4896 = vmax.f32 %v4124, %v4703
    %v4897 = vmax.f32 %v4125, %v4704
    %v4898 = vmax.f32 %v4126, %v4705
    %v4899 = vmax.f32 %v4127, %v4706
    %v4900 = vmax.f32 %v4128, %v4707
    %v4901 = vmax.f32 %v4129, %v4708
    %v4902 = vmax.f32 %v4130, %v4709
    %v4903 = vmax.f32 %v4131, %v4710
    %v4904 = vmax.f32 %v4132, %v4711
    %v4905 = vmax.f32 %v4133, %v4712
    %v4906 = vmax.f32 %v4134, %v4713
    %v4907 = vmax.f32 %v4135, %v4714
    %v4908 = vmax.f32 %v4136, %v4715
    %v4909 = vmax.f32 %v4137, %v4716
    %v4910 = vmax.f32 %v4138, %v4717
    %v4911 = vmax.f32 %v4139, %v4718
    %v4912 = vmax.f32 %v4140, %v4719
    %v4913 = vmax.f32 %v4141, %v4720
    %v4914 = vmax.f32 %v4142, %v4721
    %v4915 = vmax.f32 %v4143, %v4722
    %v4916 = vmax.f32 %v4144, %v4723
    %v4917 = vmax.f32 %v4145, %v4724
    %v4918 = vmax.f32 %v4146, %v4725
    %v4919 = vmax.f32 %v4147, %v4726
    %v4920 = vmax.f32 %v4148, %v4727
    %v4921 = vmax.f32 %v4149, %v4728
    %v4922 = vmax.f32 %v4150, %v4729
    %v4923 = vmax.f32 %v4151, %v4730
    %v4924 = vmax.f32 %v4152, %v4731
    %v4925 = vmax.f32 %v4153, %v4732
    %v4926 = vmax.f32 %v4154, %v4733
    %v4927 = vmax.f32 %v4155, %v4734
    %v4928 = vmax.f32 %v4156, %v4735
    %v4929 = vmax.f32 %v4157, %v4736
    %v4930 = vmax.f32 %v4158, %v4737
    %v4931 = vmax.f32 %v4159, %v4738
    %v4932 = vmax.f32 %v4160, %v4739
    %v4933 = vmax.f32 %v4161, %v4740
    %v4934 = vmax.f32 %v4162, %v4741
    %v4935 = vmax.f32 %v4163, %v4742
    %v4936 = vmax.f32 %v4164, %v4743
    %v4937 = vmax.f32 %v4165, %v4744
    %v4938 = vmax.f32 %v4166, %v4745
    %v4939 = vmax.f32 %v4167, %v4746
    %v4940 = vmax.f32 %v4168, %v4747
    %v4941 = vmax.f32 %v4169, %v4748
    %v4942 = vmax.f32 %v4170, %v4749
    %v4943 = vmax.f32 %v4171, %v4750
    %v4944 = vmax.f32 %v4172, %v4751
    %v4945 = vmax.f32 %v4173, %v4752
    %v4946 = vmax.f32 %v4174, %v4753
    %v4947 = vmax.f32 %v4175, %v4754
    %v4948 = vmax.f32 %v4176, %v4755
    %v4949 = vmax.f32 %v4177, %v4756
    %v4950 = vmax.f32 %v4178, %v4757
    %v4951 = vmax.f32 %v4179, %v4758
    %v4952 = vmax.f32 %v4180, %v4759
    %v4953 = vmax.f32 %v4181, %v4760
    %v4954 = vmax.f32 %v4182, %v4761
    %v4955 = vmax.f32 %v4183, %v4762
    %v4956 = vmax.f32 %v4184, %v4763
    %v4957 = vmax.f32 %v4185, %v4764
    %v4958 = vmax.f32 %v4186, %v4765
    %v4959 = vmax.f32 %v4187, %v4766
    %v4960 = vmax.f32 %v4188, %v4767
    %v4961 = vmax.f32 %v4189, %v4768
    %v4962 = vmax.f32 %v4190, %v4769
    %v4963 = vmax.f32 %v4191, %v4770
    %v4964 = vmax.f32 %v4192, %v4771
    %v4965 = vmax.f32 %v4193, %v4772
    %v4966 = vmax.f32 %v4194, %v4773
    %v4967 = vmax.f32 %v4195, %v4774
    %v4968 = vmax.f32 %v4196, %v4775
    %v4969 = vmax.f32 %v4197, %v4776
    %v4970 = vmax.f32 %v4198, %v4777
    %v4971 = vmax.f32 %v4199, %v4778
    %v4972 = vmax.f32 %v4200, %v4779
    %v4973 = vmax.f32 %v4201, %v4780
    %v4974 = vmax.f32 %v4202, %v4781
    %v4975 = vmax.f32 %v4203, %v4782
    %v4976 = vmax.f32 %v4204, %v4783
    %v4977 = vmax.f32 %v4205, %v4784
    %v4978 = vmax.f32 %v4206, %v4785
    %v4979 = vmax.f32 %v4207, %v4786
    %v4980 = vmax.f32 %v4208, %v4787
    %v4981 = vmax.f32 %v4209, %v4788
    %v4982 = vmax.f32 %v4210, %v4789
    %v4983 = vmax.f32 %v4211, %v4790
    %v4984 = vmax.f32 %v4212, %v4791
    %v4985 = vmax.f32 %v4213, %v4792
    %v4986 = vmax.f32 %v4214, %v4793
    %v4987 = vmax.f32 %v4215, %v4794
    %v4988 = vmax.f32 %v4216, %v4795
    %v4989 = vmax.f32 %v4217, %v4796
    %v4990 = vmax.f32 %v4218, %v4797
    %v4991 = vmax.f32 %v4219, %v4798
    %v4992 = vmax.f32 %v4220, %v4799
    %v4993 = vmax.f32 %v4221, %v4800
    %v4994 = vmax.f32 %v4222, %v4801
    %v4995 = vmax.f32 %v4223, %v4802
    %v4996 = vmax.f32 %v4224, %v4803
    %v4997 = vmax.f32 %v4225, %v4804
    %v4998 = vmax.f32 %v4226, %v4805
    %v4999 = vmax.f32 %v4227, %v4806
    %v5000 = vmax.f32 %v4228, %v4807
    %v5001 = vmax.f32 %v4229, %v4808
    %v5002 = vmax.f32 %v4230, %v4809
    %v5003 = vmax.f32 %v4231, %v4810
    %v5004 = vmax.f32 %v4232, %v4811
    %v5005 = vmax.f32 %v4233, %v4812
    %v5006 = vmax.f32 %v4234, %v4813
    %v5007 = vmax.f32 %v4235, %v4814
    %v5008 = vmax.f32 %v4236, %v4815
    %v5009 = vmax.f32 %v4237, %v4816
    %v5010 = vmax.f32 %v4238, %v4817
    %v5011 = vmax.f32 %v4239, %v4818
    %v5012 = vmax.f32 %v4240, %v4819
    %v5013 = vmax.f32 %v4241, %v4820
    %v5014 = vmax.f32 %v4242, %v4821
    %v5015 = vmax.f32 %v4243, %v4822
    %v5016 = vmax.f32 %v4244, %v4823
    %v5017 = vmax.f32 %v4245, %v4824
    %v5018 = vmax.f32 %v4246, %v4825
    %v5019 = vmax.f32 %v4247, %v4826
    %v5020 = vmax.f32 %v4248, %v4827
    %v5021 = vmax.f32 %v4249, %v4828
    %v5022 = vmax.f32 %v4250, %v4829
    %v5023 = vmax.f32 %v4251, %v4830
    %v5024 = vmax.f32 %v4252, %v4831
    %v5025 = vmax.f32 %v4253, %v4832
    %v5026 = vmax.f32 %v4254, %v4833
    %v5027 = vmax.f32 %v4255, %v4834
    %v5028 = vmax.f32 %v4256, %v4835
    %v5029 = vmax.f32 %v4257, %v4836
    %v5030 = vmax.f32 %v4258, %v4837
    %v5031 = vmax.f32 %v4259, %v4838
    %v5032 = vmax.f32 %v4260, %v4839
    %v5033 = vmax.f32 %v4261, %v4840
    %v5034 = vmax.f32 %v4262, %v4841
    %v5035 = vmax.f32 %v4263, %v4842
    %v5036 = vmax.f32 %v4264, %v4843
    %5037 = vst.msk [vmem:[%s4] sm:$0xff] %vm254, %v4844
    %5038 = vst.msk [vmem:[%s4 + $0x8] sm:$0xff] %vm254, %v4845
    %5039 = vst.msk [vmem:[%s4 + $0x10] sm:$0xff] %vm254, %v4846
    %5040 = vst.msk [vmem:[%s4 + $0x18] sm:$0xff] %vm254, %v4847
    %5041 = vst.msk [vmem:[%s4 + $0x20] sm:$0xff] %vm254, %v4848
    %5042 = vst.msk [vmem:[%s4 + $0x28] sm:$0xff] %vm254, %v4849
    %5043 = vst.msk [vmem:[%s4 + $0x30] sm:$0xff] %vm254, %v4850
    %5044 = vst.msk [vmem:[%s4 + $0x38] sm:$0xff] %vm254, %v4851
    %5045 = vst.msk [vmem:[%s4 + $0x40] sm:$0xff] %vm254, %v4852
    %5046 = vst.msk [vmem:[%s4 + $0x48] sm:$0xff] %vm254, %v4853
    %5047 = vst.msk [vmem:[%s4 + $0x50] sm:$0xff] %vm254, %v4854
    %5048 = vst.msk [vmem:[%s4 + $0x58] sm:$0xff] %vm254, %v4855
    %5049 = vst.msk [vmem:[%s4 + $0x60] sm:$0xff] %vm254, %v4856
    %5050 = vst.msk [vmem:[%s4 + $0x68] sm:$0xff] %vm254, %v4857
    %5051 = vst.msk [vmem:[%s4 + $0x70] sm:$0xff] %vm254, %v4858
    %5052 = vst.msk [vmem:[%s4 + $0x78] sm:$0xff] %vm254, %v4859
    %5053 = vst.msk [vmem:[%s4 + $0x80] sm:$0xff] %vm254, %v4860
    %5054 = vst.msk [vmem:[%s4 + $0x88] sm:$0xff] %vm254, %v4861
    %5055 = vst.msk [vmem:[%s4 + $0x90] sm:$0xff] %vm254, %v4862
    %5056 = vst.msk [vmem:[%s4 + $0x98] sm:$0xff] %vm254, %v4863
    %5057 = vst.msk [vmem:[%s4 + $0xa0] sm:$0xff] %vm254, %v4864
    %5058 = vst.msk [vmem:[%s4 + $0xa8] sm:$0xff] %vm254, %v4865
    %5059 = vst.msk [vmem:[%s4 + $0xb0] sm:$0xff] %vm254, %v4866
    %5060 = vst.msk [vmem:[%s4 + $0xb8] sm:$0xff] %vm254, %v4867
    %5061 = vst.msk [vmem:[%s4 + $0xc0] sm:$0xff] %vm254, %v4868
    %5062 = vst.msk [vmem:[%s4 + $0xc8] sm:$0xff] %vm254, %v4869
    %5063 = vst.msk [vmem:[%s4 + $0xd0] sm:$0xff] %vm254, %v4870
    %5064 = vst.msk [vmem:[%s4 + $0xd8] sm:$0xff] %vm254, %v4871
    %5065 = vst.msk [vmem:[%s4 + $0xe0] sm:$0xff] %vm254, %v4872
    %5066 = vst.msk [vmem:[%s4 + $0xe8] sm:$0xff] %vm254, %v4873
    %5067 = vst.msk [vmem:[%s4 + $0xf0] sm:$0xff] %vm254, %v4874
    %5068 = vst.msk [vmem:[%s4 + $0xf8] sm:$0xff] %vm254, %v4875
    %5069 = vst.msk [vmem:[%s4 + $0x100] sm:$0xff] %vm254, %v4876
    %5070 = vst.msk [vmem:[%s4 + $0x108] sm:$0xff] %vm254, %v4877
    %5071 = vst.msk [vmem:[%s4 + $0x110] sm:$0xff] %vm254, %v4878
    %5072 = vst.msk [vmem:[%s4 + $0x118] sm:$0xff] %vm254, %v4879
    %5073 = vst.msk [vmem:[%s4 + $0x120] sm:$0xff] %vm254, %v4880
    %5074 = vst.msk [vmem:[%s4 + $0x128] sm:$0xff] %vm254, %v4881
    %5075 = vst.msk [vmem:[%s4 + $0x130] sm:$0xff] %vm254, %v4882
    %5076 = vst.msk [vmem:[%s4 + $0x138] sm:$0xff] %vm254, %v4883
    %5077 = vst.msk [vmem:[%s4 + $0x140] sm:$0xff] %vm254, %v4884
    %5078 = vst.msk [vmem:[%s4 + $0x148] sm:$0xff] %vm254, %v4885
    %5079 = vst.msk [vmem:[%s4 + $0x150] sm:$0xff] %vm254, %v4886
    %5080 = vst.msk [vmem:[%s4 + $0x158] sm:$0xff] %vm254, %v4887
    %5081 = vst.msk [vmem:[%s4 + $0x160] sm:$0xff] %vm254, %v4888
    %5082 = vst.msk [vmem:[%s4 + $0x168] sm:$0xff] %vm254, %v4889
    %5083 = vst.msk [vmem:[%s4 + $0x170] sm:$0xff] %vm254, %v4890
    %5084 = vst.msk [vmem:[%s4 + $0x178] sm:$0xff] %vm254, %v4891
    %5085 = vst.msk [vmem:[%s4 + $0x180] sm:$0xff] %vm254, %v4892
    %5086 = vst.msk [vmem:[%s4 + $0x188] sm:$0xff] %vm254, %v4893
    %5087 = vst.msk [vmem:[%s4 + $0x190] sm:$0xff] %vm254, %v4894
    %5088 = vst.msk [vmem:[%s4 + $0x198] sm:$0xff] %vm254, %v4895
    %5089 = vst.msk [vmem:[%s4 + $0x1a0] sm:$0xff] %vm254, %v4896
    %5090 = vst.msk [vmem:[%s4 + $0x1a8] sm:$0xff] %vm254, %v4897
    %5091 = vst.msk [vmem:[%s4 + $0x1b0] sm:$0xff] %vm254, %v4898
    %5092 = vst.msk [vmem:[%s4 + $0x1b8] sm:$0xff] %vm254, %v4899
    %5093 = vst.msk [vmem:[%s4 + $0x1c0] sm:$0xff] %vm254, %v4900
    %5094 = vst.msk [vmem:[%s4 + $0x1c8] sm:$0xff] %vm254, %v4901
    %5095 = vst.msk [vmem:[%s4 + $0x1d0] sm:$0xff] %vm254, %v4902
    %5096 = vst.msk [vmem:[%s4 + $0x1d8] sm:$0xff] %vm254, %v4903
    %5097 = vst.msk [vmem:[%s4 + $0x1e0] sm:$0xff] %vm254, %v4904
    %5098 = vst.msk [vmem:[%s4 + $0x1e8] sm:$0xff] %vm254, %v4905
    %5099 = vst.msk [vmem:[%s4 + $0x1f0] sm:$0xff] %vm254, %v4906
    %5100 = vst.msk [vmem:[%s4 + $0x1f8] sm:$0xff] %vm254, %v4907
    %5101 = vst.msk [vmem:[%s4 + $0x200] sm:$0xff] %vm254, %v4908
    %5102 = vst.msk [vmem:[%s4 + $0x208] sm:$0xff] %vm254, %v4909
    %5103 = vst.msk [vmem:[%s4 + $0x210] sm:$0xff] %vm254, %v4910
    %5104 = vst.msk [vmem:[%s4 + $0x218] sm:$0xff] %vm254, %v4911
    %5105 = vst.msk [vmem:[%s4 + $0x220] sm:$0xff] %vm254, %v4912
    %5106 = vst.msk [vmem:[%s4 + $0x228] sm:$0xff] %vm254, %v4913
    %5107 = vst.msk [vmem:[%s4 + $0x230] sm:$0xff] %vm254, %v4914
    %5108 = vst.msk [vmem:[%s4 + $0x238] sm:$0xff] %vm254, %v4915
    %5109 = vst.msk [vmem:[%s4 + $0x240] sm:$0xff] %vm254, %v4916
    %5110 = vst.msk [vmem:[%s4 + $0x248] sm:$0xff] %vm254, %v4917
    %5111 = vst.msk [vmem:[%s4 + $0x250] sm:$0xff] %vm254, %v4918
    %5112 = vst.msk [vmem:[%s4 + $0x258] sm:$0xff] %vm254, %v4919
    %5113 = vst.msk [vmem:[%s4 + $0x260] sm:$0xff] %vm254, %v4920
    %5114 = vst.msk [vmem:[%s4 + $0x268] sm:$0xff] %vm254, %v4921
    %5115 = vst.msk [vmem:[%s4 + $0x270] sm:$0xff] %vm254, %v4922
    %5116 = vst.msk [vmem:[%s4 + $0x278] sm:$0xff] %vm254, %v4923
    %5117 = vst.msk [vmem:[%s4 + $0x280] sm:$0xff] %vm254, %v4924
    %5118 = vst.msk [vmem:[%s4 + $0x288] sm:$0xff] %vm254, %v4925
    %5119 = vst.msk [vmem:[%s4 + $0x290] sm:$0xff] %vm254, %v4926
    %5120 = vst.msk [vmem:[%s4 + $0x298] sm:$0xff] %vm254, %v4927
    %5121 = vst.msk [vmem:[%s4 + $0x2a0] sm:$0xff] %vm254, %v4928
    %5122 = vst.msk [vmem:[%s4 + $0x2a8] sm:$0xff] %vm254, %v4929
    %5123 = vst.msk [vmem:[%s4 + $0x2b0] sm:$0xff] %vm254, %v4930
    %5124 = vst.msk [vmem:[%s4 + $0x2b8] sm:$0xff] %vm254, %v4931
    %5125 = vst.msk [vmem:[%s4 + $0x2c0] sm:$0xff] %vm254, %v4932
    %5126 = vst.msk [vmem:[%s4 + $0x2c8] sm:$0xff] %vm254, %v4933
    %5127 = vst.msk [vmem:[%s4 + $0x2d0] sm:$0xff] %vm254, %v4934
    %5128 = vst.msk [vmem:[%s4 + $0x2d8] sm:$0xff] %vm254, %v4935
    %5129 = vst.msk [vmem:[%s4 + $0x2e0] sm:$0xff] %vm254, %v4936
    %5130 = vst.msk [vmem:[%s4 + $0x2e8] sm:$0xff] %vm254, %v4937
    %5131 = vst.msk [vmem:[%s4 + $0x2f0] sm:$0xff] %vm254, %v4938
    %5132 = vst.msk [vmem:[%s4 + $0x2f8] sm:$0xff] %vm254, %v4939
    %5133 = vst.msk [vmem:[%s4 + $0x300] sm:$0xff] %vm254, %v4940
    %5134 = vst.msk [vmem:[%s4 + $0x308] sm:$0xff] %vm254, %v4941
    %5135 = vst.msk [vmem:[%s4 + $0x310] sm:$0xff] %vm254, %v4942
    %5136 = vst.msk [vmem:[%s4 + $0x318] sm:$0xff] %vm254, %v4943
    %5137 = vst.msk [vmem:[%s4 + $0x320] sm:$0xff] %vm254, %v4944
    %5138 = vst.msk [vmem:[%s4 + $0x328] sm:$0xff] %vm254, %v4945
    %5139 = vst.msk [vmem:[%s4 + $0x330] sm:$0xff] %vm254, %v4946
    %5140 = vst.msk [vmem:[%s4 + $0x338] sm:$0xff] %vm254, %v4947
    %5141 = vst.msk [vmem:[%s4 + $0x340] sm:$0xff] %vm254, %v4948
    %5142 = vst.msk [vmem:[%s4 + $0x348] sm:$0xff] %vm254, %v4949
    %5143 = vst.msk [vmem:[%s4 + $0x350] sm:$0xff] %vm254, %v4950
    %5144 = vst.msk [vmem:[%s4 + $0x358] sm:$0xff] %vm254, %v4951
    %5145 = vst.msk [vmem:[%s4 + $0x360] sm:$0xff] %vm254, %v4952
    %5146 = vst.msk [vmem:[%s4 + $0x368] sm:$0xff] %vm254, %v4953
    %5147 = vst.msk [vmem:[%s4 + $0x370] sm:$0xff] %vm254, %v4954
    %5148 = vst.msk [vmem:[%s4 + $0x378] sm:$0xff] %vm254, %v4955
    %5149 = vst.msk [vmem:[%s4 + $0x380] sm:$0xff] %vm254, %v4956
    %5150 = vst.msk [vmem:[%s4 + $0x388] sm:$0xff] %vm254, %v4957
    %5151 = vst.msk [vmem:[%s4 + $0x390] sm:$0xff] %vm254, %v4958
    %5152 = vst.msk [vmem:[%s4 + $0x398] sm:$0xff] %vm254, %v4959
    %5153 = vst.msk [vmem:[%s4 + $0x3a0] sm:$0xff] %vm254, %v4960
    %5154 = vst.msk [vmem:[%s4 + $0x3a8] sm:$0xff] %vm254, %v4961
    %5155 = vst.msk [vmem:[%s4 + $0x3b0] sm:$0xff] %vm254, %v4962
    %5156 = vst.msk [vmem:[%s4 + $0x3b8] sm:$0xff] %vm254, %v4963
    %5157 = vst.msk [vmem:[%s4 + $0x3c0] sm:$0xff] %vm254, %v4964
    %5158 = vst.msk [vmem:[%s4 + $0x3c8] sm:$0xff] %vm254, %v4965
    %5159 = vst.msk [vmem:[%s4 + $0x3d0] sm:$0xff] %vm254, %v4966
    %5160 = vst.msk [vmem:[%s4 + $0x3d8] sm:$0xff] %vm254, %v4967
    %5161 = vst.msk [vmem:[%s4 + $0x3e0] sm:$0xff] %vm254, %v4968
    %5162 = vst.msk [vmem:[%s4 + $0x3e8] sm:$0xff] %vm254, %v4969
    %5163 = vst.msk [vmem:[%s4 + $0x3f0] sm:$0xff] %vm254, %v4970
    %5164 = vst.msk [vmem:[%s4 + $0x3f8] sm:$0xff] %vm254, %v4971
    %5165 = vst.msk [vmem:[%s4 + $0x400] sm:$0xff] %vm254, %v4972
    %5166 = vst.msk [vmem:[%s4 + $0x408] sm:$0xff] %vm254, %v4973
    %5167 = vst.msk [vmem:[%s4 + $0x410] sm:$0xff] %vm254, %v4974
    %5168 = vst.msk [vmem:[%s4 + $0x418] sm:$0xff] %vm254, %v4975
    %5169 = vst.msk [vmem:[%s4 + $0x420] sm:$0xff] %vm254, %v4976
    %5170 = vst.msk [vmem:[%s4 + $0x428] sm:$0xff] %vm254, %v4977
    %5171 = vst.msk [vmem:[%s4 + $0x430] sm:$0xff] %vm254, %v4978
    %5172 = vst.msk [vmem:[%s4 + $0x438] sm:$0xff] %vm254, %v4979
    %5173 = vst.msk [vmem:[%s4 + $0x440] sm:$0xff] %vm254, %v4980
    %5174 = vst.msk [vmem:[%s4 + $0x448] sm:$0xff] %vm254, %v4981
    %5175 = vst.msk [vmem:[%s4 + $0x450] sm:$0xff] %vm254, %v4982
    %5176 = vst.msk [vmem:[%s4 + $0x458] sm:$0xff] %vm254, %v4983
    %5177 = vst.msk [vmem:[%s4 + $0x460] sm:$0xff] %vm254, %v4984
    %5178 = vst.msk [vmem:[%s4 + $0x468] sm:$0xff] %vm254, %v4985
    %5179 = vst.msk [vmem:[%s4 + $0x470] sm:$0xff] %vm254, %v4986
    %5180 = vst.msk [vmem:[%s4 + $0x478] sm:$0xff] %vm254, %v4987
    %5181 = vst.msk [vmem:[%s4 + $0x480] sm:$0xff] %vm254, %v4988
    %5182 = vst.msk [vmem:[%s4 + $0x488] sm:$0xff] %vm254, %v4989
    %5183 = vst.msk [vmem:[%s4 + $0x490] sm:$0xff] %vm254, %v4990
    %5184 = vst.msk [vmem:[%s4 + $0x498] sm:$0xff] %vm254, %v4991
    %5185 = vst.msk [vmem:[%s4 + $0x4a0] sm:$0xff] %vm254, %v4992
    %5186 = vst.msk [vmem:[%s4 + $0x4a8] sm:$0xff] %vm254, %v4993
    %5187 = vst.msk [vmem:[%s4 + $0x4b0] sm:$0xff] %vm254, %v4994
    %5188 = vst.msk [vmem:[%s4 + $0x4b8] sm:$0xff] %vm254, %v4995
    %5189 = vst.msk [vmem:[%s4 + $0x4c0] sm:$0xff] %vm254, %v4996
    %5190 = vst.msk [vmem:[%s4 + $0x4c8] sm:$0xff] %vm254, %v4997
    %5191 = vst.msk [vmem:[%s4 + $0x4d0] sm:$0xff] %vm254, %v4998
    %5192 = vst.msk [vmem:[%s4 + $0x4d8] sm:$0xff] %vm254, %v4999
    %5193 = vst.msk [vmem:[%s4 + $0x4e0] sm:$0xff] %vm254, %v5000
    %5194 = vst.msk [vmem:[%s4 + $0x4e8] sm:$0xff] %vm254, %v5001
    %5195 = vst.msk [vmem:[%s4 + $0x4f0] sm:$0xff] %vm254, %v5002
    %5196 = vst.msk [vmem:[%s4 + $0x4f8] sm:$0xff] %vm254, %v5003
    %5197 = vst.msk [vmem:[%s4 + $0x500] sm:$0xff] %vm254, %v5004
    %5198 = vst.msk [vmem:[%s4 + $0x508] sm:$0xff] %vm254, %v5005
    %5199 = vst.msk [vmem:[%s4 + $0x510] sm:$0xff] %vm254, %v5006
    %5200 = vst.msk [vmem:[%s4 + $0x518] sm:$0xff] %vm254, %v5007
    %5201 = vst.msk [vmem:[%s4 + $0x520] sm:$0xff] %vm254, %v5008
    %5202 = vst.msk [vmem:[%s4 + $0x528] sm:$0xff] %vm254, %v5009
    %5203 = vst.msk [vmem:[%s4 + $0x530] sm:$0xff] %vm254, %v5010
    %5204 = vst.msk [vmem:[%s4 + $0x538] sm:$0xff] %vm254, %v5011
    %5205 = vst.msk [vmem:[%s4 + $0x540] sm:$0xff] %vm254, %v5012
    %5206 = vst.msk [vmem:[%s4 + $0x548] sm:$0xff] %vm254, %v5013
    %5207 = vst.msk [vmem:[%s4 + $0x550] sm:$0xff] %vm254, %v5014
    %5208 = vst.msk [vmem:[%s4 + $0x558] sm:$0xff] %vm254, %v5015
    %5209 = vst.msk [vmem:[%s4 + $0x560] sm:$0xff] %vm254, %v5016
    %5210 = vst.msk [vmem:[%s4 + $0x568] sm:$0xff] %vm254, %v5017
    %5211 = vst.msk [vmem:[%s4 + $0x570] sm:$0xff] %vm254, %v5018
    %5212 = vst.msk [vmem:[%s4 + $0x578] sm:$0xff] %vm254, %v5019
    %5213 = vst.msk [vmem:[%s4 + $0x580] sm:$0xff] %vm254, %v5020
    %5214 = vst.msk [vmem:[%s4 + $0x588] sm:$0xff] %vm254, %v5021
    %5215 = vst.msk [vmem:[%s4 + $0x590] sm:$0xff] %vm254, %v5022
    %5216 = vst.msk [vmem:[%s4 + $0x598] sm:$0xff] %vm254, %v5023
    %5217 = vst.msk [vmem:[%s4 + $0x5a0] sm:$0xff] %vm254, %v5024
    %5218 = vst.msk [vmem:[%s4 + $0x5a8] sm:$0xff] %vm254, %v5025
    %5219 = vst.msk [vmem:[%s4 + $0x5b0] sm:$0xff] %vm254, %v5026
    %5220 = vst.msk [vmem:[%s4 + $0x5b8] sm:$0xff] %vm254, %v5027
    %5221 = vst.msk [vmem:[%s4 + $0x5c0] sm:$0xff] %vm254, %v5028
    %5222 = vst.msk [vmem:[%s4 + $0x5c8] sm:$0xff] %vm254, %v5029
    %5223 = vst.msk [vmem:[%s4 + $0x5d0] sm:$0xff] %vm254, %v5030
    %5224 = vst.msk [vmem:[%s4 + $0x5d8] sm:$0xff] %vm254, %v5031
    %5225 = vst.msk [vmem:[%s4 + $0x5e0] sm:$0xff] %vm254, %v5032
    %5226 = vst.msk [vmem:[%s4 + $0x5e8] sm:$0xff] %vm254, %v5033
    %5227 = vst.msk [vmem:[%s4 + $0x5f0] sm:$0xff] %vm254, %v5034
    %5228 = vst.msk [vmem:[%s4 + $0x5f8] sm:$0xff] %vm254, %v5035
    %vm5229 = vcmask 256000
    %5230 = vst.msk [vmem:[%s4 + $0x600] sm:$0x7] %vm5229, %v5036
    // Predicated region
    $region30: #{spinalnet_forward.3} parent=1 // pred_check
      _
    $region31: #{spinalnet_forward.3} parent=1 // pred_check_branch
      %5232 = sbr.rel (0) target = $region33
    $region32: #{spinalnet_forward.3} parent=1 // pred_region
      _
    $region33: #{spinalnet_forward.3} parent=1 // pred_fallthru
      _
    // Predicated region
    $region34: #{spinalnet_forward.3} parent=1 // pred_check
      _
    $region35: #{spinalnet_forward.3} parent=1 // pred_check_branch
      %5234 = sbr.rel (0) target = $region37
    $region36: #{spinalnet_forward.3} parent=1 // pred_region
      _
    $region37: #{spinalnet_forward.3} parent=1 // pred_fallthru
      _
    %5235 = vsyncpa [#allocation3], 1
    %5236 = vsyncpa [#allocation5], 1

// kernel: spinalnet_forward.4
$region0: #{spinalnet_forward.4}
  #allocation0 [shape = 'u32[]', space=smem, size = 0x4, offset = 0x4, fixed_abs, tag = 'smem constant byte address 0x4 - core index']
  #allocation1 [shape = 'u32[144,128]{1,0:T(1,128)}', space=vmem, size = 0x12000, scoped, tag = 'internal scratch']
  %s0 = inlined_call_operand.vmem [shape: bf16[392,800], index: 0, kind: input, shape index: {}]
  %s1 = inlined_call_operand.vmem [shape: bf16[800,64], index: 1, kind: input, shape index: {}]
  %s2 = inlined_call_operand.vmem [shape: f32[1,64], index: 2, kind: input, shape index: {}]
  %s3 = inlined_call_operand.vmem [shape: f32[1,64], index: 3, kind: input, shape index: {}]
  %s4 = inlined_call_operand.vmem [shape: f32[392,64], index: 4, kind: output, shape index: {}]
  %s5 = sld [smem:[#allocation0]]
  $region26: #{spinalnet_forward.4} parent=0
    _
  %s7 = ssub.s32 1, %s5
  %s8 = scalar_select 0, %s7, %s5
  // Predicated region
  $region2: #{spinalnet_forward.4} parent=0 // pred_check
    _
  $region3: #{spinalnet_forward.4} parent=0 // pred_check_branch
    %10 = sbr.rel (0) target = $region5
  $region4: #{spinalnet_forward.4} parent=0 // pred_region
    _
  $region5: #{spinalnet_forward.4} parent=0 // pred_fallthru
    _
  // Predicated region
  $region6: #{spinalnet_forward.4} parent=0 // pred_check
    _
  $region7: #{spinalnet_forward.4} parent=0 // pred_check_branch
    %12 = sbr.rel (0) target = $region9
  $region8: #{spinalnet_forward.4} parent=0 // pred_region
    _
  $region9: #{spinalnet_forward.4} parent=0 // pred_fallthru
    _
  // Predicated region
  $region10: #{spinalnet_forward.4} parent=0 // pred_check
    _
  $region11: #{spinalnet_forward.4} parent=0 // pred_check_branch
    %14 = sbr.rel (0) target = $region13
  $region12: #{spinalnet_forward.4} parent=0 // pred_region
    _
  $region13: #{spinalnet_forward.4} parent=0 // pred_fallthru
    _
  // Predicated region
  $region14: #{spinalnet_forward.4} parent=0 // pred_check
    _
  $region15: #{spinalnet_forward.4} parent=0 // pred_check_branch
    %16 = sbr.rel (0) target = $region17
  $region16: #{spinalnet_forward.4} parent=0 // pred_region
    _
  $region17: #{spinalnet_forward.4} parent=0 // pred_fallthru
    _
  %v18 = vld [vmem:[%s0] sm:$0xff]
  %v19 = vld [vmem:[%s0 + $0x8] sm:$0xff]
  %v20 = vld [vmem:[%s0 + $0x10] sm:$0xff]
  %v21 = vld [vmem:[%s0 + $0x18] sm:$0xf]
  %v22 = vld [vmem:[%s0 + $0x1c] sm:$0xff]
  %v23 = vld [vmem:[%s0 + $0x24] sm:$0xff]
  %v24 = vld [vmem:[%s0 + $0x2c] sm:$0xff]
  %v25 = vld [vmem:[%s0 + $0x34] sm:$0xf]
  %v26 = vld [vmem:[%s0 + $0x38] sm:$0xff]
  %v27 = vld [vmem:[%s0 + $0x40] sm:$0xff]
  %v28 = vld [vmem:[%s0 + $0x48] sm:$0xff]
  %v29 = vld [vmem:[%s0 + $0x50] sm:$0xf]
  %v30 = vld [vmem:[%s0 + $0x54] sm:$0xff]
  %v31 = vld [vmem:[%s0 + $0x5c] sm:$0xff]
  %v32 = vld [vmem:[%s0 + $0x64] sm:$0xff]
  %v33 = vld [vmem:[%s0 + $0x6c] sm:$0xf]
  %v34 = vld [vmem:[%s0 + $0x70] sm:$0xff]
  %v35 = vld [vmem:[%s0 + $0x78] sm:$0xff]
  %v36 = vld [vmem:[%s0 + $0x80] sm:$0xff]
  %v37 = vld [vmem:[%s0 + $0x88] sm:$0xf]
  %v38 = vld [vmem:[%s0 + $0x8c] sm:$0xff]
  %v39 = vld [vmem:[%s0 + $0x94] sm:$0xff]
  %v40 = vld [vmem:[%s0 + $0x9c] sm:$0xff]
  %v41 = vld [vmem:[%s0 + $0xa4] sm:$0xf]
  %v42 = vld [vmem:[%s0 + $0xa8] sm:$0xff]
  %v43 = vld [vmem:[%s0 + $0xb0] sm:$0xff]
  %v44 = vld [vmem:[%s0 + $0xb8] sm:$0xff]
  %v45 = vld [vmem:[%s0 + $0xc0] sm:$0xf]
  %v46 = vld [vmem:[%s0 + $0xc4] sm:$0xff]
  %v47 = vld [vmem:[%s0 + $0xcc] sm:$0xff]
  %v48 = vld [vmem:[%s0 + $0xd4] sm:$0xff]
  %v49 = vld [vmem:[%s0 + $0xdc] sm:$0xf]
  %v50 = vld [vmem:[%s0 + $0xe0] sm:$0xff]
  %v51 = vld [vmem:[%s0 + $0xe8] sm:$0xff]
  %v52 = vld [vmem:[%s0 + $0xf0] sm:$0xff]
  %v53 = vld [vmem:[%s0 + $0xf8] sm:$0xf]
  %v54 = vld [vmem:[%s0 + $0xfc] sm:$0xff]
  %v55 = vld [vmem:[%s0 + $0x104] sm:$0xff]
  %v56 = vld [vmem:[%s0 + $0x10c] sm:$0xff]
  %v57 = vld [vmem:[%s0 + $0x114] sm:$0xf]
  %v58 = vld [vmem:[%s0 + $0x118] sm:$0xff]
  %v59 = vld [vmem:[%s0 + $0x120] sm:$0xff]
  %v60 = vld [vmem:[%s0 + $0x128] sm:$0xff]
  %v61 = vld [vmem:[%s0 + $0x130] sm:$0xf]
  %v62 = vld [vmem:[%s0 + $0x134] sm:$0xff]
  %v63 = vld [vmem:[%s0 + $0x13c] sm:$0xff]
  %v64 = vld [vmem:[%s0 + $0x144] sm:$0xff]
  %v65 = vld [vmem:[%s0 + $0x14c] sm:$0xf]
  %v66 = vld [vmem:[%s0 + $0x150] sm:$0xff]
  %v67 = vld [vmem:[%s0 + $0x158] sm:$0xff]
  %v68 = vld [vmem:[%s0 + $0x160] sm:$0xff]
  %v69 = vld [vmem:[%s0 + $0x168] sm:$0xf]
  %v70 = vld [vmem:[%s0 + $0x16c] sm:$0xff]
  %v71 = vld [vmem:[%s0 + $0x174] sm:$0xff]
  %v72 = vld [vmem:[%s0 + $0x17c] sm:$0xff]
  %v73 = vld [vmem:[%s0 + $0x184] sm:$0xf]
  %v74 = vld [vmem:[%s0 + $0x188] sm:$0xff]
  %v75 = vld [vmem:[%s0 + $0x190] sm:$0xff]
  %v76 = vld [vmem:[%s0 + $0x198] sm:$0xff]
  %v77 = vld [vmem:[%s0 + $0x1a0] sm:$0xf]
  %v78 = vld [vmem:[%s0 + $0x1a4] sm:$0xff]
  %v79 = vld [vmem:[%s0 + $0x1ac] sm:$0xff]
  %v80 = vld [vmem:[%s0 + $0x1b4] sm:$0xff]
  %v81 = vld [vmem:[%s0 + $0x1bc] sm:$0xf]
  %v82 = vld [vmem:[%s0 + $0x1c0] sm:$0xff]
  %v83 = vld [vmem:[%s0 + $0x1c8] sm:$0xff]
  %v84 = vld [vmem:[%s0 + $0x1d0] sm:$0xff]
  %v85 = vld [vmem:[%s0 + $0x1d8] sm:$0xf]
  %v86 = vld [vmem:[%s0 + $0x1dc] sm:$0xff]
  %v87 = vld [vmem:[%s0 + $0x1e4] sm:$0xff]
  %v88 = vld [vmem:[%s0 + $0x1ec] sm:$0xff]
  %v89 = vld [vmem:[%s0 + $0x1f4] sm:$0xf]
  %v90 = vld [vmem:[%s0 + $0x1f8] sm:$0xff]
  %v91 = vld [vmem:[%s0 + $0x200] sm:$0xff]
  %v92 = vld [vmem:[%s0 + $0x208] sm:$0xff]
  %v93 = vld [vmem:[%s0 + $0x210] sm:$0xf]
  %v94 = vld [vmem:[%s0 + $0x214] sm:$0xff]
  %v95 = vld [vmem:[%s0 + $0x21c] sm:$0xff]
  %v96 = vld [vmem:[%s0 + $0x224] sm:$0xff]
  %v97 = vld [vmem:[%s0 + $0x22c] sm:$0xf]
  %v98 = vld [vmem:[%s0 + $0x230] sm:$0xff]
  %v99 = vld [vmem:[%s0 + $0x238] sm:$0xff]
  %v100 = vld [vmem:[%s0 + $0x240] sm:$0xff]
  %v101 = vld [vmem:[%s0 + $0x248] sm:$0xf]
  %v102 = vld [vmem:[%s0 + $0x24c] sm:$0xff]
  %v103 = vld [vmem:[%s0 + $0x254] sm:$0xff]
  %v104 = vld [vmem:[%s0 + $0x25c] sm:$0xff]
  %v105 = vld [vmem:[%s0 + $0x264] sm:$0xf]
  %v106 = vld [vmem:[%s0 + $0x268] sm:$0xff]
  %v107 = vld [vmem:[%s0 + $0x270] sm:$0xff]
  %v108 = vld [vmem:[%s0 + $0x278] sm:$0xff]
  %v109 = vld [vmem:[%s0 + $0x280] sm:$0xf]
  %v110 = vld [vmem:[%s0 + $0x284] sm:$0xff]
  %v111 = vld [vmem:[%s0 + $0x28c] sm:$0xff]
  %v112 = vld [vmem:[%s0 + $0x294] sm:$0xff]
  %v113 = vld [vmem:[%s0 + $0x29c] sm:$0xf]
  %v114 = vld [vmem:[%s0 + $0x2a0] sm:$0xff]
  %v115 = vld [vmem:[%s0 + $0x2a8] sm:$0xff]
  %v116 = vld [vmem:[%s0 + $0x2b0] sm:$0xff]
  %v117 = vld [vmem:[%s0 + $0x2b8] sm:$0xf]
  %v118 = vld [vmem:[%s0 + $0x2bc] sm:$0xff]
  %v119 = vld [vmem:[%s0 + $0x2c4] sm:$0xff]
  %v120 = vld [vmem:[%s0 + $0x2cc] sm:$0xff]
  %v121 = vld [vmem:[%s0 + $0x2d4] sm:$0xf]
  %v122 = vld [vmem:[%s0 + $0x2d8] sm:$0xff]
  %v123 = vld [vmem:[%s0 + $0x2e0] sm:$0xff]
  %v124 = vld [vmem:[%s0 + $0x2e8] sm:$0xff]
  %v125 = vld [vmem:[%s0 + $0x2f0] sm:$0xf]
  %v126 = vld [vmem:[%s0 + $0x2f4] sm:$0xff]
  %v127 = vld [vmem:[%s0 + $0x2fc] sm:$0xff]
  %v128 = vld [vmem:[%s0 + $0x304] sm:$0xff]
  %v129 = vld [vmem:[%s0 + $0x30c] sm:$0xf]
  %v130 = vld [vmem:[%s0 + $0x310] sm:$0xff]
  %v131 = vld [vmem:[%s0 + $0x318] sm:$0xff]
  %v132 = vld [vmem:[%s0 + $0x320] sm:$0xff]
  %v133 = vld [vmem:[%s0 + $0x328] sm:$0xf]
  %v134 = vld [vmem:[%s0 + $0x32c] sm:$0xff]
  %v135 = vld [vmem:[%s0 + $0x334] sm:$0xff]
  %v136 = vld [vmem:[%s0 + $0x33c] sm:$0xff]
  %v137 = vld [vmem:[%s0 + $0x344] sm:$0xf]
  %v138 = vld [vmem:[%s0 + $0x348] sm:$0xff]
  %v139 = vld [vmem:[%s0 + $0x350] sm:$0xff]
  %v140 = vld [vmem:[%s0 + $0x358] sm:$0xff]
  %v141 = vld [vmem:[%s0 + $0x360] sm:$0xf]
  %v142 = vld [vmem:[%s0 + $0x364] sm:$0xff]
  %v143 = vld [vmem:[%s0 + $0x36c] sm:$0xff]
  %v144 = vld [vmem:[%s0 + $0x374] sm:$0xff]
  %v145 = vld [vmem:[%s0 + $0x37c] sm:$0xf]
  %v146 = vld [vmem:[%s0 + $0x380] sm:$0xff]
  %v147 = vld [vmem:[%s0 + $0x388] sm:$0xff]
  %v148 = vld [vmem:[%s0 + $0x390] sm:$0xff]
  %v149 = vld [vmem:[%s0 + $0x398] sm:$0xf]
  %v150 = vld [vmem:[%s0 + $0x39c] sm:$0xff]
  %v151 = vld [vmem:[%s0 + $0x3a4] sm:$0xff]
  %v152 = vld [vmem:[%s0 + $0x3ac] sm:$0xff]
  %v153 = vld [vmem:[%s0 + $0x3b4] sm:$0xf]
  %v154 = vld [vmem:[%s0 + $0x3b8] sm:$0xff]
  %v155 = vld [vmem:[%s0 + $0x3c0] sm:$0xff]
  %v156 = vld [vmem:[%s0 + $0x3c8] sm:$0xff]
  %v157 = vld [vmem:[%s0 + $0x3d0] sm:$0xf]
  %v158 = vld [vmem:[%s0 + $0x3d4] sm:$0xff]
  %v159 = vld [vmem:[%s0 + $0x3dc] sm:$0xff]
  %v160 = vld [vmem:[%s0 + $0x3e4] sm:$0xff]
  %v161 = vld [vmem:[%s0 + $0x3ec] sm:$0xf]
  %v162 = vld [vmem:[%s0 + $0x3f0] sm:$0xff]
  %v163 = vld [vmem:[%s0 + $0x3f8] sm:$0xff]
  %v164 = vld [vmem:[%s0 + $0x400] sm:$0xff]
  %v165 = vld [vmem:[%s0 + $0x408] sm:$0xf]
  %v166 = vld [vmem:[%s0 + $0x40c] sm:$0xff]
  %v167 = vld [vmem:[%s0 + $0x414] sm:$0xff]
  %v168 = vld [vmem:[%s0 + $0x41c] sm:$0xff]
  %v169 = vld [vmem:[%s0 + $0x424] sm:$0xf]
  %v170 = vld [vmem:[%s0 + $0x428] sm:$0xff]
  %v171 = vld [vmem:[%s0 + $0x430] sm:$0xff]
  %v172 = vld [vmem:[%s0 + $0x438] sm:$0xff]
  %v173 = vld [vmem:[%s0 + $0x440] sm:$0xf]
  %v174 = vld [vmem:[%s0 + $0x444] sm:$0xff]
  %v175 = vld [vmem:[%s0 + $0x44c] sm:$0xff]
  %v176 = vld [vmem:[%s0 + $0x454] sm:$0xff]
  %v177 = vld [vmem:[%s0 + $0x45c] sm:$0xf]
  %v178 = vld [vmem:[%s0 + $0x460] sm:$0xff]
  %v179 = vld [vmem:[%s0 + $0x468] sm:$0xff]
  %v180 = vld [vmem:[%s0 + $0x470] sm:$0xff]
  %v181 = vld [vmem:[%s0 + $0x478] sm:$0xf]
  %v182 = vld [vmem:[%s0 + $0x47c] sm:$0xff]
  %v183 = vld [vmem:[%s0 + $0x484] sm:$0xff]
  %v184 = vld [vmem:[%s0 + $0x48c] sm:$0xff]
  %v185 = vld [vmem:[%s0 + $0x494] sm:$0xf]
  %v186 = vld [vmem:[%s0 + $0x498] sm:$0xff]
  %v187 = vld [vmem:[%s0 + $0x4a0] sm:$0xff]
  %v188 = vld [vmem:[%s0 + $0x4a8] sm:$0xff]
  %v189 = vld [vmem:[%s0 + $0x4b0] sm:$0xf]
  %v190 = vld [vmem:[%s0 + $0x4b4] sm:$0xff]
  %v191 = vld [vmem:[%s0 + $0x4bc] sm:$0xff]
  %v192 = vld [vmem:[%s0 + $0x4c4] sm:$0xff]
  %v193 = vld [vmem:[%s0 + $0x4cc] sm:$0xf]
  %v194 = vld [vmem:[%s0 + $0x4d0] sm:$0xff]
  %v195 = vld [vmem:[%s0 + $0x4d8] sm:$0xff]
  %v196 = vld [vmem:[%s0 + $0x4e0] sm:$0xff]
  %v197 = vld [vmem:[%s0 + $0x4e8] sm:$0xf]
  %v198 = vld [vmem:[%s0 + $0x4ec] sm:$0xff]
  %v199 = vld [vmem:[%s0 + $0x4f4] sm:$0xff]
  %v200 = vld [vmem:[%s0 + $0x4fc] sm:$0xff]
  %v201 = vld [vmem:[%s0 + $0x504] sm:$0xf]
  %v202 = vld [vmem:[%s0 + $0x508] sm:$0xff]
  %v203 = vld [vmem:[%s0 + $0x510] sm:$0xff]
  %v204 = vld [vmem:[%s0 + $0x518] sm:$0xff]
  %v205 = vld [vmem:[%s0 + $0x520] sm:$0xf]
  %v206 = vld [vmem:[%s0 + $0x524] sm:$0xff]
  %v207 = vld [vmem:[%s0 + $0x52c] sm:$0xff]
  %v208 = vld [vmem:[%s0 + $0x534] sm:$0xff]
  %v209 = vld [vmem:[%s0 + $0x53c] sm:$0xf]
  %v210 = vld [vmem:[%s0 + $0x540] sm:$0xff]
  %v211 = vld [vmem:[%s0 + $0x548] sm:$0xff]
  %v212 = vld [vmem:[%s0 + $0x550] sm:$0xff]
  %v213 = vld [vmem:[%s0 + $0x558] sm:$0xf]
  %v214 = vld [vmem:[%s1] sm:$0xf]
  %v215 = vld [vmem:[%s1 + $0x4] sm:$0xf]
  %v216 = vld [vmem:[%s1 + $0x8] sm:$0xf]
  %v217 = vld [vmem:[%s1 + $0xc] sm:$0xf]
  %v218 = vld [vmem:[%s1 + $0x10] sm:$0xf]
  %v219 = vld [vmem:[%s1 + $0x14] sm:$0xf]
  %v220 = vld [vmem:[%s1 + $0x18] sm:$0xf]
  %v221 = vld [vmem:[%s1 + $0x1c] sm:$0xf]
  %v222 = vld [vmem:[%s1 + $0x20] sm:$0xf]
  %v223 = vld [vmem:[%s1 + $0x24] sm:$0xf]
  %v224 = vld [vmem:[%s1 + $0x28] sm:$0xf]
  %v225 = vld [vmem:[%s1 + $0x2c] sm:$0xf]
  %v226 = vld [vmem:[%s1 + $0x30] sm:$0xf]
  %v227 = vld [vmem:[%s1 + $0x34] sm:$0xf]
  %v228 = vld [vmem:[%s1 + $0x38] sm:$0xf]
  %v229 = vld [vmem:[%s1 + $0x3c] sm:$0xf]
  %v230 = vld [vmem:[%s1 + $0x40] sm:$0xf]
  %v231 = vld [vmem:[%s1 + $0x44] sm:$0xf]
  %v232 = vld [vmem:[%s1 + $0x48] sm:$0xf]
  %v233 = vld [vmem:[%s1 + $0x4c] sm:$0xf]
  %v234 = vld [vmem:[%s1 + $0x50] sm:$0xf]
  %v235 = vld [vmem:[%s1 + $0x54] sm:$0xf]
  %v236 = vld [vmem:[%s1 + $0x58] sm:$0xf]
  %v237 = vld [vmem:[%s1 + $0x5c] sm:$0xf]
  %v238 = vld [vmem:[%s1 + $0x60] sm:$0xf]
  %v239 = vld [vmem:[%s1 + $0x64] sm:$0xf]
  %v240 = vld [vmem:[%s1 + $0x68] sm:$0xf]
  %v241 = vld [vmem:[%s1 + $0x6c] sm:$0xf]
  %v242 = vld [vmem:[%s1 + $0x70] sm:$0xf]
  %v243 = vld [vmem:[%s1 + $0x74] sm:$0xf]
  %v244 = vld [vmem:[%s1 + $0x78] sm:$0xf]
  %v245 = vld [vmem:[%s1 + $0x7c] sm:$0xf]
  %v246 = vld [vmem:[%s1 + $0x80] sm:$0xf]
  %v247 = vld [vmem:[%s1 + $0x84] sm:$0xf]
  %v248 = vld [vmem:[%s1 + $0x88] sm:$0xf]
  %v249 = vld [vmem:[%s1 + $0x8c] sm:$0xf]
  %v250 = vld [vmem:[%s1 + $0x90] sm:$0xf]
  %v251 = vld [vmem:[%s1 + $0x94] sm:$0xf]
  %v252 = vld [vmem:[%s1 + $0x98] sm:$0xf]
  %v253 = vld [vmem:[%s1 + $0x9c] sm:$0xf]
  %v254 = vld [vmem:[%s1 + $0xa0] sm:$0xf]
  %v255 = vld [vmem:[%s1 + $0xa4] sm:$0xf]
  %v256 = vld [vmem:[%s1 + $0xa8] sm:$0xf]
  %v257 = vld [vmem:[%s1 + $0xac] sm:$0xf]
  %v258 = vld [vmem:[%s1 + $0xb0] sm:$0xf]
  %v259 = vld [vmem:[%s1 + $0xb4] sm:$0xf]
  %v260 = vld [vmem:[%s1 + $0xb8] sm:$0xf]
  %v261 = vld [vmem:[%s1 + $0xbc] sm:$0xf]
  %v262 = vld [vmem:[%s1 + $0xc0] sm:$0xf]
  %v263 = vld [vmem:[%s1 + $0xc4] sm:$0xf]
  %v264 = vld [vmem:[%s1 + $0xc8] sm:$0xf]
  %v265 = vld [vmem:[%s1 + $0xcc] sm:$0xf]
  %v266 = vld [vmem:[%s1 + $0xd0] sm:$0xf]
  %v267 = vld [vmem:[%s1 + $0xd4] sm:$0xf]
  %v268 = vld [vmem:[%s1 + $0xd8] sm:$0xf]
  %v269 = vld [vmem:[%s1 + $0xdc] sm:$0xf]
  %v270 = vld [vmem:[%s1 + $0xe0] sm:$0xf]
  %v271 = vld [vmem:[%s1 + $0xe4] sm:$0xf]
  %v272 = vld [vmem:[%s1 + $0xe8] sm:$0xf]
  %v273 = vld [vmem:[%s1 + $0xec] sm:$0xf]
  %v274 = vld [vmem:[%s1 + $0xf0] sm:$0xf]
  %v275 = vld [vmem:[%s1 + $0xf4] sm:$0xf]
  %v276 = vld [vmem:[%s1 + $0xf8] sm:$0xf]
  %v277 = vld [vmem:[%s1 + $0xfc] sm:$0xf]
  %v278 = vld [vmem:[%s1 + $0x100] sm:$0xf]
  %v279 = vld [vmem:[%s1 + $0x104] sm:$0xf]
  %v280 = vld [vmem:[%s1 + $0x108] sm:$0xf]
  %v281 = vld [vmem:[%s1 + $0x10c] sm:$0xf]
  %v282 = vld [vmem:[%s1 + $0x110] sm:$0xf]
  %v283 = vld [vmem:[%s1 + $0x114] sm:$0xf]
  %v284 = vld [vmem:[%s1 + $0x118] sm:$0xf]
  %v285 = vld [vmem:[%s1 + $0x11c] sm:$0xf]
  %v286 = vld [vmem:[%s1 + $0x120] sm:$0xf]
  %v287 = vld [vmem:[%s1 + $0x124] sm:$0xf]
  %v288 = vld [vmem:[%s1 + $0x128] sm:$0xf]
  %v289 = vld [vmem:[%s1 + $0x12c] sm:$0xf]
  %v290 = vld [vmem:[%s1 + $0x130] sm:$0xf]
  %v291 = vld [vmem:[%s1 + $0x134] sm:$0xf]
  %v292 = vld [vmem:[%s1 + $0x138] sm:$0xf]
  %v293 = vld [vmem:[%s1 + $0x13c] sm:$0xf]
  %v294 = vld [vmem:[%s1 + $0x140] sm:$0xf]
  %v295 = vld [vmem:[%s1 + $0x144] sm:$0xf]
  %v296 = vld [vmem:[%s1 + $0x148] sm:$0xf]
  %v297 = vld [vmem:[%s1 + $0x14c] sm:$0xf]
  %v298 = vld [vmem:[%s1 + $0x150] sm:$0xf]
  %v299 = vld [vmem:[%s1 + $0x154] sm:$0xf]
  %v300 = vld [vmem:[%s1 + $0x158] sm:$0xf]
  %v301 = vld [vmem:[%s1 + $0x15c] sm:$0xf]
  %v302 = vld [vmem:[%s1 + $0x160] sm:$0xf]
  %v303 = vld [vmem:[%s1 + $0x164] sm:$0xf]
  %v304 = vld [vmem:[%s1 + $0x168] sm:$0xf]
  %v305 = vld [vmem:[%s1 + $0x16c] sm:$0xf]
  %v306 = vld [vmem:[%s1 + $0x170] sm:$0xf]
  %v307 = vld [vmem:[%s1 + $0x174] sm:$0xf]
  %v308 = vld [vmem:[%s1 + $0x178] sm:$0xf]
  %v309 = vld [vmem:[%s1 + $0x17c] sm:$0xf]
  %v310 = vld [vmem:[%s1 + $0x180] sm:$0xf]
  %v311 = vld [vmem:[%s1 + $0x184] sm:$0xf]
  %v312 = vld [vmem:[%s1 + $0x188] sm:$0xf]
  %v313 = vld [vmem:[%s1 + $0x18c] sm:$0xf]
  %v510 = vunpack.c.l.b16 %v18
  %v511 = vunpack.c.h.b16 %v18
  %v512 = vunpack.c.l.b16 %v19
  %v513 = vunpack.c.h.b16 %v19
  %v514 = vunpack.c.l.b16 %v20
  %v515 = vunpack.c.h.b16 %v20
  %v516 = vunpack.c.l.b16 %v21
  %v517 = vunpack.c.l.b16 %v22
  %v518 = vunpack.c.h.b16 %v22
  %v519 = vunpack.c.l.b16 %v23
  %v520 = vunpack.c.h.b16 %v23
  %v521 = vunpack.c.l.b16 %v24
  %v522 = vunpack.c.h.b16 %v24
  %v523 = vunpack.c.l.b16 %v25
  %v524 = vunpack.c.l.b16 %v26
  %v525 = vunpack.c.h.b16 %v26
  %v526 = vunpack.c.l.b16 %v27
  %v527 = vunpack.c.h.b16 %v27
  %v528 = vunpack.c.l.b16 %v28
  %v529 = vunpack.c.h.b16 %v28
  %v530 = vunpack.c.l.b16 %v29
  %v531 = vunpack.c.l.b16 %v30
  %v532 = vunpack.c.h.b16 %v30
  %v533 = vunpack.c.l.b16 %v31
  %v534 = vunpack.c.h.b16 %v31
  %v535 = vunpack.c.l.b16 %v32
  %v536 = vunpack.c.h.b16 %v32
  %v537 = vunpack.c.l.b16 %v33
  %v538 = vunpack.c.l.b16 %v34
  %v539 = vunpack.c.h.b16 %v34
  %v540 = vunpack.c.l.b16 %v35
  %v541 = vunpack.c.h.b16 %v35
  %v542 = vunpack.c.l.b16 %v36
  %v543 = vunpack.c.h.b16 %v36
  %v544 = vunpack.c.l.b16 %v37
  %v545 = vunpack.c.l.b16 %v38
  %v546 = vunpack.c.h.b16 %v38
  %v547 = vunpack.c.l.b16 %v39
  %v548 = vunpack.c.h.b16 %v39
  %v549 = vunpack.c.l.b16 %v40
  %v550 = vunpack.c.h.b16 %v40
  %v551 = vunpack.c.l.b16 %v41
  %v552 = vunpack.c.l.b16 %v42
  %v553 = vunpack.c.h.b16 %v42
  %v554 = vunpack.c.l.b16 %v43
  %v555 = vunpack.c.h.b16 %v43
  %v556 = vunpack.c.l.b16 %v44
  %v557 = vunpack.c.h.b16 %v44
  %v558 = vunpack.c.l.b16 %v45
  %v559 = vunpack.c.l.b16 %v46
  %v560 = vunpack.c.h.b16 %v46
  %v561 = vunpack.c.l.b16 %v47
  %v562 = vunpack.c.h.b16 %v47
  %v563 = vunpack.c.l.b16 %v48
  %v564 = vunpack.c.h.b16 %v48
  %v565 = vunpack.c.l.b16 %v49
  %v566 = vunpack.c.l.b16 %v50
  %v567 = vunpack.c.h.b16 %v50
  %v568 = vunpack.c.l.b16 %v51
  %v569 = vunpack.c.h.b16 %v51
  %v570 = vunpack.c.l.b16 %v52
  %v571 = vunpack.c.h.b16 %v52
  %v572 = vunpack.c.l.b16 %v53
  %v573 = vunpack.c.l.b16 %v54
  %v574 = vunpack.c.h.b16 %v54
  %v575 = vunpack.c.l.b16 %v55
  %v576 = vunpack.c.h.b16 %v55
  %v577 = vunpack.c.l.b16 %v56
  %v578 = vunpack.c.h.b16 %v56
  %v579 = vunpack.c.l.b16 %v57
  %v580 = vunpack.c.l.b16 %v58
  %v581 = vunpack.c.h.b16 %v58
  %v582 = vunpack.c.l.b16 %v59
  %v583 = vunpack.c.h.b16 %v59
  %v584 = vunpack.c.l.b16 %v60
  %v585 = vunpack.c.h.b16 %v60
  %v586 = vunpack.c.l.b16 %v61
  %v587 = vunpack.c.l.b16 %v62
  %v588 = vunpack.c.h.b16 %v62
  %v589 = vunpack.c.l.b16 %v63
  %v590 = vunpack.c.h.b16 %v63
  %v591 = vunpack.c.l.b16 %v64
  %v592 = vunpack.c.h.b16 %v64
  %v593 = vunpack.c.l.b16 %v65
  %v594 = vunpack.c.l.b16 %v66
  %v595 = vunpack.c.h.b16 %v66
  %v596 = vunpack.c.l.b16 %v67
  %v597 = vunpack.c.h.b16 %v67
  %v598 = vunpack.c.l.b16 %v68
  %v599 = vunpack.c.h.b16 %v68
  %v600 = vunpack.c.l.b16 %v69
  %v601 = vunpack.c.l.b16 %v70
  %v602 = vunpack.c.h.b16 %v70
  %v603 = vunpack.c.l.b16 %v71
  %v604 = vunpack.c.h.b16 %v71
  %v605 = vunpack.c.l.b16 %v72
  %v606 = vunpack.c.h.b16 %v72
  %v607 = vunpack.c.l.b16 %v73
  %v608 = vunpack.c.l.b16 %v74
  %v609 = vunpack.c.h.b16 %v74
  %v610 = vunpack.c.l.b16 %v75
  %v611 = vunpack.c.h.b16 %v75
  %v612 = vunpack.c.l.b16 %v76
  %v613 = vunpack.c.h.b16 %v76
  %v614 = vunpack.c.l.b16 %v77
  %v615 = vunpack.c.l.b16 %v78
  %v616 = vunpack.c.h.b16 %v78
  %v617 = vunpack.c.l.b16 %v79
  %v618 = vunpack.c.h.b16 %v79
  %v619 = vunpack.c.l.b16 %v80
  %v620 = vunpack.c.h.b16 %v80
  %v621 = vunpack.c.l.b16 %v81
  %v622 = vunpack.c.l.b16 %v82
  %v623 = vunpack.c.h.b16 %v82
  %v624 = vunpack.c.l.b16 %v83
  %v625 = vunpack.c.h.b16 %v83
  %v626 = vunpack.c.l.b16 %v84
  %v627 = vunpack.c.h.b16 %v84
  %v628 = vunpack.c.l.b16 %v85
  %v629 = vunpack.c.l.b16 %v86
  %v630 = vunpack.c.h.b16 %v86
  %v631 = vunpack.c.l.b16 %v87
  %v632 = vunpack.c.h.b16 %v87
  %v633 = vunpack.c.l.b16 %v88
  %v634 = vunpack.c.h.b16 %v88
  %v635 = vunpack.c.l.b16 %v89
  %v636 = vunpack.c.l.b16 %v90
  %v637 = vunpack.c.h.b16 %v90
  %v638 = vunpack.c.l.b16 %v91
  %v639 = vunpack.c.h.b16 %v91
  %v640 = vunpack.c.l.b16 %v92
  %v641 = vunpack.c.h.b16 %v92
  %v642 = vunpack.c.l.b16 %v93
  %v643 = vunpack.c.l.b16 %v94
  %v644 = vunpack.c.h.b16 %v94
  %v645 = vunpack.c.l.b16 %v95
  %v646 = vunpack.c.h.b16 %v95
  %v647 = vunpack.c.l.b16 %v96
  %v648 = vunpack.c.h.b16 %v96
  %v649 = vunpack.c.l.b16 %v97
  %v650 = vunpack.c.l.b16 %v98
  %v651 = vunpack.c.h.b16 %v98
  %v652 = vunpack.c.l.b16 %v99
  %v653 = vunpack.c.h.b16 %v99
  %v654 = vunpack.c.l.b16 %v100
  %v655 = vunpack.c.h.b16 %v100
  %v656 = vunpack.c.l.b16 %v101
  %v657 = vunpack.c.l.b16 %v102
  %v658 = vunpack.c.h.b16 %v102
  %v659 = vunpack.c.l.b16 %v103
  %v660 = vunpack.c.h.b16 %v103
  %v661 = vunpack.c.l.b16 %v104
  %v662 = vunpack.c.h.b16 %v104
  %v663 = vunpack.c.l.b16 %v105
  %v664 = vunpack.c.l.b16 %v106
  %v665 = vunpack.c.h.b16 %v106
  %v666 = vunpack.c.l.b16 %v107
  %v667 = vunpack.c.h.b16 %v107
  %v668 = vunpack.c.l.b16 %v108
  %v669 = vunpack.c.h.b16 %v108
  %v670 = vunpack.c.l.b16 %v109
  %v671 = vunpack.c.l.b16 %v110
  %v672 = vunpack.c.h.b16 %v110
  %v673 = vunpack.c.l.b16 %v111
  %v674 = vunpack.c.h.b16 %v111
  %v675 = vunpack.c.l.b16 %v112
  %v676 = vunpack.c.h.b16 %v112
  %v677 = vunpack.c.l.b16 %v113
  %v678 = vunpack.c.l.b16 %v114
  %v679 = vunpack.c.h.b16 %v114
  %v680 = vunpack.c.l.b16 %v115
  %v681 = vunpack.c.h.b16 %v115
  %v682 = vunpack.c.l.b16 %v116
  %v683 = vunpack.c.h.b16 %v116
  %v684 = vunpack.c.l.b16 %v117
  %v685 = vunpack.c.l.b16 %v118
  %v686 = vunpack.c.h.b16 %v118
  %v687 = vunpack.c.l.b16 %v119
  %v688 = vunpack.c.h.b16 %v119
  %v689 = vunpack.c.l.b16 %v120
  %v690 = vunpack.c.h.b16 %v120
  %v691 = vunpack.c.l.b16 %v121
  %v692 = vunpack.c.l.b16 %v122
  %v693 = vunpack.c.h.b16 %v122
  %v694 = vunpack.c.l.b16 %v123
  %v695 = vunpack.c.h.b16 %v123
  %v696 = vunpack.c.l.b16 %v124
  %v697 = vunpack.c.h.b16 %v124
  %v698 = vunpack.c.l.b16 %v125
  %v699 = vunpack.c.l.b16 %v126
  %v700 = vunpack.c.h.b16 %v126
  %v701 = vunpack.c.l.b16 %v127
  %v702 = vunpack.c.h.b16 %v127
  %v703 = vunpack.c.l.b16 %v128
  %v704 = vunpack.c.h.b16 %v128
  %v705 = vunpack.c.l.b16 %v129
  %v706 = vunpack.c.l.b16 %v130
  %v707 = vunpack.c.h.b16 %v130
  %v708 = vunpack.c.l.b16 %v131
  %v709 = vunpack.c.h.b16 %v131
  %v710 = vunpack.c.l.b16 %v132
  %v711 = vunpack.c.h.b16 %v132
  %v712 = vunpack.c.l.b16 %v133
  %v713 = vunpack.c.l.b16 %v134
  %v714 = vunpack.c.h.b16 %v134
  %v715 = vunpack.c.l.b16 %v135
  %v716 = vunpack.c.h.b16 %v135
  %v717 = vunpack.c.l.b16 %v136
  %v718 = vunpack.c.h.b16 %v136
  %v719 = vunpack.c.l.b16 %v137
  %v720 = vunpack.c.l.b16 %v138
  %v721 = vunpack.c.h.b16 %v138
  %v722 = vunpack.c.l.b16 %v139
  %v723 = vunpack.c.h.b16 %v139
  %v724 = vunpack.c.l.b16 %v140
  %v725 = vunpack.c.h.b16 %v140
  %v726 = vunpack.c.l.b16 %v141
  %v727 = vunpack.c.l.b16 %v142
  %v728 = vunpack.c.h.b16 %v142
  %v729 = vunpack.c.l.b16 %v143
  %v730 = vunpack.c.h.b16 %v143
  %v731 = vunpack.c.l.b16 %v144
  %v732 = vunpack.c.h.b16 %v144
  %v733 = vunpack.c.l.b16 %v145
  %v734 = vunpack.c.l.b16 %v146
  %v735 = vunpack.c.h.b16 %v146
  %v736 = vunpack.c.l.b16 %v147
  %v737 = vunpack.c.h.b16 %v147
  %v738 = vunpack.c.l.b16 %v148
  %v739 = vunpack.c.h.b16 %v148
  %v740 = vunpack.c.l.b16 %v149
  %v741 = vunpack.c.l.b16 %v150
  %v742 = vunpack.c.h.b16 %v150
  %v743 = vunpack.c.l.b16 %v151
  %v744 = vunpack.c.h.b16 %v151
  %v745 = vunpack.c.l.b16 %v152
  %v746 = vunpack.c.h.b16 %v152
  %v747 = vunpack.c.l.b16 %v153
  %v748 = vunpack.c.l.b16 %v154
  %v749 = vunpack.c.h.b16 %v154
  %v750 = vunpack.c.l.b16 %v155
  %v751 = vunpack.c.h.b16 %v155
  %v752 = vunpack.c.l.b16 %v156
  %v753 = vunpack.c.h.b16 %v156
  %v754 = vunpack.c.l.b16 %v157
  %v755 = vunpack.c.l.b16 %v158
  %v756 = vunpack.c.h.b16 %v158
  %v757 = vunpack.c.l.b16 %v159
  %v758 = vunpack.c.h.b16 %v159
  %v759 = vunpack.c.l.b16 %v160
  %v760 = vunpack.c.h.b16 %v160
  %v761 = vunpack.c.l.b16 %v161
  %v762 = vunpack.c.l.b16 %v162
  %v763 = vunpack.c.h.b16 %v162
  %v764 = vunpack.c.l.b16 %v163
  %v765 = vunpack.c.h.b16 %v163
  %v766 = vunpack.c.l.b16 %v164
  %v767 = vunpack.c.h.b16 %v164
  %v768 = vunpack.c.l.b16 %v165
  %v769 = vunpack.c.l.b16 %v166
  %v770 = vunpack.c.h.b16 %v166
  %v771 = vunpack.c.l.b16 %v167
  %v772 = vunpack.c.h.b16 %v167
  %v773 = vunpack.c.l.b16 %v168
  %v774 = vunpack.c.h.b16 %v168
  %v775 = vunpack.c.l.b16 %v169
  %v776 = vunpack.c.l.b16 %v170
  %v777 = vunpack.c.h.b16 %v170
  %v778 = vunpack.c.l.b16 %v171
  %v779 = vunpack.c.h.b16 %v171
  %v780 = vunpack.c.l.b16 %v172
  %v781 = vunpack.c.h.b16 %v172
  %v782 = vunpack.c.l.b16 %v173
  %v783 = vunpack.c.l.b16 %v174
  %v784 = vunpack.c.h.b16 %v174
  %v785 = vunpack.c.l.b16 %v175
  %v786 = vunpack.c.h.b16 %v175
  %v787 = vunpack.c.l.b16 %v176
  %v788 = vunpack.c.h.b16 %v176
  %v789 = vunpack.c.l.b16 %v177
  %v790 = vunpack.c.l.b16 %v178
  %v791 = vunpack.c.h.b16 %v178
  %v792 = vunpack.c.l.b16 %v179
  %v793 = vunpack.c.h.b16 %v179
  %v794 = vunpack.c.l.b16 %v180
  %v795 = vunpack.c.h.b16 %v180
  %v796 = vunpack.c.l.b16 %v181
  %v797 = vunpack.c.l.b16 %v182
  %v798 = vunpack.c.h.b16 %v182
  %v799 = vunpack.c.l.b16 %v183
  %v800 = vunpack.c.h.b16 %v183
  %v801 = vunpack.c.l.b16 %v184
  %v802 = vunpack.c.h.b16 %v184
  %v803 = vunpack.c.l.b16 %v185
  %v804 = vunpack.c.l.b16 %v186
  %v805 = vunpack.c.h.b16 %v186
  %v806 = vunpack.c.l.b16 %v187
  %v807 = vunpack.c.h.b16 %v187
  %v808 = vunpack.c.l.b16 %v188
  %v809 = vunpack.c.h.b16 %v188
  %v810 = vunpack.c.l.b16 %v189
  %v811 = vunpack.c.l.b16 %v190
  %v812 = vunpack.c.h.b16 %v190
  %v813 = vunpack.c.l.b16 %v191
  %v814 = vunpack.c.h.b16 %v191
  %v815 = vunpack.c.l.b16 %v192
  %v816 = vunpack.c.h.b16 %v192
  %v817 = vunpack.c.l.b16 %v193
  %v818 = vunpack.c.l.b16 %v194
  %v819 = vunpack.c.h.b16 %v194
  %v820 = vunpack.c.l.b16 %v195
  %v821 = vunpack.c.h.b16 %v195
  %v822 = vunpack.c.l.b16 %v196
  %v823 = vunpack.c.h.b16 %v196
  %v824 = vunpack.c.l.b16 %v197
  %v825 = vunpack.c.l.b16 %v198
  %v826 = vunpack.c.h.b16 %v198
  %v827 = vunpack.c.l.b16 %v199
  %v828 = vunpack.c.h.b16 %v199
  %v829 = vunpack.c.l.b16 %v200
  %v830 = vunpack.c.h.b16 %v200
  %v831 = vunpack.c.l.b16 %v201
  %v832 = vunpack.c.l.b16 %v202
  %v833 = vunpack.c.h.b16 %v202
  %v834 = vunpack.c.l.b16 %v203
  %v835 = vunpack.c.h.b16 %v203
  %v836 = vunpack.c.l.b16 %v204
  %v837 = vunpack.c.h.b16 %v204
  %v838 = vunpack.c.l.b16 %v205
  %v839 = vunpack.c.l.b16 %v206
  %v840 = vunpack.c.h.b16 %v206
  %v841 = vunpack.c.l.b16 %v207
  %v842 = vunpack.c.h.b16 %v207
  %v843 = vunpack.c.l.b16 %v208
  %v844 = vunpack.c.h.b16 %v208
  %v845 = vunpack.c.l.b16 %v209
  %v846 = vunpack.c.l.b16 %v210
  %v847 = vunpack.c.h.b16 %v210
  %v848 = vunpack.c.l.b16 %v211
  %v849 = vunpack.c.h.b16 %v211
  %v850 = vunpack.c.l.b16 %v212
  %v851 = vunpack.c.h.b16 %v212
  %v852 = vunpack.c.l.b16 %v213
  %v853 = vpack.c.b16 %v517, %v510
  %v854 = vpack.c.b16 %v518, %v511
  %v855 = vpack.c.b16 %v519, %v512
  %v856 = vpack.c.b16 %v520, %v513
  %v857 = vpack.c.b16 %v521, %v514
  %v858 = vpack.c.b16 %v522, %v515
  %v859 = vpack.c.b16 %v523, %v516
  %v860 = vpack.c.b16 %v531, %v524
  %v861 = vpack.c.b16 %v532, %v525
  %v862 = vpack.c.b16 %v533, %v526
  %v863 = vpack.c.b16 %v534, %v527
  %v864 = vpack.c.b16 %v535, %v528
  %v865 = vpack.c.b16 %v536, %v529
  %v866 = vpack.c.b16 %v537, %v530
  %v867 = vpack.c.b16 %v545, %v538
  %v868 = vpack.c.b16 %v546, %v539
  %v869 = vpack.c.b16 %v547, %v540
  %v870 = vpack.c.b16 %v548, %v541
  %v871 = vpack.c.b16 %v549, %v542
  %v872 = vpack.c.b16 %v550, %v543
  %v873 = vpack.c.b16 %v551, %v544
  %v874 = vpack.c.b16 %v559, %v552
  %v875 = vpack.c.b16 %v560, %v553
  %v876 = vpack.c.b16 %v561, %v554
  %v877 = vpack.c.b16 %v562, %v555
  %v878 = vpack.c.b16 %v563, %v556
  %v879 = vpack.c.b16 %v564, %v557
  %v880 = vpack.c.b16 %v565, %v558
  %v881 = vpack.c.b16 %v573, %v566
  %v882 = vpack.c.b16 %v574, %v567
  %v883 = vpack.c.b16 %v575, %v568
  %v884 = vpack.c.b16 %v576, %v569
  %v885 = vpack.c.b16 %v577, %v570
  %v886 = vpack.c.b16 %v578, %v571
  %v887 = vpack.c.b16 %v579, %v572
  %v888 = vpack.c.b16 %v587, %v580
  %v889 = vpack.c.b16 %v588, %v581
  %v890 = vpack.c.b16 %v589, %v582
  %v891 = vpack.c.b16 %v590, %v583
  %v892 = vpack.c.b16 %v591, %v584
  %v893 = vpack.c.b16 %v592, %v585
  %v894 = vpack.c.b16 %v593, %v586
  %v895 = vpack.c.b16 %v601, %v594
  %v896 = vpack.c.b16 %v602, %v595
  %v897 = vpack.c.b16 %v603, %v596
  %v898 = vpack.c.b16 %v604, %v597
  %v899 = vpack.c.b16 %v605, %v598
  %v900 = vpack.c.b16 %v606, %v599
  %v901 = vpack.c.b16 %v607, %v600
  %v902 = vpack.c.b16 %v615, %v608
  %v903 = vpack.c.b16 %v616, %v609
  %v904 = vpack.c.b16 %v617, %v610
  %v905 = vpack.c.b16 %v618, %v611
  %v906 = vpack.c.b16 %v619, %v612
  %v907 = vpack.c.b16 %v620, %v613
  %v908 = vpack.c.b16 %v621, %v614
  %v909 = vpack.c.b16 %v629, %v622
  %v910 = vpack.c.b16 %v630, %v623
  %v911 = vpack.c.b16 %v631, %v624
  %v912 = vpack.c.b16 %v632, %v625
  %v913 = vpack.c.b16 %v633, %v626
  %v914 = vpack.c.b16 %v634, %v627
  %v915 = vpack.c.b16 %v635, %v628
  %v916 = vpack.c.b16 %v643, %v636
  %v917 = vpack.c.b16 %v644, %v637
  %v918 = vpack.c.b16 %v645, %v638
  %v919 = vpack.c.b16 %v646, %v639
  %v920 = vpack.c.b16 %v647, %v640
  %v921 = vpack.c.b16 %v648, %v641
  %v922 = vpack.c.b16 %v649, %v642
  %v923 = vpack.c.b16 %v657, %v650
  %v924 = vpack.c.b16 %v658, %v651
  %v925 = vpack.c.b16 %v659, %v652
  %v926 = vpack.c.b16 %v660, %v653
  %v927 = vpack.c.b16 %v661, %v654
  %v928 = vpack.c.b16 %v662, %v655
  %v929 = vpack.c.b16 %v663, %v656
  %v930 = vpack.c.b16 %v671, %v664
  %v931 = vpack.c.b16 %v672, %v665
  %v932 = vpack.c.b16 %v673, %v666
  %v933 = vpack.c.b16 %v674, %v667
  %v934 = vpack.c.b16 %v675, %v668
  %v935 = vpack.c.b16 %v676, %v669
  %v936 = vpack.c.b16 %v677, %v670
  %v937 = vpack.c.b16 %v685, %v678
  %v938 = vpack.c.b16 %v686, %v679
  %v939 = vpack.c.b16 %v687, %v680
  %v940 = vpack.c.b16 %v688, %v681
  %v941 = vpack.c.b16 %v689, %v682
  %v942 = vpack.c.b16 %v690, %v683
  %v943 = vpack.c.b16 %v691, %v684
  %v944 = vpack.c.b16 %v699, %v692
  %v945 = vpack.c.b16 %v700, %v693
  %v946 = vpack.c.b16 %v701, %v694
  %v947 = vpack.c.b16 %v702, %v695
  %v948 = vpack.c.b16 %v703, %v696
  %v949 = vpack.c.b16 %v704, %v697
  %v950 = vpack.c.b16 %v705, %v698
  %v951 = vpack.c.b16 %v713, %v706
  %v952 = vpack.c.b16 %v714, %v707
  %v953 = vpack.c.b16 %v715, %v708
  %v954 = vpack.c.b16 %v716, %v709
  %v955 = vpack.c.b16 %v717, %v710
  %v956 = vpack.c.b16 %v718, %v711
  %v957 = vpack.c.b16 %v719, %v712
  %v958 = vpack.c.b16 %v727, %v720
  %v959 = vpack.c.b16 %v728, %v721
  %v960 = vpack.c.b16 %v729, %v722
  %v961 = vpack.c.b16 %v730, %v723
  %v962 = vpack.c.b16 %v731, %v724
  %v963 = vpack.c.b16 %v732, %v725
  %v964 = vpack.c.b16 %v733, %v726
  %v965 = vpack.c.b16 %v741, %v734
  %v966 = vpack.c.b16 %v742, %v735
  %v967 = vpack.c.b16 %v743, %v736
  %v968 = vpack.c.b16 %v744, %v737
  %v969 = vpack.c.b16 %v745, %v738
  %v970 = vpack.c.b16 %v746, %v739
  %v971 = vpack.c.b16 %v747, %v740
  %v972 = vpack.c.b16 %v755, %v748
  %v973 = vpack.c.b16 %v756, %v749
  %v974 = vpack.c.b16 %v757, %v750
  %v975 = vpack.c.b16 %v758, %v751
  %v976 = vpack.c.b16 %v759, %v752
  %v977 = vpack.c.b16 %v760, %v753
  %v978 = vpack.c.b16 %v761, %v754
  %v979 = vpack.c.b16 %v769, %v762
  %v980 = vpack.c.b16 %v770, %v763
  %v981 = vpack.c.b16 %v771, %v764
  %v982 = vpack.c.b16 %v772, %v765
  %v983 = vpack.c.b16 %v773, %v766
  %v984 = vpack.c.b16 %v774, %v767
  %v985 = vpack.c.b16 %v775, %v768
  %v986 = vpack.c.b16 %v783, %v776
  %v987 = vpack.c.b16 %v784, %v777
  %v988 = vpack.c.b16 %v785, %v778
  %v989 = vpack.c.b16 %v786, %v779
  %v990 = vpack.c.b16 %v787, %v780
  %v991 = vpack.c.b16 %v788, %v781
  %v992 = vpack.c.b16 %v789, %v782
  %v993 = vpack.c.b16 %v797, %v790
  %v994 = vpack.c.b16 %v798, %v791
  %v995 = vpack.c.b16 %v799, %v792
  %v996 = vpack.c.b16 %v800, %v793
  %v997 = vpack.c.b16 %v801, %v794
  %v998 = vpack.c.b16 %v802, %v795
  %v999 = vpack.c.b16 %v803, %v796
  %v1000 = vpack.c.b16 %v811, %v804
  %v1001 = vpack.c.b16 %v812, %v805
  %v1002 = vpack.c.b16 %v813, %v806
  %v1003 = vpack.c.b16 %v814, %v807
  %v1004 = vpack.c.b16 %v815, %v808
  %v1005 = vpack.c.b16 %v816, %v809
  %v1006 = vpack.c.b16 %v817, %v810
  %v1007 = vpack.c.b16 %v825, %v818
  %v1008 = vpack.c.b16 %v826, %v819
  %v1009 = vpack.c.b16 %v827, %v820
  %v1010 = vpack.c.b16 %v828, %v821
  %v1011 = vpack.c.b16 %v829, %v822
  %v1012 = vpack.c.b16 %v830, %v823
  %v1013 = vpack.c.b16 %v831, %v824
  %v1014 = vpack.c.b16 %v839, %v832
  %v1015 = vpack.c.b16 %v840, %v833
  %v1016 = vpack.c.b16 %v841, %v834
  %v1017 = vpack.c.b16 %v842, %v835
  %v1018 = vpack.c.b16 %v843, %v836
  %v1019 = vpack.c.b16 %v844, %v837
  %v1020 = vpack.c.b16 %v845, %v838
  %v1021 = vpack.c.b16 %v846, %v846
  %v1022 = vpack.c.b16 %v847, %v847
  %v1023 = vpack.c.b16 %v848, %v848
  %v1024 = vpack.c.b16 %v849, %v849
  %v1025 = vpack.c.b16 %v850, %v850
  %v1026 = vpack.c.b16 %v851, %v851
  %v1027 = vpack.c.b16 %v852, %v852
  %v1278 = vunpack.c.l.b16 %v214
  %v1279 = vunpack.c.l.b16 %v215
  %v1280 = vunpack.c.l.b16 %v216
  %v1281 = vunpack.c.l.b16 %v217
  %v1282 = vunpack.c.l.b16 %v218
  %v1283 = vunpack.c.l.b16 %v219
  %v1284 = vunpack.c.l.b16 %v220
  %v1285 = vunpack.c.l.b16 %v221
  %v1286 = vunpack.c.l.b16 %v222
  %v1287 = vunpack.c.l.b16 %v223
  %v1288 = vunpack.c.l.b16 %v224
  %v1289 = vunpack.c.l.b16 %v225
  %v1290 = vunpack.c.l.b16 %v226
  %v1291 = vunpack.c.l.b16 %v227
  %v1292 = vunpack.c.l.b16 %v228
  %v1293 = vunpack.c.l.b16 %v229
  %v1294 = vunpack.c.l.b16 %v230
  %v1295 = vunpack.c.l.b16 %v231
  %v1296 = vunpack.c.l.b16 %v232
  %v1297 = vunpack.c.l.b16 %v233
  %v1298 = vunpack.c.l.b16 %v234
  %v1299 = vunpack.c.l.b16 %v235
  %v1300 = vunpack.c.l.b16 %v236
  %v1301 = vunpack.c.l.b16 %v237
  %v1302 = vunpack.c.l.b16 %v238
  %v1303 = vunpack.c.l.b16 %v239
  %v1304 = vunpack.c.l.b16 %v240
  %v1305 = vunpack.c.l.b16 %v241
  %v1306 = vunpack.c.l.b16 %v242
  %v1307 = vunpack.c.l.b16 %v243
  %v1308 = vunpack.c.l.b16 %v244
  %v1309 = vunpack.c.l.b16 %v245
  %v1310 = vunpack.c.l.b16 %v246
  %v1311 = vunpack.c.l.b16 %v247
  %v1312 = vunpack.c.l.b16 %v248
  %v1313 = vunpack.c.l.b16 %v249
  %v1314 = vunpack.c.l.b16 %v250
  %v1315 = vunpack.c.l.b16 %v251
  %v1316 = vunpack.c.l.b16 %v252
  %v1317 = vunpack.c.l.b16 %v253
  %v1318 = vunpack.c.l.b16 %v254
  %v1319 = vunpack.c.l.b16 %v255
  %v1320 = vunpack.c.l.b16 %v256
  %v1321 = vunpack.c.l.b16 %v257
  %v1322 = vunpack.c.l.b16 %v258
  %v1323 = vunpack.c.l.b16 %v259
  %v1324 = vunpack.c.l.b16 %v260
  %v1325 = vunpack.c.l.b16 %v261
  %v1326 = vunpack.c.l.b16 %v262
  %v1327 = vunpack.c.l.b16 %v263
  %v1328 = vunpack.c.l.b16 %v264
  %v1329 = vunpack.c.l.b16 %v265
  %v1330 = vunpack.c.l.b16 %v266
  %v1331 = vunpack.c.l.b16 %v267
  %v1332 = vunpack.c.l.b16 %v268
  %v1333 = vunpack.c.l.b16 %v269
  %v1334 = vunpack.c.l.b16 %v270
  %v1335 = vunpack.c.l.b16 %v271
  %v1336 = vunpack.c.l.b16 %v272
  %v1337 = vunpack.c.l.b16 %v273
  %v1338 = vunpack.c.l.b16 %v274
  %v1339 = vunpack.c.l.b16 %v275
  %v1340 = vunpack.c.l.b16 %v276
  %v1341 = vunpack.c.l.b16 %v277
  %v1342 = vunpack.c.l.b16 %v278
  %v1343 = vunpack.c.l.b16 %v279
  %v1344 = vunpack.c.l.b16 %v280
  %v1345 = vunpack.c.l.b16 %v281
  %v1346 = vunpack.c.l.b16 %v282
  %v1347 = vunpack.c.l.b16 %v283
  %v1348 = vunpack.c.l.b16 %v284
  %v1349 = vunpack.c.l.b16 %v285
  %v1350 = vunpack.c.l.b16 %v286
  %v1351 = vunpack.c.l.b16 %v287
  %v1352 = vunpack.c.l.b16 %v288
  %v1353 = vunpack.c.l.b16 %v289
  %v1354 = vunpack.c.l.b16 %v290
  %v1355 = vunpack.c.l.b16 %v291
  %v1356 = vunpack.c.l.b16 %v292
  %v1357 = vunpack.c.l.b16 %v293
  %v1358 = vunpack.c.l.b16 %v294
  %v1359 = vunpack.c.l.b16 %v295
  %v1360 = vunpack.c.l.b16 %v296
  %v1361 = vunpack.c.l.b16 %v297
  %v1362 = vunpack.c.l.b16 %v298
  %v1363 = vunpack.c.l.b16 %v299
  %v1364 = vunpack.c.l.b16 %v300
  %v1365 = vunpack.c.l.b16 %v301
  %v1366 = vunpack.c.l.b16 %v302
  %v1367 = vunpack.c.l.b16 %v303
  %v1368 = vunpack.c.l.b16 %v304
  %v1369 = vunpack.c.l.b16 %v305
  %v1370 = vunpack.c.l.b16 %v306
  %v1371 = vunpack.c.l.b16 %v307
  %v1372 = vunpack.c.l.b16 %v308
  %v1373 = vunpack.c.l.b16 %v309
  %v1374 = vunpack.c.l.b16 %v310
  %v1375 = vunpack.c.l.b16 %v311
  %v1376 = vunpack.c.l.b16 %v312
  %v1377 = vunpack.c.l.b16 %v313
  %v1378 = vpack.c.b16 %v1279, %v1278
  %v1379 = vpack.c.b16 %v1281, %v1280
  %v1380 = vpack.c.b16 %v1283, %v1282
  %v1381 = vpack.c.b16 %v1285, %v1284
  %v1382 = vpack.c.b16 %v1287, %v1286
  %v1383 = vpack.c.b16 %v1289, %v1288
  %v1384 = vpack.c.b16 %v1291, %v1290
  %v1385 = vpack.c.b16 %v1293, %v1292
  %v1386 = vpack.c.b16 %v1295, %v1294
  %v1387 = vpack.c.b16 %v1297, %v1296
  %v1388 = vpack.c.b16 %v1299, %v1298
  %v1389 = vpack.c.b16 %v1301, %v1300
  %v1390 = vpack.c.b16 %v1303, %v1302
  %v1391 = vpack.c.b16 %v1305, %v1304
  %v1392 = vpack.c.b16 %v1307, %v1306
  %v1393 = vpack.c.b16 %v1309, %v1308
  %v1394 = vpack.c.b16 %v1311, %v1310
  %v1395 = vpack.c.b16 %v1313, %v1312
  %v1396 = vpack.c.b16 %v1315, %v1314
  %v1397 = vpack.c.b16 %v1317, %v1316
  %v1398 = vpack.c.b16 %v1319, %v1318
  %v1399 = vpack.c.b16 %v1321, %v1320
  %v1400 = vpack.c.b16 %v1323, %v1322
  %v1401 = vpack.c.b16 %v1325, %v1324
  %v1402 = vpack.c.b16 %v1327, %v1326
  %v1403 = vpack.c.b16 %v1329, %v1328
  %v1404 = vpack.c.b16 %v1331, %v1330
  %v1405 = vpack.c.b16 %v1333, %v1332
  %v1406 = vpack.c.b16 %v1335, %v1334
  %v1407 = vpack.c.b16 %v1337, %v1336
  %v1408 = vpack.c.b16 %v1339, %v1338
  %v1409 = vpack.c.b16 %v1341, %v1340
  %v1410 = vpack.c.b16 %v1343, %v1342
  %v1411 = vpack.c.b16 %v1345, %v1344
  %v1412 = vpack.c.b16 %v1347, %v1346
  %v1413 = vpack.c.b16 %v1349, %v1348
  %v1414 = vpack.c.b16 %v1351, %v1350
  %v1415 = vpack.c.b16 %v1353, %v1352
  %v1416 = vpack.c.b16 %v1355, %v1354
  %v1417 = vpack.c.b16 %v1357, %v1356
  %v1418 = vpack.c.b16 %v1359, %v1358
  %v1419 = vpack.c.b16 %v1361, %v1360
  %v1420 = vpack.c.b16 %v1363, %v1362
  %v1421 = vpack.c.b16 %v1365, %v1364
  %v1422 = vpack.c.b16 %v1367, %v1366
  %v1423 = vpack.c.b16 %v1369, %v1368
  %v1424 = vpack.c.b16 %v1371, %v1370
  %v1425 = vpack.c.b16 %v1373, %v1372
  %v1426 = vpack.c.b16 %v1375, %v1374
  %v1427 = vpack.c.b16 %v1377, %v1376
  %vm1478 = vcmask 261120
  %v1480 = vsel %vm1478, %v859, 0
  %v1483 = vsel %vm1478, %v866, 0
  %v1486 = vsel %vm1478, %v873, 0
  %v1489 = vsel %vm1478, %v880, 0
  %v1492 = vsel %vm1478, %v887, 0
  %v1495 = vsel %vm1478, %v894, 0
  %v1498 = vsel %vm1478, %v901, 0
  %v1501 = vsel %vm1478, %v908, 0
  %v1504 = vsel %vm1478, %v915, 0
  %v1507 = vsel %vm1478, %v922, 0
  %v1510 = vsel %vm1478, %v929, 0
  %v1513 = vsel %vm1478, %v936, 0
  %v1516 = vsel %vm1478, %v943, 0
  %v1519 = vsel %vm1478, %v950, 0
  %v1522 = vsel %vm1478, %v957, 0
  %v1525 = vsel %vm1478, %v964, 0
  %v1528 = vsel %vm1478, %v971, 0
  %v1531 = vsel %vm1478, %v978, 0
  %v1534 = vsel %vm1478, %v985, 0
  %v1537 = vsel %vm1478, %v992, 0
  %v1540 = vsel %vm1478, %v999, 0
  %v1543 = vsel %vm1478, %v1006, 0
  %v1546 = vsel %vm1478, %v1013, 0
  %v1549 = vsel %vm1478, %v1020, 0
  %v1552 = vsel %vm1478, %v1027, 0
  %1554 = vmatprep.subr.bf16.mxu0 0
  %1555 = vmatpush1.bf16.msra.mxu0 %v1378
  %1556 = vmatprep.subr.bf16.mxu0 0
  %1557 = vmatpush1.bf16.msra.mxu0 %v1379
  %1558 = vmatprep.subr.bf16.mxu0 0
  %1559 = vmatpush1.bf16.msra.mxu0 %v1380
  %1560 = vmatprep.subr.bf16.mxu0 0
  %1561 = vmatpush1.bf16.msra.mxu0 %v1381
  %1562 = vmatprep.subr.bf16.mxu0 0
  %1563 = vmatpush1.bf16.msra.mxu0 %v1382
  %1564 = vmatprep.subr.bf16.mxu0 0
  %1565 = vmatpush1.bf16.msra.mxu0 %v1383
  %1566 = vmatprep.subr.bf16.mxu0 0
  %1567 = vmatpush1.bf16.msra.mxu0 %v1384
  %1568 = vmatprep.subr.bf16.mxu0 0
  %1569 = vmatpush1.bf16.msra.mxu0 %v1385
  %1570 = vmatprep.subr.bf16.mxu0 0
  %1571 = vmatpush1.bf16.msra.mxu0 %v1386
  %1572 = vmatprep.subr.bf16.mxu0 0
  %1573 = vmatpush1.bf16.msra.mxu0 %v1387
  %1574 = vmatprep.subr.bf16.mxu0 0
  %1575 = vmatpush1.bf16.msra.mxu0 %v1388
  %1576 = vmatprep.subr.bf16.mxu0 0
  %1577 = vmatpush1.bf16.msra.mxu0 %v1389
  %1578 = vmatprep.subr.bf16.mxu0 0
  %1579 = vmatpush1.bf16.msra.mxu0 %v1390
  %1580 = vmatprep.subr.bf16.mxu0 0
  %1581 = vmatpush1.bf16.msra.mxu0 %v1391
  %1582 = vmatprep.subr.bf16.mxu0 0
  %1583 = vmatpush1.bf16.msra.mxu0 %v1392
  %1584 = vmatprep.subr.bf16.mxu0 0
  %1585 = vmatpush1.bf16.msra.mxu0 %v1393
  %1586 = vmatprep.mubr.bf16.mxu0 %v854
  %1587 = vmatmul.mubr.bf16.gmra.mrb[0].mxu0 %v853
  %v1588 = vpop.f32.mrb[0].mxu0
  %v1589 = vadd.f32 0.0, %v1588
  %v1590 = vpop.f32.mrb[0].mxu0
  %v1591 = vpop.f32.mrb[0].mxu0
  %v1592 = vadd.f32 0.0, %v1591
  %v1593 = vpop.f32.mrb[0].mxu0
  %1594 = vmatprep.mubr.bf16.mxu0 %v861
  %1595 = vmatmul.mubr.bf16.gmra.mrb[0].mxu0 %v860
  %v1596 = vpop.f32.mrb[0].mxu0
  %v1597 = vadd.f32 0.0, %v1596
  %v1598 = vpop.f32.mrb[0].mxu0
  %v1599 = vpop.f32.mrb[0].mxu0
  %v1600 = vadd.f32 0.0, %v1599
  %v1601 = vpop.f32.mrb[0].mxu0
  %1602 = vmatprep.mubr.bf16.mxu0 %v868
  %1603 = vmatmul.mubr.bf16.gmra.mrb[0].mxu0 %v867
  %v1604 = vpop.f32.mrb[0].mxu0
  %v1605 = vadd.f32 0.0, %v1604
  %v1606 = vpop.f32.mrb[0].mxu0
  %v1607 = vpop.f32.mrb[0].mxu0
  %v1608 = vadd.f32 0.0, %v1607
  %v1609 = vpop.f32.mrb[0].mxu0
  %1610 = vmatprep.mubr.bf16.mxu0 %v875
  %1611 = vmatmul.mubr.bf16.gmra.mrb[0].mxu0 %v874
  %v1612 = vpop.f32.mrb[0].mxu0
  %v1613 = vadd.f32 0.0, %v1612
  %v1614 = vpop.f32.mrb[0].mxu0
  %v1615 = vpop.f32.mrb[0].mxu0
  %v1616 = vadd.f32 0.0, %v1615
  %v1617 = vpop.f32.mrb[0].mxu0
  %1618 = vmatprep.mubr.bf16.mxu0 %v882
  %1619 = vmatmul.mubr.bf16.gmra.mrb[0].mxu0 %v881
  %v1620 = vpop.f32.mrb[0].mxu0
  %v1621 = vadd.f32 0.0, %v1620
  %v1622 = vpop.f32.mrb[0].mxu0
  %v1623 = vpop.f32.mrb[0].mxu0
  %v1624 = vadd.f32 0.0, %v1623
  %v1625 = vpop.f32.mrb[0].mxu0
  %1626 = vmatprep.mubr.bf16.mxu0 %v889
  %1627 = vmatmul.mubr.bf16.gmra.mrb[0].mxu0 %v888
  %v1628 = vpop.f32.mrb[0].mxu0
  %v1629 = vadd.f32 0.0, %v1628
  %v1630 = vpop.f32.mrb[0].mxu0
  %v1631 = vpop.f32.mrb[0].mxu0
  %v1632 = vadd.f32 0.0, %v1631
  %v1633 = vpop.f32.mrb[0].mxu0
  %1634 = vmatprep.mubr.bf16.mxu0 %v896
  %1635 = vmatmul.mubr.bf16.gmra.mrb[0].mxu0 %v895
  %v1636 = vpop.f32.mrb[0].mxu0
  %v1637 = vadd.f32 0.0, %v1636
  %v1638 = vpop.f32.mrb[0].mxu0
  %v1639 = vpop.f32.mrb[0].mxu0
  %v1640 = vadd.f32 0.0, %v1639
  %v1641 = vpop.f32.mrb[0].mxu0
  %1642 = vmatprep.mubr.bf16.mxu0 %v903
  %1643 = vmatmul.mubr.bf16.gmra.mrb[0].mxu0 %v902
  %v1644 = vpop.f32.mrb[0].mxu0
  %v1645 = vadd.f32 0.0, %v1644
  %v1646 = vpop.f32.mrb[0].mxu0
  %v1647 = vpop.f32.mrb[0].mxu0
  %v1648 = vadd.f32 0.0, %v1647
  %v1649 = vpop.f32.mrb[0].mxu0
  %1650 = vmatprep.mubr.bf16.mxu0 %v910
  %1651 = vmatmul.mubr.bf16.gmra.mrb[0].mxu0 %v909
  %v1652 = vpop.f32.mrb[0].mxu0
  %v1653 = vadd.f32 0.0, %v1652
  %v1654 = vpop.f32.mrb[0].mxu0
  %v1655 = vpop.f32.mrb[0].mxu0
  %v1656 = vadd.f32 0.0, %v1655
  %v1657 = vpop.f32.mrb[0].mxu0
  %1658 = vmatprep.mubr.bf16.mxu0 %v917
  %1659 = vmatmul.mubr.bf16.gmra.mrb[0].mxu0 %v916
  %v1660 = vpop.f32.mrb[0].mxu0
  %v1661 = vadd.f32 0.0, %v1660
  %v1662 = vpop.f32.mrb[0].mxu0
  %v1663 = vpop.f32.mrb[0].mxu0
  %v1664 = vadd.f32 0.0, %v1663
  %v1665 = vpop.f32.mrb[0].mxu0
  %1666 = vmatprep.mubr.bf16.mxu0 %v924
  %1667 = vmatmul.mubr.bf16.gmra.mrb[0].mxu0 %v923
  %v1668 = vpop.f32.mrb[0].mxu0
  %v1669 = vadd.f32 0.0, %v1668
  %v1670 = vpop.f32.mrb[0].mxu0
  %v1671 = vpop.f32.mrb[0].mxu0
  %v1672 = vadd.f32 0.0, %v1671
  %v1673 = vpop.f32.mrb[0].mxu0
  %1674 = vmatprep.mubr.bf16.mxu0 %v931
  %1675 = vmatmul.mubr.bf16.gmra.mrb[0].mxu0 %v930
  %v1676 = vpop.f32.mrb[0].mxu0
  %v1677 = vadd.f32 0.0, %v1676
  %v1678 = vpop.f32.mrb[0].mxu0
  %v1679 = vpop.f32.mrb[0].mxu0
  %v1680 = vadd.f32 0.0, %v1679
  %v1681 = vpop.f32.mrb[0].mxu0
  %1682 = vmatprep.mubr.bf16.mxu0 %v938
  %1683 = vmatmul.mubr.bf16.gmra.mrb[0].mxu0 %v937
  %v1684 = vpop.f32.mrb[0].mxu0
  %v1685 = vadd.f32 0.0, %v1684
  %v1686 = vpop.f32.mrb[0].mxu0
  %v1687 = vpop.f32.mrb[0].mxu0
  %v1688 = vadd.f32 0.0, %v1687
  %v1689 = vpop.f32.mrb[0].mxu0
  %1690 = vmatprep.mubr.bf16.mxu0 %v945
  %1691 = vmatmul.mubr.bf16.gmra.mrb[0].mxu0 %v944
  %v1692 = vpop.f32.mrb[0].mxu0
  %v1693 = vadd.f32 0.0, %v1692
  %v1694 = vpop.f32.mrb[0].mxu0
  %v1695 = vpop.f32.mrb[0].mxu0
  %v1696 = vadd.f32 0.0, %v1695
  %v1697 = vpop.f32.mrb[0].mxu0
  %1698 = vmatprep.mubr.bf16.mxu0 %v952
  %1699 = vmatmul.mubr.bf16.gmra.mrb[0].mxu0 %v951
  %v1700 = vpop.f32.mrb[0].mxu0
  %v1701 = vadd.f32 0.0, %v1700
  %v1702 = vpop.f32.mrb[0].mxu0
  %v1703 = vpop.f32.mrb[0].mxu0
  %v1704 = vadd.f32 0.0, %v1703
  %v1705 = vpop.f32.mrb[0].mxu0
  %1706 = vmatprep.mubr.bf16.mxu0 %v959
  %1707 = vmatmul.mubr.bf16.gmra.mrb[0].mxu0 %v958
  %v1708 = vpop.f32.mrb[0].mxu0
  %v1709 = vadd.f32 0.0, %v1708
  %v1710 = vpop.f32.mrb[0].mxu0
  %v1711 = vpop.f32.mrb[0].mxu0
  %v1712 = vadd.f32 0.0, %v1711
  %v1713 = vpop.f32.mrb[0].mxu0
  %1714 = vmatprep.mubr.bf16.mxu0 %v966
  %1715 = vmatmul.mubr.bf16.gmra.mrb[0].mxu0 %v965
  %v1716 = vpop.f32.mrb[0].mxu0
  %v1717 = vadd.f32 0.0, %v1716
  %v1718 = vpop.f32.mrb[0].mxu0
  %v1719 = vpop.f32.mrb[0].mxu0
  %v1720 = vadd.f32 0.0, %v1719
  %v1721 = vpop.f32.mrb[0].mxu0
  %1722 = vmatprep.mubr.bf16.mxu0 %v973
  %1723 = vmatmul.mubr.bf16.gmra.mrb[0].mxu0 %v972
  %v1724 = vpop.f32.mrb[0].mxu0
  %v1725 = vadd.f32 0.0, %v1724
  %v1726 = vpop.f32.mrb[0].mxu0
  %v1727 = vpop.f32.mrb[0].mxu0
  %v1728 = vadd.f32 0.0, %v1727
  %v1729 = vpop.f32.mrb[0].mxu0
  %1730 = vmatprep.mubr.bf16.mxu0 %v980
  %1731 = vmatmul.mubr.bf16.gmra.mrb[0].mxu0 %v979
  %v1732 = vpop.f32.mrb[0].mxu0
  %v1733 = vadd.f32 0.0, %v1732
  %v1734 = vpop.f32.mrb[0].mxu0
  %v1735 = vpop.f32.mrb[0].mxu0
  %v1736 = vadd.f32 0.0, %v1735
  %v1737 = vpop.f32.mrb[0].mxu0
  %1738 = vmatprep.mubr.bf16.mxu0 %v987
  %1739 = vmatmul.mubr.bf16.gmra.mrb[0].mxu0 %v986
  %v1740 = vpop.f32.mrb[0].mxu0
  %v1741 = vadd.f32 0.0, %v1740
  %v1742 = vpop.f32.mrb[0].mxu0
  %v1743 = vpop.f32.mrb[0].mxu0
  %v1744 = vadd.f32 0.0, %v1743
  %v1745 = vpop.f32.mrb[0].mxu0
  %1746 = vmatprep.mubr.bf16.mxu0 %v994
  %1747 = vmatmul.mubr.bf16.gmra.mrb[0].mxu0 %v993
  %v1748 = vpop.f32.mrb[0].mxu0
  %v1749 = vadd.f32 0.0, %v1748
  %v1750 = vpop.f32.mrb[0].mxu0
  %v1751 = vpop.f32.mrb[0].mxu0
  %v1752 = vadd.f32 0.0, %v1751
  %v1753 = vpop.f32.mrb[0].mxu0
  %1754 = vmatprep.mubr.bf16.mxu0 %v1001
  %1755 = vmatmul.mubr.bf16.gmra.mrb[0].mxu0 %v1000
  %v1756 = vpop.f32.mrb[0].mxu0
  %v1757 = vadd.f32 0.0, %v1756
  %v1758 = vpop.f32.mrb[0].mxu0
  %v1759 = vpop.f32.mrb[0].mxu0
  %v1760 = vadd.f32 0.0, %v1759
  %v1761 = vpop.f32.mrb[0].mxu0
  %1762 = vmatprep.mubr.bf16.mxu0 %v1008
  %1763 = vmatmul.mubr.bf16.gmra.mrb[0].mxu0 %v1007
  %v1764 = vpop.f32.mrb[0].mxu0
  %v1765 = vadd.f32 0.0, %v1764
  %v1766 = vpop.f32.mrb[0].mxu0
  %v1767 = vpop.f32.mrb[0].mxu0
  %v1768 = vadd.f32 0.0, %v1767
  %v1769 = vpop.f32.mrb[0].mxu0
  %1770 = vmatprep.mubr.bf16.mxu0 %v1015
  %1771 = vmatmul.mubr.bf16.gmra.mrb[0].mxu0 %v1014
  %v1772 = vpop.f32.mrb[0].mxu0
  %v1773 = vadd.f32 0.0, %v1772
  %v1774 = vpop.f32.mrb[0].mxu0
  %v1775 = vpop.f32.mrb[0].mxu0
  %v1776 = vadd.f32 0.0, %v1775
  %v1777 = vpop.f32.mrb[0].mxu0
  %1778 = vmatprep.mubr.bf16.mxu0 %v1022
  %1779 = vmatmul.mubr.bf16.gmra.mrb[0].mxu0 %v1021
  %v1780 = vpop.f32.mrb[0].mxu0
  %v1781 = vadd.f32 0.0, %v1780
  %v1782 = vpop.f32.mrb[0].mxu0
  %v1783 = vpop.f32.mrb[0].mxu0
  %v1784 = vpop.f32.mrb[0].mxu0
  %1785 = vdwg.mxu0
  %1786 = vmatprep.subr.bf16.mxu0 0
  %1787 = vmatpush1.bf16.msra.mxu0 %v1394
  %1788 = vmatprep.subr.bf16.mxu0 0
  %1789 = vmatpush1.bf16.msra.mxu0 %v1395
  %1790 = vmatprep.subr.bf16.mxu0 0
  %1791 = vmatpush1.bf16.msra.mxu0 %v1396
  %1792 = vmatprep.subr.bf16.mxu0 0
  %1793 = vmatpush1.bf16.msra.mxu0 %v1397
  %1794 = vmatprep.subr.bf16.mxu0 0
  %1795 = vmatpush1.bf16.msra.mxu0 %v1398
  %1796 = vmatprep.subr.bf16.mxu0 0
  %1797 = vmatpush1.bf16.msra.mxu0 %v1399
  %1798 = vmatprep.subr.bf16.mxu0 0
  %1799 = vmatpush1.bf16.msra.mxu0 %v1400
  %1800 = vmatprep.subr.bf16.mxu0 0
  %1801 = vmatpush1.bf16.msra.mxu0 %v1401
  %1802 = vmatprep.subr.bf16.mxu0 0
  %1803 = vmatpush1.bf16.msra.mxu0 %v1402
  %1804 = vmatprep.subr.bf16.mxu0 0
  %1805 = vmatpush1.bf16.msra.mxu0 %v1403
  %1806 = vmatprep.subr.bf16.mxu0 0
  %1807 = vmatpush1.bf16.msra.mxu0 %v1404
  %1808 = vmatprep.subr.bf16.mxu0 0
  %1809 = vmatpush1.bf16.msra.mxu0 %v1405
  %1810 = vmatprep.subr.bf16.mxu0 0
  %1811 = vmatpush1.bf16.msra.mxu0 %v1406
  %1812 = vmatprep.subr.bf16.mxu0 0
  %1813 = vmatpush1.bf16.msra.mxu0 %v1407
  %1814 = vmatprep.subr.bf16.mxu0 0
  %1815 = vmatpush1.bf16.msra.mxu0 %v1408
  %1816 = vmatprep.subr.bf16.mxu0 0
  %1817 = vmatpush1.bf16.msra.mxu0 %v1409
  %1818 = vmatprep.mubr.bf16.mxu0 %v856
  %1819 = vmatmul.mubr.bf16.gmra.mrb[0].mxu0 %v855
  %v1820 = vpop.f32.mrb[0].mxu0
  %v1821 = vadd.f32 %v1589, %v1820
  %v1822 = vpop.f32.mrb[0].mxu0
  %v1823 = vpop.f32.mrb[0].mxu0
  %v1824 = vadd.f32 %v1592, %v1823
  %v1825 = vpop.f32.mrb[0].mxu0
  %1826 = vmatprep.mubr.bf16.mxu0 %v863
  %1827 = vmatmul.mubr.bf16.gmra.mrb[0].mxu0 %v862
  %v1828 = vpop.f32.mrb[0].mxu0
  %v1829 = vadd.f32 %v1597, %v1828
  %v1830 = vpop.f32.mrb[0].mxu0
  %v1831 = vpop.f32.mrb[0].mxu0
  %v1832 = vadd.f32 %v1600, %v1831
  %v1833 = vpop.f32.mrb[0].mxu0
  %1834 = vmatprep.mubr.bf16.mxu0 %v870
  %1835 = vmatmul.mubr.bf16.gmra.mrb[0].mxu0 %v869
  %v1836 = vpop.f32.mrb[0].mxu0
  %v1837 = vadd.f32 %v1605, %v1836
  %v1838 = vpop.f32.mrb[0].mxu0
  %v1839 = vpop.f32.mrb[0].mxu0
  %v1840 = vadd.f32 %v1608, %v1839
  %v1841 = vpop.f32.mrb[0].mxu0
  %1842 = vmatprep.mubr.bf16.mxu0 %v877
  %1843 = vmatmul.mubr.bf16.gmra.mrb[0].mxu0 %v876
  %v1844 = vpop.f32.mrb[0].mxu0
  %v1845 = vadd.f32 %v1613, %v1844
  %v1846 = vpop.f32.mrb[0].mxu0
  %v1847 = vpop.f32.mrb[0].mxu0
  %v1848 = vadd.f32 %v1616, %v1847
  %v1849 = vpop.f32.mrb[0].mxu0
  %1850 = vmatprep.mubr.bf16.mxu0 %v884
  %1851 = vmatmul.mubr.bf16.gmra.mrb[0].mxu0 %v883
  %v1852 = vpop.f32.mrb[0].mxu0
  %v1853 = vadd.f32 %v1621, %v1852
  %v1854 = vpop.f32.mrb[0].mxu0
  %v1855 = vpop.f32.mrb[0].mxu0
  %v1856 = vadd.f32 %v1624, %v1855
  %v1857 = vpop.f32.mrb[0].mxu0
  %1858 = vmatprep.mubr.bf16.mxu0 %v891
  %1859 = vmatmul.mubr.bf16.gmra.mrb[0].mxu0 %v890
  %v1860 = vpop.f32.mrb[0].mxu0
  %v1861 = vadd.f32 %v1629, %v1860
  %v1862 = vpop.f32.mrb[0].mxu0
  %v1863 = vpop.f32.mrb[0].mxu0
  %v1864 = vadd.f32 %v1632, %v1863
  %v1865 = vpop.f32.mrb[0].mxu0
  %1866 = vmatprep.mubr.bf16.mxu0 %v898
  %1867 = vmatmul.mubr.bf16.gmra.mrb[0].mxu0 %v897
  %v1868 = vpop.f32.mrb[0].mxu0
  %v1869 = vadd.f32 %v1637, %v1868
  %v1870 = vpop.f32.mrb[0].mxu0
  %v1871 = vpop.f32.mrb[0].mxu0
  %v1872 = vadd.f32 %v1640, %v1871
  %v1873 = vpop.f32.mrb[0].mxu0
  %1874 = vmatprep.mubr.bf16.mxu0 %v905
  %1875 = vmatmul.mubr.bf16.gmra.mrb[0].mxu0 %v904
  %v1876 = vpop.f32.mrb[0].mxu0
  %v1877 = vadd.f32 %v1645, %v1876
  %v1878 = vpop.f32.mrb[0].mxu0
  %v1879 = vpop.f32.mrb[0].mxu0
  %v1880 = vadd.f32 %v1648, %v1879
  %v1881 = vpop.f32.mrb[0].mxu0
  %1882 = vmatprep.mubr.bf16.mxu0 %v912
  %1883 = vmatmul.mubr.bf16.gmra.mrb[0].mxu0 %v911
  %v1884 = vpop.f32.mrb[0].mxu0
  %v1885 = vadd.f32 %v1653, %v1884
  %v1886 = vpop.f32.mrb[0].mxu0
  %v1887 = vpop.f32.mrb[0].mxu0
  %v1888 = vadd.f32 %v1656, %v1887
  %v1889 = vpop.f32.mrb[0].mxu0
  %1890 = vmatprep.mubr.bf16.mxu0 %v919
  %1891 = vmatmul.mubr.bf16.gmra.mrb[0].mxu0 %v918
  %v1892 = vpop.f32.mrb[0].mxu0
  %v1893 = vadd.f32 %v1661, %v1892
  %v1894 = vpop.f32.mrb[0].mxu0
  %v1895 = vpop.f32.mrb[0].mxu0
  %v1896 = vadd.f32 %v1664, %v1895
  %v1897 = vpop.f32.mrb[0].mxu0
  %1898 = vmatprep.mubr.bf16.mxu0 %v926
  %1899 = vmatmul.mubr.bf16.gmra.mrb[0].mxu0 %v925
  %v1900 = vpop.f32.mrb[0].mxu0
  %v1901 = vadd.f32 %v1669, %v1900
  %v1902 = vpop.f32.mrb[0].mxu0
  %v1903 = vpop.f32.mrb[0].mxu0
  %v1904 = vadd.f32 %v1672, %v1903
  %v1905 = vpop.f32.mrb[0].mxu0
  %1906 = vmatprep.mubr.bf16.mxu0 %v933
  %1907 = vmatmul.mubr.bf16.gmra.mrb[0].mxu0 %v932
  %v1908 = vpop.f32.mrb[0].mxu0
  %v1909 = vadd.f32 %v1677, %v1908
  %v1910 = vpop.f32.mrb[0].mxu0
  %v1911 = vpop.f32.mrb[0].mxu0
  %v1912 = vadd.f32 %v1680, %v1911
  %v1913 = vpop.f32.mrb[0].mxu0
  %1914 = vmatprep.mubr.bf16.mxu0 %v940
  %1915 = vmatmul.mubr.bf16.gmra.mrb[0].mxu0 %v939
  %v1916 = vpop.f32.mrb[0].mxu0
  %v1917 = vadd.f32 %v1685, %v1916
  %v1918 = vpop.f32.mrb[0].mxu0
  %v1919 = vpop.f32.mrb[0].mxu0
  %v1920 = vadd.f32 %v1688, %v1919
  %v1921 = vpop.f32.mrb[0].mxu0
  %1922 = vmatprep.mubr.bf16.mxu0 %v947
  %1923 = vmatmul.mubr.bf16.gmra.mrb[0].mxu0 %v946
  %v1924 = vpop.f32.mrb[0].mxu0
  %v1925 = vadd.f32 %v1693, %v1924
  %v1926 = vpop.f32.mrb[0].mxu0
  %v1927 = vpop.f32.mrb[0].mxu0
  %v1928 = vadd.f32 %v1696, %v1927
  %v1929 = vpop.f32.mrb[0].mxu0
  %1930 = vmatprep.mubr.bf16.mxu0 %v954
  %1931 = vmatmul.mubr.bf16.gmra.mrb[0].mxu0 %v953
  %v1932 = vpop.f32.mrb[0].mxu0
  %v1933 = vadd.f32 %v1701, %v1932
  %v1934 = vpop.f32.mrb[0].mxu0
  %v1935 = vpop.f32.mrb[0].mxu0
  %v1936 = vadd.f32 %v1704, %v1935
  %v1937 = vpop.f32.mrb[0].mxu0
  %1938 = vmatprep.mubr.bf16.mxu0 %v961
  %1939 = vmatmul.mubr.bf16.gmra.mrb[0].mxu0 %v960
  %v1940 = vpop.f32.mrb[0].mxu0
  %v1941 = vadd.f32 %v1709, %v1940
  %v1942 = vpop.f32.mrb[0].mxu0
  %v1943 = vpop.f32.mrb[0].mxu0
  %v1944 = vadd.f32 %v1712, %v1943
  %v1945 = vpop.f32.mrb[0].mxu0
  %1946 = vmatprep.mubr.bf16.mxu0 %v968
  %1947 = vmatmul.mubr.bf16.gmra.mrb[0].mxu0 %v967
  %v1948 = vpop.f32.mrb[0].mxu0
  %v1949 = vadd.f32 %v1717, %v1948
  %v1950 = vpop.f32.mrb[0].mxu0
  %v1951 = vpop.f32.mrb[0].mxu0
  %v1952 = vadd.f32 %v1720, %v1951
  %v1953 = vpop.f32.mrb[0].mxu0
  %1954 = vmatprep.mubr.bf16.mxu0 %v975
  %1955 = vmatmul.mubr.bf16.gmra.mrb[0].mxu0 %v974
  %v1956 = vpop.f32.mrb[0].mxu0
  %v1957 = vadd.f32 %v1725, %v1956
  %v1958 = vpop.f32.mrb[0].mxu0
  %v1959 = vpop.f32.mrb[0].mxu0
  %v1960 = vadd.f32 %v1728, %v1959
  %v1961 = vpop.f32.mrb[0].mxu0
  %1962 = vmatprep.mubr.bf16.mxu0 %v982
  %1963 = vmatmul.mubr.bf16.gmra.mrb[0].mxu0 %v981
  %v1964 = vpop.f32.mrb[0].mxu0
  %v1965 = vadd.f32 %v1733, %v1964
  %v1966 = vpop.f32.mrb[0].mxu0
  %v1967 = vpop.f32.mrb[0].mxu0
  %v1968 = vadd.f32 %v1736, %v1967
  %v1969 = vpop.f32.mrb[0].mxu0
  %1970 = vmatprep.mubr.bf16.mxu0 %v989
  %1971 = vmatmul.mubr.bf16.gmra.mrb[0].mxu0 %v988
  %v1972 = vpop.f32.mrb[0].mxu0
  %v1973 = vadd.f32 %v1741, %v1972
  %v1974 = vpop.f32.mrb[0].mxu0
  %v1975 = vpop.f32.mrb[0].mxu0
  %v1976 = vadd.f32 %v1744, %v1975
  %v1977 = vpop.f32.mrb[0].mxu0
  %1978 = vmatprep.mubr.bf16.mxu0 %v996
  %1979 = vmatmul.mubr.bf16.gmra.mrb[0].mxu0 %v995
  %v1980 = vpop.f32.mrb[0].mxu0
  %v1981 = vadd.f32 %v1749, %v1980
  %v1982 = vpop.f32.mrb[0].mxu0
  %v1983 = vpop.f32.mrb[0].mxu0
  %v1984 = vadd.f32 %v1752, %v1983
  %v1985 = vpop.f32.mrb[0].mxu0
  %1986 = vmatprep.mubr.bf16.mxu0 %v1003
  %1987 = vmatmul.mubr.bf16.gmra.mrb[0].mxu0 %v1002
  %v1988 = vpop.f32.mrb[0].mxu0
  %v1989 = vadd.f32 %v1757, %v1988
  %v1990 = vpop.f32.mrb[0].mxu0
  %v1991 = vpop.f32.mrb[0].mxu0
  %v1992 = vadd.f32 %v1760, %v1991
  %v1993 = vpop.f32.mrb[0].mxu0
  %1994 = vmatprep.mubr.bf16.mxu0 %v1010
  %1995 = vmatmul.mubr.bf16.gmra.mrb[0].mxu0 %v1009
  %v1996 = vpop.f32.mrb[0].mxu0
  %v1997 = vadd.f32 %v1765, %v1996
  %v1998 = vpop.f32.mrb[0].mxu0
  %v1999 = vpop.f32.mrb[0].mxu0
  %v2000 = vadd.f32 %v1768, %v1999
  %v2001 = vpop.f32.mrb[0].mxu0
  %2002 = vmatprep.mubr.bf16.mxu0 %v1017
  %2003 = vmatmul.mubr.bf16.gmra.mrb[0].mxu0 %v1016
  %v2004 = vpop.f32.mrb[0].mxu0
  %v2005 = vadd.f32 %v1773, %v2004
  %v2006 = vpop.f32.mrb[0].mxu0
  %v2007 = vpop.f32.mrb[0].mxu0
  %v2008 = vadd.f32 %v1776, %v2007
  %v2009 = vpop.f32.mrb[0].mxu0
  %2010 = vmatprep.mubr.bf16.mxu0 %v1024
  %2011 = vmatmul.mubr.bf16.gmra.mrb[0].mxu0 %v1023
  %v2012 = vpop.f32.mrb[0].mxu0
  %v2013 = vadd.f32 %v1781, %v2012
  %v2014 = vpop.f32.mrb[0].mxu0
  %v2015 = vpop.f32.mrb[0].mxu0
  %v2016 = vpop.f32.mrb[0].mxu0
  %2017 = vdwg.mxu0
  %2018 = vmatprep.subr.bf16.mxu0 0
  %2019 = vmatpush1.bf16.msra.mxu0 %v1410
  %2020 = vmatprep.subr.bf16.mxu0 0
  %2021 = vmatpush1.bf16.msra.mxu0 %v1411
  %2022 = vmatprep.subr.bf16.mxu0 0
  %2023 = vmatpush1.bf16.msra.mxu0 %v1412
  %2024 = vmatprep.subr.bf16.mxu0 0
  %2025 = vmatpush1.bf16.msra.mxu0 %v1413
  %2026 = vmatprep.subr.bf16.mxu0 0
  %2027 = vmatpush1.bf16.msra.mxu0 %v1414
  %2028 = vmatprep.subr.bf16.mxu0 0
  %2029 = vmatpush1.bf16.msra.mxu0 %v1415
  %2030 = vmatprep.subr.bf16.mxu0 0
  %2031 = vmatpush1.bf16.msra.mxu0 %v1416
  %2032 = vmatprep.subr.bf16.mxu0 0
  %2033 = vmatpush1.bf16.msra.mxu0 %v1417
  %2034 = vmatprep.subr.bf16.mxu0 0
  %2035 = vmatpush1.bf16.msra.mxu0 %v1418
  %2036 = vmatprep.subr.bf16.mxu0 0
  %2037 = vmatpush1.bf16.msra.mxu0 %v1419
  %2038 = vmatprep.subr.bf16.mxu0 0
  %2039 = vmatpush1.bf16.msra.mxu0 %v1420
  %2040 = vmatprep.subr.bf16.mxu0 0
  %2041 = vmatpush1.bf16.msra.mxu0 %v1421
  %2042 = vmatprep.subr.bf16.mxu0 0
  %2043 = vmatpush1.bf16.msra.mxu0 %v1422
  %2044 = vmatprep.subr.bf16.mxu0 0
  %2045 = vmatpush1.bf16.msra.mxu0 %v1423
  %2046 = vmatprep.subr.bf16.mxu0 0
  %2047 = vmatpush1.bf16.msra.mxu0 %v1424
  %2048 = vmatprep.subr.bf16.mxu0 0
  %2049 = vmatpush1.bf16.msra.mxu0 %v1425
  %2050 = vmatprep.mubr.bf16.mxu0 %v858
  %2051 = vmatmul.mubr.bf16.gmra.mrb[0].mxu0 %v857
  %v2052 = vpop.f32.mrb[0].mxu0
  %v2053 = vadd.f32 %v1821, %v2052
  %v2054 = vpop.f32.mrb[0].mxu0
  %v2055 = vpop.f32.mrb[0].mxu0
  %v2056 = vadd.f32 %v1824, %v2055
  %v2057 = vpop.f32.mrb[0].mxu0
  %2058 = vmatprep.mubr.bf16.mxu0 %v865
  %2059 = vmatmul.mubr.bf16.gmra.mrb[0].mxu0 %v864
  %v2060 = vpop.f32.mrb[0].mxu0
  %v2061 = vadd.f32 %v1829, %v2060
  %v2062 = vpop.f32.mrb[0].mxu0
  %v2063 = vpop.f32.mrb[0].mxu0
  %v2064 = vadd.f32 %v1832, %v2063
  %v2065 = vpop.f32.mrb[0].mxu0
  %2066 = vmatprep.mubr.bf16.mxu0 %v872
  %2067 = vmatmul.mubr.bf16.gmra.mrb[0].mxu0 %v871
  %v2068 = vpop.f32.mrb[0].mxu0
  %v2069 = vadd.f32 %v1837, %v2068
  %v2070 = vpop.f32.mrb[0].mxu0
  %v2071 = vpop.f32.mrb[0].mxu0
  %v2072 = vadd.f32 %v1840, %v2071
  %v2073 = vpop.f32.mrb[0].mxu0
  %2074 = vmatprep.mubr.bf16.mxu0 %v879
  %2075 = vmatmul.mubr.bf16.gmra.mrb[0].mxu0 %v878
  %v2076 = vpop.f32.mrb[0].mxu0
  %v2077 = vadd.f32 %v1845, %v2076
  %v2078 = vpop.f32.mrb[0].mxu0
  %v2079 = vpop.f32.mrb[0].mxu0
  %v2080 = vadd.f32 %v1848, %v2079
  %v2081 = vpop.f32.mrb[0].mxu0
  %2082 = vmatprep.mubr.bf16.mxu0 %v886
  %2083 = vmatmul.mubr.bf16.gmra.mrb[0].mxu0 %v885
  %v2084 = vpop.f32.mrb[0].mxu0
  %v2085 = vadd.f32 %v1853, %v2084
  %v2086 = vpop.f32.mrb[0].mxu0
  %v2087 = vpop.f32.mrb[0].mxu0
  %v2088 = vadd.f32 %v1856, %v2087
  %v2089 = vpop.f32.mrb[0].mxu0
  %2090 = vmatprep.mubr.bf16.mxu0 %v893
  %2091 = vmatmul.mubr.bf16.gmra.mrb[0].mxu0 %v892
  %v2092 = vpop.f32.mrb[0].mxu0
  %v2093 = vadd.f32 %v1861, %v2092
  %v2094 = vpop.f32.mrb[0].mxu0
  %v2095 = vpop.f32.mrb[0].mxu0
  %v2096 = vadd.f32 %v1864, %v2095
  %v2097 = vpop.f32.mrb[0].mxu0
  %2098 = vmatprep.mubr.bf16.mxu0 %v900
  %2099 = vmatmul.mubr.bf16.gmra.mrb[0].mxu0 %v899
  %v2100 = vpop.f32.mrb[0].mxu0
  %v2101 = vadd.f32 %v1869, %v2100
  %v2102 = vpop.f32.mrb[0].mxu0
  %v2103 = vpop.f32.mrb[0].mxu0
  %v2104 = vadd.f32 %v1872, %v2103
  %v2105 = vpop.f32.mrb[0].mxu0
  %2106 = vmatprep.mubr.bf16.mxu0 %v907
  %2107 = vmatmul.mubr.bf16.gmra.mrb[0].mxu0 %v906
  %v2108 = vpop.f32.mrb[0].mxu0
  %v2109 = vadd.f32 %v1877, %v2108
  %v2110 = vpop.f32.mrb[0].mxu0
  %v2111 = vpop.f32.mrb[0].mxu0
  %v2112 = vadd.f32 %v1880, %v2111
  %v2113 = vpop.f32.mrb[0].mxu0
  %2114 = vmatprep.mubr.bf16.mxu0 %v914
  %2115 = vmatmul.mubr.bf16.gmra.mrb[0].mxu0 %v913
  %v2116 = vpop.f32.mrb[0].mxu0
  %v2117 = vadd.f32 %v1885, %v2116
  %v2118 = vpop.f32.mrb[0].mxu0
  %v2119 = vpop.f32.mrb[0].mxu0
  %v2120 = vadd.f32 %v1888, %v2119
  %v2121 = vpop.f32.mrb[0].mxu0
  %2122 = vmatprep.mubr.bf16.mxu0 %v921
  %2123 = vmatmul.mubr.bf16.gmra.mrb[0].mxu0 %v920
  %v2124 = vpop.f32.mrb[0].mxu0
  %v2125 = vadd.f32 %v1893, %v2124
  %v2126 = vpop.f32.mrb[0].mxu0
  %v2127 = vpop.f32.mrb[0].mxu0
  %v2128 = vadd.f32 %v1896, %v2127
  %v2129 = vpop.f32.mrb[0].mxu0
  %2130 = vmatprep.mubr.bf16.mxu0 %v928
  %2131 = vmatmul.mubr.bf16.gmra.mrb[0].mxu0 %v927
  %v2132 = vpop.f32.mrb[0].mxu0
  %v2133 = vadd.f32 %v1901, %v2132
  %v2134 = vpop.f32.mrb[0].mxu0
  %v2135 = vpop.f32.mrb[0].mxu0
  %v2136 = vadd.f32 %v1904, %v2135
  %v2137 = vpop.f32.mrb[0].mxu0
  %2138 = vmatprep.mubr.bf16.mxu0 %v935
  %2139 = vmatmul.mubr.bf16.gmra.mrb[0].mxu0 %v934
  %v2140 = vpop.f32.mrb[0].mxu0
  %v2141 = vadd.f32 %v1909, %v2140
  %v2142 = vpop.f32.mrb[0].mxu0
  %v2143 = vpop.f32.mrb[0].mxu0
  %v2144 = vadd.f32 %v1912, %v2143
  %v2145 = vpop.f32.mrb[0].mxu0
  %2146 = vmatprep.mubr.bf16.mxu0 %v942
  %2147 = vmatmul.mubr.bf16.gmra.mrb[0].mxu0 %v941
  %v2148 = vpop.f32.mrb[0].mxu0
  %v2149 = vadd.f32 %v1917, %v2148
  %v2150 = vpop.f32.mrb[0].mxu0
  %v2151 = vpop.f32.mrb[0].mxu0
  %v2152 = vadd.f32 %v1920, %v2151
  %v2153 = vpop.f32.mrb[0].mxu0
  %2154 = vmatprep.mubr.bf16.mxu0 %v949
  %2155 = vmatmul.mubr.bf16.gmra.mrb[0].mxu0 %v948
  %v2156 = vpop.f32.mrb[0].mxu0
  %v2157 = vadd.f32 %v1925, %v2156
  %v2158 = vpop.f32.mrb[0].mxu0
  %v2159 = vpop.f32.mrb[0].mxu0
  %v2160 = vadd.f32 %v1928, %v2159
  %v2161 = vpop.f32.mrb[0].mxu0
  %2162 = vmatprep.mubr.bf16.mxu0 %v956
  %2163 = vmatmul.mubr.bf16.gmra.mrb[0].mxu0 %v955
  %v2164 = vpop.f32.mrb[0].mxu0
  %v2165 = vadd.f32 %v1933, %v2164
  %v2166 = vpop.f32.mrb[0].mxu0
  %v2167 = vpop.f32.mrb[0].mxu0
  %v2168 = vadd.f32 %v1936, %v2167
  %v2169 = vpop.f32.mrb[0].mxu0
  %2170 = vmatprep.mubr.bf16.mxu0 %v963
  %2171 = vmatmul.mubr.bf16.gmra.mrb[0].mxu0 %v962
  %v2172 = vpop.f32.mrb[0].mxu0
  %v2173 = vadd.f32 %v1941, %v2172
  %v2174 = vpop.f32.mrb[0].mxu0
  %v2175 = vpop.f32.mrb[0].mxu0
  %v2176 = vadd.f32 %v1944, %v2175
  %v2177 = vpop.f32.mrb[0].mxu0
  %2178 = vmatprep.mubr.bf16.mxu0 %v970
  %2179 = vmatmul.mubr.bf16.gmra.mrb[0].mxu0 %v969
  %v2180 = vpop.f32.mrb[0].mxu0
  %v2181 = vadd.f32 %v1949, %v2180
  %v2182 = vpop.f32.mrb[0].mxu0
  %v2183 = vpop.f32.mrb[0].mxu0
  %v2184 = vadd.f32 %v1952, %v2183
  %v2185 = vpop.f32.mrb[0].mxu0
  %2186 = vmatprep.mubr.bf16.mxu0 %v977
  %2187 = vmatmul.mubr.bf16.gmra.mrb[0].mxu0 %v976
  %v2188 = vpop.f32.mrb[0].mxu0
  %v2189 = vadd.f32 %v1957, %v2188
  %v2190 = vpop.f32.mrb[0].mxu0
  %v2191 = vpop.f32.mrb[0].mxu0
  %v2192 = vadd.f32 %v1960, %v2191
  %v2193 = vpop.f32.mrb[0].mxu0
  %2194 = vmatprep.mubr.bf16.mxu0 %v984
  %2195 = vmatmul.mubr.bf16.gmra.mrb[0].mxu0 %v983
  %v2196 = vpop.f32.mrb[0].mxu0
  %v2197 = vadd.f32 %v1965, %v2196
  %v2198 = vpop.f32.mrb[0].mxu0
  %v2199 = vpop.f32.mrb[0].mxu0
  %v2200 = vadd.f32 %v1968, %v2199
  %v2201 = vpop.f32.mrb[0].mxu0
  %2202 = vmatprep.mubr.bf16.mxu0 %v991
  %2203 = vmatmul.mubr.bf16.gmra.mrb[0].mxu0 %v990
  %v2204 = vpop.f32.mrb[0].mxu0
  %v2205 = vadd.f32 %v1973, %v2204
  %v2206 = vpop.f32.mrb[0].mxu0
  %v2207 = vpop.f32.mrb[0].mxu0
  %v2208 = vadd.f32 %v1976, %v2207
  %v2209 = vpop.f32.mrb[0].mxu0
  %2210 = vmatprep.mubr.bf16.mxu0 %v998
  %2211 = vmatmul.mubr.bf16.gmra.mrb[0].mxu0 %v997
  %v2212 = vpop.f32.mrb[0].mxu0
  %v2213 = vadd.f32 %v1981, %v2212
  %v2214 = vpop.f32.mrb[0].mxu0
  %v2215 = vpop.f32.mrb[0].mxu0
  %v2216 = vadd.f32 %v1984, %v2215
  %v2217 = vpop.f32.mrb[0].mxu0
  %2218 = vmatprep.mubr.bf16.mxu0 %v1005
  %2219 = vmatmul.mubr.bf16.gmra.mrb[0].mxu0 %v1004
  %v2220 = vpop.f32.mrb[0].mxu0
  %v2221 = vadd.f32 %v1989, %v2220
  %v2222 = vpop.f32.mrb[0].mxu0
  %v2223 = vpop.f32.mrb[0].mxu0
  %v2224 = vadd.f32 %v1992, %v2223
  %v2225 = vpop.f32.mrb[0].mxu0
  %2226 = vmatprep.mubr.bf16.mxu0 %v1012
  %2227 = vmatmul.mubr.bf16.gmra.mrb[0].mxu0 %v1011
  %v2228 = vpop.f32.mrb[0].mxu0
  %v2229 = vadd.f32 %v1997, %v2228
  %v2230 = vpop.f32.mrb[0].mxu0
  %v2231 = vpop.f32.mrb[0].mxu0
  %v2232 = vadd.f32 %v2000, %v2231
  %v2233 = vpop.f32.mrb[0].mxu0
  %2234 = vmatprep.mubr.bf16.mxu0 %v1019
  %2235 = vmatmul.mubr.bf16.gmra.mrb[0].mxu0 %v1018
  %v2236 = vpop.f32.mrb[0].mxu0
  %v2237 = vadd.f32 %v2005, %v2236
  %v2238 = vpop.f32.mrb[0].mxu0
  %v2239 = vpop.f32.mrb[0].mxu0
  %v2240 = vadd.f32 %v2008, %v2239
  %v2241 = vpop.f32.mrb[0].mxu0
  %2242 = vmatprep.mubr.bf16.mxu0 %v1026
  %2243 = vmatmul.mubr.bf16.gmra.mrb[0].mxu0 %v1025
  %v2244 = vpop.f32.mrb[0].mxu0
  %v2245 = vadd.f32 %v2013, %v2244
  %v2246 = vpop.f32.mrb[0].mxu0
  %v2247 = vpop.f32.mrb[0].mxu0
  %v2248 = vpop.f32.mrb[0].mxu0
  %2249 = vdwg.mxu0
  %2250 = vmatprep.subr.bf16.mxu0 0
  %2251 = vmatpush1.bf16.msra.mxu0 %v1426
  %2252 = vmatprep.subr.bf16.mxu0 0
  %2253 = vmatpush1.bf16.msra.mxu0 %v1427
  %2254 = vmatprep.subr.bf16.mxu0 0
  %2255 = vmatpush1.bf16.msra.mxu0 0
  %2256 = vmatprep.subr.bf16.mxu0 0
  %2257 = vmatpush1.bf16.msra.mxu0 0
  %2258 = vmatprep.subr.bf16.mxu0 0
  %2259 = vmatpush1.bf16.msra.mxu0 0
  %2260 = vmatprep.subr.bf16.mxu0 0
  %2261 = vmatpush1.bf16.msra.mxu0 0
  %2262 = vmatprep.subr.bf16.mxu0 0
  %2263 = vmatpush1.bf16.msra.mxu0 0
  %2264 = vmatprep.subr.bf16.mxu0 0
  %2265 = vmatpush1.bf16.msra.mxu0 0
  %2266 = vmatprep.subr.bf16.mxu0 0
  %2267 = vmatpush1.bf16.msra.mxu0 0
  %2268 = vmatprep.subr.bf16.mxu0 0
  %2269 = vmatpush1.bf16.msra.mxu0 0
  %2270 = vmatprep.subr.bf16.mxu0 0
  %2271 = vmatpush1.bf16.msra.mxu0 0
  %2272 = vmatprep.subr.bf16.mxu0 0
  %2273 = vmatpush1.bf16.msra.mxu0 0
  %2274 = vmatprep.subr.bf16.mxu0 0
  %2275 = vmatpush1.bf16.msra.mxu0 0
  %2276 = vmatprep.subr.bf16.mxu0 0
  %2277 = vmatpush1.bf16.msra.mxu0 0
  %2278 = vmatprep.subr.bf16.mxu0 0
  %2279 = vmatpush1.bf16.msra.mxu0 0
  %2280 = vmatprep.subr.bf16.mxu0 0
  %2281 = vmatpush1.bf16.msra.mxu0 0
  %2282 = vmatprep.mubr.bf16.mxu0 0
  %2283 = vmatmul.mubr.bf16.gmra.mrb[0].mxu0 %v1480
  %v2284 = vpop.f32.mrb[0].mxu0
  %v2285 = vadd.f32 %v2053, %v2284
  %v2286 = vpop.f32.mrb[0].mxu0
  %v2287 = vpop.f32.mrb[0].mxu0
  %v2288 = vadd.f32 %v2056, %v2287
  %v2289 = vpop.f32.mrb[0].mxu0
  %2290 = vmatprep.mubr.bf16.mxu0 0
  %2291 = vmatmul.mubr.bf16.gmra.mrb[0].mxu0 %v1483
  %v2292 = vpop.f32.mrb[0].mxu0
  %v2293 = vadd.f32 %v2061, %v2292
  %v2294 = vpop.f32.mrb[0].mxu0
  %v2295 = vpop.f32.mrb[0].mxu0
  %v2296 = vadd.f32 %v2064, %v2295
  %v2297 = vpop.f32.mrb[0].mxu0
  %2298 = vmatprep.mubr.bf16.mxu0 0
  %2299 = vmatmul.mubr.bf16.gmra.mrb[0].mxu0 %v1486
  %v2300 = vpop.f32.mrb[0].mxu0
  %v2301 = vadd.f32 %v2069, %v2300
  %v2302 = vpop.f32.mrb[0].mxu0
  %v2303 = vpop.f32.mrb[0].mxu0
  %v2304 = vadd.f32 %v2072, %v2303
  %v2305 = vpop.f32.mrb[0].mxu0
  %2306 = vmatprep.mubr.bf16.mxu0 0
  %2307 = vmatmul.mubr.bf16.gmra.mrb[0].mxu0 %v1489
  %v2308 = vpop.f32.mrb[0].mxu0
  %v2309 = vadd.f32 %v2077, %v2308
  %v2310 = vpop.f32.mrb[0].mxu0
  %v2311 = vpop.f32.mrb[0].mxu0
  %v2312 = vadd.f32 %v2080, %v2311
  %v2313 = vpop.f32.mrb[0].mxu0
  %2314 = vmatprep.mubr.bf16.mxu0 0
  %2315 = vmatmul.mubr.bf16.gmra.mrb[0].mxu0 %v1492
  %v2316 = vpop.f32.mrb[0].mxu0
  %v2317 = vadd.f32 %v2085, %v2316
  %v2318 = vpop.f32.mrb[0].mxu0
  %v2319 = vpop.f32.mrb[0].mxu0
  %v2320 = vadd.f32 %v2088, %v2319
  %v2321 = vpop.f32.mrb[0].mxu0
  %2322 = vmatprep.mubr.bf16.mxu0 0
  %2323 = vmatmul.mubr.bf16.gmra.mrb[0].mxu0 %v1495
  %v2324 = vpop.f32.mrb[0].mxu0
  %v2325 = vadd.f32 %v2093, %v2324
  %v2326 = vpop.f32.mrb[0].mxu0
  %v2327 = vpop.f32.mrb[0].mxu0
  %v2328 = vadd.f32 %v2096, %v2327
  %v2329 = vpop.f32.mrb[0].mxu0
  %2330 = vmatprep.mubr.bf16.mxu0 0
  %2331 = vmatmul.mubr.bf16.gmra.mrb[0].mxu0 %v1498
  %v2332 = vpop.f32.mrb[0].mxu0
  %v2333 = vadd.f32 %v2101, %v2332
  %v2334 = vpop.f32.mrb[0].mxu0
  %v2335 = vpop.f32.mrb[0].mxu0
  %v2336 = vadd.f32 %v2104, %v2335
  %v2337 = vpop.f32.mrb[0].mxu0
  %2338 = vmatprep.mubr.bf16.mxu0 0
  %2339 = vmatmul.mubr.bf16.gmra.mrb[0].mxu0 %v1501
  %v2340 = vpop.f32.mrb[0].mxu0
  %v2341 = vadd.f32 %v2109, %v2340
  %v2342 = vpop.f32.mrb[0].mxu0
  %v2343 = vpop.f32.mrb[0].mxu0
  %v2344 = vadd.f32 %v2112, %v2343
  %v2345 = vpop.f32.mrb[0].mxu0
  %2346 = vmatprep.mubr.bf16.mxu0 0
  %2347 = vmatmul.mubr.bf16.gmra.mrb[0].mxu0 %v1504
  %v2348 = vpop.f32.mrb[0].mxu0
  %v2349 = vadd.f32 %v2117, %v2348
  %v2350 = vpop.f32.mrb[0].mxu0
  %v2351 = vpop.f32.mrb[0].mxu0
  %v2352 = vadd.f32 %v2120, %v2351
  %v2353 = vpop.f32.mrb[0].mxu0
  %2354 = vmatprep.mubr.bf16.mxu0 0
  %2355 = vmatmul.mubr.bf16.gmra.mrb[0].mxu0 %v1507
  %v2356 = vpop.f32.mrb[0].mxu0
  %v2357 = vadd.f32 %v2125, %v2356
  %v2358 = vpop.f32.mrb[0].mxu0
  %v2359 = vpop.f32.mrb[0].mxu0
  %v2360 = vadd.f32 %v2128, %v2359
  %v2361 = vpop.f32.mrb[0].mxu0
  %2362 = vmatprep.mubr.bf16.mxu0 0
  %2363 = vmatmul.mubr.bf16.gmra.mrb[0].mxu0 %v1510
  %v2364 = vpop.f32.mrb[0].mxu0
  %v2365 = vadd.f32 %v2133, %v2364
  %v2366 = vpop.f32.mrb[0].mxu0
  %v2367 = vpop.f32.mrb[0].mxu0
  %v2368 = vadd.f32 %v2136, %v2367
  %v2369 = vpop.f32.mrb[0].mxu0
  %2370 = vmatprep.mubr.bf16.mxu0 0
  %2371 = vmatmul.mubr.bf16.gmra.mrb[0].mxu0 %v1513
  %v2372 = vpop.f32.mrb[0].mxu0
  %v2373 = vadd.f32 %v2141, %v2372
  %v2374 = vpop.f32.mrb[0].mxu0
  %v2375 = vpop.f32.mrb[0].mxu0
  %v2376 = vadd.f32 %v2144, %v2375
  %v2377 = vpop.f32.mrb[0].mxu0
  %2378 = vmatprep.mubr.bf16.mxu0 0
  %2379 = vmatmul.mubr.bf16.gmra.mrb[0].mxu0 %v1516
  %v2380 = vpop.f32.mrb[0].mxu0
  %v2381 = vadd.f32 %v2149, %v2380
  %v2382 = vpop.f32.mrb[0].mxu0
  %v2383 = vpop.f32.mrb[0].mxu0
  %v2384 = vadd.f32 %v2152, %v2383
  %v2385 = vpop.f32.mrb[0].mxu0
  %2386 = vmatprep.mubr.bf16.mxu0 0
  %2387 = vmatmul.mubr.bf16.gmra.mrb[0].mxu0 %v1519
  %v2388 = vpop.f32.mrb[0].mxu0
  %v2389 = vadd.f32 %v2157, %v2388
  %v2390 = vpop.f32.mrb[0].mxu0
  %v2391 = vpop.f32.mrb[0].mxu0
  %v2392 = vadd.f32 %v2160, %v2391
  %v2393 = vpop.f32.mrb[0].mxu0
  %2394 = vmatprep.mubr.bf16.mxu0 0
  %2395 = vmatmul.mubr.bf16.gmra.mrb[0].mxu0 %v1522
  %v2396 = vpop.f32.mrb[0].mxu0
  %v2397 = vadd.f32 %v2165, %v2396
  %v2398 = vpop.f32.mrb[0].mxu0
  %v2399 = vpop.f32.mrb[0].mxu0
  %v2400 = vadd.f32 %v2168, %v2399
  %v2401 = vpop.f32.mrb[0].mxu0
  %2402 = vmatprep.mubr.bf16.mxu0 0
  %2403 = vmatmul.mubr.bf16.gmra.mrb[0].mxu0 %v1525
  %v2404 = vpop.f32.mrb[0].mxu0
  %v2405 = vadd.f32 %v2173, %v2404
  %v2406 = vpop.f32.mrb[0].mxu0
  %v2407 = vpop.f32.mrb[0].mxu0
  %v2408 = vadd.f32 %v2176, %v2407
  %v2409 = vpop.f32.mrb[0].mxu0
  %2410 = vmatprep.mubr.bf16.mxu0 0
  %2411 = vmatmul.mubr.bf16.gmra.mrb[0].mxu0 %v1528
  %v2412 = vpop.f32.mrb[0].mxu0
  %v2413 = vadd.f32 %v2181, %v2412
  %v2414 = vpop.f32.mrb[0].mxu0
  %v2415 = vpop.f32.mrb[0].mxu0
  %v2416 = vadd.f32 %v2184, %v2415
  %v2417 = vpop.f32.mrb[0].mxu0
  %2418 = vmatprep.mubr.bf16.mxu0 0
  %2419 = vmatmul.mubr.bf16.gmra.mrb[0].mxu0 %v1531
  %v2420 = vpop.f32.mrb[0].mxu0
  %v2421 = vadd.f32 %v2189, %v2420
  %v2422 = vpop.f32.mrb[0].mxu0
  %v2423 = vpop.f32.mrb[0].mxu0
  %v2424 = vadd.f32 %v2192, %v2423
  %v2425 = vpop.f32.mrb[0].mxu0
  %2426 = vmatprep.mubr.bf16.mxu0 0
  %2427 = vmatmul.mubr.bf16.gmra.mrb[0].mxu0 %v1534
  %v2428 = vpop.f32.mrb[0].mxu0
  %v2429 = vadd.f32 %v2197, %v2428
  %v2430 = vpop.f32.mrb[0].mxu0
  %v2431 = vpop.f32.mrb[0].mxu0
  %v2432 = vadd.f32 %v2200, %v2431
  %v2433 = vpop.f32.mrb[0].mxu0
  %2434 = vmatprep.mubr.bf16.mxu0 0
  %2435 = vmatmul.mubr.bf16.gmra.mrb[0].mxu0 %v1537
  %v2436 = vpop.f32.mrb[0].mxu0
  %v2437 = vadd.f32 %v2205, %v2436
  %v2438 = vpop.f32.mrb[0].mxu0
  %v2439 = vpop.f32.mrb[0].mxu0
  %v2440 = vadd.f32 %v2208, %v2439
  %v2441 = vpop.f32.mrb[0].mxu0
  %2442 = vmatprep.mubr.bf16.mxu0 0
  %2443 = vmatmul.mubr.bf16.gmra.mrb[0].mxu0 %v1540
  %v2444 = vpop.f32.mrb[0].mxu0
  %v2445 = vadd.f32 %v2213, %v2444
  %v2446 = vpop.f32.mrb[0].mxu0
  %v2447 = vpop.f32.mrb[0].mxu0
  %v2448 = vadd.f32 %v2216, %v2447
  %v2449 = vpop.f32.mrb[0].mxu0
  %2450 = vmatprep.mubr.bf16.mxu0 0
  %2451 = vmatmul.mubr.bf16.gmra.mrb[0].mxu0 %v1543
  %v2452 = vpop.f32.mrb[0].mxu0
  %v2453 = vadd.f32 %v2221, %v2452
  %v2454 = vpop.f32.mrb[0].mxu0
  %v2455 = vpop.f32.mrb[0].mxu0
  %v2456 = vadd.f32 %v2224, %v2455
  %v2457 = vpop.f32.mrb[0].mxu0
  %2458 = vmatprep.mubr.bf16.mxu0 0
  %2459 = vmatmul.mubr.bf16.gmra.mrb[0].mxu0 %v1546
  %v2460 = vpop.f32.mrb[0].mxu0
  %v2461 = vadd.f32 %v2229, %v2460
  %v2462 = vpop.f32.mrb[0].mxu0
  %v2463 = vpop.f32.mrb[0].mxu0
  %v2464 = vadd.f32 %v2232, %v2463
  %v2465 = vpop.f32.mrb[0].mxu0
  %2466 = vmatprep.mubr.bf16.mxu0 0
  %2467 = vmatmul.mubr.bf16.gmra.mrb[0].mxu0 %v1549
  %v2468 = vpop.f32.mrb[0].mxu0
  %v2469 = vadd.f32 %v2237, %v2468
  %v2470 = vpop.f32.mrb[0].mxu0
  %v2471 = vpop.f32.mrb[0].mxu0
  %v2472 = vadd.f32 %v2240, %v2471
  %v2473 = vpop.f32.mrb[0].mxu0
  %2474 = vmatprep.mubr.bf16.mxu0 0
  %2475 = vmatmul.mubr.bf16.gmra.mrb[0].mxu0 %v1552
  %v2476 = vpop.f32.mrb[0].mxu0
  %v2477 = vadd.f32 %v2245, %v2476
  %v2478 = vpop.f32.mrb[0].mxu0
  %v2479 = vpop.f32.mrb[0].mxu0
  %v2480 = vpop.f32.mrb[0].mxu0
  %2481 = vdwg.mxu0
  %vm2482 = vcmask 523264
  %v2483 = vsel %vm2482, %v2285, 0.0
  %v2484 = vsel %vm2482, %v2288, 0.0
  %v2485 = vadd.f32 %v2483, %v2484
  %v2486 = vsel %vm2482, %v2293, 0.0
  %v2487 = vadd.f32 %v2485, %v2486
  %v2488 = vsel %vm2482, %v2296, 0.0
  %v2489 = vadd.f32 %v2487, %v2488
  %v2490 = vsel %vm2482, %v2301, 0.0
  %v2491 = vadd.f32 %v2489, %v2490
  %v2492 = vsel %vm2482, %v2304, 0.0
  %v2493 = vadd.f32 %v2491, %v2492
  %v2494 = vsel %vm2482, %v2309, 0.0
  %v2495 = vadd.f32 %v2493, %v2494
  %v2496 = vsel %vm2482, %v2312, 0.0
  %v2497 = vadd.f32 %v2495, %v2496
  %v2498 = vsel %vm2482, %v2317, 0.0
  %v2499 = vadd.f32 %v2497, %v2498
  %v2500 = vsel %vm2482, %v2320, 0.0
  %v2501 = vadd.f32 %v2499, %v2500
  %v2502 = vsel %vm2482, %v2325, 0.0
  %v2503 = vadd.f32 %v2501, %v2502
  %v2504 = vsel %vm2482, %v2328, 0.0
  %v2505 = vadd.f32 %v2503, %v2504
  %v2506 = vsel %vm2482, %v2333, 0.0
  %v2507 = vadd.f32 %v2505, %v2506
  %v2508 = vsel %vm2482, %v2336, 0.0
  %v2509 = vadd.f32 %v2507, %v2508
  %v2510 = vsel %vm2482, %v2341, 0.0
  %v2511 = vadd.f32 %v2509, %v2510
  %v2512 = vsel %vm2482, %v2344, 0.0
  %v2513 = vadd.f32 %v2511, %v2512
  %v2514 = vsel %vm2482, %v2349, 0.0
  %v2515 = vadd.f32 %v2513, %v2514
  %v2516 = vsel %vm2482, %v2352, 0.0
  %v2517 = vadd.f32 %v2515, %v2516
  %v2518 = vsel %vm2482, %v2357, 0.0
  %v2519 = vadd.f32 %v2517, %v2518
  %v2520 = vsel %vm2482, %v2360, 0.0
  %v2521 = vadd.f32 %v2519, %v2520
  %v2522 = vsel %vm2482, %v2365, 0.0
  %v2523 = vadd.f32 %v2521, %v2522
  %v2524 = vsel %vm2482, %v2368, 0.0
  %v2525 = vadd.f32 %v2523, %v2524
  %v2526 = vsel %vm2482, %v2373, 0.0
  %v2527 = vadd.f32 %v2525, %v2526
  %v2528 = vsel %vm2482, %v2376, 0.0
  %v2529 = vadd.f32 %v2527, %v2528
  %v2530 = vsel %vm2482, %v2381, 0.0
  %v2531 = vadd.f32 %v2529, %v2530
  %v2532 = vsel %vm2482, %v2384, 0.0
  %v2533 = vadd.f32 %v2531, %v2532
  %v2534 = vsel %vm2482, %v2389, 0.0
  %v2535 = vadd.f32 %v2533, %v2534
  %v2536 = vsel %vm2482, %v2392, 0.0
  %v2537 = vadd.f32 %v2535, %v2536
  %v2538 = vsel %vm2482, %v2397, 0.0
  %v2539 = vadd.f32 %v2537, %v2538
  %v2540 = vsel %vm2482, %v2400, 0.0
  %v2541 = vadd.f32 %v2539, %v2540
  %v2542 = vsel %vm2482, %v2405, 0.0
  %v2543 = vadd.f32 %v2541, %v2542
  %v2544 = vsel %vm2482, %v2408, 0.0
  %v2545 = vadd.f32 %v2543, %v2544
  %v2546 = vsel %vm2482, %v2413, 0.0
  %v2547 = vadd.f32 %v2545, %v2546
  %v2548 = vsel %vm2482, %v2416, 0.0
  %v2549 = vadd.f32 %v2547, %v2548
  %v2550 = vsel %vm2482, %v2421, 0.0
  %v2551 = vadd.f32 %v2549, %v2550
  %v2552 = vsel %vm2482, %v2424, 0.0
  %v2553 = vadd.f32 %v2551, %v2552
  %v2554 = vsel %vm2482, %v2429, 0.0
  %v2555 = vadd.f32 %v2553, %v2554
  %v2556 = vsel %vm2482, %v2432, 0.0
  %v2557 = vadd.f32 %v2555, %v2556
  %v2558 = vsel %vm2482, %v2437, 0.0
  %v2559 = vadd.f32 %v2557, %v2558
  %v2560 = vsel %vm2482, %v2440, 0.0
  %v2561 = vadd.f32 %v2559, %v2560
  %v2562 = vsel %vm2482, %v2445, 0.0
  %v2563 = vadd.f32 %v2561, %v2562
  %v2564 = vsel %vm2482, %v2448, 0.0
  %v2565 = vadd.f32 %v2563, %v2564
  %v2566 = vsel %vm2482, %v2453, 0.0
  %v2567 = vadd.f32 %v2565, %v2566
  %v2568 = vsel %vm2482, %v2456, 0.0
  %v2569 = vadd.f32 %v2567, %v2568
  %v2570 = vsel %vm2482, %v2461, 0.0
  %v2571 = vadd.f32 %v2569, %v2570
  %v2572 = vsel %vm2482, %v2464, 0.0
  %v2573 = vadd.f32 %v2571, %v2572
  %v2574 = vsel %vm2482, %v2469, 0.0
  %v2575 = vadd.f32 %v2573, %v2574
  %v2576 = vsel %vm2482, %v2472, 0.0
  %v2577 = vadd.f32 %v2575, %v2576
  %v2578 = vsel %vm2482, %v2477, 0.0
  %v2579 = vadd.f32 %v2577, %v2578
  %v2580 = vrot.slane %v2579, 4
  %v2581 = vadd.f32 %v2579, %v2580
  %v2582 = vrot.slane %v2581, 2
  %v2583 = vadd.f32 %v2581, %v2582
  %v2584 = vrot.slane %v2583, 1
  %v2585 = vadd.f32 %v2583, %v2584
  %v2586 = vmul.f32 %v2285, %v2285
  %v2587 = vmul.f32 %v2288, %v2288
  %v2588 = vmul.f32 %v2293, %v2293
  %v2589 = vmul.f32 %v2296, %v2296
  %v2590 = vmul.f32 %v2301, %v2301
  %v2591 = vmul.f32 %v2304, %v2304
  %v2592 = vmul.f32 %v2309, %v2309
  %v2593 = vmul.f32 %v2312, %v2312
  %v2594 = vmul.f32 %v2317, %v2317
  %v2595 = vmul.f32 %v2320, %v2320
  %v2596 = vmul.f32 %v2325, %v2325
  %v2597 = vmul.f32 %v2328, %v2328
  %v2598 = vmul.f32 %v2333, %v2333
  %v2599 = vmul.f32 %v2336, %v2336
  %v2600 = vmul.f32 %v2341, %v2341
  %v2601 = vmul.f32 %v2344, %v2344
  %v2602 = vmul.f32 %v2349, %v2349
  %v2603 = vmul.f32 %v2352, %v2352
  %v2604 = vmul.f32 %v2357, %v2357
  %v2605 = vmul.f32 %v2360, %v2360
  %v2606 = vmul.f32 %v2365, %v2365
  %v2607 = vmul.f32 %v2368, %v2368
  %v2608 = vmul.f32 %v2373, %v2373
  %v2609 = vmul.f32 %v2376, %v2376
  %v2610 = vmul.f32 %v2381, %v2381
  %v2611 = vmul.f32 %v2384, %v2384
  %v2612 = vmul.f32 %v2389, %v2389
  %v2613 = vmul.f32 %v2392, %v2392
  %v2614 = vmul.f32 %v2397, %v2397
  %v2615 = vmul.f32 %v2400, %v2400
  %v2616 = vmul.f32 %v2405, %v2405
  %v2617 = vmul.f32 %v2408, %v2408
  %v2618 = vmul.f32 %v2413, %v2413
  %v2619 = vmul.f32 %v2416, %v2416
  %v2620 = vmul.f32 %v2421, %v2421
  %v2621 = vmul.f32 %v2424, %v2424
  %v2622 = vmul.f32 %v2429, %v2429
  %v2623 = vmul.f32 %v2432, %v2432
  %v2624 = vmul.f32 %v2437, %v2437
  %v2625 = vmul.f32 %v2440, %v2440
  %v2626 = vmul.f32 %v2445, %v2445
  %v2627 = vmul.f32 %v2448, %v2448
  %v2628 = vmul.f32 %v2453, %v2453
  %v2629 = vmul.f32 %v2456, %v2456
  %v2630 = vmul.f32 %v2461, %v2461
  %v2631 = vmul.f32 %v2464, %v2464
  %v2632 = vmul.f32 %v2469, %v2469
  %v2633 = vmul.f32 %v2472, %v2472
  %v2634 = vmul.f32 %v2477, %v2477
  %v2635 = vsel %vm2482, %v2586, 0.0
  %v2636 = vsel %vm2482, %v2587, 0.0
  %v2637 = vadd.f32 %v2635, %v2636
  %v2638 = vsel %vm2482, %v2588, 0.0
  %v2639 = vadd.f32 %v2637, %v2638
  %v2640 = vsel %vm2482, %v2589, 0.0
  %v2641 = vadd.f32 %v2639, %v2640
  %v2642 = vsel %vm2482, %v2590, 0.0
  %v2643 = vadd.f32 %v2641, %v2642
  %v2644 = vsel %vm2482, %v2591, 0.0
  %v2645 = vadd.f32 %v2643, %v2644
  %v2646 = vsel %vm2482, %v2592, 0.0
  %v2647 = vadd.f32 %v2645, %v2646
  %v2648 = vsel %vm2482, %v2593, 0.0
  %v2649 = vadd.f32 %v2647, %v2648
  %v2650 = vsel %vm2482, %v2594, 0.0
  %v2651 = vadd.f32 %v2649, %v2650
  %v2652 = vsel %vm2482, %v2595, 0.0
  %v2653 = vadd.f32 %v2651, %v2652
  %v2654 = vsel %vm2482, %v2596, 0.0
  %v2655 = vadd.f32 %v2653, %v2654
  %v2656 = vsel %vm2482, %v2597, 0.0
  %v2657 = vadd.f32 %v2655, %v2656
  %v2658 = vsel %vm2482, %v2598, 0.0
  %v2659 = vadd.f32 %v2657, %v2658
  %v2660 = vsel %vm2482, %v2599, 0.0
  %v2661 = vadd.f32 %v2659, %v2660
  %v2662 = vsel %vm2482, %v2600, 0.0
  %v2663 = vadd.f32 %v2661, %v2662
  %v2664 = vsel %vm2482, %v2601, 0.0
  %v2665 = vadd.f32 %v2663, %v2664
  %v2666 = vsel %vm2482, %v2602, 0.0
  %v2667 = vadd.f32 %v2665, %v2666
  %v2668 = vsel %vm2482, %v2603, 0.0
  %v2669 = vadd.f32 %v2667, %v2668
  %v2670 = vsel %vm2482, %v2604, 0.0
  %v2671 = vadd.f32 %v2669, %v2670
  %v2672 = vsel %vm2482, %v2605, 0.0
  %v2673 = vadd.f32 %v2671, %v2672
  %v2674 = vsel %vm2482, %v2606, 0.0
  %v2675 = vadd.f32 %v2673, %v2674
  %v2676 = vsel %vm2482, %v2607, 0.0
  %v2677 = vadd.f32 %v2675, %v2676
  %v2678 = vsel %vm2482, %v2608, 0.0
  %v2679 = vadd.f32 %v2677, %v2678
  %v2680 = vsel %vm2482, %v2609, 0.0
  %v2681 = vadd.f32 %v2679, %v2680
  %v2682 = vsel %vm2482, %v2610, 0.0
  %v2683 = vadd.f32 %v2681, %v2682
  %v2684 = vsel %vm2482, %v2611, 0.0
  %v2685 = vadd.f32 %v2683, %v2684
  %v2686 = vsel %vm2482, %v2612, 0.0
  %v2687 = vadd.f32 %v2685, %v2686
  %v2688 = vsel %vm2482, %v2613, 0.0
  %v2689 = vadd.f32 %v2687, %v2688
  %v2690 = vsel %vm2482, %v2614, 0.0
  %v2691 = vadd.f32 %v2689, %v2690
  %v2692 = vsel %vm2482, %v2615, 0.0
  %v2693 = vadd.f32 %v2691, %v2692
  %v2694 = vsel %vm2482, %v2616, 0.0
  %v2695 = vadd.f32 %v2693, %v2694
  %v2696 = vsel %vm2482, %v2617, 0.0
  %v2697 = vadd.f32 %v2695, %v2696
  %v2698 = vsel %vm2482, %v2618, 0.0
  %v2699 = vadd.f32 %v2697, %v2698
  %v2700 = vsel %vm2482, %v2619, 0.0
  %v2701 = vadd.f32 %v2699, %v2700
  %v2702 = vsel %vm2482, %v2620, 0.0
  %v2703 = vadd.f32 %v2701, %v2702
  %v2704 = vsel %vm2482, %v2621, 0.0
  %v2705 = vadd.f32 %v2703, %v2704
  %v2706 = vsel %vm2482, %v2622, 0.0
  %v2707 = vadd.f32 %v2705, %v2706
  %v2708 = vsel %vm2482, %v2623, 0.0
  %v2709 = vadd.f32 %v2707, %v2708
  %v2710 = vsel %vm2482, %v2624, 0.0
  %v2711 = vadd.f32 %v2709, %v2710
  %v2712 = vsel %vm2482, %v2625, 0.0
  %v2713 = vadd.f32 %v2711, %v2712
  %v2714 = vsel %vm2482, %v2626, 0.0
  %v2715 = vadd.f32 %v2713, %v2714
  %v2716 = vsel %vm2482, %v2627, 0.0
  %v2717 = vadd.f32 %v2715, %v2716
  %v2718 = vsel %vm2482, %v2628, 0.0
  %v2719 = vadd.f32 %v2717, %v2718
  %v2720 = vsel %vm2482, %v2629, 0.0
  %v2721 = vadd.f32 %v2719, %v2720
  %v2722 = vsel %vm2482, %v2630, 0.0
  %v2723 = vadd.f32 %v2721, %v2722
  %v2724 = vsel %vm2482, %v2631, 0.0
  %v2725 = vadd.f32 %v2723, %v2724
  %v2726 = vsel %vm2482, %v2632, 0.0
  %v2727 = vadd.f32 %v2725, %v2726
  %v2728 = vsel %vm2482, %v2633, 0.0
  %v2729 = vadd.f32 %v2727, %v2728
  %v2730 = vsel %vm2482, %v2634, 0.0
  %v2731 = vadd.f32 %v2729, %v2730
  %v2732 = vrot.slane %v2731, 4
  %v2733 = vadd.f32 %v2731, %v2732
  %v2734 = vrot.slane %v2733, 2
  %v2735 = vadd.f32 %v2733, %v2734
  %v2736 = vrot.slane %v2735, 1
  %v2737 = vadd.f32 %v2735, %v2736
  %v2738 = vmul.f32 %v2585, 0.0025510204
  %v2739 = vmul.f32 %v2737, 0.0025510204
  %v2740 = vmul.f32 %v2738, %v2738
  %v2741 = vsub.f32 %v2739, %v2740
  %v2742 = vmax.f32 %v2741, 0.0
  %v2743 = vld [vmem:[%s2] sm:$0x1]
  %v2744 = vadd.f32 %v2742, 1e-05
  %v2745 = vrsqrt.pop %v2744
  %v2746 = vmul.f32 %v2743, %v2745
  %v2747 = vld [vmem:[%s3] sm:$0x1]
  %v2748 = vmul.f32 %v2738, %v2746
  %v2749 = vsub.f32 %v2747, %v2748
  %v2751 = vlaneseq
  %v2752 = vshrl.u32 %v2751, 7
  %v2753 = vsub.s32 0, %v2752
  %v2754 = vrot.slane %v2746, %v2753
  %v2756 = vmul.f32 %v2285, %v2754
  %v2757 = vmul.f32 %v2288, %v2754
  %v2758 = vmul.f32 %v2293, %v2754
  %v2759 = vmul.f32 %v2296, %v2754
  %v2760 = vmul.f32 %v2301, %v2754
  %v2761 = vmul.f32 %v2304, %v2754
  %v2762 = vmul.f32 %v2309, %v2754
  %v2763 = vmul.f32 %v2312, %v2754
  %v2764 = vmul.f32 %v2317, %v2754
  %v2765 = vmul.f32 %v2320, %v2754
  %v2766 = vmul.f32 %v2325, %v2754
  %v2767 = vmul.f32 %v2328, %v2754
  %v2768 = vmul.f32 %v2333, %v2754
  %v2769 = vmul.f32 %v2336, %v2754
  %v2770 = vmul.f32 %v2341, %v2754
  %v2771 = vmul.f32 %v2344, %v2754
  %v2772 = vmul.f32 %v2349, %v2754
  %v2773 = vmul.f32 %v2352, %v2754
  %v2774 = vmul.f32 %v2357, %v2754
  %v2775 = vmul.f32 %v2360, %v2754
  %v2776 = vmul.f32 %v2365, %v2754
  %v2777 = vmul.f32 %v2368, %v2754
  %v2778 = vmul.f32 %v2373, %v2754
  %v2779 = vmul.f32 %v2376, %v2754
  %v2780 = vmul.f32 %v2381, %v2754
  %v2781 = vmul.f32 %v2384, %v2754
  %v2782 = vmul.f32 %v2389, %v2754
  %v2783 = vmul.f32 %v2392, %v2754
  %v2784 = vmul.f32 %v2397, %v2754
  %v2785 = vmul.f32 %v2400, %v2754
  %v2786 = vmul.f32 %v2405, %v2754
  %v2787 = vmul.f32 %v2408, %v2754
  %v2788 = vmul.f32 %v2413, %v2754
  %v2789 = vmul.f32 %v2416, %v2754
  %v2790 = vmul.f32 %v2421, %v2754
  %v2791 = vmul.f32 %v2424, %v2754
  %v2792 = vmul.f32 %v2429, %v2754
  %v2793 = vmul.f32 %v2432, %v2754
  %v2794 = vmul.f32 %v2437, %v2754
  %v2795 = vmul.f32 %v2440, %v2754
  %v2796 = vmul.f32 %v2445, %v2754
  %v2797 = vmul.f32 %v2448, %v2754
  %v2798 = vmul.f32 %v2453, %v2754
  %v2799 = vmul.f32 %v2456, %v2754
  %v2800 = vmul.f32 %v2461, %v2754
  %v2801 = vmul.f32 %v2464, %v2754
  %v2802 = vmul.f32 %v2469, %v2754
  %v2803 = vmul.f32 %v2472, %v2754
  %v2804 = vmul.f32 %v2477, %v2754
  %v2806 = vlaneseq
  %v2807 = vshrl.u32 %v2806, 7
  %v2808 = vsub.s32 0, %v2807
  %v2809 = vrot.slane %v2749, %v2808
  %v2811 = vadd.f32 %v2756, %v2809
  %v2812 = vadd.f32 %v2757, %v2809
  %v2813 = vadd.f32 %v2758, %v2809
  %v2814 = vadd.f32 %v2759, %v2809
  %v2815 = vadd.f32 %v2760, %v2809
  %v2816 = vadd.f32 %v2761, %v2809
  %v2817 = vadd.f32 %v2762, %v2809
  %v2818 = vadd.f32 %v2763, %v2809
  %v2819 = vadd.f32 %v2764, %v2809
  %v2820 = vadd.f32 %v2765, %v2809
  %v2821 = vadd.f32 %v2766, %v2809
  %v2822 = vadd.f32 %v2767, %v2809
  %v2823 = vadd.f32 %v2768, %v2809
  %v2824 = vadd.f32 %v2769, %v2809
  %v2825 = vadd.f32 %v2770, %v2809
  %v2826 = vadd.f32 %v2771, %v2809
  %v2827 = vadd.f32 %v2772, %v2809
  %v2828 = vadd.f32 %v2773, %v2809
  %v2829 = vadd.f32 %v2774, %v2809
  %v2830 = vadd.f32 %v2775, %v2809
  %v2831 = vadd.f32 %v2776, %v2809
  %v2832 = vadd.f32 %v2777, %v2809
  %v2833 = vadd.f32 %v2778, %v2809
  %v2834 = vadd.f32 %v2779, %v2809
  %v2835 = vadd.f32 %v2780, %v2809
  %v2836 = vadd.f32 %v2781, %v2809
  %v2837 = vadd.f32 %v2782, %v2809
  %v2838 = vadd.f32 %v2783, %v2809
  %v2839 = vadd.f32 %v2784, %v2809
  %v2840 = vadd.f32 %v2785, %v2809
  %v2841 = vadd.f32 %v2786, %v2809
  %v2842 = vadd.f32 %v2787, %v2809
  %v2843 = vadd.f32 %v2788, %v2809
  %v2844 = vadd.f32 %v2789, %v2809
  %v2845 = vadd.f32 %v2790, %v2809
  %v2846 = vadd.f32 %v2791, %v2809
  %v2847 = vadd.f32 %v2792, %v2809
  %v2848 = vadd.f32 %v2793, %v2809
  %v2849 = vadd.f32 %v2794, %v2809
  %v2850 = vadd.f32 %v2795, %v2809
  %v2851 = vadd.f32 %v2796, %v2809
  %v2852 = vadd.f32 %v2797, %v2809
  %v2853 = vadd.f32 %v2798, %v2809
  %v2854 = vadd.f32 %v2799, %v2809
  %v2855 = vadd.f32 %v2800, %v2809
  %v2856 = vadd.f32 %v2801, %v2809
  %v2857 = vadd.f32 %v2802, %v2809
  %v2858 = vadd.f32 %v2803, %v2809
  %v2859 = vadd.f32 %v2804, %v2809
  %v2860 = vmax.f32 %v2811, 0.0
  %v2861 = vmax.f32 %v2812, 0.0
  %v2862 = vmax.f32 %v2813, 0.0
  %v2863 = vmax.f32 %v2814, 0.0
  %v2864 = vmax.f32 %v2815, 0.0
  %v2865 = vmax.f32 %v2816, 0.0
  %v2866 = vmax.f32 %v2817, 0.0
  %v2867 = vmax.f32 %v2818, 0.0
  %v2868 = vmax.f32 %v2819, 0.0
  %v2869 = vmax.f32 %v2820, 0.0
  %v2870 = vmax.f32 %v2821, 0.0
  %v2871 = vmax.f32 %v2822, 0.0
  %v2872 = vmax.f32 %v2823, 0.0
  %v2873 = vmax.f32 %v2824, 0.0
  %v2874 = vmax.f32 %v2825, 0.0
  %v2875 = vmax.f32 %v2826, 0.0
  %v2876 = vmax.f32 %v2827, 0.0
  %v2877 = vmax.f32 %v2828, 0.0
  %v2878 = vmax.f32 %v2829, 0.0
  %v2879 = vmax.f32 %v2830, 0.0
  %v2880 = vmax.f32 %v2831, 0.0
  %v2881 = vmax.f32 %v2832, 0.0
  %v2882 = vmax.f32 %v2833, 0.0
  %v2883 = vmax.f32 %v2834, 0.0
  %v2884 = vmax.f32 %v2835, 0.0
  %v2885 = vmax.f32 %v2836, 0.0
  %v2886 = vmax.f32 %v2837, 0.0
  %v2887 = vmax.f32 %v2838, 0.0
  %v2888 = vmax.f32 %v2839, 0.0
  %v2889 = vmax.f32 %v2840, 0.0
  %v2890 = vmax.f32 %v2841, 0.0
  %v2891 = vmax.f32 %v2842, 0.0
  %v2892 = vmax.f32 %v2843, 0.0
  %v2893 = vmax.f32 %v2844, 0.0
  %v2894 = vmax.f32 %v2845, 0.0
  %v2895 = vmax.f32 %v2846, 0.0
  %v2896 = vmax.f32 %v2847, 0.0
  %v2897 = vmax.f32 %v2848, 0.0
  %v2898 = vmax.f32 %v2849, 0.0
  %v2899 = vmax.f32 %v2850, 0.0
  %v2900 = vmax.f32 %v2851, 0.0
  %v2901 = vmax.f32 %v2852, 0.0
  %v2902 = vmax.f32 %v2853, 0.0
  %v2903 = vmax.f32 %v2854, 0.0
  %v2904 = vmax.f32 %v2855, 0.0
  %v2905 = vmax.f32 %v2856, 0.0
  %v2906 = vmax.f32 %v2857, 0.0
  %v2907 = vmax.f32 %v2858, 0.0
  %v2908 = vmax.f32 %v2859, 0.0
  %2909 = vst.msk [vmem:[%s4] sm:$0xff] %vm2482, %v2860
  %2910 = vst.msk [vmem:[%s4 + $0x8] sm:$0xff] %vm2482, %v2861
  %2911 = vst.msk [vmem:[%s4 + $0x10] sm:$0xff] %vm2482, %v2862
  %2912 = vst.msk [vmem:[%s4 + $0x18] sm:$0xff] %vm2482, %v2863
  %2913 = vst.msk [vmem:[%s4 + $0x20] sm:$0xff] %vm2482, %v2864
  %2914 = vst.msk [vmem:[%s4 + $0x28] sm:$0xff] %vm2482, %v2865
  %2915 = vst.msk [vmem:[%s4 + $0x30] sm:$0xff] %vm2482, %v2866
  %2916 = vst.msk [vmem:[%s4 + $0x38] sm:$0xff] %vm2482, %v2867
  %2917 = vst.msk [vmem:[%s4 + $0x40] sm:$0xff] %vm2482, %v2868
  %2918 = vst.msk [vmem:[%s4 + $0x48] sm:$0xff] %vm2482, %v2869
  %2919 = vst.msk [vmem:[%s4 + $0x50] sm:$0xff] %vm2482, %v2870
  %2920 = vst.msk [vmem:[%s4 + $0x58] sm:$0xff] %vm2482, %v2871
  %2921 = vst.msk [vmem:[%s4 + $0x60] sm:$0xff] %vm2482, %v2872
  %2922 = vst.msk [vmem:[%s4 + $0x68] sm:$0xff] %vm2482, %v2873
  %2923 = vst.msk [vmem:[%s4 + $0x70] sm:$0xff] %vm2482, %v2874
  %2924 = vst.msk [vmem:[%s4 + $0x78] sm:$0xff] %vm2482, %v2875
  %2925 = vst.msk [vmem:[%s4 + $0x80] sm:$0xff] %vm2482, %v2876
  %2926 = vst.msk [vmem:[%s4 + $0x88] sm:$0xff] %vm2482, %v2877
  %2927 = vst.msk [vmem:[%s4 + $0x90] sm:$0xff] %vm2482, %v2878
  %2928 = vst.msk [vmem:[%s4 + $0x98] sm:$0xff] %vm2482, %v2879
  %2929 = vst.msk [vmem:[%s4 + $0xa0] sm:$0xff] %vm2482, %v2880
  %2930 = vst.msk [vmem:[%s4 + $0xa8] sm:$0xff] %vm2482, %v2881
  %2931 = vst.msk [vmem:[%s4 + $0xb0] sm:$0xff] %vm2482, %v2882
  %2932 = vst.msk [vmem:[%s4 + $0xb8] sm:$0xff] %vm2482, %v2883
  %2933 = vst.msk [vmem:[%s4 + $0xc0] sm:$0xff] %vm2482, %v2884
  %2934 = vst.msk [vmem:[%s4 + $0xc8] sm:$0xff] %vm2482, %v2885
  %2935 = vst.msk [vmem:[%s4 + $0xd0] sm:$0xff] %vm2482, %v2886
  %2936 = vst.msk [vmem:[%s4 + $0xd8] sm:$0xff] %vm2482, %v2887
  %2937 = vst.msk [vmem:[%s4 + $0xe0] sm:$0xff] %vm2482, %v2888
  %2938 = vst.msk [vmem:[%s4 + $0xe8] sm:$0xff] %vm2482, %v2889
  %2939 = vst.msk [vmem:[%s4 + $0xf0] sm:$0xff] %vm2482, %v2890
  %2940 = vst.msk [vmem:[%s4 + $0xf8] sm:$0xff] %vm2482, %v2891
  %2941 = vst.msk [vmem:[%s4 + $0x100] sm:$0xff] %vm2482, %v2892
  %2942 = vst.msk [vmem:[%s4 + $0x108] sm:$0xff] %vm2482, %v2893
  %2943 = vst.msk [vmem:[%s4 + $0x110] sm:$0xff] %vm2482, %v2894
  %2944 = vst.msk [vmem:[%s4 + $0x118] sm:$0xff] %vm2482, %v2895
  %2945 = vst.msk [vmem:[%s4 + $0x120] sm:$0xff] %vm2482, %v2896
  %2946 = vst.msk [vmem:[%s4 + $0x128] sm:$0xff] %vm2482, %v2897
  %2947 = vst.msk [vmem:[%s4 + $0x130] sm:$0xff] %vm2482, %v2898
  %2948 = vst.msk [vmem:[%s4 + $0x138] sm:$0xff] %vm2482, %v2899
  %2949 = vst.msk [vmem:[%s4 + $0x140] sm:$0xff] %vm2482, %v2900
  %2950 = vst.msk [vmem:[%s4 + $0x148] sm:$0xff] %vm2482, %v2901
  %2951 = vst.msk [vmem:[%s4 + $0x150] sm:$0xff] %vm2482, %v2902
  %2952 = vst.msk [vmem:[%s4 + $0x158] sm:$0xff] %vm2482, %v2903
  %2953 = vst.msk [vmem:[%s4 + $0x160] sm:$0xff] %vm2482, %v2904
  %2954 = vst.msk [vmem:[%s4 + $0x168] sm:$0xff] %vm2482, %v2905
  %2955 = vst.msk [vmem:[%s4 + $0x170] sm:$0xff] %vm2482, %v2906
  %2956 = vst.msk [vmem:[%s4 + $0x178] sm:$0xff] %vm2482, %v2907
  %2957 = vst.msk [vmem:[%s4 + $0x180] sm:$0xff] %vm2482, %v2908
  %v2958 = vld [vmem:[%s4] sm:$0xff]
  %v2959 = vld [vmem:[%s4 + $0x8] sm:$0xff]
  %v2960 = vld [vmem:[%s4 + $0x10] sm:$0xff]
  %v2961 = vld [vmem:[%s4 + $0x18] sm:$0xff]
  %v2962 = vld [vmem:[%s4 + $0x20] sm:$0xff]
  %v2963 = vld [vmem:[%s4 + $0x28] sm:$0xff]
  %v2964 = vld [vmem:[%s4 + $0x30] sm:$0xff]
  %v2965 = vld [vmem:[%s4 + $0x38] sm:$0xff]
  %v2966 = vld [vmem:[%s4 + $0x40] sm:$0xff]
  %v2967 = vld [vmem:[%s4 + $0x48] sm:$0xff]
  %v2968 = vld [vmem:[%s4 + $0x50] sm:$0xff]
  %v2969 = vld [vmem:[%s4 + $0x58] sm:$0xff]
  %v2970 = vld [vmem:[%s4 + $0x60] sm:$0xff]
  %v2971 = vld [vmem:[%s4 + $0x68] sm:$0xff]
  %v2972 = vld [vmem:[%s4 + $0x70] sm:$0xff]
  %v2973 = vld [vmem:[%s4 + $0x78] sm:$0xff]
  %v2974 = vld [vmem:[%s4 + $0x80] sm:$0xff]
  %v2975 = vld [vmem:[%s4 + $0x88] sm:$0xff]
  %v2976 = vld [vmem:[%s4 + $0x90] sm:$0xff]
  %v2977 = vld [vmem:[%s4 + $0x98] sm:$0xff]
  %v2978 = vld [vmem:[%s4 + $0xa0] sm:$0xff]
  %v2979 = vld [vmem:[%s4 + $0xa8] sm:$0xff]
  %v2980 = vld [vmem:[%s4 + $0xb0] sm:$0xff]
  %v2981 = vld [vmem:[%s4 + $0xb8] sm:$0xff]
  %v2982 = vld [vmem:[%s4 + $0xc0] sm:$0xff]
  %v2983 = vld [vmem:[%s4 + $0xc8] sm:$0xff]
  %v2984 = vld [vmem:[%s4 + $0xd0] sm:$0xff]
  %v2985 = vld [vmem:[%s4 + $0xd8] sm:$0xff]
  %v2986 = vld [vmem:[%s4 + $0xe0] sm:$0xff]
  %v2987 = vld [vmem:[%s4 + $0xe8] sm:$0xff]
  %v2988 = vld [vmem:[%s4 + $0xf0] sm:$0xff]
  %v2989 = vld [vmem:[%s4 + $0xf8] sm:$0xff]
  %v2990 = vld [vmem:[%s4 + $0x100] sm:$0xff]
  %v2991 = vld [vmem:[%s4 + $0x108] sm:$0xff]
  %v2992 = vld [vmem:[%s4 + $0x110] sm:$0xff]
  %v2993 = vld [vmem:[%s4 + $0x118] sm:$0xff]
  %v2994 = vld [vmem:[%s4 + $0x120] sm:$0xff]
  %v2995 = vld [vmem:[%s4 + $0x128] sm:$0xff]
  %v2996 = vld [vmem:[%s4 + $0x130] sm:$0xff]
  %v2997 = vld [vmem:[%s4 + $0x138] sm:$0xff]
  %v2998 = vld [vmem:[%s4 + $0x140] sm:$0xff]
  %v2999 = vld [vmem:[%s4 + $0x148] sm:$0xff]
  %v3000 = vld [vmem:[%s4 + $0x150] sm:$0xff]
  %v3001 = vld [vmem:[%s4 + $0x158] sm:$0xff]
  %v3002 = vld [vmem:[%s4 + $0x160] sm:$0xff]
  %v3003 = vld [vmem:[%s4 + $0x168] sm:$0xff]
  %v3004 = vld [vmem:[%s4 + $0x170] sm:$0xff]
  %v3005 = vld [vmem:[%s4 + $0x178] sm:$0x1]
  %v3006 = vld [vmem:[%s4 + $0x1] sm:$0xff]
  %v3007 = vld [vmem:[%s4 + $0x9] sm:$0xff]
  %v3008 = vld [vmem:[%s4 + $0x11] sm:$0xff]
  %v3009 = vld [vmem:[%s4 + $0x19] sm:$0xff]
  %v3010 = vld [vmem:[%s4 + $0x21] sm:$0xff]
  %v3011 = vld [vmem:[%s4 + $0x29] sm:$0xff]
  %v3012 = vld [vmem:[%s4 + $0x31] sm:$0xff]
  %v3013 = vld [vmem:[%s4 + $0x39] sm:$0xff]
  %v3014 = vld [vmem:[%s4 + $0x41] sm:$0xff]
  %v3015 = vld [vmem:[%s4 + $0x49] sm:$0xff]
  %v3016 = vld [vmem:[%s4 + $0x51] sm:$0xff]
  %v3017 = vld [vmem:[%s4 + $0x59] sm:$0xff]
  %v3018 = vld [vmem:[%s4 + $0x61] sm:$0xff]
  %v3019 = vld [vmem:[%s4 + $0x69] sm:$0xff]
  %v3020 = vld [vmem:[%s4 + $0x71] sm:$0xff]
  %v3021 = vld [vmem:[%s4 + $0x79] sm:$0xff]
  %v3022 = vld [vmem:[%s4 + $0x81] sm:$0xff]
  %v3023 = vld [vmem:[%s4 + $0x89] sm:$0xff]
  %v3024 = vld [vmem:[%s4 + $0x91] sm:$0xff]
  %v3025 = vld [vmem:[%s4 + $0x99] sm:$0xff]
  %v3026 = vld [vmem:[%s4 + $0xa1] sm:$0xff]
  %v3027 = vld [vmem:[%s4 + $0xa9] sm:$0xff]
  %v3028 = vld [vmem:[%s4 + $0xb1] sm:$0xff]
  %v3029 = vld [vmem:[%s4 + $0xb9] sm:$0xff]
  %v3030 = vld [vmem:[%s4 + $0xc1] sm:$0xff]
  %v3031 = vld [vmem:[%s4 + $0xc9] sm:$0xff]
  %v3032 = vld [vmem:[%s4 + $0xd1] sm:$0xff]
  %v3033 = vld [vmem:[%s4 + $0xd9] sm:$0xff]
  %v3034 = vld [vmem:[%s4 + $0xe1] sm:$0xff]
  %v3035 = vld [vmem:[%s4 + $0xe9] sm:$0xff]
  %v3036 = vld [vmem:[%s4 + $0xf1] sm:$0xff]
  %v3037 = vld [vmem:[%s4 + $0xf9] sm:$0xff]
  %v3038 = vld [vmem:[%s4 + $0x101] sm:$0xff]
  %v3039 = vld [vmem:[%s4 + $0x109] sm:$0xff]
  %v3040 = vld [vmem:[%s4 + $0x111] sm:$0xff]
  %v3041 = vld [vmem:[%s4 + $0x119] sm:$0xff]
  %v3042 = vld [vmem:[%s4 + $0x121] sm:$0xff]
  %v3043 = vld [vmem:[%s4 + $0x129] sm:$0xff]
  %v3044 = vld [vmem:[%s4 + $0x131] sm:$0xff]
  %v3045 = vld [vmem:[%s4 + $0x139] sm:$0xff]
  %v3046 = vld [vmem:[%s4 + $0x141] sm:$0xff]
  %v3047 = vld [vmem:[%s4 + $0x149] sm:$0xff]
  %v3048 = vld [vmem:[%s4 + $0x151] sm:$0xff]
  %v3049 = vld [vmem:[%s4 + $0x159] sm:$0xff]
  %v3050 = vld [vmem:[%s4 + $0x161] sm:$0xff]
  %v3051 = vld [vmem:[%s4 + $0x169] sm:$0xff]
  %v3052 = vld [vmem:[%s4 + $0x171] sm:$0xff]
  %v3053 = vld [vmem:[%s4 + $0x179] sm:$0x1]
  %v3054 = vmax.f32 %v2958, %v3006
  %v3055 = vmax.f32 %v2959, %v3007
  %v3056 = vmax.f32 %v2960, %v3008
  %v3057 = vmax.f32 %v2961, %v3009
  %v3058 = vmax.f32 %v2962, %v3010
  %v3059 = vmax.f32 %v2963, %v3011
  %v3060 = vmax.f32 %v2964, %v3012
  %v3061 = vmax.f32 %v2965, %v3013
  %v3062 = vmax.f32 %v2966, %v3014
  %v3063 = vmax.f32 %v2967, %v3015
  %v3064 = vmax.f32 %v2968, %v3016
  %v3065 = vmax.f32 %v2969, %v3017
  %v3066 = vmax.f32 %v2970, %v3018
  %v3067 = vmax.f32 %v2971, %v3019
  %v3068 = vmax.f32 %v2972, %v3020
  %v3069 = vmax.f32 %v2973, %v3021
  %v3070 = vmax.f32 %v2974, %v3022
  %v3071 = vmax.f32 %v2975, %v3023
  %v3072 = vmax.f32 %v2976, %v3024
  %v3073 = vmax.f32 %v2977, %v3025
  %v3074 = vmax.f32 %v2978, %v3026
  %v3075 = vmax.f32 %v2979, %v3027
  %v3076 = vmax.f32 %v2980, %v3028
  %v3077 = vmax.f32 %v2981, %v3029
  %v3078 = vmax.f32 %v2982, %v3030
  %v3079 = vmax.f32 %v2983, %v3031
  %v3080 = vmax.f32 %v2984, %v3032
  %v3081 = vmax.f32 %v2985, %v3033
  %v3082 = vmax.f32 %v2986, %v3034
  %v3083 = vmax.f32 %v2987, %v3035
  %v3084 = vmax.f32 %v2988, %v3036
  %v3085 = vmax.f32 %v2989, %v3037
  %v3086 = vmax.f32 %v2990, %v3038
  %v3087 = vmax.f32 %v2991, %v3039
  %v3088 = vmax.f32 %v2992, %v3040
  %v3089 = vmax.f32 %v2993, %v3041
  %v3090 = vmax.f32 %v2994, %v3042
  %v3091 = vmax.f32 %v2995, %v3043
  %v3092 = vmax.f32 %v2996, %v3044
  %v3093 = vmax.f32 %v2997, %v3045
  %v3094 = vmax.f32 %v2998, %v3046
  %v3095 = vmax.f32 %v2999, %v3047
  %v3096 = vmax.f32 %v3000, %v3048
  %v3097 = vmax.f32 %v3001, %v3049
  %v3098 = vmax.f32 %v3002, %v3050
  %v3099 = vmax.f32 %v3003, %v3051
  %v3100 = vmax.f32 %v3004, %v3052
  %v3101 = vmax.f32 %v3005, %v3053
  %v3102 = vld [vmem:[%s4 + $0xe] sm:$0xff]
  %v3103 = vld [vmem:[%s4 + $0x16] sm:$0xff]
  %v3104 = vld [vmem:[%s4 + $0x1e] sm:$0xff]
  %v3105 = vld [vmem:[%s4 + $0x26] sm:$0xff]
  %v3106 = vld [vmem:[%s4 + $0x2e] sm:$0xff]
  %v3107 = vld [vmem:[%s4 + $0x36] sm:$0xff]
  %v3108 = vld [vmem:[%s4 + $0x3e] sm:$0xff]
  %v3109 = vld [vmem:[%s4 + $0x46] sm:$0xff]
  %v3110 = vld [vmem:[%s4 + $0x4e] sm:$0xff]
  %v3111 = vld [vmem:[%s4 + $0x56] sm:$0xff]
  %v3112 = vld [vmem:[%s4 + $0x5e] sm:$0xff]
  %v3113 = vld [vmem:[%s4 + $0x66] sm:$0xff]
  %v3114 = vld [vmem:[%s4 + $0x6e] sm:$0xff]
  %v3115 = vld [vmem:[%s4 + $0x76] sm:$0xff]
  %v3116 = vld [vmem:[%s4 + $0x7e] sm:$0xff]
  %v3117 = vld [vmem:[%s4 + $0x86] sm:$0xff]
  %v3118 = vld [vmem:[%s4 + $0x8e] sm:$0xff]
  %v3119 = vld [vmem:[%s4 + $0x96] sm:$0xff]
  %v3120 = vld [vmem:[%s4 + $0x9e] sm:$0xff]
  %v3121 = vld [vmem:[%s4 + $0xa6] sm:$0xff]
  %v3122 = vld [vmem:[%s4 + $0xae] sm:$0xff]
  %v3123 = vld [vmem:[%s4 + $0xb6] sm:$0xff]
  %v3124 = vld [vmem:[%s4 + $0xbe] sm:$0xff]
  %v3125 = vld [vmem:[%s4 + $0xc6] sm:$0xff]
  %v3126 = vld [vmem:[%s4 + $0xce] sm:$0xff]
  %v3127 = vld [vmem:[%s4 + $0xd6] sm:$0xff]
  %v3128 = vld [vmem:[%s4 + $0xde] sm:$0xff]
  %v3129 = vld [vmem:[%s4 + $0xe6] sm:$0xff]
  %v3130 = vld [vmem:[%s4 + $0xee] sm:$0xff]
  %v3131 = vld [vmem:[%s4 + $0xf6] sm:$0xff]
  %v3132 = vld [vmem:[%s4 + $0xfe] sm:$0xff]
  %v3133 = vld [vmem:[%s4 + $0x106] sm:$0xff]
  %v3134 = vld [vmem:[%s4 + $0x10e] sm:$0xff]
  %v3135 = vld [vmem:[%s4 + $0x116] sm:$0xff]
  %v3136 = vld [vmem:[%s4 + $0x11e] sm:$0xff]
  %v3137 = vld [vmem:[%s4 + $0x126] sm:$0xff]
  %v3138 = vld [vmem:[%s4 + $0x12e] sm:$0xff]
  %v3139 = vld [vmem:[%s4 + $0x136] sm:$0xff]
  %v3140 = vld [vmem:[%s4 + $0x13e] sm:$0xff]
  %v3141 = vld [vmem:[%s4 + $0x146] sm:$0xff]
  %v3142 = vld [vmem:[%s4 + $0x14e] sm:$0xff]
  %v3143 = vld [vmem:[%s4 + $0x156] sm:$0xff]
  %v3144 = vld [vmem:[%s4 + $0x15e] sm:$0xff]
  %v3145 = vld [vmem:[%s4 + $0x166] sm:$0xff]
  %v3146 = vld [vmem:[%s4 + $0x16e] sm:$0xff]
  %v3147 = vld [vmem:[%s4 + $0x176] sm:$0xff]
  %v3148 = vld [vmem:[%s4 + $0x17e] sm:$0xff]
  %v3149 = vld [vmem:[%s4 + $0x186] sm:$0x1]
  %v3150 = vld [vmem:[%s4 + $0xf] sm:$0xff]
  %v3151 = vld [vmem:[%s4 + $0x17] sm:$0xff]
  %v3152 = vld [vmem:[%s4 + $0x1f] sm:$0xff]
  %v3153 = vld [vmem:[%s4 + $0x27] sm:$0xff]
  %v3154 = vld [vmem:[%s4 + $0x2f] sm:$0xff]
  %v3155 = vld [vmem:[%s4 + $0x37] sm:$0xff]
  %v3156 = vld [vmem:[%s4 + $0x3f] sm:$0xff]
  %v3157 = vld [vmem:[%s4 + $0x47] sm:$0xff]
  %v3158 = vld [vmem:[%s4 + $0x4f] sm:$0xff]
  %v3159 = vld [vmem:[%s4 + $0x57] sm:$0xff]
  %v3160 = vld [vmem:[%s4 + $0x5f] sm:$0xff]
  %v3161 = vld [vmem:[%s4 + $0x67] sm:$0xff]
  %v3162 = vld [vmem:[%s4 + $0x6f] sm:$0xff]
  %v3163 = vld [vmem:[%s4 + $0x77] sm:$0xff]
  %v3164 = vld [vmem:[%s4 + $0x7f] sm:$0xff]
  %v3165 = vld [vmem:[%s4 + $0x87] sm:$0xff]
  %v3166 = vld [vmem:[%s4 + $0x8f] sm:$0xff]
  %v3167 = vld [vmem:[%s4 + $0x97] sm:$0xff]
  %v3168 = vld [vmem:[%s4 + $0x9f] sm:$0xff]
  %v3169 = vld [vmem:[%s4 + $0xa7] sm:$0xff]
  %v3170 = vld [vmem:[%s4 + $0xaf] sm:$0xff]
  %v3171 = vld [vmem:[%s4 + $0xb7] sm:$0xff]
  %v3172 = vld [vmem:[%s4 + $0xbf] sm:$0xff]
  %v3173 = vld [vmem:[%s4 + $0xc7] sm:$0xff]
  %v3174 = vld [vmem:[%s4 + $0xcf] sm:$0xff]
  %v3175 = vld [vmem:[%s4 + $0xd7] sm:$0xff]
  %v3176 = vld [vmem:[%s4 + $0xdf] sm:$0xff]
  %v3177 = vld [vmem:[%s4 + $0xe7] sm:$0xff]
  %v3178 = vld [vmem:[%s4 + $0xef] sm:$0xff]
  %v3179 = vld [vmem:[%s4 + $0xf7] sm:$0xff]
  %v3180 = vld [vmem:[%s4 + $0xff] sm:$0xff]
  %v3181 = vld [vmem:[%s4 + $0x107] sm:$0xff]
  %v3182 = vld [vmem:[%s4 + $0x10f] sm:$0xff]
  %v3183 = vld [vmem:[%s4 + $0x117] sm:$0xff]
  %v3184 = vld [vmem:[%s4 + $0x11f] sm:$0xff]
  %v3185 = vld [vmem:[%s4 + $0x127] sm:$0xff]
  %v3186 = vld [vmem:[%s4 + $0x12f] sm:$0xff]
  %v3187 = vld [vmem:[%s4 + $0x137] sm:$0xff]
  %v3188 = vld [vmem:[%s4 + $0x13f] sm:$0xff]
  %v3189 = vld [vmem:[%s4 + $0x147] sm:$0xff]
  %v3190 = vld [vmem:[%s4 + $0x14f] sm:$0xff]
  %v3191 = vld [vmem:[%s4 + $0x157] sm:$0xff]
  %v3192 = vld [vmem:[%s4 + $0x15f] sm:$0xff]
  %v3193 = vld [vmem:[%s4 + $0x167] sm:$0xff]
  %v3194 = vld [vmem:[%s4 + $0x16f] sm:$0xff]
  %v3195 = vld [vmem:[%s4 + $0x177] sm:$0xff]
  %v3196 = vld [vmem:[%s4 + $0x17f] sm:$0xff]
  %v3197 = vld [vmem:[%s4 + $0x187] sm:$0x1]
  %v3198 = vmax.f32 %v3102, %v3150
  %v3199 = vmax.f32 %v3103, %v3151
  %v3200 = vmax.f32 %v3104, %v3152
  %v3201 = vmax.f32 %v3105, %v3153
  %v3202 = vmax.f32 %v3106, %v3154
  %v3203 = vmax.f32 %v3107, %v3155
  %v3204 = vmax.f32 %v3108, %v3156
  %v3205 = vmax.f32 %v3109, %v3157
  %v3206 = vmax.f32 %v3110, %v3158
  %v3207 = vmax.f32 %v3111, %v3159
  %v3208 = vmax.f32 %v3112, %v3160
  %v3209 = vmax.f32 %v3113, %v3161
  %v3210 = vmax.f32 %v3114, %v3162
  %v3211 = vmax.f32 %v3115, %v3163
  %v3212 = vmax.f32 %v3116, %v3164
  %v3213 = vmax.f32 %v3117, %v3165
  %v3214 = vmax.f32 %v3118, %v3166
  %v3215 = vmax.f32 %v3119, %v3167
  %v3216 = vmax.f32 %v3120, %v3168
  %v3217 = vmax.f32 %v3121, %v3169
  %v3218 = vmax.f32 %v3122, %v3170
  %v3219 = vmax.f32 %v3123, %v3171
  %v3220 = vmax.f32 %v3124, %v3172
  %v3221 = vmax.f32 %v3125, %v3173
  %v3222 = vmax.f32 %v3126, %v3174
  %v3223 = vmax.f32 %v3127, %v3175
  %v3224 = vmax.f32 %v3128, %v3176
  %v3225 = vmax.f32 %v3129, %v3177
  %v3226 = vmax.f32 %v3130, %v3178
  %v3227 = vmax.f32 %v3131, %v3179
  %v3228 = vmax.f32 %v3132, %v3180
  %v3229 = vmax.f32 %v3133, %v3181
  %v3230 = vmax.f32 %v3134, %v3182
  %v3231 = vmax.f32 %v3135, %v3183
  %v3232 = vmax.f32 %v3136, %v3184
  %v3233 = vmax.f32 %v3137, %v3185
  %v3234 = vmax.f32 %v3138, %v3186
  %v3235 = vmax.f32 %v3139, %v3187
  %v3236 = vmax.f32 %v3140, %v3188
  %v3237 = vmax.f32 %v3141, %v3189
  %v3238 = vmax.f32 %v3142, %v3190
  %v3239 = vmax.f32 %v3143, %v3191
  %v3240 = vmax.f32 %v3144, %v3192
  %v3241 = vmax.f32 %v3145, %v3193
  %v3242 = vmax.f32 %v3146, %v3194
  %v3243 = vmax.f32 %v3147, %v3195
  %v3244 = vmax.f32 %v3148, %v3196
  %v3245 = vmax.f32 %v3149, %v3197
  %v3246 = vmax.f32 %v3054, %v3198
  %v3247 = vmax.f32 %v3055, %v3199
  %v3248 = vmax.f32 %v3056, %v3200
  %v3249 = vmax.f32 %v3057, %v3201
  %v3250 = vmax.f32 %v3058, %v3202
  %v3251 = vmax.f32 %v3059, %v3203
  %v3252 = vmax.f32 %v3060, %v3204
  %v3253 = vmax.f32 %v3061, %v3205
  %v3254 = vmax.f32 %v3062, %v3206
  %v3255 = vmax.f32 %v3063, %v3207
  %v3256 = vmax.f32 %v3064, %v3208
  %v3257 = vmax.f32 %v3065, %v3209
  %v3258 = vmax.f32 %v3066, %v3210
  %v3259 = vmax.f32 %v3067, %v3211
  %v3260 = vmax.f32 %v3068, %v3212
  %v3261 = vmax.f32 %v3069, %v3213
  %v3262 = vmax.f32 %v3070, %v3214
  %v3263 = vmax.f32 %v3071, %v3215
  %v3264 = vmax.f32 %v3072, %v3216
  %v3265 = vmax.f32 %v3073, %v3217
  %v3266 = vmax.f32 %v3074, %v3218
  %v3267 = vmax.f32 %v3075, %v3219
  %v3268 = vmax.f32 %v3076, %v3220
  %v3269 = vmax.f32 %v3077, %v3221
  %v3270 = vmax.f32 %v3078, %v3222
  %v3271 = vmax.f32 %v3079, %v3223
  %v3272 = vmax.f32 %v3080, %v3224
  %v3273 = vmax.f32 %v3081, %v3225
  %v3274 = vmax.f32 %v3082, %v3226
  %v3275 = vmax.f32 %v3083, %v3227
  %v3276 = vmax.f32 %v3084, %v3228
  %v3277 = vmax.f32 %v3085, %v3229
  %v3278 = vmax.f32 %v3086, %v3230
  %v3279 = vmax.f32 %v3087, %v3231
  %v3280 = vmax.f32 %v3088, %v3232
  %v3281 = vmax.f32 %v3089, %v3233
  %v3282 = vmax.f32 %v3090, %v3234
  %v3283 = vmax.f32 %v3091, %v3235
  %v3284 = vmax.f32 %v3092, %v3236
  %v3285 = vmax.f32 %v3093, %v3237
  %v3286 = vmax.f32 %v3094, %v3238
  %v3287 = vmax.f32 %v3095, %v3239
  %v3288 = vmax.f32 %v3096, %v3240
  %v3289 = vmax.f32 %v3097, %v3241
  %v3290 = vmax.f32 %v3098, %v3242
  %v3291 = vmax.f32 %v3099, %v3243
  %v3292 = vmax.f32 %v3100, %v3244
  %v3293 = vmax.f32 %v3101, %v3245
  %3294 = vst.msk [vmem:[%s4] sm:$0xff] %vm2482, %v3246
  %3295 = vst.msk [vmem:[%s4 + $0x8] sm:$0xff] %vm2482, %v3247
  %3296 = vst.msk [vmem:[%s4 + $0x10] sm:$0xff] %vm2482, %v3248
  %3297 = vst.msk [vmem:[%s4 + $0x18] sm:$0xff] %vm2482, %v3249
  %3298 = vst.msk [vmem:[%s4 + $0x20] sm:$0xff] %vm2482, %v3250
  %3299 = vst.msk [vmem:[%s4 + $0x28] sm:$0xff] %vm2482, %v3251
  %3300 = vst.msk [vmem:[%s4 + $0x30] sm:$0xff] %vm2482, %v3252
  %3301 = vst.msk [vmem:[%s4 + $0x38] sm:$0xff] %vm2482, %v3253
  %3302 = vst.msk [vmem:[%s4 + $0x40] sm:$0xff] %vm2482, %v3254
  %3303 = vst.msk [vmem:[%s4 + $0x48] sm:$0xff] %vm2482, %v3255
  %3304 = vst.msk [vmem:[%s4 + $0x50] sm:$0xff] %vm2482, %v3256
  %3305 = vst.msk [vmem:[%s4 + $0x58] sm:$0xff] %vm2482, %v3257
  %3306 = vst.msk [vmem:[%s4 + $0x60] sm:$0xff] %vm2482, %v3258
  %3307 = vst.msk [vmem:[%s4 + $0x68] sm:$0xff] %vm2482, %v3259
  %3308 = vst.msk [vmem:[%s4 + $0x70] sm:$0xff] %vm2482, %v3260
  %3309 = vst.msk [vmem:[%s4 + $0x78] sm:$0xff] %vm2482, %v3261
  %3310 = vst.msk [vmem:[%s4 + $0x80] sm:$0xff] %vm2482, %v3262
  %3311 = vst.msk [vmem:[%s4 + $0x88] sm:$0xff] %vm2482, %v3263
  %3312 = vst.msk [vmem:[%s4 + $0x90] sm:$0xff] %vm2482, %v3264
  %3313 = vst.msk [vmem:[%s4 + $0x98] sm:$0xff] %vm2482, %v3265
  %3314 = vst.msk [vmem:[%s4 + $0xa0] sm:$0xff] %vm2482, %v3266
  %3315 = vst.msk [vmem:[%s4 + $0xa8] sm:$0xff] %vm2482, %v3267
  %3316 = vst.msk [vmem:[%s4 + $0xb0] sm:$0xff] %vm2482, %v3268
  %3317 = vst.msk [vmem:[%s4 + $0xb8] sm:$0xff] %vm2482, %v3269
  %3318 = vst.msk [vmem:[%s4 + $0xc0] sm:$0xff] %vm2482, %v3270
  %3319 = vst.msk [vmem:[%s4 + $0xc8] sm:$0xff] %vm2482, %v3271
  %3320 = vst.msk [vmem:[%s4 + $0xd0] sm:$0xff] %vm2482, %v3272
  %3321 = vst.msk [vmem:[%s4 + $0xd8] sm:$0xff] %vm2482, %v3273
  %3322 = vst.msk [vmem:[%s4 + $0xe0] sm:$0xff] %vm2482, %v3274
  %3323 = vst.msk [vmem:[%s4 + $0xe8] sm:$0xff] %vm2482, %v3275
  %3324 = vst.msk [vmem:[%s4 + $0xf0] sm:$0xff] %vm2482, %v3276
  %3325 = vst.msk [vmem:[%s4 + $0xf8] sm:$0xff] %vm2482, %v3277
  %3326 = vst.msk [vmem:[%s4 + $0x100] sm:$0xff] %vm2482, %v3278
  %3327 = vst.msk [vmem:[%s4 + $0x108] sm:$0xff] %vm2482, %v3279
  %3328 = vst.msk [vmem:[%s4 + $0x110] sm:$0xff] %vm2482, %v3280
  %3329 = vst.msk [vmem:[%s4 + $0x118] sm:$0xff] %vm2482, %v3281
  %3330 = vst.msk [vmem:[%s4 + $0x120] sm:$0xff] %vm2482, %v3282
  %3331 = vst.msk [vmem:[%s4 + $0x128] sm:$0xff] %vm2482, %v3283
  %3332 = vst.msk [vmem:[%s4 + $0x130] sm:$0xff] %vm2482, %v3284
  %3333 = vst.msk [vmem:[%s4 + $0x138] sm:$0xff] %vm2482, %v3285
  %3334 = vst.msk [vmem:[%s4 + $0x140] sm:$0xff] %vm2482, %v3286
  %3335 = vst.msk [vmem:[%s4 + $0x148] sm:$0xff] %vm2482, %v3287
  %3336 = vst.msk [vmem:[%s4 + $0x150] sm:$0xff] %vm2482, %v3288
  %3337 = vst.msk [vmem:[%s4 + $0x158] sm:$0xff] %vm2482, %v3289
  %3338 = vst.msk [vmem:[%s4 + $0x160] sm:$0xff] %vm2482, %v3290
  %3339 = vst.msk [vmem:[%s4 + $0x168] sm:$0xff] %vm2482, %v3291
  %3340 = vst.msk [vmem:[%s4 + $0x170] sm:$0xff] %vm2482, %v3292
  %vm3341 = vcmask 516096
  %3342 = vst.msk [vmem:[%s4 + $0x178] sm:$0x1] %vm3341, %v3293
  // Predicated region
  $region18: #{spinalnet_forward.4} parent=0 // pred_check
    _
  $region19: #{spinalnet_forward.4} parent=0 // pred_check_branch
    %3344 = sbr.rel (0) target = $region21
  $region20: #{spinalnet_forward.4} parent=0 // pred_region
    _
  $region21: #{spinalnet_forward.4} parent=0 // pred_fallthru
    _
  // Predicated region
  $region22: #{spinalnet_forward.4} parent=0 // pred_check
    _
  $region23: #{spinalnet_forward.4} parent=0 // pred_check_branch
    %3346 = sbr.rel (0) target = $region25
  $region24: #{spinalnet_forward.4} parent=0 // pred_region
    _
  $region25: #{spinalnet_forward.4} parent=0 // pred_fallthru
    _

// kernel: spinalnet_forward.5
$region0: #{spinalnet_forward.5}
  #allocation0 [shape = 'u32[]', space=smem, size = 0x4, offset = 0x4, fixed_abs, tag = 'smem constant byte address 0x4 - core index']
  #allocation1 [shape = 'u32[144,128]{1,0:T(1,128)}', space=vmem, size = 0x12000, scoped, tag = 'internal scratch']
  #allocation2 [shape = 'f32[2,256]{1,0:T(2,128)}', space=vmem, size = 0x800, scoped, tag = 'scratch operand']
  %s0 = inlined_call_operand.vmem [shape: f32[2,3136], index: 0, kind: input, shape index: {}]
  %s1 = inlined_call_operand.vmem [shape: bf16[3136,256], index: 1, kind: input, shape index: {}]
  %s2 = inlined_call_operand.vmem [shape: f32[1,256], index: 2, kind: input, shape index: {}]
  %s3 = inlined_call_operand.vmem [shape: f32[150,50], index: 3, kind: input, shape index: {}]
  %s4 = inlined_call_operand.vmem [shape: f32[200,128], index: 4, kind: input, shape index: {}]
  %s5 = inlined_call_operand.vmem [shape: f32[1,128], index: 5, kind: input, shape index: {}]
  %s6 = inlined_call_operand.hbm [shape: f32[2,128], index: 6, kind: output, shape index: {}]
  %s7 = sld [smem:[#allocation0]]
  $region34: #{spinalnet_forward.5} parent=0
    _
  %s9 = ssub.s32 1, %s7
  %s10 = scalar_select 0, %s9, %s7
  $region1: #{spinalnet_forward.5} parent=0
    #allocation3 [shape = 'u8[1024]{0}', space=vmem, size = 0x400, scoped, tag = 'output window, operand 0, single buffered']
    #allocation4 [shape = 's32[1]{0}', space=sflag, size = 0x4, scoped, tag = 'scoped memory for spinalnet_forward.5']
    %11 = vsyncpa [#allocation4], 0
    // Predicated region
    $region2: #{spinalnet_forward.5} parent=1 // pred_check
      _
    $region3: #{spinalnet_forward.5} parent=1 // pred_check_branch
      %13 = sbr.rel (0) target = $region5
    $region4: #{spinalnet_forward.5} parent=1 // pred_region
      _
    $region5: #{spinalnet_forward.5} parent=1 // pred_fallthru
      _
    // Predicated region
    $region6: #{spinalnet_forward.5} parent=1 // pred_check
      _
    $region7: #{spinalnet_forward.5} parent=1 // pred_check_branch
      %15 = sbr.rel (0) target = $region9
    $region8: #{spinalnet_forward.5} parent=1 // pred_region
      _
    $region9: #{spinalnet_forward.5} parent=1 // pred_fallthru
      _
    // Predicated region
    $region10: #{spinalnet_forward.5} parent=1 // pred_check
      _
    $region11: #{spinalnet_forward.5} parent=1 // pred_check_branch
      %17 = sbr.rel (0) target = $region13
    $region12: #{spinalnet_forward.5} parent=1 // pred_region
      _
    $region13: #{spinalnet_forward.5} parent=1 // pred_fallthru
      _
    // Predicated region
    $region14: #{spinalnet_forward.5} parent=1 // pred_check
      _
    $region15: #{spinalnet_forward.5} parent=1 // pred_check_branch
      %19 = sbr.rel (0) target = $region17
    $region16: #{spinalnet_forward.5} parent=1 // pred_region
      _
    $region17: #{spinalnet_forward.5} parent=1 // pred_fallthru
      _
    // Predicated region
    $region18: #{spinalnet_forward.5} parent=1 // pred_check
      _
    $region19: #{spinalnet_forward.5} parent=1 // pred_check_branch
      %21 = sbr.rel (0) target = $region21
    $region20: #{spinalnet_forward.5} parent=1 // pred_region
      _
    $region21: #{spinalnet_forward.5} parent=1 // pred_fallthru
      _
    // Predicated region
    $region22: #{spinalnet_forward.5} parent=1 // pred_check
      _
    $region23: #{spinalnet_forward.5} parent=1 // pred_check_branch
      %23 = sbr.rel (0) target = $region25
    $region24: #{spinalnet_forward.5} parent=1 // pred_region
      _
    $region25: #{spinalnet_forward.5} parent=1 // pred_fallthru
      _
    %v25 = vld [vmem:[%s0] sm:$0xff]
    %v26 = vld [vmem:[%s0 + $0x8] sm:$0xff]
    %v27 = vld [vmem:[%s0 + $0x10] sm:$0xff]
    %v28 = vld [vmem:[%s0 + $0x18] sm:$0xff]
    %v29 = vld [vmem:[%s0 + $0x20] sm:$0xff]
    %v30 = vld [vmem:[%s0 + $0x28] sm:$0xff]
    %v31 = vld [vmem:[%s0 + $0x30] sm:$0x3]
    %v39 = vcombine.high %v25, %v25
    %v41 = vunpack.c.l.s4 1983009808
    %v42 = vunpack.c.0.s8 %v41
    %v43 = vlaneseq
    %v44 = vshrl.u32 %v43, 7
    %v45 = vsub.s32 %v42, %v44
    %v46 = vrot.slane %v25, %v45
    %v48 = vunpack.c.l.s4 1983009808
    %v49 = vunpack.c.0.s8 %v48
    %v50 = vlaneseq
    %v51 = vshrl.u32 %v50, 7
    %v52 = vsub.s32 %v49, %v51
    %v53 = vrot.slane %v39, %v52
    %v54 = vcombine.high %v46, %v46
    %v55 = vcombine.high %v53, %v53
    %v56 = vcombine.high %v26, %v26
    %v58 = vunpack.c.l.s4 1983009808
    %v59 = vunpack.c.0.s8 %v58
    %v60 = vlaneseq
    %v61 = vshrl.u32 %v60, 7
    %v62 = vsub.s32 %v59, %v61
    %v63 = vrot.slane %v26, %v62
    %v65 = vunpack.c.l.s4 1983009808
    %v66 = vunpack.c.0.s8 %v65
    %v67 = vlaneseq
    %v68 = vshrl.u32 %v67, 7
    %v69 = vsub.s32 %v66, %v68
    %v70 = vrot.slane %v56, %v69
    %v71 = vcombine.high %v63, %v63
    %v72 = vcombine.high %v70, %v70
    %v73 = vcombine.high %v27, %v27
    %v75 = vunpack.c.l.s4 1983009808
    %v76 = vunpack.c.0.s8 %v75
    %v77 = vlaneseq
    %v78 = vshrl.u32 %v77, 7
    %v79 = vsub.s32 %v76, %v78
    %v80 = vrot.slane %v27, %v79
    %v82 = vunpack.c.l.s4 1983009808
    %v83 = vunpack.c.0.s8 %v82
    %v84 = vlaneseq
    %v85 = vshrl.u32 %v84, 7
    %v86 = vsub.s32 %v83, %v85
    %v87 = vrot.slane %v73, %v86
    %v88 = vcombine.high %v80, %v80
    %v89 = vcombine.high %v87, %v87
    %v90 = vcombine.high %v28, %v28
    %v92 = vunpack.c.l.s4 1983009808
    %v93 = vunpack.c.0.s8 %v92
    %v94 = vlaneseq
    %v95 = vshrl.u32 %v94, 7
    %v96 = vsub.s32 %v93, %v95
    %v97 = vrot.slane %v28, %v96
    %v99 = vunpack.c.l.s4 1983009808
    %v100 = vunpack.c.0.s8 %v99
    %v101 = vlaneseq
    %v102 = vshrl.u32 %v101, 7
    %v103 = vsub.s32 %v100, %v102
    %v104 = vrot.slane %v90, %v103
    %v105 = vcombine.high %v97, %v97
    %v106 = vcombine.high %v104, %v104
    %v107 = vcombine.high %v29, %v29
    %v109 = vunpack.c.l.s4 1983009808
    %v110 = vunpack.c.0.s8 %v109
    %v111 = vlaneseq
    %v112 = vshrl.u32 %v111, 7
    %v113 = vsub.s32 %v110, %v112
    %v114 = vrot.slane %v29, %v113
    %v116 = vunpack.c.l.s4 1983009808
    %v117 = vunpack.c.0.s8 %v116
    %v118 = vlaneseq
    %v119 = vshrl.u32 %v118, 7
    %v120 = vsub.s32 %v117, %v119
    %v121 = vrot.slane %v107, %v120
    %v122 = vcombine.high %v114, %v114
    %v123 = vcombine.high %v121, %v121
    %v124 = vcombine.high %v30, %v30
    %v126 = vunpack.c.l.s4 1983009808
    %v127 = vunpack.c.0.s8 %v126
    %v128 = vlaneseq
    %v129 = vshrl.u32 %v128, 7
    %v130 = vsub.s32 %v127, %v129
    %v131 = vrot.slane %v30, %v130
    %v133 = vunpack.c.l.s4 1983009808
    %v134 = vunpack.c.0.s8 %v133
    %v135 = vlaneseq
    %v136 = vshrl.u32 %v135, 7
    %v137 = vsub.s32 %v134, %v136
    %v138 = vrot.slane %v124, %v137
    %v139 = vcombine.high %v131, %v131
    %v140 = vcombine.high %v138, %v138
    %v142 = vunpack.c.l.s4 1983009808
    %v143 = vunpack.c.0.s8 %v142
    %v144 = vlaneseq
    %v145 = vshrl.u32 %v144, 7
    %v146 = vsub.s32 %v143, %v145
    %v147 = vrot.slane %v31, %v146
    %v173 = vpack.c.bf16 %v46, %v46
    %v174 = vpack.c.bf16 %v54, %v54
    %v175 = vpack.c.bf16 %v53, %v53
    %v176 = vpack.c.bf16 %v55, %v55
    %v177 = vpack.c.bf16 %v63, %v63
    %v178 = vpack.c.bf16 %v71, %v71
    %v179 = vpack.c.bf16 %v70, %v70
    %v180 = vpack.c.bf16 %v72, %v72
    %v181 = vpack.c.bf16 %v80, %v80
    %v182 = vpack.c.bf16 %v88, %v88
    %v183 = vpack.c.bf16 %v87, %v87
    %v184 = vpack.c.bf16 %v89, %v89
    %v185 = vpack.c.bf16 %v97, %v97
    %v186 = vpack.c.bf16 %v105, %v105
    %v187 = vpack.c.bf16 %v104, %v104
    %v188 = vpack.c.bf16 %v106, %v106
    %v189 = vpack.c.bf16 %v114, %v114
    %v190 = vpack.c.bf16 %v122, %v122
    %v191 = vpack.c.bf16 %v121, %v121
    %v192 = vpack.c.bf16 %v123, %v123
    %v193 = vpack.c.bf16 %v131, %v131
    %v194 = vpack.c.bf16 %v139, %v139
    %v195 = vpack.c.bf16 %v138, %v138
    %v196 = vpack.c.bf16 %v140, %v140
    %v197 = vpack.c.bf16 %v147, %v147
    %v198 = vld [vmem:[%s1] sm:$0xff]
    %v199 = vld [vmem:[%s1 + $0x8] sm:$0xff]
    %v200 = vld [vmem:[%s1 + $0x10] sm:$0xff]
    %v201 = vld [vmem:[%s1 + $0x18] sm:$0xff]
    %v202 = vld [vmem:[%s1 + $0x20] sm:$0xff]
    %v203 = vld [vmem:[%s1 + $0x28] sm:$0xff]
    %v204 = vld [vmem:[%s1 + $0x30] sm:$0xff]
    %v205 = vld [vmem:[%s1 + $0x38] sm:$0xff]
    %v206 = vld [vmem:[%s1 + $0x40] sm:$0xff]
    %v207 = vld [vmem:[%s1 + $0x48] sm:$0xff]
    %v208 = vld [vmem:[%s1 + $0x50] sm:$0xff]
    %v209 = vld [vmem:[%s1 + $0x58] sm:$0xff]
    %v210 = vld [vmem:[%s1 + $0x60] sm:$0xff]
    %v211 = vld [vmem:[%s1 + $0x68] sm:$0xff]
    %v212 = vld [vmem:[%s1 + $0x70] sm:$0xff]
    %v213 = vld [vmem:[%s1 + $0x78] sm:$0xff]
    %v214 = vld [vmem:[%s1 + $0x80] sm:$0xff]
    %v215 = vld [vmem:[%s1 + $0x88] sm:$0xff]
    %v216 = vld [vmem:[%s1 + $0x90] sm:$0xff]
    %v217 = vld [vmem:[%s1 + $0x98] sm:$0xff]
    %v218 = vld [vmem:[%s1 + $0xa0] sm:$0xff]
    %v219 = vld [vmem:[%s1 + $0xa8] sm:$0xff]
    %v220 = vld [vmem:[%s1 + $0xb0] sm:$0xff]
    %v221 = vld [vmem:[%s1 + $0xb8] sm:$0xff]
    %v222 = vld [vmem:[%s1 + $0xc0] sm:$0xff]
    %v223 = vld [vmem:[%s1 + $0xc8] sm:$0xff]
    %v224 = vld [vmem:[%s1 + $0xd0] sm:$0xff]
    %v225 = vld [vmem:[%s1 + $0xd8] sm:$0xff]
    %v226 = vld [vmem:[%s1 + $0xe0] sm:$0xff]
    %v227 = vld [vmem:[%s1 + $0xe8] sm:$0xff]
    %v228 = vld [vmem:[%s1 + $0xf0] sm:$0xff]
    %v229 = vld [vmem:[%s1 + $0xf8] sm:$0xff]
    %v230 = vld [vmem:[%s1 + $0x100] sm:$0xff]
    %v231 = vld [vmem:[%s1 + $0x108] sm:$0xff]
    %v232 = vld [vmem:[%s1 + $0x110] sm:$0xff]
    %v233 = vld [vmem:[%s1 + $0x118] sm:$0xff]
    %v234 = vld [vmem:[%s1 + $0x120] sm:$0xff]
    %v235 = vld [vmem:[%s1 + $0x128] sm:$0xff]
    %v236 = vld [vmem:[%s1 + $0x130] sm:$0xff]
    %v237 = vld [vmem:[%s1 + $0x138] sm:$0xff]
    %v238 = vld [vmem:[%s1 + $0x140] sm:$0xff]
    %v239 = vld [vmem:[%s1 + $0x148] sm:$0xff]
    %v240 = vld [vmem:[%s1 + $0x150] sm:$0xff]
    %v241 = vld [vmem:[%s1 + $0x158] sm:$0xff]
    %v242 = vld [vmem:[%s1 + $0x160] sm:$0xff]
    %v243 = vld [vmem:[%s1 + $0x168] sm:$0xff]
    %v244 = vld [vmem:[%s1 + $0x170] sm:$0xff]
    %v245 = vld [vmem:[%s1 + $0x178] sm:$0xff]
    %v246 = vld [vmem:[%s1 + $0x180] sm:$0xff]
    %v247 = vld [vmem:[%s1 + $0x188] sm:$0xff]
    %v248 = vld [vmem:[%s1 + $0x190] sm:$0xff]
    %v249 = vld [vmem:[%s1 + $0x198] sm:$0xff]
    %v250 = vld [vmem:[%s1 + $0x1a0] sm:$0xff]
    %v251 = vld [vmem:[%s1 + $0x1a8] sm:$0xff]
    %v252 = vld [vmem:[%s1 + $0x1b0] sm:$0xff]
    %v253 = vld [vmem:[%s1 + $0x1b8] sm:$0xff]
    %v254 = vld [vmem:[%s1 + $0x1c0] sm:$0xff]
    %v255 = vld [vmem:[%s1 + $0x1c8] sm:$0xff]
    %v256 = vld [vmem:[%s1 + $0x1d0] sm:$0xff]
    %v257 = vld [vmem:[%s1 + $0x1d8] sm:$0xff]
    %v258 = vld [vmem:[%s1 + $0x1e0] sm:$0xff]
    %v259 = vld [vmem:[%s1 + $0x1e8] sm:$0xff]
    %v260 = vld [vmem:[%s1 + $0x1f0] sm:$0xff]
    %v261 = vld [vmem:[%s1 + $0x1f8] sm:$0xff]
    %v262 = vld [vmem:[%s1 + $0x200] sm:$0xff]
    %v263 = vld [vmem:[%s1 + $0x208] sm:$0xff]
    %v264 = vld [vmem:[%s1 + $0x210] sm:$0xff]
    %v265 = vld [vmem:[%s1 + $0x218] sm:$0xff]
    %v266 = vld [vmem:[%s1 + $0x220] sm:$0xff]
    %v267 = vld [vmem:[%s1 + $0x228] sm:$0xff]
    %v268 = vld [vmem:[%s1 + $0x230] sm:$0xff]
    %v269 = vld [vmem:[%s1 + $0x238] sm:$0xff]
    %v270 = vld [vmem:[%s1 + $0x240] sm:$0xff]
    %v271 = vld [vmem:[%s1 + $0x248] sm:$0xff]
    %v272 = vld [vmem:[%s1 + $0x250] sm:$0xff]
    %v273 = vld [vmem:[%s1 + $0x258] sm:$0xff]
    %v274 = vld [vmem:[%s1 + $0x260] sm:$0xff]
    %v275 = vld [vmem:[%s1 + $0x268] sm:$0xff]
    %v276 = vld [vmem:[%s1 + $0x270] sm:$0xff]
    %v277 = vld [vmem:[%s1 + $0x278] sm:$0xff]
    %v278 = vld [vmem:[%s1 + $0x280] sm:$0xff]
    %v279 = vld [vmem:[%s1 + $0x288] sm:$0xff]
    %v280 = vld [vmem:[%s1 + $0x290] sm:$0xff]
    %v281 = vld [vmem:[%s1 + $0x298] sm:$0xff]
    %v282 = vld [vmem:[%s1 + $0x2a0] sm:$0xff]
    %v283 = vld [vmem:[%s1 + $0x2a8] sm:$0xff]
    %v284 = vld [vmem:[%s1 + $0x2b0] sm:$0xff]
    %v285 = vld [vmem:[%s1 + $0x2b8] sm:$0xff]
    %v286 = vld [vmem:[%s1 + $0x2c0] sm:$0xff]
    %v287 = vld [vmem:[%s1 + $0x2c8] sm:$0xff]
    %v288 = vld [vmem:[%s1 + $0x2d0] sm:$0xff]
    %v289 = vld [vmem:[%s1 + $0x2d8] sm:$0xff]
    %v290 = vld [vmem:[%s1 + $0x2e0] sm:$0xff]
    %v291 = vld [vmem:[%s1 + $0x2e8] sm:$0xff]
    %v292 = vld [vmem:[%s1 + $0x2f0] sm:$0xff]
    %v293 = vld [vmem:[%s1 + $0x2f8] sm:$0xff]
    %v294 = vld [vmem:[%s1 + $0x300] sm:$0xff]
    %v295 = vld [vmem:[%s1 + $0x308] sm:$0xff]
    %v296 = vld [vmem:[%s1 + $0x310] sm:$0xff]
    %v297 = vld [vmem:[%s1 + $0x318] sm:$0xff]
    %v298 = vld [vmem:[%s1 + $0x320] sm:$0xff]
    %v299 = vld [vmem:[%s1 + $0x328] sm:$0xff]
    %v300 = vld [vmem:[%s1 + $0x330] sm:$0xff]
    %v301 = vld [vmem:[%s1 + $0x338] sm:$0xff]
    %v302 = vld [vmem:[%s1 + $0x340] sm:$0xff]
    %v303 = vld [vmem:[%s1 + $0x348] sm:$0xff]
    %v304 = vld [vmem:[%s1 + $0x350] sm:$0xff]
    %v305 = vld [vmem:[%s1 + $0x358] sm:$0xff]
    %v306 = vld [vmem:[%s1 + $0x360] sm:$0xff]
    %v307 = vld [vmem:[%s1 + $0x368] sm:$0xff]
    %v308 = vld [vmem:[%s1 + $0x370] sm:$0xff]
    %v309 = vld [vmem:[%s1 + $0x378] sm:$0xff]
    %v310 = vld [vmem:[%s1 + $0x380] sm:$0xff]
    %v311 = vld [vmem:[%s1 + $0x388] sm:$0xff]
    %v312 = vld [vmem:[%s1 + $0x390] sm:$0xff]
    %v313 = vld [vmem:[%s1 + $0x398] sm:$0xff]
    %v314 = vld [vmem:[%s1 + $0x3a0] sm:$0xff]
    %v315 = vld [vmem:[%s1 + $0x3a8] sm:$0xff]
    %v316 = vld [vmem:[%s1 + $0x3b0] sm:$0xff]
    %v317 = vld [vmem:[%s1 + $0x3b8] sm:$0xff]
    %v318 = vld [vmem:[%s1 + $0x3c0] sm:$0xff]
    %v319 = vld [vmem:[%s1 + $0x3c8] sm:$0xff]
    %v320 = vld [vmem:[%s1 + $0x3d0] sm:$0xff]
    %v321 = vld [vmem:[%s1 + $0x3d8] sm:$0xff]
    %v322 = vld [vmem:[%s1 + $0x3e0] sm:$0xff]
    %v323 = vld [vmem:[%s1 + $0x3e8] sm:$0xff]
    %v324 = vld [vmem:[%s1 + $0x3f0] sm:$0xff]
    %v325 = vld [vmem:[%s1 + $0x3f8] sm:$0xff]
    %v326 = vld [vmem:[%s1 + $0x400] sm:$0xff]
    %v327 = vld [vmem:[%s1 + $0x408] sm:$0xff]
    %v328 = vld [vmem:[%s1 + $0x410] sm:$0xff]
    %v329 = vld [vmem:[%s1 + $0x418] sm:$0xff]
    %v330 = vld [vmem:[%s1 + $0x420] sm:$0xff]
    %v331 = vld [vmem:[%s1 + $0x428] sm:$0xff]
    %v332 = vld [vmem:[%s1 + $0x430] sm:$0xff]
    %v333 = vld [vmem:[%s1 + $0x438] sm:$0xff]
    %v334 = vld [vmem:[%s1 + $0x440] sm:$0xff]
    %v335 = vld [vmem:[%s1 + $0x448] sm:$0xff]
    %v336 = vld [vmem:[%s1 + $0x450] sm:$0xff]
    %v337 = vld [vmem:[%s1 + $0x458] sm:$0xff]
    %v338 = vld [vmem:[%s1 + $0x460] sm:$0xff]
    %v339 = vld [vmem:[%s1 + $0x468] sm:$0xff]
    %v340 = vld [vmem:[%s1 + $0x470] sm:$0xff]
    %v341 = vld [vmem:[%s1 + $0x478] sm:$0xff]
    %v342 = vld [vmem:[%s1 + $0x480] sm:$0xff]
    %v343 = vld [vmem:[%s1 + $0x488] sm:$0xff]
    %v344 = vld [vmem:[%s1 + $0x490] sm:$0xff]
    %v345 = vld [vmem:[%s1 + $0x498] sm:$0xff]
    %v346 = vld [vmem:[%s1 + $0x4a0] sm:$0xff]
    %v347 = vld [vmem:[%s1 + $0x4a8] sm:$0xff]
    %v348 = vld [vmem:[%s1 + $0x4b0] sm:$0xff]
    %v349 = vld [vmem:[%s1 + $0x4b8] sm:$0xff]
    %v350 = vld [vmem:[%s1 + $0x4c0] sm:$0xff]
    %v351 = vld [vmem:[%s1 + $0x4c8] sm:$0xff]
    %v352 = vld [vmem:[%s1 + $0x4d0] sm:$0xff]
    %v353 = vld [vmem:[%s1 + $0x4d8] sm:$0xff]
    %v354 = vld [vmem:[%s1 + $0x4e0] sm:$0xff]
    %v355 = vld [vmem:[%s1 + $0x4e8] sm:$0xff]
    %v356 = vld [vmem:[%s1 + $0x4f0] sm:$0xff]
    %v357 = vld [vmem:[%s1 + $0x4f8] sm:$0xff]
    %v358 = vld [vmem:[%s1 + $0x500] sm:$0xff]
    %v359 = vld [vmem:[%s1 + $0x508] sm:$0xff]
    %v360 = vld [vmem:[%s1 + $0x510] sm:$0xff]
    %v361 = vld [vmem:[%s1 + $0x518] sm:$0xff]
    %v362 = vld [vmem:[%s1 + $0x520] sm:$0xff]
    %v363 = vld [vmem:[%s1 + $0x528] sm:$0xff]
    %v364 = vld [vmem:[%s1 + $0x530] sm:$0xff]
    %v365 = vld [vmem:[%s1 + $0x538] sm:$0xff]
    %v366 = vld [vmem:[%s1 + $0x540] sm:$0xff]
    %v367 = vld [vmem:[%s1 + $0x548] sm:$0xff]
    %v368 = vld [vmem:[%s1 + $0x550] sm:$0xff]
    %v369 = vld [vmem:[%s1 + $0x558] sm:$0xff]
    %v370 = vld [vmem:[%s1 + $0x560] sm:$0xff]
    %v371 = vld [vmem:[%s1 + $0x568] sm:$0xff]
    %v372 = vld [vmem:[%s1 + $0x570] sm:$0xff]
    %v373 = vld [vmem:[%s1 + $0x578] sm:$0xff]
    %v374 = vld [vmem:[%s1 + $0x580] sm:$0xff]
    %v375 = vld [vmem:[%s1 + $0x588] sm:$0xff]
    %v376 = vld [vmem:[%s1 + $0x590] sm:$0xff]
    %v377 = vld [vmem:[%s1 + $0x598] sm:$0xff]
    %v378 = vld [vmem:[%s1 + $0x5a0] sm:$0xff]
    %v379 = vld [vmem:[%s1 + $0x5a8] sm:$0xff]
    %v380 = vld [vmem:[%s1 + $0x5b0] sm:$0xff]
    %v381 = vld [vmem:[%s1 + $0x5b8] sm:$0xff]
    %v382 = vld [vmem:[%s1 + $0x5c0] sm:$0xff]
    %v383 = vld [vmem:[%s1 + $0x5c8] sm:$0xff]
    %v384 = vld [vmem:[%s1 + $0x5d0] sm:$0xff]
    %v385 = vld [vmem:[%s1 + $0x5d8] sm:$0xff]
    %v386 = vld [vmem:[%s1 + $0x5e0] sm:$0xff]
    %v387 = vld [vmem:[%s1 + $0x5e8] sm:$0xff]
    %v388 = vld [vmem:[%s1 + $0x5f0] sm:$0xff]
    %v389 = vld [vmem:[%s1 + $0x5f8] sm:$0xff]
    %v390 = vld [vmem:[%s1 + $0x600] sm:$0xff]
    %v391 = vld [vmem:[%s1 + $0x608] sm:$0xff]
    %v392 = vld [vmem:[%s1 + $0x610] sm:$0xff]
    %v393 = vld [vmem:[%s1 + $0x618] sm:$0xff]
    %v394 = vld [vmem:[%s1 + $0x620] sm:$0xff]
    %v395 = vld [vmem:[%s1 + $0x628] sm:$0xff]
    %v396 = vld [vmem:[%s1 + $0x630] sm:$0xff]
    %v397 = vld [vmem:[%s1 + $0x638] sm:$0xff]
    %v398 = vld [vmem:[%s1 + $0x640] sm:$0xff]
    %v399 = vld [vmem:[%s1 + $0x648] sm:$0xff]
    %v400 = vld [vmem:[%s1 + $0x650] sm:$0xff]
    %v401 = vld [vmem:[%s1 + $0x658] sm:$0xff]
    %v402 = vld [vmem:[%s1 + $0x660] sm:$0xff]
    %v403 = vld [vmem:[%s1 + $0x668] sm:$0xff]
    %v404 = vld [vmem:[%s1 + $0x670] sm:$0xff]
    %v405 = vld [vmem:[%s1 + $0x678] sm:$0xff]
    %v406 = vld [vmem:[%s1 + $0x680] sm:$0xff]
    %v407 = vld [vmem:[%s1 + $0x688] sm:$0xff]
    %v408 = vld [vmem:[%s1 + $0x690] sm:$0xff]
    %v409 = vld [vmem:[%s1 + $0x698] sm:$0xff]
    %v410 = vld [vmem:[%s1 + $0x6a0] sm:$0xff]
    %v411 = vld [vmem:[%s1 + $0x6a8] sm:$0xff]
    %v412 = vld [vmem:[%s1 + $0x6b0] sm:$0xff]
    %v413 = vld [vmem:[%s1 + $0x6b8] sm:$0xff]
    %v414 = vld [vmem:[%s1 + $0x6c0] sm:$0xff]
    %v415 = vld [vmem:[%s1 + $0x6c8] sm:$0xff]
    %v416 = vld [vmem:[%s1 + $0x6d0] sm:$0xff]
    %v417 = vld [vmem:[%s1 + $0x6d8] sm:$0xff]
    %v418 = vld [vmem:[%s1 + $0x6e0] sm:$0xff]
    %v419 = vld [vmem:[%s1 + $0x6e8] sm:$0xff]
    %v420 = vld [vmem:[%s1 + $0x6f0] sm:$0xff]
    %v421 = vld [vmem:[%s1 + $0x6f8] sm:$0xff]
    %v422 = vld [vmem:[%s1 + $0x700] sm:$0xff]
    %v423 = vld [vmem:[%s1 + $0x708] sm:$0xff]
    %v424 = vld [vmem:[%s1 + $0x710] sm:$0xff]
    %v425 = vld [vmem:[%s1 + $0x718] sm:$0xff]
    %v426 = vld [vmem:[%s1 + $0x720] sm:$0xff]
    %v427 = vld [vmem:[%s1 + $0x728] sm:$0xff]
    %v428 = vld [vmem:[%s1 + $0x730] sm:$0xff]
    %v429 = vld [vmem:[%s1 + $0x738] sm:$0xff]
    %v430 = vld [vmem:[%s1 + $0x740] sm:$0xff]
    %v431 = vld [vmem:[%s1 + $0x748] sm:$0xff]
    %v432 = vld [vmem:[%s1 + $0x750] sm:$0xff]
    %v433 = vld [vmem:[%s1 + $0x758] sm:$0xff]
    %v434 = vld [vmem:[%s1 + $0x760] sm:$0xff]
    %v435 = vld [vmem:[%s1 + $0x768] sm:$0xff]
    %v436 = vld [vmem:[%s1 + $0x770] sm:$0xff]
    %v437 = vld [vmem:[%s1 + $0x778] sm:$0xff]
    %v438 = vld [vmem:[%s1 + $0x780] sm:$0xff]
    %v439 = vld [vmem:[%s1 + $0x788] sm:$0xff]
    %v440 = vld [vmem:[%s1 + $0x790] sm:$0xff]
    %v441 = vld [vmem:[%s1 + $0x798] sm:$0xff]
    %v442 = vld [vmem:[%s1 + $0x7a0] sm:$0xff]
    %v443 = vld [vmem:[%s1 + $0x7a8] sm:$0xff]
    %v444 = vld [vmem:[%s1 + $0x7b0] sm:$0xff]
    %v445 = vld [vmem:[%s1 + $0x7b8] sm:$0xff]
    %v446 = vld [vmem:[%s1 + $0x7c0] sm:$0xff]
    %v447 = vld [vmem:[%s1 + $0x7c8] sm:$0xff]
    %v448 = vld [vmem:[%s1 + $0x7d0] sm:$0xff]
    %v449 = vld [vmem:[%s1 + $0x7d8] sm:$0xff]
    %v450 = vld [vmem:[%s1 + $0x7e0] sm:$0xff]
    %v451 = vld [vmem:[%s1 + $0x7e8] sm:$0xff]
    %v452 = vld [vmem:[%s1 + $0x7f0] sm:$0xff]
    %v453 = vld [vmem:[%s1 + $0x7f8] sm:$0xff]
    %v454 = vld [vmem:[%s1 + $0x800] sm:$0xff]
    %v455 = vld [vmem:[%s1 + $0x808] sm:$0xff]
    %v456 = vld [vmem:[%s1 + $0x810] sm:$0xff]
    %v457 = vld [vmem:[%s1 + $0x818] sm:$0xff]
    %v458 = vld [vmem:[%s1 + $0x820] sm:$0xff]
    %v459 = vld [vmem:[%s1 + $0x828] sm:$0xff]
    %v460 = vld [vmem:[%s1 + $0x830] sm:$0xff]
    %v461 = vld [vmem:[%s1 + $0x838] sm:$0xff]
    %v462 = vld [vmem:[%s1 + $0x840] sm:$0xff]
    %v463 = vld [vmem:[%s1 + $0x848] sm:$0xff]
    %v464 = vld [vmem:[%s1 + $0x850] sm:$0xff]
    %v465 = vld [vmem:[%s1 + $0x858] sm:$0xff]
    %v466 = vld [vmem:[%s1 + $0x860] sm:$0xff]
    %v467 = vld [vmem:[%s1 + $0x868] sm:$0xff]
    %v468 = vld [vmem:[%s1 + $0x870] sm:$0xff]
    %v469 = vld [vmem:[%s1 + $0x878] sm:$0xff]
    %v470 = vld [vmem:[%s1 + $0x880] sm:$0xff]
    %v471 = vld [vmem:[%s1 + $0x888] sm:$0xff]
    %v472 = vld [vmem:[%s1 + $0x890] sm:$0xff]
    %v473 = vld [vmem:[%s1 + $0x898] sm:$0xff]
    %v474 = vld [vmem:[%s1 + $0x8a0] sm:$0xff]
    %v475 = vld [vmem:[%s1 + $0x8a8] sm:$0xff]
    %v476 = vld [vmem:[%s1 + $0x8b0] sm:$0xff]
    %v477 = vld [vmem:[%s1 + $0x8b8] sm:$0xff]
    %v478 = vld [vmem:[%s1 + $0x8c0] sm:$0xff]
    %v479 = vld [vmem:[%s1 + $0x8c8] sm:$0xff]
    %v480 = vld [vmem:[%s1 + $0x8d0] sm:$0xff]
    %v481 = vld [vmem:[%s1 + $0x8d8] sm:$0xff]
    %v482 = vld [vmem:[%s1 + $0x8e0] sm:$0xff]
    %v483 = vld [vmem:[%s1 + $0x8e8] sm:$0xff]
    %v484 = vld [vmem:[%s1 + $0x8f0] sm:$0xff]
    %v485 = vld [vmem:[%s1 + $0x8f8] sm:$0xff]
    %v486 = vld [vmem:[%s1 + $0x900] sm:$0xff]
    %v487 = vld [vmem:[%s1 + $0x908] sm:$0xff]
    %v488 = vld [vmem:[%s1 + $0x910] sm:$0xff]
    %v489 = vld [vmem:[%s1 + $0x918] sm:$0xff]
    %v490 = vld [vmem:[%s1 + $0x920] sm:$0xff]
    %v491 = vld [vmem:[%s1 + $0x928] sm:$0xff]
    %v492 = vld [vmem:[%s1 + $0x930] sm:$0xff]
    %v493 = vld [vmem:[%s1 + $0x938] sm:$0xff]
    %v494 = vld [vmem:[%s1 + $0x940] sm:$0xff]
    %v495 = vld [vmem:[%s1 + $0x948] sm:$0xff]
    %v496 = vld [vmem:[%s1 + $0x950] sm:$0xff]
    %v497 = vld [vmem:[%s1 + $0x958] sm:$0xff]
    %v498 = vld [vmem:[%s1 + $0x960] sm:$0xff]
    %v499 = vld [vmem:[%s1 + $0x968] sm:$0xff]
    %v500 = vld [vmem:[%s1 + $0x970] sm:$0xff]
    %v501 = vld [vmem:[%s1 + $0x978] sm:$0xff]
    %v502 = vld [vmem:[%s1 + $0x980] sm:$0xff]
    %v503 = vld [vmem:[%s1 + $0x988] sm:$0xff]
    %v504 = vld [vmem:[%s1 + $0x990] sm:$0xff]
    %v505 = vld [vmem:[%s1 + $0x998] sm:$0xff]
    %v506 = vld [vmem:[%s1 + $0x9a0] sm:$0xff]
    %v507 = vld [vmem:[%s1 + $0x9a8] sm:$0xff]
    %v508 = vld [vmem:[%s1 + $0x9b0] sm:$0xff]
    %v509 = vld [vmem:[%s1 + $0x9b8] sm:$0xff]
    %v510 = vld [vmem:[%s1 + $0x9c0] sm:$0xff]
    %v511 = vld [vmem:[%s1 + $0x9c8] sm:$0xff]
    %v512 = vld [vmem:[%s1 + $0x9d0] sm:$0xff]
    %v513 = vld [vmem:[%s1 + $0x9d8] sm:$0xff]
    %v514 = vld [vmem:[%s1 + $0x9e0] sm:$0xff]
    %v515 = vld [vmem:[%s1 + $0x9e8] sm:$0xff]
    %v516 = vld [vmem:[%s1 + $0x9f0] sm:$0xff]
    %v517 = vld [vmem:[%s1 + $0x9f8] sm:$0xff]
    %v518 = vld [vmem:[%s1 + $0xa00] sm:$0xff]
    %v519 = vld [vmem:[%s1 + $0xa08] sm:$0xff]
    %v520 = vld [vmem:[%s1 + $0xa10] sm:$0xff]
    %v521 = vld [vmem:[%s1 + $0xa18] sm:$0xff]
    %v522 = vld [vmem:[%s1 + $0xa20] sm:$0xff]
    %v523 = vld [vmem:[%s1 + $0xa28] sm:$0xff]
    %v524 = vld [vmem:[%s1 + $0xa30] sm:$0xff]
    %v525 = vld [vmem:[%s1 + $0xa38] sm:$0xff]
    %v526 = vld [vmem:[%s1 + $0xa40] sm:$0xff]
    %v527 = vld [vmem:[%s1 + $0xa48] sm:$0xff]
    %v528 = vld [vmem:[%s1 + $0xa50] sm:$0xff]
    %v529 = vld [vmem:[%s1 + $0xa58] sm:$0xff]
    %v530 = vld [vmem:[%s1 + $0xa60] sm:$0xff]
    %v531 = vld [vmem:[%s1 + $0xa68] sm:$0xff]
    %v532 = vld [vmem:[%s1 + $0xa70] sm:$0xff]
    %v533 = vld [vmem:[%s1 + $0xa78] sm:$0xff]
    %v534 = vld [vmem:[%s1 + $0xa80] sm:$0xff]
    %v535 = vld [vmem:[%s1 + $0xa88] sm:$0xff]
    %v536 = vld [vmem:[%s1 + $0xa90] sm:$0xff]
    %v537 = vld [vmem:[%s1 + $0xa98] sm:$0xff]
    %v538 = vld [vmem:[%s1 + $0xaa0] sm:$0xff]
    %v539 = vld [vmem:[%s1 + $0xaa8] sm:$0xff]
    %v540 = vld [vmem:[%s1 + $0xab0] sm:$0xff]
    %v541 = vld [vmem:[%s1 + $0xab8] sm:$0xff]
    %v542 = vld [vmem:[%s1 + $0xac0] sm:$0xff]
    %v543 = vld [vmem:[%s1 + $0xac8] sm:$0xff]
    %v544 = vld [vmem:[%s1 + $0xad0] sm:$0xff]
    %v545 = vld [vmem:[%s1 + $0xad8] sm:$0xff]
    %v546 = vld [vmem:[%s1 + $0xae0] sm:$0xff]
    %v547 = vld [vmem:[%s1 + $0xae8] sm:$0xff]
    %v548 = vld [vmem:[%s1 + $0xaf0] sm:$0xff]
    %v549 = vld [vmem:[%s1 + $0xaf8] sm:$0xff]
    %v550 = vld [vmem:[%s1 + $0xb00] sm:$0xff]
    %v551 = vld [vmem:[%s1 + $0xb08] sm:$0xff]
    %v552 = vld [vmem:[%s1 + $0xb10] sm:$0xff]
    %v553 = vld [vmem:[%s1 + $0xb18] sm:$0xff]
    %v554 = vld [vmem:[%s1 + $0xb20] sm:$0xff]
    %v555 = vld [vmem:[%s1 + $0xb28] sm:$0xff]
    %v556 = vld [vmem:[%s1 + $0xb30] sm:$0xff]
    %v557 = vld [vmem:[%s1 + $0xb38] sm:$0xff]
    %v558 = vld [vmem:[%s1 + $0xb40] sm:$0xff]
    %v559 = vld [vmem:[%s1 + $0xb48] sm:$0xff]
    %v560 = vld [vmem:[%s1 + $0xb50] sm:$0xff]
    %v561 = vld [vmem:[%s1 + $0xb58] sm:$0xff]
    %v562 = vld [vmem:[%s1 + $0xb60] sm:$0xff]
    %v563 = vld [vmem:[%s1 + $0xb68] sm:$0xff]
    %v564 = vld [vmem:[%s1 + $0xb70] sm:$0xff]
    %v565 = vld [vmem:[%s1 + $0xb78] sm:$0xff]
    %v566 = vld [vmem:[%s1 + $0xb80] sm:$0xff]
    %v567 = vld [vmem:[%s1 + $0xb88] sm:$0xff]
    %v568 = vld [vmem:[%s1 + $0xb90] sm:$0xff]
    %v569 = vld [vmem:[%s1 + $0xb98] sm:$0xff]
    %v570 = vld [vmem:[%s1 + $0xba0] sm:$0xff]
    %v571 = vld [vmem:[%s1 + $0xba8] sm:$0xff]
    %v572 = vld [vmem:[%s1 + $0xbb0] sm:$0xff]
    %v573 = vld [vmem:[%s1 + $0xbb8] sm:$0xff]
    %v574 = vld [vmem:[%s1 + $0xbc0] sm:$0xff]
    %v575 = vld [vmem:[%s1 + $0xbc8] sm:$0xff]
    %v576 = vld [vmem:[%s1 + $0xbd0] sm:$0xff]
    %v577 = vld [vmem:[%s1 + $0xbd8] sm:$0xff]
    %v578 = vld [vmem:[%s1 + $0xbe0] sm:$0xff]
    %v579 = vld [vmem:[%s1 + $0xbe8] sm:$0xff]
    %v580 = vld [vmem:[%s1 + $0xbf0] sm:$0xff]
    %v581 = vld [vmem:[%s1 + $0xbf8] sm:$0xff]
    %v582 = vld [vmem:[%s1 + $0xc00] sm:$0xff]
    %v583 = vld [vmem:[%s1 + $0xc08] sm:$0xff]
    %v584 = vld [vmem:[%s1 + $0xc10] sm:$0xff]
    %v585 = vld [vmem:[%s1 + $0xc18] sm:$0xff]
    %v586 = vld [vmem:[%s1 + $0xc20] sm:$0xff]
    %v587 = vld [vmem:[%s1 + $0xc28] sm:$0xff]
    %v588 = vld [vmem:[%s1 + $0xc30] sm:$0xff]
    %v589 = vld [vmem:[%s1 + $0xc38] sm:$0xff]
    %v590 = vld [vmem:[%s2] sm:$0x3]
    %v592 = vlaneseq
    %v593 = vshrl.u32 %v592, 7
    %v594 = vsub.s32 0, %v593
    %v595 = vrot.slane %v590, %v594
    %v596 = vlaneseq
    %v597 = vshrl.u32 %v596, 7
    %v598 = vsub.s32 1, %v597
    %v599 = vrot.slane %v590, %v598
    %v994 = vunpack.c.l.b16 %v198
    %v995 = vunpack.c.h.b16 %v198
    %v996 = vunpack.c.l.b16 %v199
    %v997 = vunpack.c.h.b16 %v199
    %v998 = vunpack.c.l.b16 %v200
    %v999 = vunpack.c.h.b16 %v200
    %v1000 = vunpack.c.l.b16 %v201
    %v1001 = vunpack.c.h.b16 %v201
    %v1002 = vunpack.c.l.b16 %v202
    %v1003 = vunpack.c.h.b16 %v202
    %v1004 = vunpack.c.l.b16 %v203
    %v1005 = vunpack.c.h.b16 %v203
    %v1006 = vunpack.c.l.b16 %v204
    %v1007 = vunpack.c.h.b16 %v204
    %v1008 = vunpack.c.l.b16 %v205
    %v1009 = vunpack.c.h.b16 %v205
    %v1010 = vunpack.c.l.b16 %v206
    %v1011 = vunpack.c.h.b16 %v206
    %v1012 = vunpack.c.l.b16 %v207
    %v1013 = vunpack.c.h.b16 %v207
    %v1014 = vunpack.c.l.b16 %v208
    %v1015 = vunpack.c.h.b16 %v208
    %v1016 = vunpack.c.l.b16 %v209
    %v1017 = vunpack.c.h.b16 %v209
    %v1018 = vunpack.c.l.b16 %v210
    %v1019 = vunpack.c.h.b16 %v210
    %v1020 = vunpack.c.l.b16 %v211
    %v1021 = vunpack.c.h.b16 %v211
    %v1022 = vunpack.c.l.b16 %v212
    %v1023 = vunpack.c.h.b16 %v212
    %v1024 = vunpack.c.l.b16 %v213
    %v1025 = vunpack.c.h.b16 %v213
    %v1026 = vunpack.c.l.b16 %v214
    %v1027 = vunpack.c.h.b16 %v214
    %v1028 = vunpack.c.l.b16 %v215
    %v1029 = vunpack.c.h.b16 %v215
    %v1030 = vunpack.c.l.b16 %v216
    %v1031 = vunpack.c.h.b16 %v216
    %v1032 = vunpack.c.l.b16 %v217
    %v1033 = vunpack.c.h.b16 %v217
    %v1034 = vunpack.c.l.b16 %v218
    %v1035 = vunpack.c.h.b16 %v218
    %v1036 = vunpack.c.l.b16 %v219
    %v1037 = vunpack.c.h.b16 %v219
    %v1038 = vunpack.c.l.b16 %v220
    %v1039 = vunpack.c.h.b16 %v220
    %v1040 = vunpack.c.l.b16 %v221
    %v1041 = vunpack.c.h.b16 %v221
    %v1042 = vunpack.c.l.b16 %v222
    %v1043 = vunpack.c.h.b16 %v222
    %v1044 = vunpack.c.l.b16 %v223
    %v1045 = vunpack.c.h.b16 %v223
    %v1046 = vunpack.c.l.b16 %v224
    %v1047 = vunpack.c.h.b16 %v224
    %v1048 = vunpack.c.l.b16 %v225
    %v1049 = vunpack.c.h.b16 %v225
    %v1050 = vunpack.c.l.b16 %v226
    %v1051 = vunpack.c.h.b16 %v226
    %v1052 = vunpack.c.l.b16 %v227
    %v1053 = vunpack.c.h.b16 %v227
    %v1054 = vunpack.c.l.b16 %v228
    %v1055 = vunpack.c.h.b16 %v228
    %v1056 = vunpack.c.l.b16 %v229
    %v1057 = vunpack.c.h.b16 %v229
    %v1058 = vunpack.c.l.b16 %v230
    %v1059 = vunpack.c.h.b16 %v230
    %v1060 = vunpack.c.l.b16 %v231
    %v1061 = vunpack.c.h.b16 %v231
    %v1062 = vunpack.c.l.b16 %v232
    %v1063 = vunpack.c.h.b16 %v232
    %v1064 = vunpack.c.l.b16 %v233
    %v1065 = vunpack.c.h.b16 %v233
    %v1066 = vunpack.c.l.b16 %v234
    %v1067 = vunpack.c.h.b16 %v234
    %v1068 = vunpack.c.l.b16 %v235
    %v1069 = vunpack.c.h.b16 %v235
    %v1070 = vunpack.c.l.b16 %v236
    %v1071 = vunpack.c.h.b16 %v236
    %v1072 = vunpack.c.l.b16 %v237
    %v1073 = vunpack.c.h.b16 %v237
    %v1074 = vunpack.c.l.b16 %v238
    %v1075 = vunpack.c.h.b16 %v238
    %v1076 = vunpack.c.l.b16 %v239
    %v1077 = vunpack.c.h.b16 %v239
    %v1078 = vunpack.c.l.b16 %v240
    %v1079 = vunpack.c.h.b16 %v240
    %v1080 = vunpack.c.l.b16 %v241
    %v1081 = vunpack.c.h.b16 %v241
    %v1082 = vunpack.c.l.b16 %v242
    %v1083 = vunpack.c.h.b16 %v242
    %v1084 = vunpack.c.l.b16 %v243
    %v1085 = vunpack.c.h.b16 %v243
    %v1086 = vunpack.c.l.b16 %v244
    %v1087 = vunpack.c.h.b16 %v244
    %v1088 = vunpack.c.l.b16 %v245
    %v1089 = vunpack.c.h.b16 %v245
    %v1090 = vunpack.c.l.b16 %v246
    %v1091 = vunpack.c.h.b16 %v246
    %v1092 = vunpack.c.l.b16 %v247
    %v1093 = vunpack.c.h.b16 %v247
    %v1094 = vunpack.c.l.b16 %v248
    %v1095 = vunpack.c.h.b16 %v248
    %v1096 = vunpack.c.l.b16 %v249
    %v1097 = vunpack.c.h.b16 %v249
    %v1098 = vunpack.c.l.b16 %v250
    %v1099 = vunpack.c.h.b16 %v250
    %v1100 = vunpack.c.l.b16 %v251
    %v1101 = vunpack.c.h.b16 %v251
    %v1102 = vunpack.c.l.b16 %v252
    %v1103 = vunpack.c.h.b16 %v252
    %v1104 = vunpack.c.l.b16 %v253
    %v1105 = vunpack.c.h.b16 %v253
    %v1106 = vunpack.c.l.b16 %v254
    %v1107 = vunpack.c.h.b16 %v254
    %v1108 = vunpack.c.l.b16 %v255
    %v1109 = vunpack.c.h.b16 %v255
    %v1110 = vunpack.c.l.b16 %v256
    %v1111 = vunpack.c.h.b16 %v256
    %v1112 = vunpack.c.l.b16 %v257
    %v1113 = vunpack.c.h.b16 %v257
    %v1114 = vunpack.c.l.b16 %v258
    %v1115 = vunpack.c.h.b16 %v258
    %v1116 = vunpack.c.l.b16 %v259
    %v1117 = vunpack.c.h.b16 %v259
    %v1118 = vunpack.c.l.b16 %v260
    %v1119 = vunpack.c.h.b16 %v260
    %v1120 = vunpack.c.l.b16 %v261
    %v1121 = vunpack.c.h.b16 %v261
    %v1122 = vunpack.c.l.b16 %v262
    %v1123 = vunpack.c.h.b16 %v262
    %v1124 = vunpack.c.l.b16 %v263
    %v1125 = vunpack.c.h.b16 %v263
    %v1126 = vunpack.c.l.b16 %v264
    %v1127 = vunpack.c.h.b16 %v264
    %v1128 = vunpack.c.l.b16 %v265
    %v1129 = vunpack.c.h.b16 %v265
    %v1130 = vunpack.c.l.b16 %v266
    %v1131 = vunpack.c.h.b16 %v266
    %v1132 = vunpack.c.l.b16 %v267
    %v1133 = vunpack.c.h.b16 %v267
    %v1134 = vunpack.c.l.b16 %v268
    %v1135 = vunpack.c.h.b16 %v268
    %v1136 = vunpack.c.l.b16 %v269
    %v1137 = vunpack.c.h.b16 %v269
    %v1138 = vunpack.c.l.b16 %v270
    %v1139 = vunpack.c.h.b16 %v270
    %v1140 = vunpack.c.l.b16 %v271
    %v1141 = vunpack.c.h.b16 %v271
    %v1142 = vunpack.c.l.b16 %v272
    %v1143 = vunpack.c.h.b16 %v272
    %v1144 = vunpack.c.l.b16 %v273
    %v1145 = vunpack.c.h.b16 %v273
    %v1146 = vunpack.c.l.b16 %v274
    %v1147 = vunpack.c.h.b16 %v274
    %v1148 = vunpack.c.l.b16 %v275
    %v1149 = vunpack.c.h.b16 %v275
    %v1150 = vunpack.c.l.b16 %v276
    %v1151 = vunpack.c.h.b16 %v276
    %v1152 = vunpack.c.l.b16 %v277
    %v1153 = vunpack.c.h.b16 %v277
    %v1154 = vunpack.c.l.b16 %v278
    %v1155 = vunpack.c.h.b16 %v278
    %v1156 = vunpack.c.l.b16 %v279
    %v1157 = vunpack.c.h.b16 %v279
    %v1158 = vunpack.c.l.b16 %v280
    %v1159 = vunpack.c.h.b16 %v280
    %v1160 = vunpack.c.l.b16 %v281
    %v1161 = vunpack.c.h.b16 %v281
    %v1162 = vunpack.c.l.b16 %v282
    %v1163 = vunpack.c.h.b16 %v282
    %v1164 = vunpack.c.l.b16 %v283
    %v1165 = vunpack.c.h.b16 %v283
    %v1166 = vunpack.c.l.b16 %v284
    %v1167 = vunpack.c.h.b16 %v284
    %v1168 = vunpack.c.l.b16 %v285
    %v1169 = vunpack.c.h.b16 %v285
    %v1170 = vunpack.c.l.b16 %v286
    %v1171 = vunpack.c.h.b16 %v286
    %v1172 = vunpack.c.l.b16 %v287
    %v1173 = vunpack.c.h.b16 %v287
    %v1174 = vunpack.c.l.b16 %v288
    %v1175 = vunpack.c.h.b16 %v288
    %v1176 = vunpack.c.l.b16 %v289
    %v1177 = vunpack.c.h.b16 %v289
    %v1178 = vunpack.c.l.b16 %v290
    %v1179 = vunpack.c.h.b16 %v290
    %v1180 = vunpack.c.l.b16 %v291
    %v1181 = vunpack.c.h.b16 %v291
    %v1182 = vunpack.c.l.b16 %v292
    %v1183 = vunpack.c.h.b16 %v292
    %v1184 = vunpack.c.l.b16 %v293
    %v1185 = vunpack.c.h.b16 %v293
    %v1186 = vunpack.c.l.b16 %v294
    %v1187 = vunpack.c.h.b16 %v294
    %v1188 = vunpack.c.l.b16 %v295
    %v1189 = vunpack.c.h.b16 %v295
    %v1190 = vunpack.c.l.b16 %v296
    %v1191 = vunpack.c.h.b16 %v296
    %v1192 = vunpack.c.l.b16 %v297
    %v1193 = vunpack.c.h.b16 %v297
    %v1194 = vunpack.c.l.b16 %v298
    %v1195 = vunpack.c.h.b16 %v298
    %v1196 = vunpack.c.l.b16 %v299
    %v1197 = vunpack.c.h.b16 %v299
    %v1198 = vunpack.c.l.b16 %v300
    %v1199 = vunpack.c.h.b16 %v300
    %v1200 = vunpack.c.l.b16 %v301
    %v1201 = vunpack.c.h.b16 %v301
    %v1202 = vunpack.c.l.b16 %v302
    %v1203 = vunpack.c.h.b16 %v302
    %v1204 = vunpack.c.l.b16 %v303
    %v1205 = vunpack.c.h.b16 %v303
    %v1206 = vunpack.c.l.b16 %v304
    %v1207 = vunpack.c.h.b16 %v304
    %v1208 = vunpack.c.l.b16 %v305
    %v1209 = vunpack.c.h.b16 %v305
    %v1210 = vunpack.c.l.b16 %v306
    %v1211 = vunpack.c.h.b16 %v306
    %v1212 = vunpack.c.l.b16 %v307
    %v1213 = vunpack.c.h.b16 %v307
    %v1214 = vunpack.c.l.b16 %v308
    %v1215 = vunpack.c.h.b16 %v308
    %v1216 = vunpack.c.l.b16 %v309
    %v1217 = vunpack.c.h.b16 %v309
    %v1218 = vunpack.c.l.b16 %v310
    %v1219 = vunpack.c.h.b16 %v310
    %v1220 = vunpack.c.l.b16 %v311
    %v1221 = vunpack.c.h.b16 %v311
    %v1222 = vunpack.c.l.b16 %v312
    %v1223 = vunpack.c.h.b16 %v312
    %v1224 = vunpack.c.l.b16 %v313
    %v1225 = vunpack.c.h.b16 %v313
    %v1226 = vunpack.c.l.b16 %v314
    %v1227 = vunpack.c.h.b16 %v314
    %v1228 = vunpack.c.l.b16 %v315
    %v1229 = vunpack.c.h.b16 %v315
    %v1230 = vunpack.c.l.b16 %v316
    %v1231 = vunpack.c.h.b16 %v316
    %v1232 = vunpack.c.l.b16 %v317
    %v1233 = vunpack.c.h.b16 %v317
    %v1234 = vunpack.c.l.b16 %v318
    %v1235 = vunpack.c.h.b16 %v318
    %v1236 = vunpack.c.l.b16 %v319
    %v1237 = vunpack.c.h.b16 %v319
    %v1238 = vunpack.c.l.b16 %v320
    %v1239 = vunpack.c.h.b16 %v320
    %v1240 = vunpack.c.l.b16 %v321
    %v1241 = vunpack.c.h.b16 %v321
    %v1242 = vunpack.c.l.b16 %v322
    %v1243 = vunpack.c.h.b16 %v322
    %v1244 = vunpack.c.l.b16 %v323
    %v1245 = vunpack.c.h.b16 %v323
    %v1246 = vunpack.c.l.b16 %v324
    %v1247 = vunpack.c.h.b16 %v324
    %v1248 = vunpack.c.l.b16 %v325
    %v1249 = vunpack.c.h.b16 %v325
    %v1250 = vunpack.c.l.b16 %v326
    %v1251 = vunpack.c.h.b16 %v326
    %v1252 = vunpack.c.l.b16 %v327
    %v1253 = vunpack.c.h.b16 %v327
    %v1254 = vunpack.c.l.b16 %v328
    %v1255 = vunpack.c.h.b16 %v328
    %v1256 = vunpack.c.l.b16 %v329
    %v1257 = vunpack.c.h.b16 %v329
    %v1258 = vunpack.c.l.b16 %v330
    %v1259 = vunpack.c.h.b16 %v330
    %v1260 = vunpack.c.l.b16 %v331
    %v1261 = vunpack.c.h.b16 %v331
    %v1262 = vunpack.c.l.b16 %v332
    %v1263 = vunpack.c.h.b16 %v332
    %v1264 = vunpack.c.l.b16 %v333
    %v1265 = vunpack.c.h.b16 %v333
    %v1266 = vunpack.c.l.b16 %v334
    %v1267 = vunpack.c.h.b16 %v334
    %v1268 = vunpack.c.l.b16 %v335
    %v1269 = vunpack.c.h.b16 %v335
    %v1270 = vunpack.c.l.b16 %v336
    %v1271 = vunpack.c.h.b16 %v336
    %v1272 = vunpack.c.l.b16 %v337
    %v1273 = vunpack.c.h.b16 %v337
    %v1274 = vunpack.c.l.b16 %v338
    %v1275 = vunpack.c.h.b16 %v338
    %v1276 = vunpack.c.l.b16 %v339
    %v1277 = vunpack.c.h.b16 %v339
    %v1278 = vunpack.c.l.b16 %v340
    %v1279 = vunpack.c.h.b16 %v340
    %v1280 = vunpack.c.l.b16 %v341
    %v1281 = vunpack.c.h.b16 %v341
    %v1282 = vunpack.c.l.b16 %v342
    %v1283 = vunpack.c.h.b16 %v342
    %v1284 = vunpack.c.l.b16 %v343
    %v1285 = vunpack.c.h.b16 %v343
    %v1286 = vunpack.c.l.b16 %v344
    %v1287 = vunpack.c.h.b16 %v344
    %v1288 = vunpack.c.l.b16 %v345
    %v1289 = vunpack.c.h.b16 %v345
    %v1290 = vunpack.c.l.b16 %v346
    %v1291 = vunpack.c.h.b16 %v346
    %v1292 = vunpack.c.l.b16 %v347
    %v1293 = vunpack.c.h.b16 %v347
    %v1294 = vunpack.c.l.b16 %v348
    %v1295 = vunpack.c.h.b16 %v348
    %v1296 = vunpack.c.l.b16 %v349
    %v1297 = vunpack.c.h.b16 %v349
    %v1298 = vunpack.c.l.b16 %v350
    %v1299 = vunpack.c.h.b16 %v350
    %v1300 = vunpack.c.l.b16 %v351
    %v1301 = vunpack.c.h.b16 %v351
    %v1302 = vunpack.c.l.b16 %v352
    %v1303 = vunpack.c.h.b16 %v352
    %v1304 = vunpack.c.l.b16 %v353
    %v1305 = vunpack.c.h.b16 %v353
    %v1306 = vunpack.c.l.b16 %v354
    %v1307 = vunpack.c.h.b16 %v354
    %v1308 = vunpack.c.l.b16 %v355
    %v1309 = vunpack.c.h.b16 %v355
    %v1310 = vunpack.c.l.b16 %v356
    %v1311 = vunpack.c.h.b16 %v356
    %v1312 = vunpack.c.l.b16 %v357
    %v1313 = vunpack.c.h.b16 %v357
    %v1314 = vunpack.c.l.b16 %v358
    %v1315 = vunpack.c.h.b16 %v358
    %v1316 = vunpack.c.l.b16 %v359
    %v1317 = vunpack.c.h.b16 %v359
    %v1318 = vunpack.c.l.b16 %v360
    %v1319 = vunpack.c.h.b16 %v360
    %v1320 = vunpack.c.l.b16 %v361
    %v1321 = vunpack.c.h.b16 %v361
    %v1322 = vunpack.c.l.b16 %v362
    %v1323 = vunpack.c.h.b16 %v362
    %v1324 = vunpack.c.l.b16 %v363
    %v1325 = vunpack.c.h.b16 %v363
    %v1326 = vunpack.c.l.b16 %v364
    %v1327 = vunpack.c.h.b16 %v364
    %v1328 = vunpack.c.l.b16 %v365
    %v1329 = vunpack.c.h.b16 %v365
    %v1330 = vunpack.c.l.b16 %v366
    %v1331 = vunpack.c.h.b16 %v366
    %v1332 = vunpack.c.l.b16 %v367
    %v1333 = vunpack.c.h.b16 %v367
    %v1334 = vunpack.c.l.b16 %v368
    %v1335 = vunpack.c.h.b16 %v368
    %v1336 = vunpack.c.l.b16 %v369
    %v1337 = vunpack.c.h.b16 %v369
    %v1338 = vunpack.c.l.b16 %v370
    %v1339 = vunpack.c.h.b16 %v370
    %v1340 = vunpack.c.l.b16 %v371
    %v1341 = vunpack.c.h.b16 %v371
    %v1342 = vunpack.c.l.b16 %v372
    %v1343 = vunpack.c.h.b16 %v372
    %v1344 = vunpack.c.l.b16 %v373
    %v1345 = vunpack.c.h.b16 %v373
    %v1346 = vunpack.c.l.b16 %v374
    %v1347 = vunpack.c.h.b16 %v374
    %v1348 = vunpack.c.l.b16 %v375
    %v1349 = vunpack.c.h.b16 %v375
    %v1350 = vunpack.c.l.b16 %v376
    %v1351 = vunpack.c.h.b16 %v376
    %v1352 = vunpack.c.l.b16 %v377
    %v1353 = vunpack.c.h.b16 %v377
    %v1354 = vunpack.c.l.b16 %v378
    %v1355 = vunpack.c.h.b16 %v378
    %v1356 = vunpack.c.l.b16 %v379
    %v1357 = vunpack.c.h.b16 %v379
    %v1358 = vunpack.c.l.b16 %v380
    %v1359 = vunpack.c.h.b16 %v380
    %v1360 = vunpack.c.l.b16 %v381
    %v1361 = vunpack.c.h.b16 %v381
    %v1362 = vunpack.c.l.b16 %v382
    %v1363 = vunpack.c.h.b16 %v382
    %v1364 = vunpack.c.l.b16 %v383
    %v1365 = vunpack.c.h.b16 %v383
    %v1366 = vunpack.c.l.b16 %v384
    %v1367 = vunpack.c.h.b16 %v384
    %v1368 = vunpack.c.l.b16 %v385
    %v1369 = vunpack.c.h.b16 %v385
    %v1370 = vunpack.c.l.b16 %v386
    %v1371 = vunpack.c.h.b16 %v386
    %v1372 = vunpack.c.l.b16 %v387
    %v1373 = vunpack.c.h.b16 %v387
    %v1374 = vunpack.c.l.b16 %v388
    %v1375 = vunpack.c.h.b16 %v388
    %v1376 = vunpack.c.l.b16 %v389
    %v1377 = vunpack.c.h.b16 %v389
    %v1378 = vunpack.c.l.b16 %v390
    %v1379 = vunpack.c.h.b16 %v390
    %v1380 = vunpack.c.l.b16 %v391
    %v1381 = vunpack.c.h.b16 %v391
    %v1382 = vunpack.c.l.b16 %v392
    %v1383 = vunpack.c.h.b16 %v392
    %v1384 = vunpack.c.l.b16 %v393
    %v1385 = vunpack.c.h.b16 %v393
    %v1386 = vunpack.c.l.b16 %v394
    %v1387 = vunpack.c.h.b16 %v394
    %v1388 = vunpack.c.l.b16 %v395
    %v1389 = vunpack.c.h.b16 %v395
    %v1390 = vunpack.c.l.b16 %v396
    %v1391 = vunpack.c.h.b16 %v396
    %v1392 = vunpack.c.l.b16 %v397
    %v1393 = vunpack.c.h.b16 %v397
    %v1394 = vunpack.c.l.b16 %v398
    %v1395 = vunpack.c.h.b16 %v398
    %v1396 = vunpack.c.l.b16 %v399
    %v1397 = vunpack.c.h.b16 %v399
    %v1398 = vunpack.c.l.b16 %v400
    %v1399 = vunpack.c.h.b16 %v400
    %v1400 = vunpack.c.l.b16 %v401
    %v1401 = vunpack.c.h.b16 %v401
    %v1402 = vunpack.c.l.b16 %v402
    %v1403 = vunpack.c.h.b16 %v402
    %v1404 = vunpack.c.l.b16 %v403
    %v1405 = vunpack.c.h.b16 %v403
    %v1406 = vunpack.c.l.b16 %v404
    %v1407 = vunpack.c.h.b16 %v404
    %v1408 = vunpack.c.l.b16 %v405
    %v1409 = vunpack.c.h.b16 %v405
    %v1410 = vunpack.c.l.b16 %v406
    %v1411 = vunpack.c.h.b16 %v406
    %v1412 = vunpack.c.l.b16 %v407
    %v1413 = vunpack.c.h.b16 %v407
    %v1414 = vunpack.c.l.b16 %v408
    %v1415 = vunpack.c.h.b16 %v408
    %v1416 = vunpack.c.l.b16 %v409
    %v1417 = vunpack.c.h.b16 %v409
    %v1418 = vunpack.c.l.b16 %v410
    %v1419 = vunpack.c.h.b16 %v410
    %v1420 = vunpack.c.l.b16 %v411
    %v1421 = vunpack.c.h.b16 %v411
    %v1422 = vunpack.c.l.b16 %v412
    %v1423 = vunpack.c.h.b16 %v412
    %v1424 = vunpack.c.l.b16 %v413
    %v1425 = vunpack.c.h.b16 %v413
    %v1426 = vunpack.c.l.b16 %v414
    %v1427 = vunpack.c.h.b16 %v414
    %v1428 = vunpack.c.l.b16 %v415
    %v1429 = vunpack.c.h.b16 %v415
    %v1430 = vunpack.c.l.b16 %v416
    %v1431 = vunpack.c.h.b16 %v416
    %v1432 = vunpack.c.l.b16 %v417
    %v1433 = vunpack.c.h.b16 %v417
    %v1434 = vunpack.c.l.b16 %v418
    %v1435 = vunpack.c.h.b16 %v418
    %v1436 = vunpack.c.l.b16 %v419
    %v1437 = vunpack.c.h.b16 %v419
    %v1438 = vunpack.c.l.b16 %v420
    %v1439 = vunpack.c.h.b16 %v420
    %v1440 = vunpack.c.l.b16 %v421
    %v1441 = vunpack.c.h.b16 %v421
    %v1442 = vunpack.c.l.b16 %v422
    %v1443 = vunpack.c.h.b16 %v422
    %v1444 = vunpack.c.l.b16 %v423
    %v1445 = vunpack.c.h.b16 %v423
    %v1446 = vunpack.c.l.b16 %v424
    %v1447 = vunpack.c.h.b16 %v424
    %v1448 = vunpack.c.l.b16 %v425
    %v1449 = vunpack.c.h.b16 %v425
    %v1450 = vunpack.c.l.b16 %v426
    %v1451 = vunpack.c.h.b16 %v426
    %v1452 = vunpack.c.l.b16 %v427
    %v1453 = vunpack.c.h.b16 %v427
    %v1454 = vunpack.c.l.b16 %v428
    %v1455 = vunpack.c.h.b16 %v428
    %v1456 = vunpack.c.l.b16 %v429
    %v1457 = vunpack.c.h.b16 %v429
    %v1458 = vunpack.c.l.b16 %v430
    %v1459 = vunpack.c.h.b16 %v430
    %v1460 = vunpack.c.l.b16 %v431
    %v1461 = vunpack.c.h.b16 %v431
    %v1462 = vunpack.c.l.b16 %v432
    %v1463 = vunpack.c.h.b16 %v432
    %v1464 = vunpack.c.l.b16 %v433
    %v1465 = vunpack.c.h.b16 %v433
    %v1466 = vunpack.c.l.b16 %v434
    %v1467 = vunpack.c.h.b16 %v434
    %v1468 = vunpack.c.l.b16 %v435
    %v1469 = vunpack.c.h.b16 %v435
    %v1470 = vunpack.c.l.b16 %v436
    %v1471 = vunpack.c.h.b16 %v436
    %v1472 = vunpack.c.l.b16 %v437
    %v1473 = vunpack.c.h.b16 %v437
    %v1474 = vunpack.c.l.b16 %v438
    %v1475 = vunpack.c.h.b16 %v438
    %v1476 = vunpack.c.l.b16 %v439
    %v1477 = vunpack.c.h.b16 %v439
    %v1478 = vunpack.c.l.b16 %v440
    %v1479 = vunpack.c.h.b16 %v440
    %v1480 = vunpack.c.l.b16 %v441
    %v1481 = vunpack.c.h.b16 %v441
    %v1482 = vunpack.c.l.b16 %v442
    %v1483 = vunpack.c.h.b16 %v442
    %v1484 = vunpack.c.l.b16 %v443
    %v1485 = vunpack.c.h.b16 %v443
    %v1486 = vunpack.c.l.b16 %v444
    %v1487 = vunpack.c.h.b16 %v444
    %v1488 = vunpack.c.l.b16 %v445
    %v1489 = vunpack.c.h.b16 %v445
    %v1490 = vunpack.c.l.b16 %v446
    %v1491 = vunpack.c.h.b16 %v446
    %v1492 = vunpack.c.l.b16 %v447
    %v1493 = vunpack.c.h.b16 %v447
    %v1494 = vunpack.c.l.b16 %v448
    %v1495 = vunpack.c.h.b16 %v448
    %v1496 = vunpack.c.l.b16 %v449
    %v1497 = vunpack.c.h.b16 %v449
    %v1498 = vunpack.c.l.b16 %v450
    %v1499 = vunpack.c.h.b16 %v450
    %v1500 = vunpack.c.l.b16 %v451
    %v1501 = vunpack.c.h.b16 %v451
    %v1502 = vunpack.c.l.b16 %v452
    %v1503 = vunpack.c.h.b16 %v452
    %v1504 = vunpack.c.l.b16 %v453
    %v1505 = vunpack.c.h.b16 %v453
    %v1506 = vunpack.c.l.b16 %v454
    %v1507 = vunpack.c.h.b16 %v454
    %v1508 = vunpack.c.l.b16 %v455
    %v1509 = vunpack.c.h.b16 %v455
    %v1510 = vunpack.c.l.b16 %v456
    %v1511 = vunpack.c.h.b16 %v456
    %v1512 = vunpack.c.l.b16 %v457
    %v1513 = vunpack.c.h.b16 %v457
    %v1514 = vunpack.c.l.b16 %v458
    %v1515 = vunpack.c.h.b16 %v458
    %v1516 = vunpack.c.l.b16 %v459
    %v1517 = vunpack.c.h.b16 %v459
    %v1518 = vunpack.c.l.b16 %v460
    %v1519 = vunpack.c.h.b16 %v460
    %v1520 = vunpack.c.l.b16 %v461
    %v1521 = vunpack.c.h.b16 %v461
    %v1522 = vunpack.c.l.b16 %v462
    %v1523 = vunpack.c.h.b16 %v462
    %v1524 = vunpack.c.l.b16 %v463
    %v1525 = vunpack.c.h.b16 %v463
    %v1526 = vunpack.c.l.b16 %v464
    %v1527 = vunpack.c.h.b16 %v464
    %v1528 = vunpack.c.l.b16 %v465
    %v1529 = vunpack.c.h.b16 %v465
    %v1530 = vunpack.c.l.b16 %v466
    %v1531 = vunpack.c.h.b16 %v466
    %v1532 = vunpack.c.l.b16 %v467
    %v1533 = vunpack.c.h.b16 %v467
    %v1534 = vunpack.c.l.b16 %v468
    %v1535 = vunpack.c.h.b16 %v468
    %v1536 = vunpack.c.l.b16 %v469
    %v1537 = vunpack.c.h.b16 %v469
    %v1538 = vunpack.c.l.b16 %v470
    %v1539 = vunpack.c.h.b16 %v470
    %v1540 = vunpack.c.l.b16 %v471
    %v1541 = vunpack.c.h.b16 %v471
    %v1542 = vunpack.c.l.b16 %v472
    %v1543 = vunpack.c.h.b16 %v472
    %v1544 = vunpack.c.l.b16 %v473
    %v1545 = vunpack.c.h.b16 %v473
    %v1546 = vunpack.c.l.b16 %v474
    %v1547 = vunpack.c.h.b16 %v474
    %v1548 = vunpack.c.l.b16 %v475
    %v1549 = vunpack.c.h.b16 %v475
    %v1550 = vunpack.c.l.b16 %v476
    %v1551 = vunpack.c.h.b16 %v476
    %v1552 = vunpack.c.l.b16 %v477
    %v1553 = vunpack.c.h.b16 %v477
    %v1554 = vunpack.c.l.b16 %v478
    %v1555 = vunpack.c.h.b16 %v478
    %v1556 = vunpack.c.l.b16 %v479
    %v1557 = vunpack.c.h.b16 %v479
    %v1558 = vunpack.c.l.b16 %v480
    %v1559 = vunpack.c.h.b16 %v480
    %v1560 = vunpack.c.l.b16 %v481
    %v1561 = vunpack.c.h.b16 %v481
    %v1562 = vunpack.c.l.b16 %v482
    %v1563 = vunpack.c.h.b16 %v482
    %v1564 = vunpack.c.l.b16 %v483
    %v1565 = vunpack.c.h.b16 %v483
    %v1566 = vunpack.c.l.b16 %v484
    %v1567 = vunpack.c.h.b16 %v484
    %v1568 = vunpack.c.l.b16 %v485
    %v1569 = vunpack.c.h.b16 %v485
    %v1570 = vunpack.c.l.b16 %v486
    %v1571 = vunpack.c.h.b16 %v486
    %v1572 = vunpack.c.l.b16 %v487
    %v1573 = vunpack.c.h.b16 %v487
    %v1574 = vunpack.c.l.b16 %v488
    %v1575 = vunpack.c.h.b16 %v488
    %v1576 = vunpack.c.l.b16 %v489
    %v1577 = vunpack.c.h.b16 %v489
    %v1578 = vunpack.c.l.b16 %v490
    %v1579 = vunpack.c.h.b16 %v490
    %v1580 = vunpack.c.l.b16 %v491
    %v1581 = vunpack.c.h.b16 %v491
    %v1582 = vunpack.c.l.b16 %v492
    %v1583 = vunpack.c.h.b16 %v492
    %v1584 = vunpack.c.l.b16 %v493
    %v1585 = vunpack.c.h.b16 %v493
    %v1586 = vunpack.c.l.b16 %v494
    %v1587 = vunpack.c.h.b16 %v494
    %v1588 = vunpack.c.l.b16 %v495
    %v1589 = vunpack.c.h.b16 %v495
    %v1590 = vunpack.c.l.b16 %v496
    %v1591 = vunpack.c.h.b16 %v496
    %v1592 = vunpack.c.l.b16 %v497
    %v1593 = vunpack.c.h.b16 %v497
    %v1594 = vunpack.c.l.b16 %v498
    %v1595 = vunpack.c.h.b16 %v498
    %v1596 = vunpack.c.l.b16 %v499
    %v1597 = vunpack.c.h.b16 %v499
    %v1598 = vunpack.c.l.b16 %v500
    %v1599 = vunpack.c.h.b16 %v500
    %v1600 = vunpack.c.l.b16 %v501
    %v1601 = vunpack.c.h.b16 %v501
    %v1602 = vunpack.c.l.b16 %v502
    %v1603 = vunpack.c.h.b16 %v502
    %v1604 = vunpack.c.l.b16 %v503
    %v1605 = vunpack.c.h.b16 %v503
    %v1606 = vunpack.c.l.b16 %v504
    %v1607 = vunpack.c.h.b16 %v504
    %v1608 = vunpack.c.l.b16 %v505
    %v1609 = vunpack.c.h.b16 %v505
    %v1610 = vunpack.c.l.b16 %v506
    %v1611 = vunpack.c.h.b16 %v506
    %v1612 = vunpack.c.l.b16 %v507
    %v1613 = vunpack.c.h.b16 %v507
    %v1614 = vunpack.c.l.b16 %v508
    %v1615 = vunpack.c.h.b16 %v508
    %v1616 = vunpack.c.l.b16 %v509
    %v1617 = vunpack.c.h.b16 %v509
    %v1618 = vunpack.c.l.b16 %v510
    %v1619 = vunpack.c.h.b16 %v510
    %v1620 = vunpack.c.l.b16 %v511
    %v1621 = vunpack.c.h.b16 %v511
    %v1622 = vunpack.c.l.b16 %v512
    %v1623 = vunpack.c.h.b16 %v512
    %v1624 = vunpack.c.l.b16 %v513
    %v1625 = vunpack.c.h.b16 %v513
    %v1626 = vunpack.c.l.b16 %v514
    %v1627 = vunpack.c.h.b16 %v514
    %v1628 = vunpack.c.l.b16 %v515
    %v1629 = vunpack.c.h.b16 %v515
    %v1630 = vunpack.c.l.b16 %v516
    %v1631 = vunpack.c.h.b16 %v516
    %v1632 = vunpack.c.l.b16 %v517
    %v1633 = vunpack.c.h.b16 %v517
    %v1634 = vunpack.c.l.b16 %v518
    %v1635 = vunpack.c.h.b16 %v518
    %v1636 = vunpack.c.l.b16 %v519
    %v1637 = vunpack.c.h.b16 %v519
    %v1638 = vunpack.c.l.b16 %v520
    %v1639 = vunpack.c.h.b16 %v520
    %v1640 = vunpack.c.l.b16 %v521
    %v1641 = vunpack.c.h.b16 %v521
    %v1642 = vunpack.c.l.b16 %v522
    %v1643 = vunpack.c.h.b16 %v522
    %v1644 = vunpack.c.l.b16 %v523
    %v1645 = vunpack.c.h.b16 %v523
    %v1646 = vunpack.c.l.b16 %v524
    %v1647 = vunpack.c.h.b16 %v524
    %v1648 = vunpack.c.l.b16 %v525
    %v1649 = vunpack.c.h.b16 %v525
    %v1650 = vunpack.c.l.b16 %v526
    %v1651 = vunpack.c.h.b16 %v526
    %v1652 = vunpack.c.l.b16 %v527
    %v1653 = vunpack.c.h.b16 %v527
    %v1654 = vunpack.c.l.b16 %v528
    %v1655 = vunpack.c.h.b16 %v528
    %v1656 = vunpack.c.l.b16 %v529
    %v1657 = vunpack.c.h.b16 %v529
    %v1658 = vunpack.c.l.b16 %v530
    %v1659 = vunpack.c.h.b16 %v530
    %v1660 = vunpack.c.l.b16 %v531
    %v1661 = vunpack.c.h.b16 %v531
    %v1662 = vunpack.c.l.b16 %v532
    %v1663 = vunpack.c.h.b16 %v532
    %v1664 = vunpack.c.l.b16 %v533
    %v1665 = vunpack.c.h.b16 %v533
    %v1666 = vunpack.c.l.b16 %v534
    %v1667 = vunpack.c.h.b16 %v534
    %v1668 = vunpack.c.l.b16 %v535
    %v1669 = vunpack.c.h.b16 %v535
    %v1670 = vunpack.c.l.b16 %v536
    %v1671 = vunpack.c.h.b16 %v536
    %v1672 = vunpack.c.l.b16 %v537
    %v1673 = vunpack.c.h.b16 %v537
    %v1674 = vunpack.c.l.b16 %v538
    %v1675 = vunpack.c.h.b16 %v538
    %v1676 = vunpack.c.l.b16 %v539
    %v1677 = vunpack.c.h.b16 %v539
    %v1678 = vunpack.c.l.b16 %v540
    %v1679 = vunpack.c.h.b16 %v540
    %v1680 = vunpack.c.l.b16 %v541
    %v1681 = vunpack.c.h.b16 %v541
    %v1682 = vunpack.c.l.b16 %v542
    %v1683 = vunpack.c.h.b16 %v542
    %v1684 = vunpack.c.l.b16 %v543
    %v1685 = vunpack.c.h.b16 %v543
    %v1686 = vunpack.c.l.b16 %v544
    %v1687 = vunpack.c.h.b16 %v544
    %v1688 = vunpack.c.l.b16 %v545
    %v1689 = vunpack.c.h.b16 %v545
    %v1690 = vunpack.c.l.b16 %v546
    %v1691 = vunpack.c.h.b16 %v546
    %v1692 = vunpack.c.l.b16 %v547
    %v1693 = vunpack.c.h.b16 %v547
    %v1694 = vunpack.c.l.b16 %v548
    %v1695 = vunpack.c.h.b16 %v548
    %v1696 = vunpack.c.l.b16 %v549
    %v1697 = vunpack.c.h.b16 %v549
    %v1698 = vunpack.c.l.b16 %v550
    %v1699 = vunpack.c.h.b16 %v550
    %v1700 = vunpack.c.l.b16 %v551
    %v1701 = vunpack.c.h.b16 %v551
    %v1702 = vunpack.c.l.b16 %v552
    %v1703 = vunpack.c.h.b16 %v552
    %v1704 = vunpack.c.l.b16 %v553
    %v1705 = vunpack.c.h.b16 %v553
    %v1706 = vunpack.c.l.b16 %v554
    %v1707 = vunpack.c.h.b16 %v554
    %v1708 = vunpack.c.l.b16 %v555
    %v1709 = vunpack.c.h.b16 %v555
    %v1710 = vunpack.c.l.b16 %v556
    %v1711 = vunpack.c.h.b16 %v556
    %v1712 = vunpack.c.l.b16 %v557
    %v1713 = vunpack.c.h.b16 %v557
    %v1714 = vunpack.c.l.b16 %v558
    %v1715 = vunpack.c.h.b16 %v558
    %v1716 = vunpack.c.l.b16 %v559
    %v1717 = vunpack.c.h.b16 %v559
    %v1718 = vunpack.c.l.b16 %v560
    %v1719 = vunpack.c.h.b16 %v560
    %v1720 = vunpack.c.l.b16 %v561
    %v1721 = vunpack.c.h.b16 %v561
    %v1722 = vunpack.c.l.b16 %v562
    %v1723 = vunpack.c.h.b16 %v562
    %v1724 = vunpack.c.l.b16 %v563
    %v1725 = vunpack.c.h.b16 %v563
    %v1726 = vunpack.c.l.b16 %v564
    %v1727 = vunpack.c.h.b16 %v564
    %v1728 = vunpack.c.l.b16 %v565
    %v1729 = vunpack.c.h.b16 %v565
    %v1730 = vunpack.c.l.b16 %v566
    %v1731 = vunpack.c.h.b16 %v566
    %v1732 = vunpack.c.l.b16 %v567
    %v1733 = vunpack.c.h.b16 %v567
    %v1734 = vunpack.c.l.b16 %v568
    %v1735 = vunpack.c.h.b16 %v568
    %v1736 = vunpack.c.l.b16 %v569
    %v1737 = vunpack.c.h.b16 %v569
    %v1738 = vunpack.c.l.b16 %v570
    %v1739 = vunpack.c.h.b16 %v570
    %v1740 = vunpack.c.l.b16 %v571
    %v1741 = vunpack.c.h.b16 %v571
    %v1742 = vunpack.c.l.b16 %v572
    %v1743 = vunpack.c.h.b16 %v572
    %v1744 = vunpack.c.l.b16 %v573
    %v1745 = vunpack.c.h.b16 %v573
    %v1746 = vunpack.c.l.b16 %v574
    %v1747 = vunpack.c.h.b16 %v574
    %v1748 = vunpack.c.l.b16 %v575
    %v1749 = vunpack.c.h.b16 %v575
    %v1750 = vunpack.c.l.b16 %v576
    %v1751 = vunpack.c.h.b16 %v576
    %v1752 = vunpack.c.l.b16 %v577
    %v1753 = vunpack.c.h.b16 %v577
    %v1754 = vunpack.c.l.b16 %v578
    %v1755 = vunpack.c.h.b16 %v578
    %v1756 = vunpack.c.l.b16 %v579
    %v1757 = vunpack.c.h.b16 %v579
    %v1758 = vunpack.c.l.b16 %v580
    %v1759 = vunpack.c.h.b16 %v580
    %v1760 = vunpack.c.l.b16 %v581
    %v1761 = vunpack.c.h.b16 %v581
    %v1762 = vunpack.c.l.b16 %v582
    %v1763 = vunpack.c.h.b16 %v582
    %v1764 = vunpack.c.l.b16 %v583
    %v1765 = vunpack.c.h.b16 %v583
    %v1766 = vunpack.c.l.b16 %v584
    %v1767 = vunpack.c.h.b16 %v584
    %v1768 = vunpack.c.l.b16 %v585
    %v1769 = vunpack.c.h.b16 %v585
    %v1770 = vunpack.c.l.b16 %v586
    %v1771 = vunpack.c.h.b16 %v586
    %v1772 = vunpack.c.l.b16 %v587
    %v1773 = vunpack.c.h.b16 %v587
    %v1774 = vunpack.c.l.b16 %v588
    %v1775 = vunpack.c.h.b16 %v588
    %v1776 = vunpack.c.l.b16 %v589
    %v1777 = vunpack.c.h.b16 %v589
    %v1778 = vpack.c.b16 %v996, %v994
    %v1779 = vpack.c.b16 %v997, %v995
    %v1780 = vpack.c.b16 %v1000, %v998
    %v1781 = vpack.c.b16 %v1001, %v999
    %v1782 = vpack.c.b16 %v1004, %v1002
    %v1783 = vpack.c.b16 %v1005, %v1003
    %v1784 = vpack.c.b16 %v1008, %v1006
    %v1785 = vpack.c.b16 %v1009, %v1007
    %v1786 = vpack.c.b16 %v1012, %v1010
    %v1787 = vpack.c.b16 %v1013, %v1011
    %v1788 = vpack.c.b16 %v1016, %v1014
    %v1789 = vpack.c.b16 %v1017, %v1015
    %v1790 = vpack.c.b16 %v1020, %v1018
    %v1791 = vpack.c.b16 %v1021, %v1019
    %v1792 = vpack.c.b16 %v1024, %v1022
    %v1793 = vpack.c.b16 %v1025, %v1023
    %v1794 = vpack.c.b16 %v1028, %v1026
    %v1795 = vpack.c.b16 %v1029, %v1027
    %v1796 = vpack.c.b16 %v1032, %v1030
    %v1797 = vpack.c.b16 %v1033, %v1031
    %v1798 = vpack.c.b16 %v1036, %v1034
    %v1799 = vpack.c.b16 %v1037, %v1035
    %v1800 = vpack.c.b16 %v1040, %v1038
    %v1801 = vpack.c.b16 %v1041, %v1039
    %v1802 = vpack.c.b16 %v1044, %v1042
    %v1803 = vpack.c.b16 %v1045, %v1043
    %v1804 = vpack.c.b16 %v1048, %v1046
    %v1805 = vpack.c.b16 %v1049, %v1047
    %v1806 = vpack.c.b16 %v1052, %v1050
    %v1807 = vpack.c.b16 %v1053, %v1051
    %v1808 = vpack.c.b16 %v1056, %v1054
    %v1809 = vpack.c.b16 %v1057, %v1055
    %v1810 = vpack.c.b16 %v1060, %v1058
    %v1811 = vpack.c.b16 %v1061, %v1059
    %v1812 = vpack.c.b16 %v1064, %v1062
    %v1813 = vpack.c.b16 %v1065, %v1063
    %v1814 = vpack.c.b16 %v1068, %v1066
    %v1815 = vpack.c.b16 %v1069, %v1067
    %v1816 = vpack.c.b16 %v1072, %v1070
    %v1817 = vpack.c.b16 %v1073, %v1071
    %v1818 = vpack.c.b16 %v1076, %v1074
    %v1819 = vpack.c.b16 %v1077, %v1075
    %v1820 = vpack.c.b16 %v1080, %v1078
    %v1821 = vpack.c.b16 %v1081, %v1079
    %v1822 = vpack.c.b16 %v1084, %v1082
    %v1823 = vpack.c.b16 %v1085, %v1083
    %v1824 = vpack.c.b16 %v1088, %v1086
    %v1825 = vpack.c.b16 %v1089, %v1087
    %v1826 = vpack.c.b16 %v1092, %v1090
    %v1827 = vpack.c.b16 %v1093, %v1091
    %v1828 = vpack.c.b16 %v1096, %v1094
    %v1829 = vpack.c.b16 %v1097, %v1095
    %v1830 = vpack.c.b16 %v1100, %v1098
    %v1831 = vpack.c.b16 %v1101, %v1099
    %v1832 = vpack.c.b16 %v1104, %v1102
    %v1833 = vpack.c.b16 %v1105, %v1103
    %v1834 = vpack.c.b16 %v1108, %v1106
    %v1835 = vpack.c.b16 %v1109, %v1107
    %v1836 = vpack.c.b16 %v1112, %v1110
    %v1837 = vpack.c.b16 %v1113, %v1111
    %v1838 = vpack.c.b16 %v1116, %v1114
    %v1839 = vpack.c.b16 %v1117, %v1115
    %v1840 = vpack.c.b16 %v1120, %v1118
    %v1841 = vpack.c.b16 %v1121, %v1119
    %v1842 = vpack.c.b16 %v1124, %v1122
    %v1843 = vpack.c.b16 %v1125, %v1123
    %v1844 = vpack.c.b16 %v1128, %v1126
    %v1845 = vpack.c.b16 %v1129, %v1127
    %v1846 = vpack.c.b16 %v1132, %v1130
    %v1847 = vpack.c.b16 %v1133, %v1131
    %v1848 = vpack.c.b16 %v1136, %v1134
    %v1849 = vpack.c.b16 %v1137, %v1135
    %v1850 = vpack.c.b16 %v1140, %v1138
    %v1851 = vpack.c.b16 %v1141, %v1139
    %v1852 = vpack.c.b16 %v1144, %v1142
    %v1853 = vpack.c.b16 %v1145, %v1143
    %v1854 = vpack.c.b16 %v1148, %v1146
    %v1855 = vpack.c.b16 %v1149, %v1147
    %v1856 = vpack.c.b16 %v1152, %v1150
    %v1857 = vpack.c.b16 %v1153, %v1151
    %v1858 = vpack.c.b16 %v1156, %v1154
    %v1859 = vpack.c.b16 %v1157, %v1155
    %v1860 = vpack.c.b16 %v1160, %v1158
    %v1861 = vpack.c.b16 %v1161, %v1159
    %v1862 = vpack.c.b16 %v1164, %v1162
    %v1863 = vpack.c.b16 %v1165, %v1163
    %v1864 = vpack.c.b16 %v1168, %v1166
    %v1865 = vpack.c.b16 %v1169, %v1167
    %v1866 = vpack.c.b16 %v1172, %v1170
    %v1867 = vpack.c.b16 %v1173, %v1171
    %v1868 = vpack.c.b16 %v1176, %v1174
    %v1869 = vpack.c.b16 %v1177, %v1175
    %v1870 = vpack.c.b16 %v1180, %v1178
    %v1871 = vpack.c.b16 %v1181, %v1179
    %v1872 = vpack.c.b16 %v1184, %v1182
    %v1873 = vpack.c.b16 %v1185, %v1183
    %v1874 = vpack.c.b16 %v1188, %v1186
    %v1875 = vpack.c.b16 %v1189, %v1187
    %v1876 = vpack.c.b16 %v1192, %v1190
    %v1877 = vpack.c.b16 %v1193, %v1191
    %v1878 = vpack.c.b16 %v1196, %v1194
    %v1879 = vpack.c.b16 %v1197, %v1195
    %v1880 = vpack.c.b16 %v1200, %v1198
    %v1881 = vpack.c.b16 %v1201, %v1199
    %v1882 = vpack.c.b16 %v1204, %v1202
    %v1883 = vpack.c.b16 %v1205, %v1203
    %v1884 = vpack.c.b16 %v1208, %v1206
    %v1885 = vpack.c.b16 %v1209, %v1207
    %v1886 = vpack.c.b16 %v1212, %v1210
    %v1887 = vpack.c.b16 %v1213, %v1211
    %v1888 = vpack.c.b16 %v1216, %v1214
    %v1889 = vpack.c.b16 %v1217, %v1215
    %v1890 = vpack.c.b16 %v1220, %v1218
    %v1891 = vpack.c.b16 %v1221, %v1219
    %v1892 = vpack.c.b16 %v1224, %v1222
    %v1893 = vpack.c.b16 %v1225, %v1223
    %v1894 = vpack.c.b16 %v1228, %v1226
    %v1895 = vpack.c.b16 %v1229, %v1227
    %v1896 = vpack.c.b16 %v1232, %v1230
    %v1897 = vpack.c.b16 %v1233, %v1231
    %v1898 = vpack.c.b16 %v1236, %v1234
    %v1899 = vpack.c.b16 %v1237, %v1235
    %v1900 = vpack.c.b16 %v1240, %v1238
    %v1901 = vpack.c.b16 %v1241, %v1239
    %v1902 = vpack.c.b16 %v1244, %v1242
    %v1903 = vpack.c.b16 %v1245, %v1243
    %v1904 = vpack.c.b16 %v1248, %v1246
    %v1905 = vpack.c.b16 %v1249, %v1247
    %v1906 = vpack.c.b16 %v1252, %v1250
    %v1907 = vpack.c.b16 %v1253, %v1251
    %v1908 = vpack.c.b16 %v1256, %v1254
    %v1909 = vpack.c.b16 %v1257, %v1255
    %v1910 = vpack.c.b16 %v1260, %v1258
    %v1911 = vpack.c.b16 %v1261, %v1259
    %v1912 = vpack.c.b16 %v1264, %v1262
    %v1913 = vpack.c.b16 %v1265, %v1263
    %v1914 = vpack.c.b16 %v1268, %v1266
    %v1915 = vpack.c.b16 %v1269, %v1267
    %v1916 = vpack.c.b16 %v1272, %v1270
    %v1917 = vpack.c.b16 %v1273, %v1271
    %v1918 = vpack.c.b16 %v1276, %v1274
    %v1919 = vpack.c.b16 %v1277, %v1275
    %v1920 = vpack.c.b16 %v1280, %v1278
    %v1921 = vpack.c.b16 %v1281, %v1279
    %v1922 = vpack.c.b16 %v1284, %v1282
    %v1923 = vpack.c.b16 %v1285, %v1283
    %v1924 = vpack.c.b16 %v1288, %v1286
    %v1925 = vpack.c.b16 %v1289, %v1287
    %v1926 = vpack.c.b16 %v1292, %v1290
    %v1927 = vpack.c.b16 %v1293, %v1291
    %v1928 = vpack.c.b16 %v1296, %v1294
    %v1929 = vpack.c.b16 %v1297, %v1295
    %v1930 = vpack.c.b16 %v1300, %v1298
    %v1931 = vpack.c.b16 %v1301, %v1299
    %v1932 = vpack.c.b16 %v1304, %v1302
    %v1933 = vpack.c.b16 %v1305, %v1303
    %v1934 = vpack.c.b16 %v1308, %v1306
    %v1935 = vpack.c.b16 %v1309, %v1307
    %v1936 = vpack.c.b16 %v1312, %v1310
    %v1937 = vpack.c.b16 %v1313, %v1311
    %v1938 = vpack.c.b16 %v1316, %v1314
    %v1939 = vpack.c.b16 %v1317, %v1315
    %v1940 = vpack.c.b16 %v1320, %v1318
    %v1941 = vpack.c.b16 %v1321, %v1319
    %v1942 = vpack.c.b16 %v1324, %v1322
    %v1943 = vpack.c.b16 %v1325, %v1323
    %v1944 = vpack.c.b16 %v1328, %v1326
    %v1945 = vpack.c.b16 %v1329, %v1327
    %v1946 = vpack.c.b16 %v1332, %v1330
    %v1947 = vpack.c.b16 %v1333, %v1331
    %v1948 = vpack.c.b16 %v1336, %v1334
    %v1949 = vpack.c.b16 %v1337, %v1335
    %v1950 = vpack.c.b16 %v1340, %v1338
    %v1951 = vpack.c.b16 %v1341, %v1339
    %v1952 = vpack.c.b16 %v1344, %v1342
    %v1953 = vpack.c.b16 %v1345, %v1343
    %v1954 = vpack.c.b16 %v1348, %v1346
    %v1955 = vpack.c.b16 %v1349, %v1347
    %v1956 = vpack.c.b16 %v1352, %v1350
    %v1957 = vpack.c.b16 %v1353, %v1351
    %v1958 = vpack.c.b16 %v1356, %v1354
    %v1959 = vpack.c.b16 %v1357, %v1355
    %v1960 = vpack.c.b16 %v1360, %v1358
    %v1961 = vpack.c.b16 %v1361, %v1359
    %v1962 = vpack.c.b16 %v1364, %v1362
    %v1963 = vpack.c.b16 %v1365, %v1363
    %v1964 = vpack.c.b16 %v1368, %v1366
    %v1965 = vpack.c.b16 %v1369, %v1367
    %v1966 = vpack.c.b16 %v1372, %v1370
    %v1967 = vpack.c.b16 %v1373, %v1371
    %v1968 = vpack.c.b16 %v1376, %v1374
    %v1969 = vpack.c.b16 %v1377, %v1375
    %v1970 = vpack.c.b16 %v1380, %v1378
    %v1971 = vpack.c.b16 %v1381, %v1379
    %v1972 = vpack.c.b16 %v1384, %v1382
    %v1973 = vpack.c.b16 %v1385, %v1383
    %v1974 = vpack.c.b16 %v1388, %v1386
    %v1975 = vpack.c.b16 %v1389, %v1387
    %v1976 = vpack.c.b16 %v1392, %v1390
    %v1977 = vpack.c.b16 %v1393, %v1391
    %v1978 = vpack.c.b16 %v1396, %v1394
    %v1979 = vpack.c.b16 %v1397, %v1395
    %v1980 = vpack.c.b16 %v1400, %v1398
    %v1981 = vpack.c.b16 %v1401, %v1399
    %v1982 = vpack.c.b16 %v1404, %v1402
    %v1983 = vpack.c.b16 %v1405, %v1403
    %v1984 = vpack.c.b16 %v1408, %v1406
    %v1985 = vpack.c.b16 %v1409, %v1407
    %v1986 = vpack.c.b16 %v1412, %v1410
    %v1987 = vpack.c.b16 %v1413, %v1411
    %v1988 = vpack.c.b16 %v1416, %v1414
    %v1989 = vpack.c.b16 %v1417, %v1415
    %v1990 = vpack.c.b16 %v1420, %v1418
    %v1991 = vpack.c.b16 %v1421, %v1419
    %v1992 = vpack.c.b16 %v1424, %v1422
    %v1993 = vpack.c.b16 %v1425, %v1423
    %v1994 = vpack.c.b16 %v1428, %v1426
    %v1995 = vpack.c.b16 %v1429, %v1427
    %v1996 = vpack.c.b16 %v1432, %v1430
    %v1997 = vpack.c.b16 %v1433, %v1431
    %v1998 = vpack.c.b16 %v1436, %v1434
    %v1999 = vpack.c.b16 %v1437, %v1435
    %v2000 = vpack.c.b16 %v1440, %v1438
    %v2001 = vpack.c.b16 %v1441, %v1439
    %v2002 = vpack.c.b16 %v1444, %v1442
    %v2003 = vpack.c.b16 %v1445, %v1443
    %v2004 = vpack.c.b16 %v1448, %v1446
    %v2005 = vpack.c.b16 %v1449, %v1447
    %v2006 = vpack.c.b16 %v1452, %v1450
    %v2007 = vpack.c.b16 %v1453, %v1451
    %v2008 = vpack.c.b16 %v1456, %v1454
    %v2009 = vpack.c.b16 %v1457, %v1455
    %v2010 = vpack.c.b16 %v1460, %v1458
    %v2011 = vpack.c.b16 %v1461, %v1459
    %v2012 = vpack.c.b16 %v1464, %v1462
    %v2013 = vpack.c.b16 %v1465, %v1463
    %v2014 = vpack.c.b16 %v1468, %v1466
    %v2015 = vpack.c.b16 %v1469, %v1467
    %v2016 = vpack.c.b16 %v1472, %v1470
    %v2017 = vpack.c.b16 %v1473, %v1471
    %v2018 = vpack.c.b16 %v1476, %v1474
    %v2019 = vpack.c.b16 %v1477, %v1475
    %v2020 = vpack.c.b16 %v1480, %v1478
    %v2021 = vpack.c.b16 %v1481, %v1479
    %v2022 = vpack.c.b16 %v1484, %v1482
    %v2023 = vpack.c.b16 %v1485, %v1483
    %v2024 = vpack.c.b16 %v1488, %v1486
    %v2025 = vpack.c.b16 %v1489, %v1487
    %v2026 = vpack.c.b16 %v1492, %v1490
    %v2027 = vpack.c.b16 %v1493, %v1491
    %v2028 = vpack.c.b16 %v1496, %v1494
    %v2029 = vpack.c.b16 %v1497, %v1495
    %v2030 = vpack.c.b16 %v1500, %v1498
    %v2031 = vpack.c.b16 %v1501, %v1499
    %v2032 = vpack.c.b16 %v1504, %v1502
    %v2033 = vpack.c.b16 %v1505, %v1503
    %v2034 = vpack.c.b16 %v1508, %v1506
    %v2035 = vpack.c.b16 %v1509, %v1507
    %v2036 = vpack.c.b16 %v1512, %v1510
    %v2037 = vpack.c.b16 %v1513, %v1511
    %v2038 = vpack.c.b16 %v1516, %v1514
    %v2039 = vpack.c.b16 %v1517, %v1515
    %v2040 = vpack.c.b16 %v1520, %v1518
    %v2041 = vpack.c.b16 %v1521, %v1519
    %v2042 = vpack.c.b16 %v1524, %v1522
    %v2043 = vpack.c.b16 %v1525, %v1523
    %v2044 = vpack.c.b16 %v1528, %v1526
    %v2045 = vpack.c.b16 %v1529, %v1527
    %v2046 = vpack.c.b16 %v1532, %v1530
    %v2047 = vpack.c.b16 %v1533, %v1531
    %v2048 = vpack.c.b16 %v1536, %v1534
    %v2049 = vpack.c.b16 %v1537, %v1535
    %v2050 = vpack.c.b16 %v1540, %v1538
    %v2051 = vpack.c.b16 %v1541, %v1539
    %v2052 = vpack.c.b16 %v1544, %v1542
    %v2053 = vpack.c.b16 %v1545, %v1543
    %v2054 = vpack.c.b16 %v1548, %v1546
    %v2055 = vpack.c.b16 %v1549, %v1547
    %v2056 = vpack.c.b16 %v1552, %v1550
    %v2057 = vpack.c.b16 %v1553, %v1551
    %v2058 = vpack.c.b16 %v1556, %v1554
    %v2059 = vpack.c.b16 %v1557, %v1555
    %v2060 = vpack.c.b16 %v1560, %v1558
    %v2061 = vpack.c.b16 %v1561, %v1559
    %v2062 = vpack.c.b16 %v1564, %v1562
    %v2063 = vpack.c.b16 %v1565, %v1563
    %v2064 = vpack.c.b16 %v1568, %v1566
    %v2065 = vpack.c.b16 %v1569, %v1567
    %v2066 = vpack.c.b16 %v1572, %v1570
    %v2067 = vpack.c.b16 %v1573, %v1571
    %v2068 = vpack.c.b16 %v1576, %v1574
    %v2069 = vpack.c.b16 %v1577, %v1575
    %v2070 = vpack.c.b16 %v1580, %v1578
    %v2071 = vpack.c.b16 %v1581, %v1579
    %v2072 = vpack.c.b16 %v1584, %v1582
    %v2073 = vpack.c.b16 %v1585, %v1583
    %v2074 = vpack.c.b16 %v1588, %v1586
    %v2075 = vpack.c.b16 %v1589, %v1587
    %v2076 = vpack.c.b16 %v1592, %v1590
    %v2077 = vpack.c.b16 %v1593, %v1591
    %v2078 = vpack.c.b16 %v1596, %v1594
    %v2079 = vpack.c.b16 %v1597, %v1595
    %v2080 = vpack.c.b16 %v1600, %v1598
    %v2081 = vpack.c.b16 %v1601, %v1599
    %v2082 = vpack.c.b16 %v1604, %v1602
    %v2083 = vpack.c.b16 %v1605, %v1603
    %v2084 = vpack.c.b16 %v1608, %v1606
    %v2085 = vpack.c.b16 %v1609, %v1607
    %v2086 = vpack.c.b16 %v1612, %v1610
    %v2087 = vpack.c.b16 %v1613, %v1611
    %v2088 = vpack.c.b16 %v1616, %v1614
    %v2089 = vpack.c.b16 %v1617, %v1615
    %v2090 = vpack.c.b16 %v1620, %v1618
    %v2091 = vpack.c.b16 %v1621, %v1619
    %v2092 = vpack.c.b16 %v1624, %v1622
    %v2093 = vpack.c.b16 %v1625, %v1623
    %v2094 = vpack.c.b16 %v1628, %v1626
    %v2095 = vpack.c.b16 %v1629, %v1627
    %v2096 = vpack.c.b16 %v1632, %v1630
    %v2097 = vpack.c.b16 %v1633, %v1631
    %v2098 = vpack.c.b16 %v1636, %v1634
    %v2099 = vpack.c.b16 %v1637, %v1635
    %v2100 = vpack.c.b16 %v1640, %v1638
    %v2101 = vpack.c.b16 %v1641, %v1639
    %v2102 = vpack.c.b16 %v1644, %v1642
    %v2103 = vpack.c.b16 %v1645, %v1643
    %v2104 = vpack.c.b16 %v1648, %v1646
    %v2105 = vpack.c.b16 %v1649, %v1647
    %v2106 = vpack.c.b16 %v1652, %v1650
    %v2107 = vpack.c.b16 %v1653, %v1651
    %v2108 = vpack.c.b16 %v1656, %v1654
    %v2109 = vpack.c.b16 %v1657, %v1655
    %v2110 = vpack.c.b16 %v1660, %v1658
    %v2111 = vpack.c.b16 %v1661, %v1659
    %v2112 = vpack.c.b16 %v1664, %v1662
    %v2113 = vpack.c.b16 %v1665, %v1663
    %v2114 = vpack.c.b16 %v1668, %v1666
    %v2115 = vpack.c.b16 %v1669, %v1667
    %v2116 = vpack.c.b16 %v1672, %v1670
    %v2117 = vpack.c.b16 %v1673, %v1671
    %v2118 = vpack.c.b16 %v1676, %v1674
    %v2119 = vpack.c.b16 %v1677, %v1675
    %v2120 = vpack.c.b16 %v1680, %v1678
    %v2121 = vpack.c.b16 %v1681, %v1679
    %v2122 = vpack.c.b16 %v1684, %v1682
    %v2123 = vpack.c.b16 %v1685, %v1683
    %v2124 = vpack.c.b16 %v1688, %v1686
    %v2125 = vpack.c.b16 %v1689, %v1687
    %v2126 = vpack.c.b16 %v1692, %v1690
    %v2127 = vpack.c.b16 %v1693, %v1691
    %v2128 = vpack.c.b16 %v1696, %v1694
    %v2129 = vpack.c.b16 %v1697, %v1695
    %v2130 = vpack.c.b16 %v1700, %v1698
    %v2131 = vpack.c.b16 %v1701, %v1699
    %v2132 = vpack.c.b16 %v1704, %v1702
    %v2133 = vpack.c.b16 %v1705, %v1703
    %v2134 = vpack.c.b16 %v1708, %v1706
    %v2135 = vpack.c.b16 %v1709, %v1707
    %v2136 = vpack.c.b16 %v1712, %v1710
    %v2137 = vpack.c.b16 %v1713, %v1711
    %v2138 = vpack.c.b16 %v1716, %v1714
    %v2139 = vpack.c.b16 %v1717, %v1715
    %v2140 = vpack.c.b16 %v1720, %v1718
    %v2141 = vpack.c.b16 %v1721, %v1719
    %v2142 = vpack.c.b16 %v1724, %v1722
    %v2143 = vpack.c.b16 %v1725, %v1723
    %v2144 = vpack.c.b16 %v1728, %v1726
    %v2145 = vpack.c.b16 %v1729, %v1727
    %v2146 = vpack.c.b16 %v1732, %v1730
    %v2147 = vpack.c.b16 %v1733, %v1731
    %v2148 = vpack.c.b16 %v1736, %v1734
    %v2149 = vpack.c.b16 %v1737, %v1735
    %v2150 = vpack.c.b16 %v1740, %v1738
    %v2151 = vpack.c.b16 %v1741, %v1739
    %v2152 = vpack.c.b16 %v1744, %v1742
    %v2153 = vpack.c.b16 %v1745, %v1743
    %v2154 = vpack.c.b16 %v1748, %v1746
    %v2155 = vpack.c.b16 %v1749, %v1747
    %v2156 = vpack.c.b16 %v1752, %v1750
    %v2157 = vpack.c.b16 %v1753, %v1751
    %v2158 = vpack.c.b16 %v1756, %v1754
    %v2159 = vpack.c.b16 %v1757, %v1755
    %v2160 = vpack.c.b16 %v1760, %v1758
    %v2161 = vpack.c.b16 %v1761, %v1759
    %v2162 = vpack.c.b16 %v1764, %v1762
    %v2163 = vpack.c.b16 %v1765, %v1763
    %v2164 = vpack.c.b16 %v1768, %v1766
    %v2165 = vpack.c.b16 %v1769, %v1767
    %v2166 = vpack.c.b16 %v1772, %v1770
    %v2167 = vpack.c.b16 %v1773, %v1771
    %v2168 = vpack.c.b16 %v1776, %v1774
    %v2169 = vpack.c.b16 %v1777, %v1775
    %vm2562 = vcmask 523264
    %v2564 = vsel %vm2562, %v197, 0
    %2566 = vmatprep.subr.bf16.mxu0 %v1779
    %2567 = vmatpush1.bf16.msra.mxu0 %v1778
    %2568 = vmatprep.subr.bf16.mxu0 %v1781
    %2569 = vmatpush1.bf16.msra.mxu0 %v1780
    %2570 = vmatprep.subr.bf16.mxu0 %v1783
    %2571 = vmatpush1.bf16.msra.mxu0 %v1782
    %2572 = vmatprep.subr.bf16.mxu0 %v1785
    %2573 = vmatpush1.bf16.msra.mxu0 %v1784
    %2574 = vmatprep.subr.bf16.mxu0 %v1787
    %2575 = vmatpush1.bf16.msra.mxu0 %v1786
    %2576 = vmatprep.subr.bf16.mxu0 %v1789
    %2577 = vmatpush1.bf16.msra.mxu0 %v1788
    %2578 = vmatprep.subr.bf16.mxu0 %v1791
    %2579 = vmatpush1.bf16.msra.mxu0 %v1790
    %2580 = vmatprep.subr.bf16.mxu0 %v1793
    %2581 = vmatpush1.bf16.msra.mxu0 %v1792
    %2582 = vmatprep.subr.bf16.mxu0 %v1795
    %2583 = vmatpush1.bf16.msra.mxu0 %v1794
    %2584 = vmatprep.subr.bf16.mxu0 %v1797
    %2585 = vmatpush1.bf16.msra.mxu0 %v1796
    %2586 = vmatprep.subr.bf16.mxu0 %v1799
    %2587 = vmatpush1.bf16.msra.mxu0 %v1798
    %2588 = vmatprep.subr.bf16.mxu0 %v1801
    %2589 = vmatpush1.bf16.msra.mxu0 %v1800
    %2590 = vmatprep.subr.bf16.mxu0 %v1803
    %2591 = vmatpush1.bf16.msra.mxu0 %v1802
    %2592 = vmatprep.subr.bf16.mxu0 %v1805
    %2593 = vmatpush1.bf16.msra.mxu0 %v1804
    %2594 = vmatprep.subr.bf16.mxu0 %v1807
    %2595 = vmatpush1.bf16.msra.mxu0 %v1806
    %2596 = vmatprep.subr.bf16.mxu0 %v1809
    %2597 = vmatpush1.bf16.msra.mxu0 %v1808
    %2598 = vmatprep.mubr.bf16.mxu0 %v174
    %2599 = vmatmul.mubr.bf16.gmra.mrb[0].mxu0 %v173
    %v2600 = vpop.f32.mrb[0].mxu0
    %v2601 = vadd.f32 %v595, %v2600
    %v2602 = vpop.f32.mrb[0].mxu0
    %v2603 = vadd.f32 %v599, %v2602
    %v2604 = vpop.f32.mrb[0].mxu0
    %v2605 = vpop.f32.mrb[0].mxu0
    %2606 = vdwg.mxu0
    %2607 = vmatprep.subr.bf16.mxu0 %v1811
    %2608 = vmatpush1.bf16.msra.mxu0 %v1810
    %2609 = vmatprep.subr.bf16.mxu0 %v1813
    %2610 = vmatpush1.bf16.msra.mxu0 %v1812
    %2611 = vmatprep.subr.bf16.mxu0 %v1815
    %2612 = vmatpush1.bf16.msra.mxu0 %v1814
    %2613 = vmatprep.subr.bf16.mxu0 %v1817
    %2614 = vmatpush1.bf16.msra.mxu0 %v1816
    %2615 = vmatprep.subr.bf16.mxu0 %v1819
    %2616 = vmatpush1.bf16.msra.mxu0 %v1818
    %2617 = vmatprep.subr.bf16.mxu0 %v1821
    %2618 = vmatpush1.bf16.msra.mxu0 %v1820
    %2619 = vmatprep.subr.bf16.mxu0 %v1823
    %2620 = vmatpush1.bf16.msra.mxu0 %v1822
    %2621 = vmatprep.subr.bf16.mxu0 %v1825
    %2622 = vmatpush1.bf16.msra.mxu0 %v1824
    %2623 = vmatprep.subr.bf16.mxu0 %v1827
    %2624 = vmatpush1.bf16.msra.mxu0 %v1826
    %2625 = vmatprep.subr.bf16.mxu0 %v1829
    %2626 = vmatpush1.bf16.msra.mxu0 %v1828
    %2627 = vmatprep.subr.bf16.mxu0 %v1831
    %2628 = vmatpush1.bf16.msra.mxu0 %v1830
    %2629 = vmatprep.subr.bf16.mxu0 %v1833
    %2630 = vmatpush1.bf16.msra.mxu0 %v1832
    %2631 = vmatprep.subr.bf16.mxu0 %v1835
    %2632 = vmatpush1.bf16.msra.mxu0 %v1834
    %2633 = vmatprep.subr.bf16.mxu0 %v1837
    %2634 = vmatpush1.bf16.msra.mxu0 %v1836
    %2635 = vmatprep.subr.bf16.mxu0 %v1839
    %2636 = vmatpush1.bf16.msra.mxu0 %v1838
    %2637 = vmatprep.subr.bf16.mxu0 %v1841
    %2638 = vmatpush1.bf16.msra.mxu0 %v1840
    %2639 = vmatprep.mubr.bf16.mxu0 %v176
    %2640 = vmatmul.mubr.bf16.gmra.mrb[0].mxu0 %v175
    %v2641 = vpop.f32.mrb[0].mxu0
    %v2642 = vadd.f32 %v2601, %v2641
    %v2643 = vpop.f32.mrb[0].mxu0
    %v2644 = vadd.f32 %v2603, %v2643
    %v2645 = vpop.f32.mrb[0].mxu0
    %v2646 = vpop.f32.mrb[0].mxu0
    %2647 = vdwg.mxu0
    %2648 = vmatprep.subr.bf16.mxu0 %v1843
    %2649 = vmatpush1.bf16.msra.mxu0 %v1842
    %2650 = vmatprep.subr.bf16.mxu0 %v1845
    %2651 = vmatpush1.bf16.msra.mxu0 %v1844
    %2652 = vmatprep.subr.bf16.mxu0 %v1847
    %2653 = vmatpush1.bf16.msra.mxu0 %v1846
    %2654 = vmatprep.subr.bf16.mxu0 %v1849
    %2655 = vmatpush1.bf16.msra.mxu0 %v1848
    %2656 = vmatprep.subr.bf16.mxu0 %v1851
    %2657 = vmatpush1.bf16.msra.mxu0 %v1850
    %2658 = vmatprep.subr.bf16.mxu0 %v1853
    %2659 = vmatpush1.bf16.msra.mxu0 %v1852
    %2660 = vmatprep.subr.bf16.mxu0 %v1855
    %2661 = vmatpush1.bf16.msra.mxu0 %v1854
    %2662 = vmatprep.subr.bf16.mxu0 %v1857
    %2663 = vmatpush1.bf16.msra.mxu0 %v1856
    %2664 = vmatprep.subr.bf16.mxu0 %v1859
    %2665 = vmatpush1.bf16.msra.mxu0 %v1858
    %2666 = vmatprep.subr.bf16.mxu0 %v1861
    %2667 = vmatpush1.bf16.msra.mxu0 %v1860
    %2668 = vmatprep.subr.bf16.mxu0 %v1863
    %2669 = vmatpush1.bf16.msra.mxu0 %v1862
    %2670 = vmatprep.subr.bf16.mxu0 %v1865
    %2671 = vmatpush1.bf16.msra.mxu0 %v1864
    %2672 = vmatprep.subr.bf16.mxu0 %v1867
    %2673 = vmatpush1.bf16.msra.mxu0 %v1866
    %2674 = vmatprep.subr.bf16.mxu0 %v1869
    %2675 = vmatpush1.bf16.msra.mxu0 %v1868
    %2676 = vmatprep.subr.bf16.mxu0 %v1871
    %2677 = vmatpush1.bf16.msra.mxu0 %v1870
    %2678 = vmatprep.subr.bf16.mxu0 %v1873
    %2679 = vmatpush1.bf16.msra.mxu0 %v1872
    %2680 = vmatprep.mubr.bf16.mxu0 %v178
    %2681 = vmatmul.mubr.bf16.gmra.mrb[0].mxu0 %v177
    %v2682 = vpop.f32.mrb[0].mxu0
    %v2683 = vadd.f32 %v2642, %v2682
    %v2684 = vpop.f32.mrb[0].mxu0
    %v2685 = vadd.f32 %v2644, %v2684
    %v2686 = vpop.f32.mrb[0].mxu0
    %v2687 = vpop.f32.mrb[0].mxu0
    %2688 = vdwg.mxu0
    %2689 = vmatprep.subr.bf16.mxu0 %v1875
    %2690 = vmatpush1.bf16.msra.mxu0 %v1874
    %2691 = vmatprep.subr.bf16.mxu0 %v1877
    %2692 = vmatpush1.bf16.msra.mxu0 %v1876
    %2693 = vmatprep.subr.bf16.mxu0 %v1879
    %2694 = vmatpush1.bf16.msra.mxu0 %v1878
    %2695 = vmatprep.subr.bf16.mxu0 %v1881
    %2696 = vmatpush1.bf16.msra.mxu0 %v1880
    %2697 = vmatprep.subr.bf16.mxu0 %v1883
    %2698 = vmatpush1.bf16.msra.mxu0 %v1882
    %2699 = vmatprep.subr.bf16.mxu0 %v1885
    %2700 = vmatpush1.bf16.msra.mxu0 %v1884
    %2701 = vmatprep.subr.bf16.mxu0 %v1887
    %2702 = vmatpush1.bf16.msra.mxu0 %v1886
    %2703 = vmatprep.subr.bf16.mxu0 %v1889
    %2704 = vmatpush1.bf16.msra.mxu0 %v1888
    %2705 = vmatprep.subr.bf16.mxu0 %v1891
    %2706 = vmatpush1.bf16.msra.mxu0 %v1890
    %2707 = vmatprep.subr.bf16.mxu0 %v1893
    %2708 = vmatpush1.bf16.msra.mxu0 %v1892
    %2709 = vmatprep.subr.bf16.mxu0 %v1895
    %2710 = vmatpush1.bf16.msra.mxu0 %v1894
    %2711 = vmatprep.subr.bf16.mxu0 %v1897
    %2712 = vmatpush1.bf16.msra.mxu0 %v1896
    %2713 = vmatprep.subr.bf16.mxu0 %v1899
    %2714 = vmatpush1.bf16.msra.mxu0 %v1898
    %2715 = vmatprep.subr.bf16.mxu0 %v1901
    %2716 = vmatpush1.bf16.msra.mxu0 %v1900
    %2717 = vmatprep.subr.bf16.mxu0 %v1903
    %2718 = vmatpush1.bf16.msra.mxu0 %v1902
    %2719 = vmatprep.subr.bf16.mxu0 %v1905
    %2720 = vmatpush1.bf16.msra.mxu0 %v1904
    %2721 = vmatprep.mubr.bf16.mxu0 %v180
    %2722 = vmatmul.mubr.bf16.gmra.mrb[0].mxu0 %v179
    %v2723 = vpop.f32.mrb[0].mxu0
    %v2724 = vadd.f32 %v2683, %v2723
    %v2725 = vpop.f32.mrb[0].mxu0
    %v2726 = vadd.f32 %v2685, %v2725
    %v2727 = vpop.f32.mrb[0].mxu0
    %v2728 = vpop.f32.mrb[0].mxu0
    %2729 = vdwg.mxu0
    %2730 = vmatprep.subr.bf16.mxu0 %v1907
    %2731 = vmatpush1.bf16.msra.mxu0 %v1906
    %2732 = vmatprep.subr.bf16.mxu0 %v1909
    %2733 = vmatpush1.bf16.msra.mxu0 %v1908
    %2734 = vmatprep.subr.bf16.mxu0 %v1911
    %2735 = vmatpush1.bf16.msra.mxu0 %v1910
    %2736 = vmatprep.subr.bf16.mxu0 %v1913
    %2737 = vmatpush1.bf16.msra.mxu0 %v1912
    %2738 = vmatprep.subr.bf16.mxu0 %v1915
    %2739 = vmatpush1.bf16.msra.mxu0 %v1914
    %2740 = vmatprep.subr.bf16.mxu0 %v1917
    %2741 = vmatpush1.bf16.msra.mxu0 %v1916
    %2742 = vmatprep.subr.bf16.mxu0 %v1919
    %2743 = vmatpush1.bf16.msra.mxu0 %v1918
    %2744 = vmatprep.subr.bf16.mxu0 %v1921
    %2745 = vmatpush1.bf16.msra.mxu0 %v1920
    %2746 = vmatprep.subr.bf16.mxu0 %v1923
    %2747 = vmatpush1.bf16.msra.mxu0 %v1922
    %2748 = vmatprep.subr.bf16.mxu0 %v1925
    %2749 = vmatpush1.bf16.msra.mxu0 %v1924
    %2750 = vmatprep.subr.bf16.mxu0 %v1927
    %2751 = vmatpush1.bf16.msra.mxu0 %v1926
    %2752 = vmatprep.subr.bf16.mxu0 %v1929
    %2753 = vmatpush1.bf16.msra.mxu0 %v1928
    %2754 = vmatprep.subr.bf16.mxu0 %v1931
    %2755 = vmatpush1.bf16.msra.mxu0 %v1930
    %2756 = vmatprep.subr.bf16.mxu0 %v1933
    %2757 = vmatpush1.bf16.msra.mxu0 %v1932
    %2758 = vmatprep.subr.bf16.mxu0 %v1935
    %2759 = vmatpush1.bf16.msra.mxu0 %v1934
    %2760 = vmatprep.subr.bf16.mxu0 %v1937
    %2761 = vmatpush1.bf16.msra.mxu0 %v1936
    %2762 = vmatprep.mubr.bf16.mxu0 %v182
    %2763 = vmatmul.mubr.bf16.gmra.mrb[0].mxu0 %v181
    %v2764 = vpop.f32.mrb[0].mxu0
    %v2765 = vadd.f32 %v2724, %v2764
    %v2766 = vpop.f32.mrb[0].mxu0
    %v2767 = vadd.f32 %v2726, %v2766
    %v2768 = vpop.f32.mrb[0].mxu0
    %v2769 = vpop.f32.mrb[0].mxu0
    %2770 = vdwg.mxu0
    %2771 = vmatprep.subr.bf16.mxu0 %v1939
    %2772 = vmatpush1.bf16.msra.mxu0 %v1938
    %2773 = vmatprep.subr.bf16.mxu0 %v1941
    %2774 = vmatpush1.bf16.msra.mxu0 %v1940
    %2775 = vmatprep.subr.bf16.mxu0 %v1943
    %2776 = vmatpush1.bf16.msra.mxu0 %v1942
    %2777 = vmatprep.subr.bf16.mxu0 %v1945
    %2778 = vmatpush1.bf16.msra.mxu0 %v1944
    %2779 = vmatprep.subr.bf16.mxu0 %v1947
    %2780 = vmatpush1.bf16.msra.mxu0 %v1946
    %2781 = vmatprep.subr.bf16.mxu0 %v1949
    %2782 = vmatpush1.bf16.msra.mxu0 %v1948
    %2783 = vmatprep.subr.bf16.mxu0 %v1951
    %2784 = vmatpush1.bf16.msra.mxu0 %v1950
    %2785 = vmatprep.subr.bf16.mxu0 %v1953
    %2786 = vmatpush1.bf16.msra.mxu0 %v1952
    %2787 = vmatprep.subr.bf16.mxu0 %v1955
    %2788 = vmatpush1.bf16.msra.mxu0 %v1954
    %2789 = vmatprep.subr.bf16.mxu0 %v1957
    %2790 = vmatpush1.bf16.msra.mxu0 %v1956
    %2791 = vmatprep.subr.bf16.mxu0 %v1959
    %2792 = vmatpush1.bf16.msra.mxu0 %v1958
    %2793 = vmatprep.subr.bf16.mxu0 %v1961
    %2794 = vmatpush1.bf16.msra.mxu0 %v1960
    %2795 = vmatprep.subr.bf16.mxu0 %v1963
    %2796 = vmatpush1.bf16.msra.mxu0 %v1962
    %2797 = vmatprep.subr.bf16.mxu0 %v1965
    %2798 = vmatpush1.bf16.msra.mxu0 %v1964
    %2799 = vmatprep.subr.bf16.mxu0 %v1967
    %2800 = vmatpush1.bf16.msra.mxu0 %v1966
    %2801 = vmatprep.subr.bf16.mxu0 %v1969
    %2802 = vmatpush1.bf16.msra.mxu0 %v1968
    %2803 = vmatprep.mubr.bf16.mxu0 %v184
    %2804 = vmatmul.mubr.bf16.gmra.mrb[0].mxu0 %v183
    %v2805 = vpop.f32.mrb[0].mxu0
    %v2806 = vadd.f32 %v2765, %v2805
    %v2807 = vpop.f32.mrb[0].mxu0
    %v2808 = vadd.f32 %v2767, %v2807
    %v2809 = vpop.f32.mrb[0].mxu0
    %v2810 = vpop.f32.mrb[0].mxu0
    %2811 = vdwg.mxu0
    %2812 = vmatprep.subr.bf16.mxu0 %v1971
    %2813 = vmatpush1.bf16.msra.mxu0 %v1970
    %2814 = vmatprep.subr.bf16.mxu0 %v1973
    %2815 = vmatpush1.bf16.msra.mxu0 %v1972
    %2816 = vmatprep.subr.bf16.mxu0 %v1975
    %2817 = vmatpush1.bf16.msra.mxu0 %v1974
    %2818 = vmatprep.subr.bf16.mxu0 %v1977
    %2819 = vmatpush1.bf16.msra.mxu0 %v1976
    %2820 = vmatprep.subr.bf16.mxu0 %v1979
    %2821 = vmatpush1.bf16.msra.mxu0 %v1978
    %2822 = vmatprep.subr.bf16.mxu0 %v1981
    %2823 = vmatpush1.bf16.msra.mxu0 %v1980
    %2824 = vmatprep.subr.bf16.mxu0 %v1983
    %2825 = vmatpush1.bf16.msra.mxu0 %v1982
    %2826 = vmatprep.subr.bf16.mxu0 %v1985
    %2827 = vmatpush1.bf16.msra.mxu0 %v1984
    %2828 = vmatprep.subr.bf16.mxu0 %v1987
    %2829 = vmatpush1.bf16.msra.mxu0 %v1986
    %2830 = vmatprep.subr.bf16.mxu0 %v1989
    %2831 = vmatpush1.bf16.msra.mxu0 %v1988
    %2832 = vmatprep.subr.bf16.mxu0 %v1991
    %2833 = vmatpush1.bf16.msra.mxu0 %v1990
    %2834 = vmatprep.subr.bf16.mxu0 %v1993
    %2835 = vmatpush1.bf16.msra.mxu0 %v1992
    %2836 = vmatprep.subr.bf16.mxu0 %v1995
    %2837 = vmatpush1.bf16.msra.mxu0 %v1994
    %2838 = vmatprep.subr.bf16.mxu0 %v1997
    %2839 = vmatpush1.bf16.msra.mxu0 %v1996
    %2840 = vmatprep.subr.bf16.mxu0 %v1999
    %2841 = vmatpush1.bf16.msra.mxu0 %v1998
    %2842 = vmatprep.subr.bf16.mxu0 %v2001
    %2843 = vmatpush1.bf16.msra.mxu0 %v2000
    %2844 = vmatprep.mubr.bf16.mxu0 %v186
    %2845 = vmatmul.mubr.bf16.gmra.mrb[0].mxu0 %v185
    %v2846 = vpop.f32.mrb[0].mxu0
    %v2847 = vadd.f32 %v2806, %v2846
    %v2848 = vpop.f32.mrb[0].mxu0
    %v2849 = vadd.f32 %v2808, %v2848
    %v2850 = vpop.f32.mrb[0].mxu0
    %v2851 = vpop.f32.mrb[0].mxu0
    %2852 = vdwg.mxu0
    %2853 = vmatprep.subr.bf16.mxu0 %v2003
    %2854 = vmatpush1.bf16.msra.mxu0 %v2002
    %2855 = vmatprep.subr.bf16.mxu0 %v2005
    %2856 = vmatpush1.bf16.msra.mxu0 %v2004
    %2857 = vmatprep.subr.bf16.mxu0 %v2007
    %2858 = vmatpush1.bf16.msra.mxu0 %v2006
    %2859 = vmatprep.subr.bf16.mxu0 %v2009
    %2860 = vmatpush1.bf16.msra.mxu0 %v2008
    %2861 = vmatprep.subr.bf16.mxu0 %v2011
    %2862 = vmatpush1.bf16.msra.mxu0 %v2010
    %2863 = vmatprep.subr.bf16.mxu0 %v2013
    %2864 = vmatpush1.bf16.msra.mxu0 %v2012
    %2865 = vmatprep.subr.bf16.mxu0 %v2015
    %2866 = vmatpush1.bf16.msra.mxu0 %v2014
    %2867 = vmatprep.subr.bf16.mxu0 %v2017
    %2868 = vmatpush1.bf16.msra.mxu0 %v2016
    %2869 = vmatprep.subr.bf16.mxu0 %v2019
    %2870 = vmatpush1.bf16.msra.mxu0 %v2018
    %2871 = vmatprep.subr.bf16.mxu0 %v2021
    %2872 = vmatpush1.bf16.msra.mxu0 %v2020
    %2873 = vmatprep.subr.bf16.mxu0 %v2023
    %2874 = vmatpush1.bf16.msra.mxu0 %v2022
    %2875 = vmatprep.subr.bf16.mxu0 %v2025
    %2876 = vmatpush1.bf16.msra.mxu0 %v2024
    %2877 = vmatprep.subr.bf16.mxu0 %v2027
    %2878 = vmatpush1.bf16.msra.mxu0 %v2026
    %2879 = vmatprep.subr.bf16.mxu0 %v2029
    %2880 = vmatpush1.bf16.msra.mxu0 %v2028
    %2881 = vmatprep.subr.bf16.mxu0 %v2031
    %2882 = vmatpush1.bf16.msra.mxu0 %v2030
    %2883 = vmatprep.subr.bf16.mxu0 %v2033
    %2884 = vmatpush1.bf16.msra.mxu0 %v2032
    %2885 = vmatprep.mubr.bf16.mxu0 %v188
    %2886 = vmatmul.mubr.bf16.gmra.mrb[0].mxu0 %v187
    %v2887 = vpop.f32.mrb[0].mxu0
    %v2888 = vadd.f32 %v2847, %v2887
    %v2889 = vpop.f32.mrb[0].mxu0
    %v2890 = vadd.f32 %v2849, %v2889
    %v2891 = vpop.f32.mrb[0].mxu0
    %v2892 = vpop.f32.mrb[0].mxu0
    %2893 = vdwg.mxu0
    %2894 = vmatprep.subr.bf16.mxu0 %v2035
    %2895 = vmatpush1.bf16.msra.mxu0 %v2034
    %2896 = vmatprep.subr.bf16.mxu0 %v2037
    %2897 = vmatpush1.bf16.msra.mxu0 %v2036
    %2898 = vmatprep.subr.bf16.mxu0 %v2039
    %2899 = vmatpush1.bf16.msra.mxu0 %v2038
    %2900 = vmatprep.subr.bf16.mxu0 %v2041
    %2901 = vmatpush1.bf16.msra.mxu0 %v2040
    %2902 = vmatprep.subr.bf16.mxu0 %v2043
    %2903 = vmatpush1.bf16.msra.mxu0 %v2042
    %2904 = vmatprep.subr.bf16.mxu0 %v2045
    %2905 = vmatpush1.bf16.msra.mxu0 %v2044
    %2906 = vmatprep.subr.bf16.mxu0 %v2047
    %2907 = vmatpush1.bf16.msra.mxu0 %v2046
    %2908 = vmatprep.subr.bf16.mxu0 %v2049
    %2909 = vmatpush1.bf16.msra.mxu0 %v2048
    %2910 = vmatprep.subr.bf16.mxu0 %v2051
    %2911 = vmatpush1.bf16.msra.mxu0 %v2050
    %2912 = vmatprep.subr.bf16.mxu0 %v2053
    %2913 = vmatpush1.bf16.msra.mxu0 %v2052
    %2914 = vmatprep.subr.bf16.mxu0 %v2055
    %2915 = vmatpush1.bf16.msra.mxu0 %v2054
    %2916 = vmatprep.subr.bf16.mxu0 %v2057
    %2917 = vmatpush1.bf16.msra.mxu0 %v2056
    %2918 = vmatprep.subr.bf16.mxu0 %v2059
    %2919 = vmatpush1.bf16.msra.mxu0 %v2058
    %2920 = vmatprep.subr.bf16.mxu0 %v2061
    %2921 = vmatpush1.bf16.msra.mxu0 %v2060
    %2922 = vmatprep.subr.bf16.mxu0 %v2063
    %2923 = vmatpush1.bf16.msra.mxu0 %v2062
    %2924 = vmatprep.subr.bf16.mxu0 %v2065
    %2925 = vmatpush1.bf16.msra.mxu0 %v2064
    %2926 = vmatprep.mubr.bf16.mxu0 %v190
    %2927 = vmatmul.mubr.bf16.gmra.mrb[0].mxu0 %v189
    %v2928 = vpop.f32.mrb[0].mxu0
    %v2929 = vadd.f32 %v2888, %v2928
    %v2930 = vpop.f32.mrb[0].mxu0
    %v2931 = vadd.f32 %v2890, %v2930
    %v2932 = vpop.f32.mrb[0].mxu0
    %v2933 = vpop.f32.mrb[0].mxu0
    %2934 = vdwg.mxu0
    %2935 = vmatprep.subr.bf16.mxu0 %v2067
    %2936 = vmatpush1.bf16.msra.mxu0 %v2066
    %2937 = vmatprep.subr.bf16.mxu0 %v2069
    %2938 = vmatpush1.bf16.msra.mxu0 %v2068
    %2939 = vmatprep.subr.bf16.mxu0 %v2071
    %2940 = vmatpush1.bf16.msra.mxu0 %v2070
    %2941 = vmatprep.subr.bf16.mxu0 %v2073
    %2942 = vmatpush1.bf16.msra.mxu0 %v2072
    %2943 = vmatprep.subr.bf16.mxu0 %v2075
    %2944 = vmatpush1.bf16.msra.mxu0 %v2074
    %2945 = vmatprep.subr.bf16.mxu0 %v2077
    %2946 = vmatpush1.bf16.msra.mxu0 %v2076
    %2947 = vmatprep.subr.bf16.mxu0 %v2079
    %2948 = vmatpush1.bf16.msra.mxu0 %v2078
    %2949 = vmatprep.subr.bf16.mxu0 %v2081
    %2950 = vmatpush1.bf16.msra.mxu0 %v2080
    %2951 = vmatprep.subr.bf16.mxu0 %v2083
    %2952 = vmatpush1.bf16.msra.mxu0 %v2082
    %2953 = vmatprep.subr.bf16.mxu0 %v2085
    %2954 = vmatpush1.bf16.msra.mxu0 %v2084
    %2955 = vmatprep.subr.bf16.mxu0 %v2087
    %2956 = vmatpush1.bf16.msra.mxu0 %v2086
    %2957 = vmatprep.subr.bf16.mxu0 %v2089
    %2958 = vmatpush1.bf16.msra.mxu0 %v2088
    %2959 = vmatprep.subr.bf16.mxu0 %v2091
    %2960 = vmatpush1.bf16.msra.mxu0 %v2090
    %2961 = vmatprep.subr.bf16.mxu0 %v2093
    %2962 = vmatpush1.bf16.msra.mxu0 %v2092
    %2963 = vmatprep.subr.bf16.mxu0 %v2095
    %2964 = vmatpush1.bf16.msra.mxu0 %v2094
    %2965 = vmatprep.subr.bf16.mxu0 %v2097
    %2966 = vmatpush1.bf16.msra.mxu0 %v2096
    %2967 = vmatprep.mubr.bf16.mxu0 %v192
    %2968 = vmatmul.mubr.bf16.gmra.mrb[0].mxu0 %v191
    %v2969 = vpop.f32.mrb[0].mxu0
    %v2970 = vadd.f32 %v2929, %v2969
    %v2971 = vpop.f32.mrb[0].mxu0
    %v2972 = vadd.f32 %v2931, %v2971
    %v2973 = vpop.f32.mrb[0].mxu0
    %v2974 = vpop.f32.mrb[0].mxu0
    %2975 = vdwg.mxu0
    %2976 = vmatprep.subr.bf16.mxu0 %v2099
    %2977 = vmatpush1.bf16.msra.mxu0 %v2098
    %2978 = vmatprep.subr.bf16.mxu0 %v2101
    %2979 = vmatpush1.bf16.msra.mxu0 %v2100
    %2980 = vmatprep.subr.bf16.mxu0 %v2103
    %2981 = vmatpush1.bf16.msra.mxu0 %v2102
    %2982 = vmatprep.subr.bf16.mxu0 %v2105
    %2983 = vmatpush1.bf16.msra.mxu0 %v2104
    %2984 = vmatprep.subr.bf16.mxu0 %v2107
    %2985 = vmatpush1.bf16.msra.mxu0 %v2106
    %2986 = vmatprep.subr.bf16.mxu0 %v2109
    %2987 = vmatpush1.bf16.msra.mxu0 %v2108
    %2988 = vmatprep.subr.bf16.mxu0 %v2111
    %2989 = vmatpush1.bf16.msra.mxu0 %v2110
    %2990 = vmatprep.subr.bf16.mxu0 %v2113
    %2991 = vmatpush1.bf16.msra.mxu0 %v2112
    %2992 = vmatprep.subr.bf16.mxu0 %v2115
    %2993 = vmatpush1.bf16.msra.mxu0 %v2114
    %2994 = vmatprep.subr.bf16.mxu0 %v2117
    %2995 = vmatpush1.bf16.msra.mxu0 %v2116
    %2996 = vmatprep.subr.bf16.mxu0 %v2119
    %2997 = vmatpush1.bf16.msra.mxu0 %v2118
    %2998 = vmatprep.subr.bf16.mxu0 %v2121
    %2999 = vmatpush1.bf16.msra.mxu0 %v2120
    %3000 = vmatprep.subr.bf16.mxu0 %v2123
    %3001 = vmatpush1.bf16.msra.mxu0 %v2122
    %3002 = vmatprep.subr.bf16.mxu0 %v2125
    %3003 = vmatpush1.bf16.msra.mxu0 %v2124
    %3004 = vmatprep.subr.bf16.mxu0 %v2127
    %3005 = vmatpush1.bf16.msra.mxu0 %v2126
    %3006 = vmatprep.subr.bf16.mxu0 %v2129
    %3007 = vmatpush1.bf16.msra.mxu0 %v2128
    %3008 = vmatprep.mubr.bf16.mxu0 %v194
    %3009 = vmatmul.mubr.bf16.gmra.mrb[0].mxu0 %v193
    %v3010 = vpop.f32.mrb[0].mxu0
    %v3011 = vadd.f32 %v2970, %v3010
    %v3012 = vpop.f32.mrb[0].mxu0
    %v3013 = vadd.f32 %v2972, %v3012
    %v3014 = vpop.f32.mrb[0].mxu0
    %v3015 = vpop.f32.mrb[0].mxu0
    %3016 = vdwg.mxu0
    %3017 = vmatprep.subr.bf16.mxu0 %v2131
    %3018 = vmatpush1.bf16.msra.mxu0 %v2130
    %3019 = vmatprep.subr.bf16.mxu0 %v2133
    %3020 = vmatpush1.bf16.msra.mxu0 %v2132
    %3021 = vmatprep.subr.bf16.mxu0 %v2135
    %3022 = vmatpush1.bf16.msra.mxu0 %v2134
    %3023 = vmatprep.subr.bf16.mxu0 %v2137
    %3024 = vmatpush1.bf16.msra.mxu0 %v2136
    %3025 = vmatprep.subr.bf16.mxu0 %v2139
    %3026 = vmatpush1.bf16.msra.mxu0 %v2138
    %3027 = vmatprep.subr.bf16.mxu0 %v2141
    %3028 = vmatpush1.bf16.msra.mxu0 %v2140
    %3029 = vmatprep.subr.bf16.mxu0 %v2143
    %3030 = vmatpush1.bf16.msra.mxu0 %v2142
    %3031 = vmatprep.subr.bf16.mxu0 %v2145
    %3032 = vmatpush1.bf16.msra.mxu0 %v2144
    %3033 = vmatprep.subr.bf16.mxu0 %v2147
    %3034 = vmatpush1.bf16.msra.mxu0 %v2146
    %3035 = vmatprep.subr.bf16.mxu0 %v2149
    %3036 = vmatpush1.bf16.msra.mxu0 %v2148
    %3037 = vmatprep.subr.bf16.mxu0 %v2151
    %3038 = vmatpush1.bf16.msra.mxu0 %v2150
    %3039 = vmatprep.subr.bf16.mxu0 %v2153
    %3040 = vmatpush1.bf16.msra.mxu0 %v2152
    %3041 = vmatprep.subr.bf16.mxu0 %v2155
    %3042 = vmatpush1.bf16.msra.mxu0 %v2154
    %3043 = vmatprep.subr.bf16.mxu0 %v2157
    %3044 = vmatpush1.bf16.msra.mxu0 %v2156
    %3045 = vmatprep.subr.bf16.mxu0 %v2159
    %3046 = vmatpush1.bf16.msra.mxu0 %v2158
    %3047 = vmatprep.subr.bf16.mxu0 %v2161
    %3048 = vmatpush1.bf16.msra.mxu0 %v2160
    %3049 = vmatprep.mubr.bf16.mxu0 %v196
    %3050 = vmatmul.mubr.bf16.gmra.mrb[0].mxu0 %v195
    %v3051 = vpop.f32.mrb[0].mxu0
    %v3052 = vadd.f32 %v3011, %v3051
    %v3053 = vpop.f32.mrb[0].mxu0
    %v3054 = vadd.f32 %v3013, %v3053
    %v3055 = vpop.f32.mrb[0].mxu0
    %v3056 = vpop.f32.mrb[0].mxu0
    %3057 = vdwg.mxu0
    %3058 = vmatprep.subr.bf16.mxu0 %v2163
    %3059 = vmatpush1.bf16.msra.mxu0 %v2162
    %3060 = vmatprep.subr.bf16.mxu0 %v2165
    %3061 = vmatpush1.bf16.msra.mxu0 %v2164
    %3062 = vmatprep.subr.bf16.mxu0 %v2167
    %3063 = vmatpush1.bf16.msra.mxu0 %v2166
    %3064 = vmatprep.subr.bf16.mxu0 %v2169
    %3065 = vmatpush1.bf16.msra.mxu0 %v2168
    %3066 = vmatprep.subr.bf16.mxu0 0
    %3067 = vmatpush1.bf16.msra.mxu0 0
    %3068 = vmatprep.subr.bf16.mxu0 0
    %3069 = vmatpush1.bf16.msra.mxu0 0
    %3070 = vmatprep.subr.bf16.mxu0 0
    %3071 = vmatpush1.bf16.msra.mxu0 0
    %3072 = vmatprep.subr.bf16.mxu0 0
    %3073 = vmatpush1.bf16.msra.mxu0 0
    %3074 = vmatprep.subr.bf16.mxu0 0
    %3075 = vmatpush1.bf16.msra.mxu0 0
    %3076 = vmatprep.subr.bf16.mxu0 0
    %3077 = vmatpush1.bf16.msra.mxu0 0
    %3078 = vmatprep.subr.bf16.mxu0 0
    %3079 = vmatpush1.bf16.msra.mxu0 0
    %3080 = vmatprep.subr.bf16.mxu0 0
    %3081 = vmatpush1.bf16.msra.mxu0 0
    %3082 = vmatprep.subr.bf16.mxu0 0
    %3083 = vmatpush1.bf16.msra.mxu0 0
    %3084 = vmatprep.subr.bf16.mxu0 0
    %3085 = vmatpush1.bf16.msra.mxu0 0
    %3086 = vmatprep.subr.bf16.mxu0 0
    %3087 = vmatpush1.bf16.msra.mxu0 0
    %3088 = vmatprep.subr.bf16.mxu0 0
    %3089 = vmatpush1.bf16.msra.mxu0 0
    %3090 = vmatprep.mubr.bf16.mxu0 0
    %3091 = vmatmul.mubr.bf16.gmra.mrb[0].mxu0 %v2564
    %v3092 = vpop.f32.mrb[0].mxu0
    %v3093 = vadd.f32 %v3052, %v3092
    %v3094 = vpop.f32.mrb[0].mxu0
    %v3095 = vadd.f32 %v3054, %v3094
    %v3096 = vpop.f32.mrb[0].mxu0
    %v3097 = vpop.f32.mrb[0].mxu0
    %3098 = vdwg.mxu0
    %v3101 = vcombine.low %v3093, %v3095
    %v3103 = vunpack.c.l.s4 1983009808
    %v3104 = vunpack.c.0.s8 %v3103
    %v3105 = vlaneseq
    %v3106 = vshrl.u32 %v3105, 7
    %v3107 = vsub.s32 %v3104, %v3106
    %v3108 = vrot.slane %v3101, %v3107
    %3110 = vst [vmem:[#allocation2] sm:$0xf] %v3108
    %v3111 = vld [vmem:[#allocation2] sm:$0x3]
    %v3112 = vmax.f32 %v3111, 0.0
    %v3113 = vld [vmem:[%s3] sm:$0xff]
    %v3114 = vld [vmem:[%s3 + $0x8] sm:$0xff]
    %v3115 = vld [vmem:[%s3 + $0x10] sm:$0xff]
    %v3116 = vld [vmem:[%s3 + $0x18] sm:$0xff]
    %v3117 = vld [vmem:[%s3 + $0x20] sm:$0xff]
    %v3118 = vld [vmem:[%s3 + $0x28] sm:$0xff]
    %v3119 = vld [vmem:[%s3 + $0x30] sm:$0x3]
    %vm3120 = vcmask 408576
    %v3122 = vsel %vm3120, %v3112, 0
    %vm3124 = vcmask 1041408
    %v3126 = vsel %vm3124, %v3119, 0
    %3128 = vmatprep.subr.mxu0 0.0
    %3129 = vmatpush1.msra.mxu0 %v3113
    %3130 = vmatprep.subr.mxu0 0.0
    %3131 = vmatpush1.msra.mxu0 %v3114
    %3132 = vmatprep.subr.mxu0 0.0
    %3133 = vmatpush1.msra.mxu0 %v3115
    %3134 = vmatprep.subr.mxu0 0.0
    %3135 = vmatpush1.msra.mxu0 %v3116
    %3136 = vmatprep.subr.mxu0 0.0
    %3137 = vmatpush1.msra.mxu0 %v3117
    %3138 = vmatprep.subr.mxu0 0.0
    %3139 = vmatpush1.msra.mxu0 %v3118
    %3140 = vmatprep.subr.mxu0 0.0
    %3141 = vmatpush1.msra.mxu0 %v3126
    %3142 = vmatprep.subr.mxu0 0.0
    %3143 = vmatpush1.msra.mxu0 0.0
    %3144 = vmatprep.subr.mxu0 0.0
    %3145 = vmatpush1.msra.mxu0 0.0
    %3146 = vmatprep.subr.mxu0 0.0
    %3147 = vmatpush1.msra.mxu0 0.0
    %3148 = vmatprep.subr.mxu0 0.0
    %3149 = vmatpush1.msra.mxu0 0.0
    %3150 = vmatprep.subr.mxu0 0.0
    %3151 = vmatpush1.msra.mxu0 0.0
    %3152 = vmatprep.subr.mxu0 0.0
    %3153 = vmatpush1.msra.mxu0 0.0
    %3154 = vmatprep.subr.mxu0 0.0
    %3155 = vmatpush1.msra.mxu0 0.0
    %3156 = vmatprep.subr.mxu0 0.0
    %3157 = vmatpush1.msra.mxu0 0.0
    %3158 = vmatprep.subr.mxu0 0.0
    %3159 = vmatpush1.msra.mxu0 0.0
    %3160 = vmatprep.subr.mxu0 0.0
    %3161 = vmatpush1.msra.mxu0 0.0
    %3162 = vmatprep.subr.mxu0 0.0
    %3163 = vmatpush1.msra.mxu0 0.0
    %3164 = vmatprep.subr.mxu0 0.0
    %3165 = vmatpush1.msra.mxu0 0.0
    %3166 = vmatprep.subr.mxu0 0.0
    %3167 = vmatpush1.msra.mxu0 0.0
    %3168 = vmatprep.subr.mxu0 0.0
    %3169 = vmatpush1.msra.mxu0 0.0
    %3170 = vmatprep.subr.mxu0 0.0
    %3171 = vmatpush1.msra.mxu0 0.0
    %3172 = vmatprep.subr.mxu0 0.0
    %3173 = vmatpush1.msra.mxu0 0.0
    %3174 = vmatprep.subr.mxu0 0.0
    %3175 = vmatpush1.msra.mxu0 0.0
    %3176 = vmatprep.subr.mxu0 0.0
    %3177 = vmatpush1.msra.mxu0 0.0
    %3178 = vmatprep.subr.mxu0 0.0
    %3179 = vmatpush1.msra.mxu0 0.0
    %3180 = vmatprep.subr.mxu0 0.0
    %3181 = vmatpush1.msra.mxu0 0.0
    %3182 = vmatprep.subr.mxu0 0.0
    %3183 = vmatpush1.msra.mxu0 0.0
    %3184 = vmatprep.subr.mxu0 0.0
    %3185 = vmatpush1.msra.mxu0 0.0
    %3186 = vmatprep.subr.mxu0 0.0
    %3187 = vmatpush1.msra.mxu0 0.0
    %3188 = vmatprep.subr.mxu0 0.0
    %3189 = vmatpush1.msra.mxu0 0.0
    %3190 = vmatprep.subr.mxu0 0.0
    %3191 = vmatpush1.msra.mxu0 0.0
    %3192 = vmatprep.mubr.f32.mxu0 0.0
    %3193 = vmatmul.mubr.f32.gmra.mrb[0].mxu0 %v3122
    %v3194 = vpop.f32.mrb[0].mxu0
    %v3195 = vadd.f32 0.0, %v3194
    %v3196 = vpop.f32.mrb[0].mxu0
    %3197 = vdwg.mxu0
    %v3200 = vunpack.c.l.s4 1983009808
    %v3201 = vunpack.c.0.s8 %v3200
    %v3202 = vlaneseq
    %v3203 = vshrl.u32 %v3202, 7
    %v3204 = vsub.s32 %v3201, %v3203
    %v3205 = vrot.slane %v3195, %v3204
    %3206 = vrot.lane.b32.xlu0 %v3205, 64
    %v3207 = vpop.permute.xlu0 %3206
    %v3209 = vadd.f32 %v3111, %v3207
    %v3210 = vmax.f32 %v3209, 0.0
    %v3211 = vld [vmem:[#allocation2 + $0x2] sm:$0x3]
    %v3212 = vld [vmem:[%s3 + $0x32] sm:$0xff]
    %v3213 = vld [vmem:[%s3 + $0x3a] sm:$0xff]
    %v3214 = vld [vmem:[%s3 + $0x42] sm:$0xff]
    %v3215 = vld [vmem:[%s3 + $0x4a] sm:$0xff]
    %v3216 = vld [vmem:[%s3 + $0x52] sm:$0xff]
    %v3217 = vld [vmem:[%s3 + $0x5a] sm:$0xff]
    %v3218 = vld [vmem:[%s3 + $0x62] sm:$0x3]
    %v3221 = vunpack.c.l.s4 1983009808
    %v3222 = vunpack.c.0.s8 %v3221
    %v3223 = vlaneseq
    %v3224 = vshrl.u32 %v3223, 7
    %v3225 = vsub.s32 %v3222, %v3224
    %v3226 = vrot.slane %v3210, %v3225
    %3227 = vrot.lane.b32.xlu0 %v3226, 64
    %v3228 = vpop.permute.xlu0 %3227
    %v3229 = vsel %vm3120, %v3228, 0
    %v3232 = vsel %vm3124, %v3218, 0
    %3234 = vmatprep.subr.mxu0 0.0
    %3235 = vmatpush1.msra.mxu0 %v3212
    %3236 = vmatprep.subr.mxu0 0.0
    %3237 = vmatpush1.msra.mxu0 %v3213
    %3238 = vmatprep.subr.mxu0 0.0
    %3239 = vmatpush1.msra.mxu0 %v3214
    %3240 = vmatprep.subr.mxu0 0.0
    %3241 = vmatpush1.msra.mxu0 %v3215
    %3242 = vmatprep.subr.mxu0 0.0
    %3243 = vmatpush1.msra.mxu0 %v3216
    %3244 = vmatprep.subr.mxu0 0.0
    %3245 = vmatpush1.msra.mxu0 %v3217
    %3246 = vmatprep.subr.mxu0 0.0
    %3247 = vmatpush1.msra.mxu0 %v3232
    %3248 = vmatprep.subr.mxu0 0.0
    %3249 = vmatpush1.msra.mxu0 0.0
    %3250 = vmatprep.subr.mxu0 0.0
    %3251 = vmatpush1.msra.mxu0 0.0
    %3252 = vmatprep.subr.mxu0 0.0
    %3253 = vmatpush1.msra.mxu0 0.0
    %3254 = vmatprep.subr.mxu0 0.0
    %3255 = vmatpush1.msra.mxu0 0.0
    %3256 = vmatprep.subr.mxu0 0.0
    %3257 = vmatpush1.msra.mxu0 0.0
    %3258 = vmatprep.subr.mxu0 0.0
    %3259 = vmatpush1.msra.mxu0 0.0
    %3260 = vmatprep.subr.mxu0 0.0
    %3261 = vmatpush1.msra.mxu0 0.0
    %3262 = vmatprep.subr.mxu0 0.0
    %3263 = vmatpush1.msra.mxu0 0.0
    %3264 = vmatprep.subr.mxu0 0.0
    %3265 = vmatpush1.msra.mxu0 0.0
    %3266 = vmatprep.subr.mxu0 0.0
    %3267 = vmatpush1.msra.mxu0 0.0
    %3268 = vmatprep.subr.mxu0 0.0
    %3269 = vmatpush1.msra.mxu0 0.0
    %3270 = vmatprep.subr.mxu0 0.0
    %3271 = vmatpush1.msra.mxu0 0.0
    %3272 = vmatprep.subr.mxu0 0.0
    %3273 = vmatpush1.msra.mxu0 0.0
    %3274 = vmatprep.subr.mxu0 0.0
    %3275 = vmatpush1.msra.mxu0 0.0
    %3276 = vmatprep.subr.mxu0 0.0
    %3277 = vmatpush1.msra.mxu0 0.0
    %3278 = vmatprep.subr.mxu0 0.0
    %3279 = vmatpush1.msra.mxu0 0.0
    %3280 = vmatprep.subr.mxu0 0.0
    %3281 = vmatpush1.msra.mxu0 0.0
    %3282 = vmatprep.subr.mxu0 0.0
    %3283 = vmatpush1.msra.mxu0 0.0
    %3284 = vmatprep.subr.mxu0 0.0
    %3285 = vmatpush1.msra.mxu0 0.0
    %3286 = vmatprep.subr.mxu0 0.0
    %3287 = vmatpush1.msra.mxu0 0.0
    %3288 = vmatprep.subr.mxu0 0.0
    %3289 = vmatpush1.msra.mxu0 0.0
    %3290 = vmatprep.subr.mxu0 0.0
    %3291 = vmatpush1.msra.mxu0 0.0
    %3292 = vmatprep.subr.mxu0 0.0
    %3293 = vmatpush1.msra.mxu0 0.0
    %3294 = vmatprep.subr.mxu0 0.0
    %3295 = vmatpush1.msra.mxu0 0.0
    %3296 = vmatprep.subr.mxu0 0.0
    %3297 = vmatpush1.msra.mxu0 0.0
    %3298 = vmatprep.mubr.f32.mxu0 0.0
    %3299 = vmatmul.mubr.f32.gmra.mrb[0].mxu0 %v3229
    %v3300 = vpop.f32.mrb[0].mxu0
    %v3301 = vadd.f32 0.0, %v3300
    %v3302 = vpop.f32.mrb[0].mxu0
    %3303 = vdwg.mxu0
    %v3304 = vadd.f32 %v3211, %v3301
    %v3305 = vmax.f32 %v3304, 0.0
    %v3306 = vld [vmem:[#allocation2 + $0x2] sm:$0x3]
    %v3307 = vld [vmem:[%s3 + $0x64] sm:$0xff]
    %v3308 = vld [vmem:[%s3 + $0x6c] sm:$0xff]
    %v3309 = vld [vmem:[%s3 + $0x74] sm:$0xff]
    %v3310 = vld [vmem:[%s3 + $0x7c] sm:$0xff]
    %v3311 = vld [vmem:[%s3 + $0x84] sm:$0xff]
    %v3312 = vld [vmem:[%s3 + $0x8c] sm:$0xff]
    %v3313 = vld [vmem:[%s3 + $0x94] sm:$0x3]
    %v3315 = vsel %vm3120, %v3305, 0
    %v3318 = vsel %vm3124, %v3313, 0
    %3320 = vmatprep.subr.mxu0 0.0
    %3321 = vmatpush1.msra.mxu0 %v3307
    %3322 = vmatprep.subr.mxu0 0.0
    %3323 = vmatpush1.msra.mxu0 %v3308
    %3324 = vmatprep.subr.mxu0 0.0
    %3325 = vmatpush1.msra.mxu0 %v3309
    %3326 = vmatprep.subr.mxu0 0.0
    %3327 = vmatpush1.msra.mxu0 %v3310
    %3328 = vmatprep.subr.mxu0 0.0
    %3329 = vmatpush1.msra.mxu0 %v3311
    %3330 = vmatprep.subr.mxu0 0.0
    %3331 = vmatpush1.msra.mxu0 %v3312
    %3332 = vmatprep.subr.mxu0 0.0
    %3333 = vmatpush1.msra.mxu0 %v3318
    %3334 = vmatprep.subr.mxu0 0.0
    %3335 = vmatpush1.msra.mxu0 0.0
    %3336 = vmatprep.subr.mxu0 0.0
    %3337 = vmatpush1.msra.mxu0 0.0
    %3338 = vmatprep.subr.mxu0 0.0
    %3339 = vmatpush1.msra.mxu0 0.0
    %3340 = vmatprep.subr.mxu0 0.0
    %3341 = vmatpush1.msra.mxu0 0.0
    %3342 = vmatprep.subr.mxu0 0.0
    %3343 = vmatpush1.msra.mxu0 0.0
    %3344 = vmatprep.subr.mxu0 0.0
    %3345 = vmatpush1.msra.mxu0 0.0
    %3346 = vmatprep.subr.mxu0 0.0
    %3347 = vmatpush1.msra.mxu0 0.0
    %3348 = vmatprep.subr.mxu0 0.0
    %3349 = vmatpush1.msra.mxu0 0.0
    %3350 = vmatprep.subr.mxu0 0.0
    %3351 = vmatpush1.msra.mxu0 0.0
    %3352 = vmatprep.subr.mxu0 0.0
    %3353 = vmatpush1.msra.mxu0 0.0
    %3354 = vmatprep.subr.mxu0 0.0
    %3355 = vmatpush1.msra.mxu0 0.0
    %3356 = vmatprep.subr.mxu0 0.0
    %3357 = vmatpush1.msra.mxu0 0.0
    %3358 = vmatprep.subr.mxu0 0.0
    %3359 = vmatpush1.msra.mxu0 0.0
    %3360 = vmatprep.subr.mxu0 0.0
    %3361 = vmatpush1.msra.mxu0 0.0
    %3362 = vmatprep.subr.mxu0 0.0
    %3363 = vmatpush1.msra.mxu0 0.0
    %3364 = vmatprep.subr.mxu0 0.0
    %3365 = vmatpush1.msra.mxu0 0.0
    %3366 = vmatprep.subr.mxu0 0.0
    %3367 = vmatpush1.msra.mxu0 0.0
    %3368 = vmatprep.subr.mxu0 0.0
    %3369 = vmatpush1.msra.mxu0 0.0
    %3370 = vmatprep.subr.mxu0 0.0
    %3371 = vmatpush1.msra.mxu0 0.0
    %3372 = vmatprep.subr.mxu0 0.0
    %3373 = vmatpush1.msra.mxu0 0.0
    %3374 = vmatprep.subr.mxu0 0.0
    %3375 = vmatpush1.msra.mxu0 0.0
    %3376 = vmatprep.subr.mxu0 0.0
    %3377 = vmatpush1.msra.mxu0 0.0
    %3378 = vmatprep.subr.mxu0 0.0
    %3379 = vmatpush1.msra.mxu0 0.0
    %3380 = vmatprep.subr.mxu0 0.0
    %3381 = vmatpush1.msra.mxu0 0.0
    %3382 = vmatprep.subr.mxu0 0.0
    %3383 = vmatpush1.msra.mxu0 0.0
    %3384 = vmatprep.mubr.f32.mxu0 0.0
    %3385 = vmatmul.mubr.f32.gmra.mrb[0].mxu0 %v3315
    %v3386 = vpop.f32.mrb[0].mxu0
    %v3387 = vadd.f32 0.0, %v3386
    %v3388 = vpop.f32.mrb[0].mxu0
    %3389 = vdwg.mxu0
    %v3392 = vunpack.c.l.s4 1983009808
    %v3393 = vunpack.c.0.s8 %v3392
    %v3394 = vlaneseq
    %v3395 = vshrl.u32 %v3394, 7
    %v3396 = vsub.s32 %v3393, %v3395
    %v3397 = vrot.slane %v3387, %v3396
    %3398 = vrot.lane.b32.xlu0 %v3397, 64
    %v3399 = vpop.permute.xlu0 %3398
    %v3401 = vadd.f32 %v3306, %v3399
    %v3402 = vmax.f32 %v3401, 0.0
    %v3403 = vld [vmem:[%s4] sm:$0xff]
    %v3404 = vld [vmem:[%s4 + $0x8] sm:$0xff]
    %v3405 = vld [vmem:[%s4 + $0x10] sm:$0xff]
    %v3406 = vld [vmem:[%s4 + $0x18] sm:$0xff]
    %v3407 = vld [vmem:[%s4 + $0x20] sm:$0xff]
    %v3408 = vld [vmem:[%s4 + $0x28] sm:$0xff]
    %v3409 = vld [vmem:[%s4 + $0x30] sm:$0x3]
    %v3410 = vld [vmem:[%s4 + $0x32] sm:$0xff]
    %v3411 = vld [vmem:[%s4 + $0x3a] sm:$0xff]
    %v3412 = vld [vmem:[%s4 + $0x42] sm:$0xff]
    %v3413 = vld [vmem:[%s4 + $0x4a] sm:$0xff]
    %v3414 = vld [vmem:[%s4 + $0x52] sm:$0xff]
    %v3415 = vld [vmem:[%s4 + $0x5a] sm:$0xff]
    %v3416 = vld [vmem:[%s4 + $0x62] sm:$0x3]
    %v3418 = vsel %vm3124, %v3416, 0
    %3420 = vmatprep.subr.mxu0 0.0
    %3421 = vmatpush1.msra.mxu0 %v3410
    %3422 = vmatprep.subr.mxu0 0.0
    %3423 = vmatpush1.msra.mxu0 %v3411
    %3424 = vmatprep.subr.mxu0 0.0
    %3425 = vmatpush1.msra.mxu0 %v3412
    %3426 = vmatprep.subr.mxu0 0.0
    %3427 = vmatpush1.msra.mxu0 %v3413
    %3428 = vmatprep.subr.mxu0 0.0
    %3429 = vmatpush1.msra.mxu0 %v3414
    %3430 = vmatprep.subr.mxu0 0.0
    %3431 = vmatpush1.msra.mxu0 %v3415
    %3432 = vmatprep.subr.mxu0 0.0
    %3433 = vmatpush1.msra.mxu0 %v3418
    %3434 = vmatprep.subr.mxu0 0.0
    %3435 = vmatpush1.msra.mxu0 0.0
    %3436 = vmatprep.subr.mxu0 0.0
    %3437 = vmatpush1.msra.mxu0 0.0
    %3438 = vmatprep.subr.mxu0 0.0
    %3439 = vmatpush1.msra.mxu0 0.0
    %3440 = vmatprep.subr.mxu0 0.0
    %3441 = vmatpush1.msra.mxu0 0.0
    %3442 = vmatprep.subr.mxu0 0.0
    %3443 = vmatpush1.msra.mxu0 0.0
    %3444 = vmatprep.subr.mxu0 0.0
    %3445 = vmatpush1.msra.mxu0 0.0
    %3446 = vmatprep.subr.mxu0 0.0
    %3447 = vmatpush1.msra.mxu0 0.0
    %3448 = vmatprep.subr.mxu0 0.0
    %3449 = vmatpush1.msra.mxu0 0.0
    %3450 = vmatprep.subr.mxu0 0.0
    %3451 = vmatpush1.msra.mxu0 0.0
    %3452 = vmatprep.subr.mxu0 0.0
    %3453 = vmatpush1.msra.mxu0 0.0
    %3454 = vmatprep.subr.mxu0 0.0
    %3455 = vmatpush1.msra.mxu0 0.0
    %3456 = vmatprep.subr.mxu0 0.0
    %3457 = vmatpush1.msra.mxu0 0.0
    %3458 = vmatprep.subr.mxu0 0.0
    %3459 = vmatpush1.msra.mxu0 0.0
    %3460 = vmatprep.subr.mxu0 0.0
    %3461 = vmatpush1.msra.mxu0 0.0
    %3462 = vmatprep.subr.mxu0 0.0
    %3463 = vmatpush1.msra.mxu0 0.0
    %3464 = vmatprep.subr.mxu0 0.0
    %3465 = vmatpush1.msra.mxu0 0.0
    %3466 = vmatprep.subr.mxu0 0.0
    %3467 = vmatpush1.msra.mxu0 0.0
    %3468 = vmatprep.subr.mxu0 0.0
    %3469 = vmatpush1.msra.mxu0 0.0
    %3470 = vmatprep.subr.mxu0 0.0
    %3471 = vmatpush1.msra.mxu0 0.0
    %3472 = vmatprep.subr.mxu0 0.0
    %3473 = vmatpush1.msra.mxu0 0.0
    %3474 = vmatprep.subr.mxu0 0.0
    %3475 = vmatpush1.msra.mxu0 0.0
    %3476 = vmatprep.subr.mxu0 0.0
    %3477 = vmatpush1.msra.mxu0 0.0
    %3478 = vmatprep.subr.mxu0 0.0
    %3479 = vmatpush1.msra.mxu0 0.0
    %3480 = vmatprep.subr.mxu0 0.0
    %3481 = vmatpush1.msra.mxu0 0.0
    %3482 = vmatprep.subr.mxu0 0.0
    %3483 = vmatpush1.msra.mxu0 0.0
    %3484 = vmatprep.mubr.f32.mxu0 0.0
    %3485 = vmatmul.mubr.f32.gmra.mrb[0].mxu0 %v3229
    %v3486 = vpop.f32.mrb[0].mxu0
    %v3487 = vadd.f32 0.0, %v3486
    %v3488 = vpop.f32.mrb[0].mxu0
    %3489 = vdwg.mxu0
    %v3491 = vsel %vm3124, %v3409, 0
    %3493 = vmatprep.subr.mxu0 0.0
    %3494 = vmatpush1.msra.mxu0 %v3403
    %3495 = vmatprep.subr.mxu0 0.0
    %3496 = vmatpush1.msra.mxu0 %v3404
    %3497 = vmatprep.subr.mxu0 0.0
    %3498 = vmatpush1.msra.mxu0 %v3405
    %3499 = vmatprep.subr.mxu0 0.0
    %3500 = vmatpush1.msra.mxu0 %v3406
    %3501 = vmatprep.subr.mxu0 0.0
    %3502 = vmatpush1.msra.mxu0 %v3407
    %3503 = vmatprep.subr.mxu0 0.0
    %3504 = vmatpush1.msra.mxu0 %v3408
    %3505 = vmatprep.subr.mxu0 0.0
    %3506 = vmatpush1.msra.mxu0 %v3491
    %3507 = vmatprep.subr.mxu0 0.0
    %3508 = vmatpush1.msra.mxu0 0.0
    %3509 = vmatprep.subr.mxu0 0.0
    %3510 = vmatpush1.msra.mxu0 0.0
    %3511 = vmatprep.subr.mxu0 0.0
    %3512 = vmatpush1.msra.mxu0 0.0
    %3513 = vmatprep.subr.mxu0 0.0
    %3514 = vmatpush1.msra.mxu0 0.0
    %3515 = vmatprep.subr.mxu0 0.0
    %3516 = vmatpush1.msra.mxu0 0.0
    %3517 = vmatprep.subr.mxu0 0.0
    %3518 = vmatpush1.msra.mxu0 0.0
    %3519 = vmatprep.subr.mxu0 0.0
    %3520 = vmatpush1.msra.mxu0 0.0
    %3521 = vmatprep.subr.mxu0 0.0
    %3522 = vmatpush1.msra.mxu0 0.0
    %3523 = vmatprep.subr.mxu0 0.0
    %3524 = vmatpush1.msra.mxu0 0.0
    %3525 = vmatprep.subr.mxu0 0.0
    %3526 = vmatpush1.msra.mxu0 0.0
    %3527 = vmatprep.subr.mxu0 0.0
    %3528 = vmatpush1.msra.mxu0 0.0
    %3529 = vmatprep.subr.mxu0 0.0
    %3530 = vmatpush1.msra.mxu0 0.0
    %3531 = vmatprep.subr.mxu0 0.0
    %3532 = vmatpush1.msra.mxu0 0.0
    %3533 = vmatprep.subr.mxu0 0.0
    %3534 = vmatpush1.msra.mxu0 0.0
    %3535 = vmatprep.subr.mxu0 0.0
    %3536 = vmatpush1.msra.mxu0 0.0
    %3537 = vmatprep.subr.mxu0 0.0
    %3538 = vmatpush1.msra.mxu0 0.0
    %3539 = vmatprep.subr.mxu0 0.0
    %3540 = vmatpush1.msra.mxu0 0.0
    %3541 = vmatprep.subr.mxu0 0.0
    %3542 = vmatpush1.msra.mxu0 0.0
    %3543 = vmatprep.subr.mxu0 0.0
    %3544 = vmatpush1.msra.mxu0 0.0
    %3545 = vmatprep.subr.mxu0 0.0
    %3546 = vmatpush1.msra.mxu0 0.0
    %3547 = vmatprep.subr.mxu0 0.0
    %3548 = vmatpush1.msra.mxu0 0.0
    %3549 = vmatprep.subr.mxu0 0.0
    %3550 = vmatpush1.msra.mxu0 0.0
    %3551 = vmatprep.subr.mxu0 0.0
    %3552 = vmatpush1.msra.mxu0 0.0
    %3553 = vmatprep.subr.mxu0 0.0
    %3554 = vmatpush1.msra.mxu0 0.0
    %3555 = vmatprep.subr.mxu0 0.0
    %3556 = vmatpush1.msra.mxu0 0.0
    %3557 = vmatprep.mubr.f32.mxu0 0.0
    %3558 = vmatmul.mubr.f32.gmra.mrb[0].mxu0 %v3122
    %v3559 = vpop.f32.mrb[0].mxu0
    %v3560 = vadd.f32 %v3487, %v3559
    %v3561 = vpop.f32.mrb[0].mxu0
    %3562 = vdwg.mxu0
    %v3563 = vld [vmem:[%s4 + $0x64] sm:$0xff]
    %v3564 = vld [vmem:[%s4 + $0x6c] sm:$0xff]
    %v3565 = vld [vmem:[%s4 + $0x74] sm:$0xff]
    %v3566 = vld [vmem:[%s4 + $0x7c] sm:$0xff]
    %v3567 = vld [vmem:[%s4 + $0x84] sm:$0xff]
    %v3568 = vld [vmem:[%s4 + $0x8c] sm:$0xff]
    %v3569 = vld [vmem:[%s4 + $0x94] sm:$0x3]
    %v3571 = vsel %vm3124, %v3569, 0
    %3573 = vmatprep.subr.mxu0 0.0
    %3574 = vmatpush1.msra.mxu0 %v3563
    %3575 = vmatprep.subr.mxu0 0.0
    %3576 = vmatpush1.msra.mxu0 %v3564
    %3577 = vmatprep.subr.mxu0 0.0
    %3578 = vmatpush1.msra.mxu0 %v3565
    %3579 = vmatprep.subr.mxu0 0.0
    %3580 = vmatpush1.msra.mxu0 %v3566
    %3581 = vmatprep.subr.mxu0 0.0
    %3582 = vmatpush1.msra.mxu0 %v3567
    %3583 = vmatprep.subr.mxu0 0.0
    %3584 = vmatpush1.msra.mxu0 %v3568
    %3585 = vmatprep.subr.mxu0 0.0
    %3586 = vmatpush1.msra.mxu0 %v3571
    %3587 = vmatprep.subr.mxu0 0.0
    %3588 = vmatpush1.msra.mxu0 0.0
    %3589 = vmatprep.subr.mxu0 0.0
    %3590 = vmatpush1.msra.mxu0 0.0
    %3591 = vmatprep.subr.mxu0 0.0
    %3592 = vmatpush1.msra.mxu0 0.0
    %3593 = vmatprep.subr.mxu0 0.0
    %3594 = vmatpush1.msra.mxu0 0.0
    %3595 = vmatprep.subr.mxu0 0.0
    %3596 = vmatpush1.msra.mxu0 0.0
    %3597 = vmatprep.subr.mxu0 0.0
    %3598 = vmatpush1.msra.mxu0 0.0
    %3599 = vmatprep.subr.mxu0 0.0
    %3600 = vmatpush1.msra.mxu0 0.0
    %3601 = vmatprep.subr.mxu0 0.0
    %3602 = vmatpush1.msra.mxu0 0.0
    %3603 = vmatprep.subr.mxu0 0.0
    %3604 = vmatpush1.msra.mxu0 0.0
    %3605 = vmatprep.subr.mxu0 0.0
    %3606 = vmatpush1.msra.mxu0 0.0
    %3607 = vmatprep.subr.mxu0 0.0
    %3608 = vmatpush1.msra.mxu0 0.0
    %3609 = vmatprep.subr.mxu0 0.0
    %3610 = vmatpush1.msra.mxu0 0.0
    %3611 = vmatprep.subr.mxu0 0.0
    %3612 = vmatpush1.msra.mxu0 0.0
    %3613 = vmatprep.subr.mxu0 0.0
    %3614 = vmatpush1.msra.mxu0 0.0
    %3615 = vmatprep.subr.mxu0 0.0
    %3616 = vmatpush1.msra.mxu0 0.0
    %3617 = vmatprep.subr.mxu0 0.0
    %3618 = vmatpush1.msra.mxu0 0.0
    %3619 = vmatprep.subr.mxu0 0.0
    %3620 = vmatpush1.msra.mxu0 0.0
    %3621 = vmatprep.subr.mxu0 0.0
    %3622 = vmatpush1.msra.mxu0 0.0
    %3623 = vmatprep.subr.mxu0 0.0
    %3624 = vmatpush1.msra.mxu0 0.0
    %3625 = vmatprep.subr.mxu0 0.0
    %3626 = vmatpush1.msra.mxu0 0.0
    %3627 = vmatprep.subr.mxu0 0.0
    %3628 = vmatpush1.msra.mxu0 0.0
    %3629 = vmatprep.subr.mxu0 0.0
    %3630 = vmatpush1.msra.mxu0 0.0
    %3631 = vmatprep.subr.mxu0 0.0
    %3632 = vmatpush1.msra.mxu0 0.0
    %3633 = vmatprep.subr.mxu0 0.0
    %3634 = vmatpush1.msra.mxu0 0.0
    %3635 = vmatprep.subr.mxu0 0.0
    %3636 = vmatpush1.msra.mxu0 0.0
    %3637 = vmatprep.mubr.f32.mxu0 0.0
    %3638 = vmatmul.mubr.f32.gmra.mrb[0].mxu0 %v3315
    %v3639 = vpop.f32.mrb[0].mxu0
    %v3640 = vadd.f32 0.0, %v3639
    %v3641 = vpop.f32.mrb[0].mxu0
    %3642 = vdwg.mxu0
    %v3643 = vadd.f32 %v3560, %v3640
    %v3644 = vld [vmem:[%s4 + $0x96] sm:$0xff]
    %v3645 = vld [vmem:[%s4 + $0x9e] sm:$0xff]
    %v3646 = vld [vmem:[%s4 + $0xa6] sm:$0xff]
    %v3647 = vld [vmem:[%s4 + $0xae] sm:$0xff]
    %v3648 = vld [vmem:[%s4 + $0xb6] sm:$0xff]
    %v3649 = vld [vmem:[%s4 + $0xbe] sm:$0xff]
    %v3650 = vld [vmem:[%s4 + $0xc6] sm:$0x3]
    %v3653 = vunpack.c.l.s4 1983009808
    %v3654 = vunpack.c.0.s8 %v3653
    %v3655 = vlaneseq
    %v3656 = vshrl.u32 %v3655, 7
    %v3657 = vsub.s32 %v3654, %v3656
    %v3658 = vrot.slane %v3402, %v3657
    %3659 = vrot.lane.b32.xlu0 %v3658, 64
    %v3660 = vpop.permute.xlu0 %3659
    %v3661 = vsel %vm3120, %v3660, 0
    %v3664 = vsel %vm3124, %v3650, 0
    %3666 = vmatprep.subr.mxu0 0.0
    %3667 = vmatpush1.msra.mxu0 %v3644
    %3668 = vmatprep.subr.mxu0 0.0
    %3669 = vmatpush1.msra.mxu0 %v3645
    %3670 = vmatprep.subr.mxu0 0.0
    %3671 = vmatpush1.msra.mxu0 %v3646
    %3672 = vmatprep.subr.mxu0 0.0
    %3673 = vmatpush1.msra.mxu0 %v3647
    %3674 = vmatprep.subr.mxu0 0.0
    %3675 = vmatpush1.msra.mxu0 %v3648
    %3676 = vmatprep.subr.mxu0 0.0
    %3677 = vmatpush1.msra.mxu0 %v3649
    %3678 = vmatprep.subr.mxu0 0.0
    %3679 = vmatpush1.msra.mxu0 %v3664
    %3680 = vmatprep.subr.mxu0 0.0
    %3681 = vmatpush1.msra.mxu0 0.0
    %3682 = vmatprep.subr.mxu0 0.0
    %3683 = vmatpush1.msra.mxu0 0.0
    %3684 = vmatprep.subr.mxu0 0.0
    %3685 = vmatpush1.msra.mxu0 0.0
    %3686 = vmatprep.subr.mxu0 0.0
    %3687 = vmatpush1.msra.mxu0 0.0
    %3688 = vmatprep.subr.mxu0 0.0
    %3689 = vmatpush1.msra.mxu0 0.0
    %3690 = vmatprep.subr.mxu0 0.0
    %3691 = vmatpush1.msra.mxu0 0.0
    %3692 = vmatprep.subr.mxu0 0.0
    %3693 = vmatpush1.msra.mxu0 0.0
    %3694 = vmatprep.subr.mxu0 0.0
    %3695 = vmatpush1.msra.mxu0 0.0
    %3696 = vmatprep.subr.mxu0 0.0
    %3697 = vmatpush1.msra.mxu0 0.0
    %3698 = vmatprep.subr.mxu0 0.0
    %3699 = vmatpush1.msra.mxu0 0.0
    %3700 = vmatprep.subr.mxu0 0.0
    %3701 = vmatpush1.msra.mxu0 0.0
    %3702 = vmatprep.subr.mxu0 0.0
    %3703 = vmatpush1.msra.mxu0 0.0
    %3704 = vmatprep.subr.mxu0 0.0
    %3705 = vmatpush1.msra.mxu0 0.0
    %3706 = vmatprep.subr.mxu0 0.0
    %3707 = vmatpush1.msra.mxu0 0.0
    %3708 = vmatprep.subr.mxu0 0.0
    %3709 = vmatpush1.msra.mxu0 0.0
    %3710 = vmatprep.subr.mxu0 0.0
    %3711 = vmatpush1.msra.mxu0 0.0
    %3712 = vmatprep.subr.mxu0 0.0
    %3713 = vmatpush1.msra.mxu0 0.0
    %3714 = vmatprep.subr.mxu0 0.0
    %3715 = vmatpush1.msra.mxu0 0.0
    %3716 = vmatprep.subr.mxu0 0.0
    %3717 = vmatpush1.msra.mxu0 0.0
    %3718 = vmatprep.subr.mxu0 0.0
    %3719 = vmatpush1.msra.mxu0 0.0
    %3720 = vmatprep.subr.mxu0 0.0
    %3721 = vmatpush1.msra.mxu0 0.0
    %3722 = vmatprep.subr.mxu0 0.0
    %3723 = vmatpush1.msra.mxu0 0.0
    %3724 = vmatprep.subr.mxu0 0.0
    %3725 = vmatpush1.msra.mxu0 0.0
    %3726 = vmatprep.subr.mxu0 0.0
    %3727 = vmatpush1.msra.mxu0 0.0
    %3728 = vmatprep.subr.mxu0 0.0
    %3729 = vmatpush1.msra.mxu0 0.0
    %3730 = vmatprep.mubr.f32.mxu0 0.0
    %3731 = vmatmul.mubr.f32.gmra.mrb[0].mxu0 %v3661
    %v3732 = vpop.f32.mrb[0].mxu0
    %v3733 = vadd.f32 0.0, %v3732
    %v3734 = vpop.f32.mrb[0].mxu0
    %3735 = vdwg.mxu0
    %v3736 = vadd.f32 %v3643, %v3733
    %v3737 = vld [vmem:[%s5] sm:$0x1]
    %v3739 = vlaneseq
    %v3740 = vshrl.u32 %v3739, 7
    %v3741 = vsub.s32 0, %v3740
    %v3742 = vrot.slane %v3737, %v3741
    %v3744 = vadd.f32 %v3736, %v3742
    %3745 = vst [vmem:[#allocation3] sm:$0x3] %v3744
    // Predicated region
    $region26: #{spinalnet_forward.5} parent=1 // pred_check
      _
    $region27: #{spinalnet_forward.5} parent=1 // pred_check_branch
      %3747 = sbr.rel (0) target = $region29
    $region28: #{spinalnet_forward.5} parent=1 // pred_region
      %s3749 = ssub.s32 32, 32
      %3750 = vsyncadd [#allocation4], %s3749
      %s3752 = sshll.u32 [#allocation3], 4
      %s3753 = int_to_ptr.vmem [resolvable:$true] %s3752
      %3755 = dma.vmem_to_hbm [thread:$0]  %s3753, 32, %s6, [#allocation4]
    $region29: #{spinalnet_forward.5} parent=1 // pred_fallthru
      _
    // Predicated region
    $region30: #{spinalnet_forward.5} parent=1 // pred_check
      _
    $region31: #{spinalnet_forward.5} parent=1 // pred_check_branch
      %3757 = sbr.rel (0) target = $region33
    $region32: #{spinalnet_forward.5} parent=1 // pred_region
      %3758 = dma.done [#allocation4], 32
    $region33: #{spinalnet_forward.5} parent=1 // pred_fallthru
      _
    %3759 = vsyncpa [#allocation4], 1

</llo_original>
